<compile_context>
chip_gen: v7x
topology: tpu7x:2x2x1
jax: 0.10.0
libtpu: 0.0.40
codegen_flags: <defaults>
</compile_context>

<pallas_src>
import functools

import jax
import jax.numpy as jnp
from jax.experimental import pallas as pl
from jax.experimental.pallas import tpu as pltpu

NEG_SLOPE = 0.2        # GATConv default negative_slope
HEADS = 2
HEAD_DIM = 16
HC = HEADS * HEAD_DIM  # 32
IN_FEAT = 67
IN_FEAT_PAD = 128      # pad the first-layer K dim 67 -> 128
LOGIT_CLAMP = 30.0     # exp(30) ~ 1e13: safe in f32, way beyond realistic logits


# ------------------------------ fused kernel ---------------------------------
def fused_gnn_kernel(x_ref, mask_ref,
                     w1_ref, asrc1_ref, adstw1_ref, b1_ref,
                     w2_ref, asrc2_ref, adstw2_ref, b2_ref,
                     w3_ref, asrc3_ref, adstw3_ref, b3_ref,
                     wout_ref, bout_ref,
                     o_ref,
                     rhs_buf, src_buf,
                     *, heads, head_dim, num_classes):
    N = x_ref.shape[1]
    N2 = 2 * N
    hc = heads * head_dim

    # mask[t, hd*N + s] = 1 iff edge s->t exists (incl. self-loop); f32 from host.
    mask = mask_ref[0]                                  # (N, 2N)

    # Static parts of the block-diagonal aggregation RHS:
    #   [ hf0  0  | 1 0 ]
    #   [  0  hf1 | 0 1 ]
    # The ones columns make the same matmul emit the softmax denominators.
    rhs_buf[...] = jnp.zeros_like(rhs_buf)
    rhs_buf[0:N, hc:hc + 1] = jnp.ones((N, 1), jnp.float32)
    rhs_buf[N:N2, hc + 1:hc + 2] = jnp.ones((N, 1), jnp.float32)

    h_in = x_ref[0]                                     # (N, Fin_pad) bf16

    layers = ((w1_ref, asrc1_ref, adstw1_ref, b1_ref),
              (w2_ref, asrc2_ref, adstw2_ref, b2_ref),
              (w3_ref, asrc3_ref, adstw3_ref, b3_ref))

    h_f32 = None
    for w_ref, asrc_ref, adstw_ref, b_ref in layers:
        # 1) Node feature transform (MXU, bf16 operands, f32 accumulation).
        h = jnp.dot(h_in, w_ref[...],
                    preferred_element_type=jnp.float32)            # (N, HC) f32

        # 2) Attention logits for BOTH heads as one lane-dense (N, 2N) slab.
        #    dst part (incl. its broadcast over source columns) is a single MXU
        #    matmul against the host-built (HC, 2N) matrix.
        dst_wide = jnp.dot(h, adstw_ref[...],
                           preferred_element_type=jnp.float32)     # (N, 2N)
        #    src part: (heads, N) on the MXU, laid into one (1, 2N) VMEM row.
        src_scores = jax.lax.dot_general(
            asrc_ref[...], h, (((1,), (1,)), ((), ())),
            preferred_element_type=jnp.float32)                    # (2, N)
        src_buf[:, 0:N] = src_scores[0:1, :]
        src_buf[:, N:N2] = src_scores[1:2, :]

        logits = dst_wide + src_buf[...]                           # (N, 2N) [t, hd*N+s]
        logits = jnp.maximum(logits, NEG_SLOPE * logits)           # LeakyReLU(0.2)
        # Clamp replaces the row-max shift: no XLU reduce, no masked-max
        # underflow hazard; '* mask' zeroes disallowed sources.
        p = jnp.exp(jnp.clip(logits, -LOGIT_CLAMP, LOGIT_CLAMP)) * mask

        # 3) Aggregation + softmax denominators in ONE MXU matmul against the
        #    block-diagonal RHS (only the h blocks change per layer).
        rhs_buf[0:N, 0:head_dim] = h[:, 0:head_dim]
        rhs_buf[N:N2, head_dim:hc] = h[:, head_dim:hc]
        agg = jnp.dot(p, rhs_buf[...],
                      preferred_element_type=jnp.float32)          # (N, HC+2)

        recip = pl.reciprocal(agg[:, hc:hc + 2], approx=True)      # (N, 2) > 0 (self-loops)
        scale = jnp.concatenate(
            [jnp.broadcast_to(recip[:, 0:1], (N, head_dim)),
             jnp.broadcast_to(recip[:, 1:2], (N, head_dim))], axis=1)  # (N, HC)
        h_f32 = jnp.maximum(agg[:, 0:hc] * scale + b_ref[...], 0.0)    # bias + F.relu
        h_in = h_f32.astype(jnp.bfloat16)

    # 4) Output Linear: y[o] = sum_{n,c} h[n, c] * Wout[o, n, c] + b[o].
    #    K=6144 with M=1 would waste the MXU; do it on the VPU/XLU with the
    #    node-axis (sublane) reduction first, then one tiny lane reduce.
    cols = []
    for o in range(num_classes):
        prod = h_f32 * wout_ref[o]                                 # (N, HC)
        s = jnp.sum(prod, axis=0, keepdims=True)                   # (1, HC)
        cols.append(jnp.sum(s, axis=1, keepdims=True))             # (1, 1)
    o_ref[0] = jnp.concatenate(cols, axis=1) + bout_ref[...]       # (1, NC)


# ------------------------------ pallas wrapper --------------------------------
def gnn_pallas(x_pad, mask2, params):
    B, N, Fp = x_pad.shape
    N2 = 2 * N
    num_classes = params["b_out"].shape[1]
    kernel = functools.partial(fused_gnn_kernel, heads=HEADS,
                               head_dim=HEAD_DIM, num_classes=num_classes)

    def rep(arr):  # grid-replicated operand (whole array every step)
        nd = arr.ndim
        return pl.BlockSpec(arr.shape, lambda b, _n=nd: (0,) * _n)

    in_specs = [
        pl.BlockSpec((1, N, Fp), lambda b: (b, 0, 0)),   # x (bf16, padded)
        pl.BlockSpec((1, N, N2), lambda b: (b, 0, 0)),   # mask (f32, both heads)
    ]
    flat_inputs = [x_pad, mask2]
    for layer in params["convs"]:
        for name in ("w", "a_src_blk", "a_dst_wide", "b"):
            arr = layer[name]
            in_specs.append(rep(arr))
            flat_inputs.append(arr)
    in_specs += [rep(params["w_out3"]), rep(params["b_out"])]
    flat_inputs += [params["w_out3"], params["b_out"]]

    # Advisory cost estimate (per review): MACs per graph + exp/reciprocal count.
    macs_l1 = N * Fp * HC + N * HC * N2 + HEADS * HC * N + N * N2 * (HC + 2)
    macs_l23 = N * HC * HC + N * HC * N2 + HEADS * HC * N + N * N2 * (HC + 2)
    macs = macs_l1 + 2 * macs_l23 + num_classes * N * HC
    transc = 3 * N * N2 + 3 * N * HEADS
    weight_bytes = sum(int(a.size) * a.dtype.itemsize for a in flat_inputs[2:])
    per_graph_bytes = (int(x_pad[0].size) * x_pad.dtype.itemsize
                       + int(mask2[0].size) * mask2.dtype.itemsize
                       + num_classes * 4)
    cost = pl.CostEstimate(flops=2 * macs * B,
                           transcendentals=transc * B,
                           bytes_accessed=B * per_graph_bytes + weight_bytes)

    y3 = pl.pallas_call(
        kernel,
        out_shape=jax.ShapeDtypeStruct((B, 1, num_classes), jnp.float32),
        grid=(B,),
        in_specs=in_specs,
        out_specs=pl.BlockSpec((1, 1, num_classes), lambda b: (b, 0, 0)),
        scratch_shapes=[pltpu.VMEM((N2, HC + 2), jnp.float32),   # block-diag agg RHS
                        pltpu.VMEM((1, N2), jnp.float32)],       # merged src-score row
        compiler_params=pltpu.CompilerParams(dimension_semantics=("parallel",)),
        cost_estimate=cost,
    )(*flat_inputs)
    return y3.reshape(B, num_classes)


# ------------------------------- param setup ----------------------------------
def _block_rows(a):
    """(heads, C) -> (heads, heads*C): row hd holds a[hd] in its head's columns."""
    heads, c = a.shape
    out = jnp.zeros((heads, heads * c), a.dtype)
    for hd in range(heads):
        out = out.at[hd, hd * c:(hd + 1) * c].set(a[hd])
    return out


def init_params(key, num_classes, nodes, in_feat=IN_FEAT):
    N = 3 * nodes
    keys = jax.random.split(key, 12)
    convs = []
    fin = in_feat
    for i in range(3):
        k0, k1, k2 = keys[3 * i], keys[3 * i + 1], keys[3 * i + 2]
        w = jax.random.normal(k0, (fin, HC), jnp.float32) * (1.0 / jnp.sqrt(fin))
        a_src = jax.random.normal(k1, (HEADS, HEAD_DIM), jnp.float32) * 0.1
        a_dst = jax.random.normal(k2, (HEADS, HEAD_DIM), jnp.float32) * 0.1
        if i == 0:
            w = jnp.pad(w, ((0, IN_FEAT_PAD - fin), (0, 0)))  # zero-pad K 67 -> 128
        a_src_blk = _block_rows(a_src)                         # (heads, HC)
        a_dst_blk = _block_rows(a_dst)                         # (heads, HC)
        # (HC, 2N): column block of head hd repeats a_dst_blk[hd] so h @ a_dst_wide
        # yields the dst logit already broadcast over all source columns.
        a_dst_wide = jnp.concatenate(
            [jnp.tile(a_dst_blk[hd][:, None], (1, N)) for hd in range(HEADS)],
            axis=1)
        convs.append(dict(
            w=w.astype(jnp.bfloat16),                          # (128 or 32, 32) bf16
            a_src_blk=a_src_blk,                               # (heads, HC) f32
            a_dst_wide=a_dst_wide,                             # (HC, 2N) f32
            b=jnp.zeros((1, HC), jnp.float32),
        ))
        fin = HC
    w_out = (jax.random.normal(keys[9], (N * HC, num_classes), jnp.float32)
             * (1.0 / jnp.sqrt(N * HC)))
    # Kernel-friendly layout: w_out3[o, n, c] = w_out[n*HC + c, o]
    w_out3 = jnp.transpose(w_out.reshape(N, HC, num_classes), (2, 0, 1))
    b_out = jnp.zeros((1, num_classes), jnp.float32)
    return dict(convs=convs, w_out3=w_out3, b_out=b_out)


# -------------------------------- forward -------------------------------------
@jax.jit
def gnn_forward(x, adj, indices, params):
    del indices  # unused by the reference forward as well
    B, N, fin = x.shape
    # Pad node features 67 -> 128 and pre-cast to bf16 (matches bf16 W1).
    x_pad = jnp.pad(x, ((0, 0), (0, 0), (0, IN_FEAT_PAD - fin))).astype(jnp.bfloat16)
    # mask[b, t, s] = 1 iff adj[b, s, t] != 0 (edge s->t) or s == t (self-loop);
    # tiled once along lanes so both heads share one lane-dense (N, 2N) slab.
    eye = jnp.eye(N, dtype=bool)
    mask = ((jnp.transpose(adj, (0, 2, 1)) != 0) | eye[None]).astype(jnp.float32)
    mask2 = jnp.concatenate([mask, mask], axis=-1)          # (B, N, 2N)
    y = gnn_pallas(x_pad, mask2, params)
    return y, None, None


# ---------------------------------- main ---------------------------------------
if __name__ == "__main__":
    num_classes = 4
    nodes = 64                 # 3 * nodes = 192, so Linear in-dim = 192*32 = 6144
    N = 3 * nodes
    B = 2                      # keep B even so neither v7x TensorCore idles

    key = jax.random.PRNGKey(0)
    kx, ka, kw, kp = jax.random.split(key, 4)

    x = jax.random.normal(kx, (B, N, IN_FEAT), jnp.float32)
    # sparse-ish weighted adjacency
    pattern = (jax.random.uniform(ka, (B, N, N)) < 0.05).astype(jnp.float32)
    weights = jax.random.uniform(kw, (B, N, N), jnp.float32)
    adj = pattern * weights
    indices = jnp.arange(B, dtype=jnp.int32)  # unused by forward

    params = init_params(kp, num_classes, nodes)

    y, _, _ = gnn_forward(x, adj, indices, params)
    y = jax.block_until_ready(y)
    assert y.shape == (B, num_classes)
    assert bool(jnp.all(jnp.isfinite(y)))
    print("KERNEL_OK")
</pallas_src>

<mosaic_0001>
module attributes {stable_mosaic.version = 11 : i64} {
  func.func @fused_gnn_kernel(%arg0: i32, %arg1: memref<1x192x128xbf16, #tpu.memory_space<vmem>>, %arg2: memref<1x192x384xf32, #tpu.memory_space<vmem>>, %arg3: memref<128x32xbf16, #tpu.memory_space<vmem>>, %arg4: memref<2x32xf32, #tpu.memory_space<vmem>>, %arg5: memref<32x384xf32, #tpu.memory_space<vmem>>, %arg6: memref<1x32xf32, #tpu.memory_space<vmem>>, %arg7: memref<32x32xbf16, #tpu.memory_space<vmem>>, %arg8: memref<2x32xf32, #tpu.memory_space<vmem>>, %arg9: memref<32x384xf32, #tpu.memory_space<vmem>>, %arg10: memref<1x32xf32, #tpu.memory_space<vmem>>, %arg11: memref<32x32xbf16, #tpu.memory_space<vmem>>, %arg12: memref<2x32xf32, #tpu.memory_space<vmem>>, %arg13: memref<32x384xf32, #tpu.memory_space<vmem>>, %arg14: memref<1x32xf32, #tpu.memory_space<vmem>>, %arg15: memref<4x192x32xf32, #tpu.memory_space<vmem>>, %arg16: memref<1x4xf32, #tpu.memory_space<vmem>>, %arg17: memref<1x1x4xf32, #tpu.memory_space<vmem>>, %arg18: memref<384x34xf32, #tpu.memory_space<vmem>>, %arg19: memref<1x384xf32, #tpu.memory_space<vmem>>) attributes {dimension_semantics = [#tpu.dimension_semantics<parallel>], iteration_bounds = array<i64: 2>, scalar_prefetch = 0 : i64, scratch_operands = 2 : i64, tpu.core_type = #tpu.core_type<tc>, window_params = [{transform_indices = @transform_0, window_bounds = array<i64: 1, 192, 128>}, {transform_indices = @transform_1, window_bounds = array<i64: 1, 192, 384>}, {pipeline_mode = #tpu.pipeline_mode<synchronous>, transform_indices = @transform_2, window_bounds = array<i64: 128, 32>}, {pipeline_mode = #tpu.pipeline_mode<synchronous>, transform_indices = @transform_3, window_bounds = array<i64: 2, 32>}, {pipeline_mode = #tpu.pipeline_mode<synchronous>, transform_indices = @transform_4, window_bounds = array<i64: 32, 384>}, {pipeline_mode = #tpu.pipeline_mode<synchronous>, transform_indices = @transform_5, window_bounds = array<i64: 1, 32>}, {pipeline_mode = #tpu.pipeline_mode<synchronous>, transform_indices = @transform_6, window_bounds = array<i64: 32, 32>}, {pipeline_mode = #tpu.pipeline_mode<synchronous>, transform_indices = @transform_7, window_bounds = array<i64: 2, 32>}, {pipeline_mode = #tpu.pipeline_mode<synchronous>, transform_indices = @transform_8, window_bounds = array<i64: 32, 384>}, {pipeline_mode = #tpu.pipeline_mode<synchronous>, transform_indices = @transform_9, window_bounds = array<i64: 1, 32>}, {pipeline_mode = #tpu.pipeline_mode<synchronous>, transform_indices = @transform_10, window_bounds = array<i64: 32, 32>}, {pipeline_mode = #tpu.pipeline_mode<synchronous>, transform_indices = @transform_11, window_bounds = array<i64: 2, 32>}, {pipeline_mode = #tpu.pipeline_mode<synchronous>, transform_indices = @transform_12, window_bounds = array<i64: 32, 384>}, {pipeline_mode = #tpu.pipeline_mode<synchronous>, transform_indices = @transform_13, window_bounds = array<i64: 1, 32>}, {pipeline_mode = #tpu.pipeline_mode<synchronous>, transform_indices = @transform_14, window_bounds = array<i64: 4, 192, 32>}, {pipeline_mode = #tpu.pipeline_mode<synchronous>, transform_indices = @transform_15, window_bounds = array<i64: 1, 4>}, {transform_indices = @transform_16, window_bounds = array<i64: 1, 1, 4>}]} {
    %c0 = arith.constant 0 : index
    %c0_0 = arith.constant 0 : index
    %c0_1 = arith.constant 0 : index
    %0 = vector.load %arg2[%c0, %c0_0, %c0_1] : memref<1x192x384xf32, #tpu.memory_space<vmem>>, vector<1x192x384xf32>
    %1 = vector.shape_cast %0 : vector<1x192x384xf32> to vector<192x384xf32>
    %cst = arith.constant 0.000000e+00 : f32
    %2 = vector.broadcast %cst : f32 to vector<384x34xf32>
    %c0_2 = arith.constant 0 : index
    %c0_3 = arith.constant 0 : index
    %3 = vector.load %arg18[%c0_2, %c0_3] : memref<384x34xf32, #tpu.memory_space<vmem>>, vector<384x34xf32>
    tpu.vector_store %arg18[%c0_2, %c0_3], %2 {strides = array<i32>} : memref<384x34xf32, #tpu.memory_space<vmem>>, vector<384x34xf32>,
    %cst_4 = arith.constant 1.000000e+00 : f32
    %4 = vector.broadcast %cst_4 : f32 to vector<192x1xf32>
    %c0_5 = arith.constant 0 : index
    %c32 = arith.constant 32 : index
    %5 = vector.load %arg18[%c0_5, %c32] : memref<384x34xf32, #tpu.memory_space<vmem>>, vector<192x1xf32>
    tpu.vector_store %arg18[%c0_5, %c32], %4 {strides = array<i32>} : memref<384x34xf32, #tpu.memory_space<vmem>>, vector<192x1xf32>,
    %cst_6 = arith.constant 1.000000e+00 : f32
    %6 = vector.broadcast %cst_6 : f32 to vector<192x1xf32>
    %c192 = arith.constant 192 : index
    %c33 = arith.constant 33 : index
    %7 = vector.load %arg18[%c192, %c33] : memref<384x34xf32, #tpu.memory_space<vmem>>, vector<192x1xf32>
    tpu.vector_store %arg18[%c192, %c33], %6 {strides = array<i32>} : memref<384x34xf32, #tpu.memory_space<vmem>>, vector<192x1xf32>,
    %c0_7 = arith.constant 0 : index
    %c0_8 = arith.constant 0 : index
    %c0_9 = arith.constant 0 : index
    %8 = vector.load %arg1[%c0_7, %c0_8, %c0_9] : memref<1x192x128xbf16, #tpu.memory_space<vmem>>, vector<1x192x128xbf16>
    %9 = vector.shape_cast %8 : vector<1x192x128xbf16> to vector<192x128xbf16>
    %c0_10 = arith.constant 0 : index
    %c0_11 = arith.constant 0 : index
    %10 = vector.load %arg3[%c0_10, %c0_11] : memref<128x32xbf16, #tpu.memory_space<vmem>>, vector<128x32xbf16>
    %cst_12 = arith.constant dense<0.000000e+00> : vector<192x32xf32>
    %11 = tpu.matmul %9, %10, %cst_12 {dimension_numbers = #tpu.dot_dimension_numbers<[1], [0], [0], [1], [0, 0, 1, 1], [], []>} : vector<192x128xbf16>, vector<128x32xbf16>, vector<192x32xf32> -> vector<192x32xf32>
    %c0_13 = arith.constant 0 : index
    %c0_14 = arith.constant 0 : index
    %12 = vector.load %arg5[%c0_13, %c0_14] : memref<32x384xf32, #tpu.memory_space<vmem>>, vector<32x384xf32>
    %cst_15 = arith.constant dense<0.000000e+00> : vector<192x384xf32>
    %13 = tpu.matmul %11, %12, %cst_15 {dimension_numbers = #tpu.dot_dimension_numbers<[1], [0], [0], [1], [0, 0, 1, 1], [], []>} : vector<192x32xf32>, vector<32x384xf32>, vector<192x384xf32> -> vector<192x384xf32>
    %c0_16 = arith.constant 0 : index
    %c0_17 = arith.constant 0 : index
    %14 = vector.load %arg4[%c0_16, %c0_17] : memref<2x32xf32, #tpu.memory_space<vmem>>, vector<2x32xf32>
    %cst_18 = arith.constant dense<0.000000e+00> : vector<2x192xf32>
    %15 = tpu.matmul %14, %11, %cst_18 {dimension_numbers = #tpu.dot_dimension_numbers<[1], [1], [0], [0], [0, 0, 1, 0], [], []>} : vector<2x32xf32>, vector<192x32xf32>, vector<2x192xf32> -> vector<2x192xf32>
    %16 = vector.extract_strided_slice %15 {offsets = [0, 0], sizes = [1, 192], strides = [1, 1]} : vector<2x192xf32> to vector<1x192xf32>
    %c0_19 = arith.constant 0 : index
    %c0_20 = arith.constant 0 : index
    %17 = vector.load %arg19[%c0_19, %c0_20] : memref<1x384xf32, #tpu.memory_space<vmem>>, vector<1x192xf32>
    tpu.vector_store %arg19[%c0_19, %c0_20], %16 {strides = array<i32>} : memref<1x384xf32, #tpu.memory_space<vmem>>, vector<1x192xf32>,
    %18 = vector.extract_strided_slice %15 {offsets = [1, 0], sizes = [1, 192], strides = [1, 1]} : vector<2x192xf32> to vector<1x192xf32>
    %c0_21 = arith.constant 0 : index
    %c192_22 = arith.constant 192 : index
    %19 = vector.load %arg19[%c0_21, %c192_22] : memref<1x384xf32, #tpu.memory_space<vmem>>, vector<1x192xf32>
    tpu.vector_store %arg19[%c0_21, %c192_22], %18 {strides = array<i32>} : memref<1x384xf32, #tpu.memory_space<vmem>>, vector<1x192xf32>,
    %c0_23 = arith.constant 0 : index
    %c0_24 = arith.constant 0 : index
    %20 = vector.load %arg19[%c0_23, %c0_24] : memref<1x384xf32, #tpu.memory_space<vmem>>, vector<1x384xf32>
    %21 = vector.broadcast %20 : vector<1x384xf32> to vector<192x384xf32>
    %22 = arith.addf %13, %21 : vector<192x384xf32>
    %cst_25 = arith.constant 2.000000e-01 : f32
    %23 = vector.broadcast %cst_25 : f32 to vector<192x384xf32>
    %24 = arith.mulf %23, %22 : vector<192x384xf32>
    %25 = arith.maximumf %22, %24 : vector<192x384xf32>
    %cst_26 = arith.constant -3.000000e+01 : f32
    %cst_27 = arith.constant 3.000000e+01 : f32
    %26 = vector.broadcast %cst_26 : f32 to vector<192x384xf32>
    %27 = arith.maximumf %26, %25 : vector<192x384xf32>
    %28 = vector.broadcast %cst_27 : f32 to vector<192x384xf32>
    %29 = arith.minimumf %28, %27 : vector<192x384xf32>
    %30 = math.exp %29 : vector<192x384xf32>
    %31 = arith.mulf %30, %1 : vector<192x384xf32>
    %32 = vector.extract_strided_slice %11 {offsets = [0, 0], sizes = [192, 16], strides = [1, 1]} : vector<192x32xf32> to vector<192x16xf32>
    %c0_28 = arith.constant 0 : index
    %c0_29 = arith.constant 0 : index
    %33 = vector.load %arg18[%c0_28, %c0_29] : memref<384x34xf32, #tpu.memory_space<vmem>>, vector<192x16xf32>
    tpu.vector_store %arg18[%c0_28, %c0_29], %32 {strides = array<i32>} : memref<384x34xf32, #tpu.memory_space<vmem>>, vector<192x16xf32>,
    %34 = vector.extract_strided_slice %11 {offsets = [0, 16], sizes = [192, 16], strides = [1, 1]} : vector<192x32xf32> to vector<192x16xf32>
    %c192_30 = arith.constant 192 : index
    %c16 = arith.constant 16 : index
    %35 = vector.load %arg18[%c192_30, %c16] : memref<384x34xf32, #tpu.memory_space<vmem>>, vector<192x16xf32>
    tpu.vector_store %arg18[%c192_30, %c16], %34 {strides = array<i32>} : memref<384x34xf32, #tpu.memory_space<vmem>>, vector<192x16xf32>,
    %c0_31 = arith.constant 0 : index
    %c0_32 = arith.constant 0 : index
    %36 = vector.load %arg18[%c0_31, %c0_32] : memref<384x34xf32, #tpu.memory_space<vmem>>, vector<384x34xf32>
    %cst_33 = arith.constant dense<0.000000e+00> : vector<192x34xf32>
    %37 = tpu.matmul %31, %36, %cst_33 {dimension_numbers = #tpu.dot_dimension_numbers<[1], [0], [0], [1], [0, 0, 1, 1], [], []>} : vector<192x384xf32>, vector<384x34xf32>, vector<192x34xf32> -> vector<192x34xf32>
    %38 = vector.extract_strided_slice %37 {offsets = [0, 32], sizes = [192, 2], strides = [1, 1]} : vector<192x34xf32> to vector<192x2xf32>
    %39 = tpu.reciprocal %38 {approx = true} : vector<192x2xf32> -> vector<192x2xf32>
    %40 = vector.extract_strided_slice %39 {offsets = [0, 0], sizes = [192, 1], strides = [1, 1]} : vector<192x2xf32> to vector<192x1xf32>
    %41 = vector.shape_cast %40 : vector<192x1xf32> to vector<192x1xf32>
    %42 = vector.broadcast %41 : vector<192x1xf32> to vector<192x16xf32>
    %43 = vector.extract_strided_slice %39 {offsets = [0, 1], sizes = [192, 1], strides = [1, 1]} : vector<192x2xf32> to vector<192x1xf32>
    %44 = vector.shape_cast %43 : vector<192x1xf32> to vector<192x1xf32>
    %45 = vector.broadcast %44 : vector<192x1xf32> to vector<192x16xf32>
    %46 = tpu.concatenate %42, %45 in 1 : vector<192x16xf32>, vector<192x16xf32> -> vector<192x32xf32>
    %47 = vector.extract_strided_slice %37 {offsets = [0, 0], sizes = [192, 32], strides = [1, 1]} : vector<192x34xf32> to vector<192x32xf32>
    %48 = arith.mulf %47, %46 : vector<192x32xf32>
    %c0_34 = arith.constant 0 : index
    %c0_35 = arith.constant 0 : index
    %49 = vector.load %arg6[%c0_34, %c0_35] : memref<1x32xf32, #tpu.memory_space<vmem>>, vector<1x32xf32>
    %50 = vector.broadcast %49 : vector<1x32xf32> to vector<192x32xf32>
    %51 = arith.addf %48, %50 : vector<192x32xf32>
    %cst_36 = arith.constant 0.000000e+00 : f32
    %52 = vector.broadcast %cst_36 : f32 to vector<192x32xf32>
    %53 = arith.maximumf %51, %52 : vector<192x32xf32>
    %54 = arith.truncf %53 : vector<192x32xf32> to vector<192x32xbf16>
    %c0_37 = arith.constant 0 : index
    %c0_38 = arith.constant 0 : index
    %55 = vector.load %arg7[%c0_37, %c0_38] : memref<32x32xbf16, #tpu.memory_space<vmem>>, vector<32x32xbf16>
    %cst_39 = arith.constant dense<0.000000e+00> : vector<192x32xf32>
    %56 = tpu.matmul %54, %55, %cst_39 {dimension_numbers = #tpu.dot_dimension_numbers<[1], [0], [0], [1], [0, 0, 1, 1], [], []>} : vector<192x32xbf16>, vector<32x32xbf16>, vector<192x32xf32> -> vector<192x32xf32>
    %c0_40 = arith.constant 0 : index
    %c0_41 = arith.constant 0 : index
    %57 = vector.load %arg9[%c0_40, %c0_41] : memref<32x384xf32, #tpu.memory_space<vmem>>, vector<32x384xf32>
    %cst_42 = arith.constant dense<0.000000e+00> : vector<192x384xf32>
    %58 = tpu.matmul %56, %57, %cst_42 {dimension_numbers = #tpu.dot_dimension_numbers<[1], [0], [0], [1], [0, 0, 1, 1], [], []>} : vector<192x32xf32>, vector<32x384xf32>, vector<192x384xf32> -> vector<192x384xf32>
    %c0_43 = arith.constant 0 : index
    %c0_44 = arith.constant 0 : index
    %59 = vector.load %arg8[%c0_43, %c0_44] : memref<2x32xf32, #tpu.memory_space<vmem>>, vector<2x32xf32>
    %cst_45 = arith.constant dense<0.000000e+00> : vector<2x192xf32>
    %60 = tpu.matmul %59, %56, %cst_45 {dimension_numbers = #tpu.dot_dimension_numbers<[1], [1], [0], [0], [0, 0, 1, 0], [], []>} : vector<2x32xf32>, vector<192x32xf32>, vector<2x192xf32> -> vector<2x192xf32>
    %61 = vector.extract_strided_slice %60 {offsets = [0, 0], sizes = [1, 192], strides = [1, 1]} : vector<2x192xf32> to vector<1x192xf32>
    %c0_46 = arith.constant 0 : index
    %c0_47 = arith.constant 0 : index
    %62 = vector.load %arg19[%c0_46, %c0_47] : memref<1x384xf32, #tpu.memory_space<vmem>>, vector<1x192xf32>
    tpu.vector_store %arg19[%c0_46, %c0_47], %61 {strides = array<i32>} : memref<1x384xf32, #tpu.memory_space<vmem>>, vector<1x192xf32>,
    %63 = vector.extract_strided_slice %60 {offsets = [1, 0], sizes = [1, 192], strides = [1, 1]} : vector<2x192xf32> to vector<1x192xf32>
    %c0_48 = arith.constant 0 : index
    %c192_49 = arith.constant 192 : index
    %64 = vector.load %arg19[%c0_48, %c192_49] : memref<1x384xf32, #tpu.memory_space<vmem>>, vector<1x192xf32>
    tpu.vector_store %arg19[%c0_48, %c192_49], %63 {strides = array<i32>} : memref<1x384xf32, #tpu.memory_space<vmem>>, vector<1x192xf32>,
    %c0_50 = arith.constant 0 : index
    %c0_51 = arith.constant 0 : index
    %65 = vector.load %arg19[%c0_50, %c0_51] : memref<1x384xf32, #tpu.memory_space<vmem>>, vector<1x384xf32>
    %66 = vector.broadcast %65 : vector<1x384xf32> to vector<192x384xf32>
    %67 = arith.addf %58, %66 : vector<192x384xf32>
    %cst_52 = arith.constant 2.000000e-01 : f32
    %68 = vector.broadcast %cst_52 : f32 to vector<192x384xf32>
    %69 = arith.mulf %68, %67 : vector<192x384xf32>
    %70 = arith.maximumf %67, %69 : vector<192x384xf32>
    %cst_53 = arith.constant -3.000000e+01 : f32
    %cst_54 = arith.constant 3.000000e+01 : f32
    %71 = vector.broadcast %cst_53 : f32 to vector<192x384xf32>
    %72 = arith.maximumf %71, %70 : vector<192x384xf32>
    %73 = vector.broadcast %cst_54 : f32 to vector<192x384xf32>
    %74 = arith.minimumf %73, %72 : vector<192x384xf32>
    %75 = math.exp %74 : vector<192x384xf32>
    %76 = arith.mulf %75, %1 : vector<192x384xf32>
    %77 = vector.extract_strided_slice %56 {offsets = [0, 0], sizes = [192, 16], strides = [1, 1]} : vector<192x32xf32> to vector<192x16xf32>
    %c0_55 = arith.constant 0 : index
    %c0_56 = arith.constant 0 : index
    %78 = vector.load %arg18[%c0_55, %c0_56] : memref<384x34xf32, #tpu.memory_space<vmem>>, vector<192x16xf32>
    tpu.vector_store %arg18[%c0_55, %c0_56], %77 {strides = array<i32>} : memref<384x34xf32, #tpu.memory_space<vmem>>, vector<192x16xf32>,
    %79 = vector.extract_strided_slice %56 {offsets = [0, 16], sizes = [192, 16], strides = [1, 1]} : vector<192x32xf32> to vector<192x16xf32>
    %c192_57 = arith.constant 192 : index
    %c16_58 = arith.constant 16 : index
    %80 = vector.load %arg18[%c192_57, %c16_58] : memref<384x34xf32, #tpu.memory_space<vmem>>, vector<192x16xf32>
    tpu.vector_store %arg18[%c192_57, %c16_58], %79 {strides = array<i32>} : memref<384x34xf32, #tpu.memory_space<vmem>>, vector<192x16xf32>,
    %c0_59 = arith.constant 0 : index
    %c0_60 = arith.constant 0 : index
    %81 = vector.load %arg18[%c0_59, %c0_60] : memref<384x34xf32, #tpu.memory_space<vmem>>, vector<384x34xf32>
    %cst_61 = arith.constant dense<0.000000e+00> : vector<192x34xf32>
    %82 = tpu.matmul %76, %81, %cst_61 {dimension_numbers = #tpu.dot_dimension_numbers<[1], [0], [0], [1], [0, 0, 1, 1], [], []>} : vector<192x384xf32>, vector<384x34xf32>, vector<192x34xf32> -> vector<192x34xf32>
    %83 = vector.extract_strided_slice %82 {offsets = [0, 32], sizes = [192, 2], strides = [1, 1]} : vector<192x34xf32> to vector<192x2xf32>
    %84 = tpu.reciprocal %83 {approx = true} : vector<192x2xf32> -> vector<192x2xf32>
    %85 = vector.extract_strided_slice %84 {offsets = [0, 0], sizes = [192, 1], strides = [1, 1]} : vector<192x2xf32> to vector<192x1xf32>
    %86 = vector.shape_cast %85 : vector<192x1xf32> to vector<192x1xf32>
    %87 = vector.broadcast %86 : vector<192x1xf32> to vector<192x16xf32>
    %88 = vector.extract_strided_slice %84 {offsets = [0, 1], sizes = [192, 1], strides = [1, 1]} : vector<192x2xf32> to vector<192x1xf32>
    %89 = vector.shape_cast %88 : vector<192x1xf32> to vector<192x1xf32>
    %90 = vector.broadcast %89 : vector<192x1xf32> to vector<192x16xf32>
    %91 = tpu.concatenate %87, %90 in 1 : vector<192x16xf32>, vector<192x16xf32> -> vector<192x32xf32>
    %92 = vector.extract_strided_slice %82 {offsets = [0, 0], sizes = [192, 32], strides = [1, 1]} : vector<192x34xf32> to vector<192x32xf32>
    %93 = arith.mulf %92, %91 : vector<192x32xf32>
    %c0_62 = arith.constant 0 : index
    %c0_63 = arith.constant 0 : index
    %94 = vector.load %arg10[%c0_62, %c0_63] : memref<1x32xf32, #tpu.memory_space<vmem>>, vector<1x32xf32>
    %95 = vector.broadcast %94 : vector<1x32xf32> to vector<192x32xf32>
    %96 = arith.addf %93, %95 : vector<192x32xf32>
    %cst_64 = arith.constant 0.000000e+00 : f32
    %97 = vector.broadcast %cst_64 : f32 to vector<192x32xf32>
    %98 = arith.maximumf %96, %97 : vector<192x32xf32>
    %99 = arith.truncf %98 : vector<192x32xf32> to vector<192x32xbf16>
    %c0_65 = arith.constant 0 : index
    %c0_66 = arith.constant 0 : index
    %100 = vector.load %arg11[%c0_65, %c0_66] : memref<32x32xbf16, #tpu.memory_space<vmem>>, vector<32x32xbf16>
    %cst_67 = arith.constant dense<0.000000e+00> : vector<192x32xf32>
    %101 = tpu.matmul %99, %100, %cst_67 {dimension_numbers = #tpu.dot_dimension_numbers<[1], [0], [0], [1], [0, 0, 1, 1], [], []>} : vector<192x32xbf16>, vector<32x32xbf16>, vector<192x32xf32> -> vector<192x32xf32>
    %c0_68 = arith.constant 0 : index
    %c0_69 = arith.constant 0 : index
    %102 = vector.load %arg13[%c0_68, %c0_69] : memref<32x384xf32, #tpu.memory_space<vmem>>, vector<32x384xf32>
    %cst_70 = arith.constant dense<0.000000e+00> : vector<192x384xf32>
    %103 = tpu.matmul %101, %102, %cst_70 {dimension_numbers = #tpu.dot_dimension_numbers<[1], [0], [0], [1], [0, 0, 1, 1], [], []>} : vector<192x32xf32>, vector<32x384xf32>, vector<192x384xf32> -> vector<192x384xf32>
    %c0_71 = arith.constant 0 : index
    %c0_72 = arith.constant 0 : index
    %104 = vector.load %arg12[%c0_71, %c0_72] : memref<2x32xf32, #tpu.memory_space<vmem>>, vector<2x32xf32>
    %cst_73 = arith.constant dense<0.000000e+00> : vector<2x192xf32>
    %105 = tpu.matmul %104, %101, %cst_73 {dimension_numbers = #tpu.dot_dimension_numbers<[1], [1], [0], [0], [0, 0, 1, 0], [], []>} : vector<2x32xf32>, vector<192x32xf32>, vector<2x192xf32> -> vector<2x192xf32>
    %106 = vector.extract_strided_slice %105 {offsets = [0, 0], sizes = [1, 192], strides = [1, 1]} : vector<2x192xf32> to vector<1x192xf32>
    %c0_74 = arith.constant 0 : index
    %c0_75 = arith.constant 0 : index
    %107 = vector.load %arg19[%c0_74, %c0_75] : memref<1x384xf32, #tpu.memory_space<vmem>>, vector<1x192xf32>
    tpu.vector_store %arg19[%c0_74, %c0_75], %106 {strides = array<i32>} : memref<1x384xf32, #tpu.memory_space<vmem>>, vector<1x192xf32>,
    %108 = vector.extract_strided_slice %105 {offsets = [1, 0], sizes = [1, 192], strides = [1, 1]} : vector<2x192xf32> to vector<1x192xf32>
    %c0_76 = arith.constant 0 : index
    %c192_77 = arith.constant 192 : index
    %109 = vector.load %arg19[%c0_76, %c192_77] : memref<1x384xf32, #tpu.memory_space<vmem>>, vector<1x192xf32>
    tpu.vector_store %arg19[%c0_76, %c192_77], %108 {strides = array<i32>} : memref<1x384xf32, #tpu.memory_space<vmem>>, vector<1x192xf32>,
    %c0_78 = arith.constant 0 : index
    %c0_79 = arith.constant 0 : index
    %110 = vector.load %arg19[%c0_78, %c0_79] : memref<1x384xf32, #tpu.memory_space<vmem>>, vector<1x384xf32>
    %111 = vector.broadcast %110 : vector<1x384xf32> to vector<192x384xf32>
    %112 = arith.addf %103, %111 : vector<192x384xf32>
    %cst_80 = arith.constant 2.000000e-01 : f32
    %113 = vector.broadcast %cst_80 : f32 to vector<192x384xf32>
    %114 = arith.mulf %113, %112 : vector<192x384xf32>
    %115 = arith.maximumf %112, %114 : vector<192x384xf32>
    %cst_81 = arith.constant -3.000000e+01 : f32
    %cst_82 = arith.constant 3.000000e+01 : f32
    %116 = vector.broadcast %cst_81 : f32 to vector<192x384xf32>
    %117 = arith.maximumf %116, %115 : vector<192x384xf32>
    %118 = vector.broadcast %cst_82 : f32 to vector<192x384xf32>
    %119 = arith.minimumf %118, %117 : vector<192x384xf32>
    %120 = math.exp %119 : vector<192x384xf32>
    %121 = arith.mulf %120, %1 : vector<192x384xf32>
    %122 = vector.extract_strided_slice %101 {offsets = [0, 0], sizes = [192, 16], strides = [1, 1]} : vector<192x32xf32> to vector<192x16xf32>
    %c0_83 = arith.constant 0 : index
    %c0_84 = arith.constant 0 : index
    %123 = vector.load %arg18[%c0_83, %c0_84] : memref<384x34xf32, #tpu.memory_space<vmem>>, vector<192x16xf32>
    tpu.vector_store %arg18[%c0_83, %c0_84], %122 {strides = array<i32>} : memref<384x34xf32, #tpu.memory_space<vmem>>, vector<192x16xf32>,
    %124 = vector.extract_strided_slice %101 {offsets = [0, 16], sizes = [192, 16], strides = [1, 1]} : vector<192x32xf32> to vector<192x16xf32>
    %c192_85 = arith.constant 192 : index
    %c16_86 = arith.constant 16 : index
    %125 = vector.load %arg18[%c192_85, %c16_86] : memref<384x34xf32, #tpu.memory_space<vmem>>, vector<192x16xf32>
    tpu.vector_store %arg18[%c192_85, %c16_86], %124 {strides = array<i32>} : memref<384x34xf32, #tpu.memory_space<vmem>>, vector<192x16xf32>,
    %c0_87 = arith.constant 0 : index
    %c0_88 = arith.constant 0 : index
    %126 = vector.load %arg18[%c0_87, %c0_88] : memref<384x34xf32, #tpu.memory_space<vmem>>, vector<384x34xf32>
    %cst_89 = arith.constant dense<0.000000e+00> : vector<192x34xf32>
    %127 = tpu.matmul %121, %126, %cst_89 {dimension_numbers = #tpu.dot_dimension_numbers<[1], [0], [0], [1], [0, 0, 1, 1], [], []>} : vector<192x384xf32>, vector<384x34xf32>, vector<192x34xf32> -> vector<192x34xf32>
    %128 = vector.extract_strided_slice %127 {offsets = [0, 32], sizes = [192, 2], strides = [1, 1]} : vector<192x34xf32> to vector<192x2xf32>
    %129 = tpu.reciprocal %128 {approx = true} : vector<192x2xf32> -> vector<192x2xf32>
    %130 = vector.extract_strided_slice %129 {offsets = [0, 0], sizes = [192, 1], strides = [1, 1]} : vector<192x2xf32> to vector<192x1xf32>
    %131 = vector.shape_cast %130 : vector<192x1xf32> to vector<192x1xf32>
    %132 = vector.broadcast %131 : vector<192x1xf32> to vector<192x16xf32>
    %133 = vector.extract_strided_slice %129 {offsets = [0, 1], sizes = [192, 1], strides = [1, 1]} : vector<192x2xf32> to vector<192x1xf32>
    %134 = vector.shape_cast %133 : vector<192x1xf32> to vector<192x1xf32>
    %135 = vector.broadcast %134 : vector<192x1xf32> to vector<192x16xf32>
    %136 = tpu.concatenate %132, %135 in 1 : vector<192x16xf32>, vector<192x16xf32> -> vector<192x32xf32>
    %137 = vector.extract_strided_slice %127 {offsets = [0, 0], sizes = [192, 32], strides = [1, 1]} : vector<192x34xf32> to vector<192x32xf32>
    %138 = arith.mulf %137, %136 : vector<192x32xf32>
    %c0_90 = arith.constant 0 : index
    %c0_91 = arith.constant 0 : index
    %139 = vector.load %arg14[%c0_90, %c0_91] : memref<1x32xf32, #tpu.memory_space<vmem>>, vector<1x32xf32>
    %140 = vector.broadcast %139 : vector<1x32xf32> to vector<192x32xf32>
    %141 = arith.addf %138, %140 : vector<192x32xf32>
    %cst_92 = arith.constant 0.000000e+00 : f32
    %142 = vector.broadcast %cst_92 : f32 to vector<192x32xf32>
    %143 = arith.maximumf %141, %142 : vector<192x32xf32>
    %c0_93 = arith.constant 0 : index
    %c0_94 = arith.constant 0 : index
    %c0_95 = arith.constant 0 : index
    %144 = vector.load %arg15[%c0_93, %c0_94, %c0_95] : memref<4x192x32xf32, #tpu.memory_space<vmem>>, vector<1x192x32xf32>
    %145 = vector.shape_cast %144 : vector<1x192x32xf32> to vector<192x32xf32>
    %146 = arith.mulf %143, %145 : vector<192x32xf32>
    %cst_96 = arith.constant dense<0.000000e+00> : vector<32xf32>
    %147 = vector.multi_reduction <add>, %146, %cst_96 [0] : vector<192x32xf32> to vector<32xf32>
    %148 = vector.shape_cast %147 : vector<32xf32> to vector<1x32xf32>
    %cst_97 = arith.constant dense<0.000000e+00> : vector<1xf32>
    %149 = vector.multi_reduction <add>, %148, %cst_97 [1] : vector<1x32xf32> to vector<1xf32>
    %150 = vector.shape_cast %149 : vector<1xf32> to vector<1x1xf32>
    %c1 = arith.constant 1 : index
    %c0_98 = arith.constant 0 : index
    %c0_99 = arith.constant 0 : index
    %151 = vector.load %arg15[%c1, %c0_98, %c0_99] : memref<4x192x32xf32, #tpu.memory_space<vmem>>, vector<1x192x32xf32>
    %152 = vector.shape_cast %151 : vector<1x192x32xf32> to vector<192x32xf32>
    %153 = arith.mulf %143, %152 : vector<192x32xf32>
    %cst_100 = arith.constant dense<0.000000e+00> : vector<32xf32>
    %154 = vector.multi_reduction <add>, %153, %cst_100 [0] : vector<192x32xf32> to vector<32xf32>
    %155 = vector.shape_cast %154 : vector<32xf32> to vector<1x32xf32>
    %cst_101 = arith.constant dense<0.000000e+00> : vector<1xf32>
    %156 = vector.multi_reduction <add>, %155, %cst_101 [1] : vector<1x32xf32> to vector<1xf32>
    %157 = vector.shape_cast %156 : vector<1xf32> to vector<1x1xf32>
    %c2 = arith.constant 2 : index
    %c0_102 = arith.constant 0 : index
    %c0_103 = arith.constant 0 : index
    %158 = vector.load %arg15[%c2, %c0_102, %c0_103] : memref<4x192x32xf32, #tpu.memory_space<vmem>>, vector<1x192x32xf32>
    %159 = vector.shape_cast %158 : vector<1x192x32xf32> to vector<192x32xf32>
    %160 = arith.mulf %143, %159 : vector<192x32xf32>
    %cst_104 = arith.constant dense<0.000000e+00> : vector<32xf32>
    %161 = vector.multi_reduction <add>, %160, %cst_104 [0] : vector<192x32xf32> to vector<32xf32>
    %162 = vector.shape_cast %161 : vector<32xf32> to vector<1x32xf32>
    %cst_105 = arith.constant dense<0.000000e+00> : vector<1xf32>
    %163 = vector.multi_reduction <add>, %162, %cst_105 [1] : vector<1x32xf32> to vector<1xf32>
    %164 = vector.shape_cast %163 : vector<1xf32> to vector<1x1xf32>
    %c3 = arith.constant 3 : index
    %c0_106 = arith.constant 0 : index
    %c0_107 = arith.constant 0 : index
    %165 = vector.load %arg15[%c3, %c0_106, %c0_107] : memref<4x192x32xf32, #tpu.memory_space<vmem>>, vector<1x192x32xf32>
    %166 = vector.shape_cast %165 : vector<1x192x32xf32> to vector<192x32xf32>
    %167 = arith.mulf %143, %166 : vector<192x32xf32>
    %cst_108 = arith.constant dense<0.000000e+00> : vector<32xf32>
    %168 = vector.multi_reduction <add>, %167, %cst_108 [0] : vector<192x32xf32> to vector<32xf32>
    %169 = vector.shape_cast %168 : vector<32xf32> to vector<1x32xf32>
    %cst_109 = arith.constant dense<0.000000e+00> : vector<1xf32>
    %170 = vector.multi_reduction <add>, %169, %cst_109 [1] : vector<1x32xf32> to vector<1xf32>
    %171 = vector.shape_cast %170 : vector<1xf32> to vector<1x1xf32>
    %172 = tpu.concatenate %150, %157, %164, %171 in 1 : vector<1x1xf32>, vector<1x1xf32>, vector<1x1xf32>, vector<1x1xf32> -> vector<1x4xf32>
    %c0_110 = arith.constant 0 : index
    %c0_111 = arith.constant 0 : index
    %173 = vector.load %arg16[%c0_110, %c0_111] : memref<1x4xf32, #tpu.memory_space<vmem>>, vector<1x4xf32>
    %174 = arith.addf %172, %173 : vector<1x4xf32>
    %c0_112 = arith.constant 0 : index
    %c0_113 = arith.constant 0 : index
    %c0_114 = arith.constant 0 : index
    %175 = vector.load %arg17[%c0_112, %c0_113, %c0_114] : memref<1x1x4xf32, #tpu.memory_space<vmem>>, vector<1x1x4xf32>
    %176 = vector.shape_cast %175 : vector<1x1x4xf32> to vector<1x4xf32>
    %177 = vector.shape_cast %174 : vector<1x4xf32> to vector<1x1x4xf32>
    tpu.vector_store %arg17[%c0_112, %c0_113, %c0_114], %177 {strides = array<i32>} : memref<1x1x4xf32, #tpu.memory_space<vmem>>, vector<1x1x4xf32>,
    return
  }
  func.func @transform_0(%arg0: i32) -> (i32, i32, i32) {
    %c0_i32 = arith.constant 0 : i32
    %c0_i32_0 = arith.constant 0 : i32
    %c0_i32_1 = arith.constant 0 : i32
    return %arg0, %c0_i32, %c0_i32_0 : i32, i32, i32
  }
  func.func @transform_1(%arg0: i32) -> (i32, i32, i32) {
    %c0_i32 = arith.constant 0 : i32
    %c0_i32_0 = arith.constant 0 : i32
    %c0_i32_1 = arith.constant 0 : i32
    return %arg0, %c0_i32, %c0_i32_0 : i32, i32, i32
  }
  func.func @transform_2(%arg0: i32) -> (i32, i32) {
    %c0_i32 = arith.constant 0 : i32
    %c0_i32_0 = arith.constant 0 : i32
    %c0_i32_1 = arith.constant 0 : i32
    return %c0_i32, %c0_i32_0 : i32, i32
  }
  func.func @transform_3(%arg0: i32) -> (i32, i32) {
    %c0_i32 = arith.constant 0 : i32
    %c0_i32_0 = arith.constant 0 : i32
    %c0_i32_1 = arith.constant 0 : i32
    return %c0_i32, %c0_i32_0 : i32, i32
  }
  func.func @transform_4(%arg0: i32) -> (i32, i32) {
    %c0_i32 = arith.constant 0 : i32
    %c0_i32_0 = arith.constant 0 : i32
    %c0_i32_1 = arith.constant 0 : i32
    return %c0_i32, %c0_i32_0 : i32, i32
  }
  func.func @transform_5(%arg0: i32) -> (i32, i32) {
    %c0_i32 = arith.constant 0 : i32
    %c0_i32_0 = arith.constant 0 : i32
    %c0_i32_1 = arith.constant 0 : i32
    return %c0_i32, %c0_i32_0 : i32, i32
  }
  func.func @transform_6(%arg0: i32) -> (i32, i32) {
    %c0_i32 = arith.constant 0 : i32
    %c0_i32_0 = arith.constant 0 : i32
    %c0_i32_1 = arith.constant 0 : i32
    return %c0_i32, %c0_i32_0 : i32, i32
  }
  func.func @transform_7(%arg0: i32) -> (i32, i32) {
    %c0_i32 = arith.constant 0 : i32
    %c0_i32_0 = arith.constant 0 : i32
    %c0_i32_1 = arith.constant 0 : i32
    return %c0_i32, %c0_i32_0 : i32, i32
  }
  func.func @transform_8(%arg0: i32) -> (i32, i32) {
    %c0_i32 = arith.constant 0 : i32
    %c0_i32_0 = arith.constant 0 : i32
    %c0_i32_1 = arith.constant 0 : i32
    return %c0_i32, %c0_i32_0 : i32, i32
  }
  func.func @transform_9(%arg0: i32) -> (i32, i32) {
    %c0_i32 = arith.constant 0 : i32
    %c0_i32_0 = arith.constant 0 : i32
    %c0_i32_1 = arith.constant 0 : i32
    return %c0_i32, %c0_i32_0 : i32, i32
  }
  func.func @transform_10(%arg0: i32) -> (i32, i32) {
    %c0_i32 = arith.constant 0 : i32
    %c0_i32_0 = arith.constant 0 : i32
    %c0_i32_1 = arith.constant 0 : i32
    return %c0_i32, %c0_i32_0 : i32, i32
  }
  func.func @transform_11(%arg0: i32) -> (i32, i32) {
    %c0_i32 = arith.constant 0 : i32
    %c0_i32_0 = arith.constant 0 : i32
    %c0_i32_1 = arith.constant 0 : i32
    return %c0_i32, %c0_i32_0 : i32, i32
  }
  func.func @transform_12(%arg0: i32) -> (i32, i32) {
    %c0_i32 = arith.constant 0 : i32
    %c0_i32_0 = arith.constant 0 : i32
    %c0_i32_1 = arith.constant 0 : i32
    return %c0_i32, %c0_i32_0 : i32, i32
  }
  func.func @transform_13(%arg0: i32) -> (i32, i32) {
    %c0_i32 = arith.constant 0 : i32
    %c0_i32_0 = arith.constant 0 : i32
    %c0_i32_1 = arith.constant 0 : i32
    return %c0_i32, %c0_i32_0 : i32, i32
  }
  func.func @transform_14(%arg0: i32) -> (i32, i32, i32) {
    %c0_i32 = arith.constant 0 : i32
    %c0_i32_0 = arith.constant 0 : i32
    %c0_i32_1 = arith.constant 0 : i32
    %c0_i32_2 = arith.constant 0 : i32
    return %c0_i32, %c0_i32_0, %c0_i32_1 : i32, i32, i32
  }
  func.func @transform_15(%arg0: i32) -> (i32, i32) {
    %c0_i32 = arith.constant 0 : i32
    %c0_i32_0 = arith.constant 0 : i32
    %c0_i32_1 = arith.constant 0 : i32
    return %c0_i32, %c0_i32_0 : i32, i32
  }
  func.func @transform_16(%arg0: i32) -> (i32, i32, i32) {
    %c0_i32 = arith.constant 0 : i32
    %c0_i32_0 = arith.constant 0 : i32
    %c0_i32_1 = arith.constant 0 : i32
    return %arg0, %c0_i32, %c0_i32_0 : i32, i32, i32
  }
}

</mosaic_0001>

<llo_original>
// kernel: gnn_forward.1
$region0: #{gnn_forward.1}
  #allocation0 [shape = 'u32[]', space=smem, size = 0x4, offset = 0x4, fixed_abs, tag = 'smem constant byte address 0x4 - core index']
  #allocation1 [shape = 'u32[144,128]{1,0:T(1,128)}', space=vmem, size = 0x12000, scoped, tag = 'internal scratch']
  #allocation2 [shape = 'f32[384,34]{1,0:T(8,128)}', space=vmem, size = 0x30000, scoped, tag = 'scratch operand']
  #allocation3 [shape = 'f32[1,384]{1,0:T(1,128)}', space=vmem, size = 0x600, scoped, tag = 'scratch operand']
  %s0 = inlined_call_operand.vmem [shape: bf16[2,192,128], index: 0, kind: input, shape index: {}]
  %s1 = inlined_call_operand.vmem [shape: f32[2,192,384], index: 1, kind: input, shape index: {}]
  %s2 = inlined_call_operand.vmem [shape: bf16[128,32], index: 2, kind: input, shape index: {}]
  %s3 = inlined_call_operand.vmem [shape: f32[2,32], index: 3, kind: input, shape index: {}]
  %s4 = inlined_call_operand.vmem [shape: f32[32,384], index: 4, kind: input, shape index: {}]
  %s5 = inlined_call_operand.vmem [shape: f32[1,32], index: 5, kind: input, shape index: {}]
  %s6 = inlined_call_operand.vmem [shape: bf16[32,32], index: 6, kind: input, shape index: {}]
  %s7 = inlined_call_operand.vmem [shape: f32[2,32], index: 7, kind: input, shape index: {}]
  %s8 = inlined_call_operand.vmem [shape: f32[32,384], index: 8, kind: input, shape index: {}]
  %s9 = inlined_call_operand.vmem [shape: f32[1,32], index: 9, kind: input, shape index: {}]
  %s10 = inlined_call_operand.vmem [shape: bf16[32,32], index: 10, kind: input, shape index: {}]
  %s11 = inlined_call_operand.vmem [shape: f32[2,32], index: 11, kind: input, shape index: {}]
  %s12 = inlined_call_operand.vmem [shape: f32[32,384], index: 12, kind: input, shape index: {}]
  %s13 = inlined_call_operand.vmem [shape: f32[1,32], index: 13, kind: input, shape index: {}]
  %s14 = inlined_call_operand.vmem [shape: f32[4,192,32], index: 14, kind: input, shape index: {}]
  %s15 = inlined_call_operand.vmem [shape: f32[1,4], index: 15, kind: input, shape index: {}]
  %s16 = inlined_call_operand.hbm [shape: f32[2,1,4], index: 16, kind: output, shape index: {}]
  %s17 = sld [smem:[#allocation0]]
  $region97: #{gnn_forward.1} parent=0
    _
  %s19 = ssub.s32 1, %s17
  %s20 = scalar_select 0, %s19, %s17
  $region1: #{gnn_forward.1} parent=0
    #allocation4 [shape = 'u8[1024]{0}', space=vmem, size = 0x400, scoped, tag = 'output window, operand 0']
    #allocation5 [shape = 's32[2]{0}', space=sflag, size = 0x8, scoped, tag = 'scoped memory for gnn_forward.1']
    %21 = vsyncpa [#allocation5], 0
    %s22 = scalar_lea.sflag [#allocation5], 1
    %23 = vsyncpa %s22, 0
    loop: start=0, step=1, limit=4
    $region2: #{gnn_forward.1} parent=1 // loop_pre_header
      _
    $region3: #{gnn_forward.1} parent=1 // loop_header
      %s25 = sphi 0, %s29
      %p26 = scmp.ge.s32.totalorder %s25, 4
      %s35 = sphi 0, %s37
      %s38 = sphi 0, %s35
      %s39 = sphi 0, %s38
      %s55 = sphi 0, %s39
      %s61 = sphi 0, %s63
      %s64 = sphi 0, %s61
      %s65 = sphi 0, %s64
      %s81 = sphi 0, %s65
      %s85 = sphi 0, %s85
      %s87 = sphi 0, %s85
      %s88 = sphi 0, %s87
      %s102 = sphi 0, %s88
      %s106 = sphi 0, %s106
      %s108 = sphi 0, %s106
      %s109 = sphi 0, %s108
      %s123 = sphi 0, %s109
      %s127 = sphi 0, %s127
      %s129 = sphi 0, %s127
      %s130 = sphi 0, %s129
      %s144 = sphi 0, %s130
      %s148 = sphi 0, %s148
      %s150 = sphi 0, %s148
      %s151 = sphi 0, %s150
      %s165 = sphi 0, %s151
      %s169 = sphi 0, %s169
      %s171 = sphi 0, %s169
      %s172 = sphi 0, %s171
      %s186 = sphi 0, %s172
      %s190 = sphi 0, %s190
      %s192 = sphi 0, %s190
      %s193 = sphi 0, %s192
      %s207 = sphi 0, %s193
      %s211 = sphi 0, %s211
      %s213 = sphi 0, %s211
      %s214 = sphi 0, %s213
      %s228 = sphi 0, %s214
      %s232 = sphi 0, %s232
      %s234 = sphi 0, %s232
      %s235 = sphi 0, %s234
      %s249 = sphi 0, %s235
      %s253 = sphi 0, %s253
      %s255 = sphi 0, %s253
      %s256 = sphi 0, %s255
      %s270 = sphi 0, %s256
      %s274 = sphi 0, %s274
      %s276 = sphi 0, %s274
      %s277 = sphi 0, %s276
      %s291 = sphi 0, %s277
      %s295 = sphi 0, %s295
      %s297 = sphi 0, %s295
      %s298 = sphi 0, %s297
      %s312 = sphi 0, %s298
      %s316 = sphi 0, %s316
      %s318 = sphi 0, %s316
      %s319 = sphi 0, %s318
      %s333 = sphi 0, %s319
      %s337 = sphi 0, %s337
      %s339 = sphi 0, %s337
      %s340 = sphi 0, %s339
      %s354 = sphi 0, %s340
      %s358 = sphi 0, %s358
      %s360 = sphi 0, %s358
      %s361 = sphi 0, %s360
      %s375 = sphi 0, %s361
      %s381 = sphi 0, %s383
      %s384 = sphi 0, %s381
      %s385 = sphi 0, %s384
      %s401 = sphi 0, %s385
    $region4: #{gnn_forward.1} parent=1 // loop_header_branch
      %28 = sbr.rel (%p26) target = $region8
    $region5: #{gnn_forward.1} parent=1 // loop_body
      %s30 = ssub.s32 %s25, 1
      %s31 = ssub.s32 %s25, 2
      %s32 = sadd.s32 %s25, 1
      %s33 = ssub.s32 %s25, %s32
      %p34 = scmp.eq.s32.totalorder %s33, 0
      %s36 = sadd.s32 %s35, 1
      %s37 = scalar_select %p34, %s35, %s36
      %p40 = pneg %p34
      %p41 = scmp.eq.s32.totalorder %s25, 1
      %p42 = por %p40, %p41
      %p43 = scmp.ne.s32.totalorder %s35, %s38
      %p44 = scmp.eq.s32.totalorder %s25, 0
      %p45 = por %p43, %p44
      %p46 = scmp.ne.s32.totalorder %s35, %s38
      %p47 = scmp.eq.s32.totalorder %s30, 1
      %p48 = por %p46, %p47
      %p49 = scmp.ne.s32.totalorder %s38, %s39
      %p50 = scmp.eq.s32.totalorder %s30, 0
      %p51 = por %p49, %p50
      %p52 = scmp.ne.s32.totalorder %s38, %s39
      %p53 = scmp.eq.s32.totalorder %s31, 1
      %p54 = por %p52, %p53
      %p56 = scmp.ne.s32.totalorder %s39, %s55
      %p57 = scmp.eq.s32.totalorder %s31, 0
      %p58 = por %p56, %p57
      %s59 = ssub.s32 %s25, %s32
      %p60 = scmp.eq.s32.totalorder %s59, 0
      %s62 = sadd.s32 %s61, 1
      %s63 = scalar_select %p60, %s61, %s62
      %p66 = pneg %p60
      %p67 = scmp.eq.s32.totalorder %s25, 1
      %p68 = por %p66, %p67
      %p69 = scmp.ne.s32.totalorder %s61, %s64
      %p70 = scmp.eq.s32.totalorder %s25, 0
      %p71 = por %p69, %p70
      %p72 = scmp.ne.s32.totalorder %s61, %s64
      %p73 = scmp.eq.s32.totalorder %s30, 1
      %p74 = por %p72, %p73
      %p75 = scmp.ne.s32.totalorder %s64, %s65
      %p76 = scmp.eq.s32.totalorder %s30, 0
      %p77 = por %p75, %p76
      %p78 = scmp.ne.s32.totalorder %s64, %s65
      %p79 = scmp.eq.s32.totalorder %s31, 1
      %p80 = por %p78, %p79
      %p82 = scmp.ne.s32.totalorder %s65, %s81
      %p83 = scmp.eq.s32.totalorder %s31, 0
      %p84 = por %p82, %p83
      %s86 = sadd.s32 %s85, 1
      %p89 = scmp.eq.s32.totalorder %s25, 1
      %p90 = scmp.ne.s32.totalorder %s85, %s87
      %p91 = scmp.eq.s32.totalorder %s25, 0
      %p92 = por %p90, %p91
      %p93 = scmp.ne.s32.totalorder %s85, %s87
      %p94 = scmp.eq.s32.totalorder %s30, 1
      %p95 = por %p93, %p94
      %p96 = scmp.ne.s32.totalorder %s87, %s88
      %p97 = scmp.eq.s32.totalorder %s30, 0
      %p98 = por %p96, %p97
      %p99 = scmp.ne.s32.totalorder %s87, %s88
      %p100 = scmp.eq.s32.totalorder %s31, 1
      %p101 = por %p99, %p100
      %p103 = scmp.ne.s32.totalorder %s88, %s102
      %p104 = scmp.eq.s32.totalorder %s31, 0
      %p105 = por %p103, %p104
      %s107 = sadd.s32 %s106, 1
      %p110 = scmp.eq.s32.totalorder %s25, 1
      %p111 = scmp.ne.s32.totalorder %s106, %s108
      %p112 = scmp.eq.s32.totalorder %s25, 0
      %p113 = por %p111, %p112
      %p114 = scmp.ne.s32.totalorder %s106, %s108
      %p115 = scmp.eq.s32.totalorder %s30, 1
      %p116 = por %p114, %p115
      %p117 = scmp.ne.s32.totalorder %s108, %s109
      %p118 = scmp.eq.s32.totalorder %s30, 0
      %p119 = por %p117, %p118
      %p120 = scmp.ne.s32.totalorder %s108, %s109
      %p121 = scmp.eq.s32.totalorder %s31, 1
      %p122 = por %p120, %p121
      %p124 = scmp.ne.s32.totalorder %s109, %s123
      %p125 = scmp.eq.s32.totalorder %s31, 0
      %p126 = por %p124, %p125
      %s128 = sadd.s32 %s127, 1
      %p131 = scmp.eq.s32.totalorder %s25, 1
      %p132 = scmp.ne.s32.totalorder %s127, %s129
      %p133 = scmp.eq.s32.totalorder %s25, 0
      %p134 = por %p132, %p133
      %p135 = scmp.ne.s32.totalorder %s127, %s129
      %p136 = scmp.eq.s32.totalorder %s30, 1
      %p137 = por %p135, %p136
      %p138 = scmp.ne.s32.totalorder %s129, %s130
      %p139 = scmp.eq.s32.totalorder %s30, 0
      %p140 = por %p138, %p139
      %p141 = scmp.ne.s32.totalorder %s129, %s130
      %p142 = scmp.eq.s32.totalorder %s31, 1
      %p143 = por %p141, %p142
      %p145 = scmp.ne.s32.totalorder %s130, %s144
      %p146 = scmp.eq.s32.totalorder %s31, 0
      %p147 = por %p145, %p146
      %s149 = sadd.s32 %s148, 1
      %p152 = scmp.eq.s32.totalorder %s25, 1
      %p153 = scmp.ne.s32.totalorder %s148, %s150
      %p154 = scmp.eq.s32.totalorder %s25, 0
      %p155 = por %p153, %p154
      %p156 = scmp.ne.s32.totalorder %s148, %s150
      %p157 = scmp.eq.s32.totalorder %s30, 1
      %p158 = por %p156, %p157
      %p159 = scmp.ne.s32.totalorder %s150, %s151
      %p160 = scmp.eq.s32.totalorder %s30, 0
      %p161 = por %p159, %p160
      %p162 = scmp.ne.s32.totalorder %s150, %s151
      %p163 = scmp.eq.s32.totalorder %s31, 1
      %p164 = por %p162, %p163
      %p166 = scmp.ne.s32.totalorder %s151, %s165
      %p167 = scmp.eq.s32.totalorder %s31, 0
      %p168 = por %p166, %p167
      %s170 = sadd.s32 %s169, 1
      %p173 = scmp.eq.s32.totalorder %s25, 1
      %p174 = scmp.ne.s32.totalorder %s169, %s171
      %p175 = scmp.eq.s32.totalorder %s25, 0
      %p176 = por %p174, %p175
      %p177 = scmp.ne.s32.totalorder %s169, %s171
      %p178 = scmp.eq.s32.totalorder %s30, 1
      %p179 = por %p177, %p178
      %p180 = scmp.ne.s32.totalorder %s171, %s172
      %p181 = scmp.eq.s32.totalorder %s30, 0
      %p182 = por %p180, %p181
      %p183 = scmp.ne.s32.totalorder %s171, %s172
      %p184 = scmp.eq.s32.totalorder %s31, 1
      %p185 = por %p183, %p184
      %p187 = scmp.ne.s32.totalorder %s172, %s186
      %p188 = scmp.eq.s32.totalorder %s31, 0
      %p189 = por %p187, %p188
      %s191 = sadd.s32 %s190, 1
      %p194 = scmp.eq.s32.totalorder %s25, 1
      %p195 = scmp.ne.s32.totalorder %s190, %s192
      %p196 = scmp.eq.s32.totalorder %s25, 0
      %p197 = por %p195, %p196
      %p198 = scmp.ne.s32.totalorder %s190, %s192
      %p199 = scmp.eq.s32.totalorder %s30, 1
      %p200 = por %p198, %p199
      %p201 = scmp.ne.s32.totalorder %s192, %s193
      %p202 = scmp.eq.s32.totalorder %s30, 0
      %p203 = por %p201, %p202
      %p204 = scmp.ne.s32.totalorder %s192, %s193
      %p205 = scmp.eq.s32.totalorder %s31, 1
      %p206 = por %p204, %p205
      %p208 = scmp.ne.s32.totalorder %s193, %s207
      %p209 = scmp.eq.s32.totalorder %s31, 0
      %p210 = por %p208, %p209
      %s212 = sadd.s32 %s211, 1
      %p215 = scmp.eq.s32.totalorder %s25, 1
      %p216 = scmp.ne.s32.totalorder %s211, %s213
      %p217 = scmp.eq.s32.totalorder %s25, 0
      %p218 = por %p216, %p217
      %p219 = scmp.ne.s32.totalorder %s211, %s213
      %p220 = scmp.eq.s32.totalorder %s30, 1
      %p221 = por %p219, %p220
      %p222 = scmp.ne.s32.totalorder %s213, %s214
      %p223 = scmp.eq.s32.totalorder %s30, 0
      %p224 = por %p222, %p223
      %p225 = scmp.ne.s32.totalorder %s213, %s214
      %p226 = scmp.eq.s32.totalorder %s31, 1
      %p227 = por %p225, %p226
      %p229 = scmp.ne.s32.totalorder %s214, %s228
      %p230 = scmp.eq.s32.totalorder %s31, 0
      %p231 = por %p229, %p230
      %s233 = sadd.s32 %s232, 1
      %p236 = scmp.eq.s32.totalorder %s25, 1
      %p237 = scmp.ne.s32.totalorder %s232, %s234
      %p238 = scmp.eq.s32.totalorder %s25, 0
      %p239 = por %p237, %p238
      %p240 = scmp.ne.s32.totalorder %s232, %s234
      %p241 = scmp.eq.s32.totalorder %s30, 1
      %p242 = por %p240, %p241
      %p243 = scmp.ne.s32.totalorder %s234, %s235
      %p244 = scmp.eq.s32.totalorder %s30, 0
      %p245 = por %p243, %p244
      %p246 = scmp.ne.s32.totalorder %s234, %s235
      %p247 = scmp.eq.s32.totalorder %s31, 1
      %p248 = por %p246, %p247
      %p250 = scmp.ne.s32.totalorder %s235, %s249
      %p251 = scmp.eq.s32.totalorder %s31, 0
      %p252 = por %p250, %p251
      %s254 = sadd.s32 %s253, 1
      %p257 = scmp.eq.s32.totalorder %s25, 1
      %p258 = scmp.ne.s32.totalorder %s253, %s255
      %p259 = scmp.eq.s32.totalorder %s25, 0
      %p260 = por %p258, %p259
      %p261 = scmp.ne.s32.totalorder %s253, %s255
      %p262 = scmp.eq.s32.totalorder %s30, 1
      %p263 = por %p261, %p262
      %p264 = scmp.ne.s32.totalorder %s255, %s256
      %p265 = scmp.eq.s32.totalorder %s30, 0
      %p266 = por %p264, %p265
      %p267 = scmp.ne.s32.totalorder %s255, %s256
      %p268 = scmp.eq.s32.totalorder %s31, 1
      %p269 = por %p267, %p268
      %p271 = scmp.ne.s32.totalorder %s256, %s270
      %p272 = scmp.eq.s32.totalorder %s31, 0
      %p273 = por %p271, %p272
      %s275 = sadd.s32 %s274, 1
      %p278 = scmp.eq.s32.totalorder %s25, 1
      %p279 = scmp.ne.s32.totalorder %s274, %s276
      %p280 = scmp.eq.s32.totalorder %s25, 0
      %p281 = por %p279, %p280
      %p282 = scmp.ne.s32.totalorder %s274, %s276
      %p283 = scmp.eq.s32.totalorder %s30, 1
      %p284 = por %p282, %p283
      %p285 = scmp.ne.s32.totalorder %s276, %s277
      %p286 = scmp.eq.s32.totalorder %s30, 0
      %p287 = por %p285, %p286
      %p288 = scmp.ne.s32.totalorder %s276, %s277
      %p289 = scmp.eq.s32.totalorder %s31, 1
      %p290 = por %p288, %p289
      %p292 = scmp.ne.s32.totalorder %s277, %s291
      %p293 = scmp.eq.s32.totalorder %s31, 0
      %p294 = por %p292, %p293
      %s296 = sadd.s32 %s295, 1
      %p299 = scmp.eq.s32.totalorder %s25, 1
      %p300 = scmp.ne.s32.totalorder %s295, %s297
      %p301 = scmp.eq.s32.totalorder %s25, 0
      %p302 = por %p300, %p301
      %p303 = scmp.ne.s32.totalorder %s295, %s297
      %p304 = scmp.eq.s32.totalorder %s30, 1
      %p305 = por %p303, %p304
      %p306 = scmp.ne.s32.totalorder %s297, %s298
      %p307 = scmp.eq.s32.totalorder %s30, 0
      %p308 = por %p306, %p307
      %p309 = scmp.ne.s32.totalorder %s297, %s298
      %p310 = scmp.eq.s32.totalorder %s31, 1
      %p311 = por %p309, %p310
      %p313 = scmp.ne.s32.totalorder %s298, %s312
      %p314 = scmp.eq.s32.totalorder %s31, 0
      %p315 = por %p313, %p314
      %s317 = sadd.s32 %s316, 1
      %p320 = scmp.eq.s32.totalorder %s25, 1
      %p321 = scmp.ne.s32.totalorder %s316, %s318
      %p322 = scmp.eq.s32.totalorder %s25, 0
      %p323 = por %p321, %p322
      %p324 = scmp.ne.s32.totalorder %s316, %s318
      %p325 = scmp.eq.s32.totalorder %s30, 1
      %p326 = por %p324, %p325
      %p327 = scmp.ne.s32.totalorder %s318, %s319
      %p328 = scmp.eq.s32.totalorder %s30, 0
      %p329 = por %p327, %p328
      %p330 = scmp.ne.s32.totalorder %s318, %s319
      %p331 = scmp.eq.s32.totalorder %s31, 1
      %p332 = por %p330, %p331
      %p334 = scmp.ne.s32.totalorder %s319, %s333
      %p335 = scmp.eq.s32.totalorder %s31, 0
      %p336 = por %p334, %p335
      %s338 = sadd.s32 %s337, 1
      %p341 = scmp.eq.s32.totalorder %s25, 1
      %p342 = scmp.ne.s32.totalorder %s337, %s339
      %p343 = scmp.eq.s32.totalorder %s25, 0
      %p344 = por %p342, %p343
      %p345 = scmp.ne.s32.totalorder %s337, %s339
      %p346 = scmp.eq.s32.totalorder %s30, 1
      %p347 = por %p345, %p346
      %p348 = scmp.ne.s32.totalorder %s339, %s340
      %p349 = scmp.eq.s32.totalorder %s30, 0
      %p350 = por %p348, %p349
      %p351 = scmp.ne.s32.totalorder %s339, %s340
      %p352 = scmp.eq.s32.totalorder %s31, 1
      %p353 = por %p351, %p352
      %p355 = scmp.ne.s32.totalorder %s340, %s354
      %p356 = scmp.eq.s32.totalorder %s31, 0
      %p357 = por %p355, %p356
      %s359 = sadd.s32 %s358, 1
      %p362 = scmp.eq.s32.totalorder %s25, 1
      %p363 = scmp.ne.s32.totalorder %s358, %s360
      %p364 = scmp.eq.s32.totalorder %s25, 0
      %p365 = por %p363, %p364
      %p366 = scmp.ne.s32.totalorder %s358, %s360
      %p367 = scmp.eq.s32.totalorder %s30, 1
      %p368 = por %p366, %p367
      %p369 = scmp.ne.s32.totalorder %s360, %s361
      %p370 = scmp.eq.s32.totalorder %s30, 0
      %p371 = por %p369, %p370
      %p372 = scmp.ne.s32.totalorder %s360, %s361
      %p373 = scmp.eq.s32.totalorder %s31, 1
      %p374 = por %p372, %p373
      %p376 = scmp.ne.s32.totalorder %s361, %s375
      %p377 = scmp.eq.s32.totalorder %s31, 0
      %p378 = por %p376, %p377
      %s379 = ssub.s32 %s25, %s32
      %p380 = scmp.eq.s32.totalorder %s379, 0
      %s382 = sadd.s32 %s381, 1
      %s383 = scalar_select %p380, %s381, %s382
      %p386 = pneg %p380
      %p387 = scmp.eq.s32.totalorder %s25, 1
      %p388 = por %p386, %p387
      %p389 = scmp.ne.s32.totalorder %s381, %s384
      %p390 = scmp.eq.s32.totalorder %s25, 0
      %p391 = por %p389, %p390
      %p392 = scmp.ne.s32.totalorder %s381, %s384
      %p393 = scmp.eq.s32.totalorder %s30, 1
      %p394 = por %p392, %p393
      %p395 = scmp.ne.s32.totalorder %s384, %s385
      %p396 = scmp.eq.s32.totalorder %s30, 0
      %p397 = por %p395, %p396
      %p398 = scmp.ne.s32.totalorder %s384, %s385
      %p399 = scmp.eq.s32.totalorder %s31, 1
      %p400 = por %p398, %p399
      %p402 = scmp.ne.s32.totalorder %s385, %s401
      %p403 = scmp.eq.s32.totalorder %s31, 0
      %p404 = por %p402, %p403
      %p405 = scmp.le.s32.totalorder 1, %s25
      %p406 = scmp.lt.s32.totalorder %s25, 3
      %p407 = pnand %p405, %p406
      %p408 = pneg %p407
      // Predicated region
      $region9: #{gnn_forward.1} parent=5 // pred_check
        _
      $region10: #{gnn_forward.1} parent=5 // pred_check_branch
        %410 = sbr.rel (%p407) target = $region12
      $region11: #{gnn_forward.1} parent=5 // pred_region
        %s411 = ssub.s32 %s25, 1
        // Predicated region
        $region13: #{gnn_forward.1} parent=11 // pred_check
          %p412 = pneg %p98
        $region14: #{gnn_forward.1} parent=11 // pred_check_branch
          %414 = sbr.rel (%p412) target = $region16
        $region15: #{gnn_forward.1} parent=11 // pred_region
          _
        $region16: #{gnn_forward.1} parent=11 // pred_fallthru
          _
        // Predicated region
        $region17: #{gnn_forward.1} parent=11 // pred_check
          %p415 = pneg %p119
        $region18: #{gnn_forward.1} parent=11 // pred_check_branch
          %417 = sbr.rel (%p415) target = $region20
        $region19: #{gnn_forward.1} parent=11 // pred_region
          _
        $region20: #{gnn_forward.1} parent=11 // pred_fallthru
          _
        // Predicated region
        $region21: #{gnn_forward.1} parent=11 // pred_check
          %p418 = pneg %p140
        $region22: #{gnn_forward.1} parent=11 // pred_check_branch
          %420 = sbr.rel (%p418) target = $region24
        $region23: #{gnn_forward.1} parent=11 // pred_region
          _
        $region24: #{gnn_forward.1} parent=11 // pred_fallthru
          _
        // Predicated region
        $region25: #{gnn_forward.1} parent=11 // pred_check
          %p421 = pneg %p161
        $region26: #{gnn_forward.1} parent=11 // pred_check_branch
          %423 = sbr.rel (%p421) target = $region28
        $region27: #{gnn_forward.1} parent=11 // pred_region
          _
        $region28: #{gnn_forward.1} parent=11 // pred_fallthru
          _
        // Predicated region
        $region29: #{gnn_forward.1} parent=11 // pred_check
          %p424 = pneg %p182
        $region30: #{gnn_forward.1} parent=11 // pred_check_branch
          %426 = sbr.rel (%p424) target = $region32
        $region31: #{gnn_forward.1} parent=11 // pred_region
          _
        $region32: #{gnn_forward.1} parent=11 // pred_fallthru
          _
        // Predicated region
        $region33: #{gnn_forward.1} parent=11 // pred_check
          %p427 = pneg %p203
        $region34: #{gnn_forward.1} parent=11 // pred_check_branch
          %429 = sbr.rel (%p427) target = $region36
        $region35: #{gnn_forward.1} parent=11 // pred_region
          _
        $region36: #{gnn_forward.1} parent=11 // pred_fallthru
          _
        // Predicated region
        $region37: #{gnn_forward.1} parent=11 // pred_check
          %p430 = pneg %p224
        $region38: #{gnn_forward.1} parent=11 // pred_check_branch
          %432 = sbr.rel (%p430) target = $region40
        $region39: #{gnn_forward.1} parent=11 // pred_region
          _
        $region40: #{gnn_forward.1} parent=11 // pred_fallthru
          _
        // Predicated region
        $region41: #{gnn_forward.1} parent=11 // pred_check
          %p433 = pneg %p245
        $region42: #{gnn_forward.1} parent=11 // pred_check_branch
          %435 = sbr.rel (%p433) target = $region44
        $region43: #{gnn_forward.1} parent=11 // pred_region
          _
        $region44: #{gnn_forward.1} parent=11 // pred_fallthru
          _
        // Predicated region
        $region45: #{gnn_forward.1} parent=11 // pred_check
          %p436 = pneg %p266
        $region46: #{gnn_forward.1} parent=11 // pred_check_branch
          %438 = sbr.rel (%p436) target = $region48
        $region47: #{gnn_forward.1} parent=11 // pred_region
          _
        $region48: #{gnn_forward.1} parent=11 // pred_fallthru
          _
        // Predicated region
        $region49: #{gnn_forward.1} parent=11 // pred_check
          %p439 = pneg %p287
        $region50: #{gnn_forward.1} parent=11 // pred_check_branch
          %441 = sbr.rel (%p439) target = $region52
        $region51: #{gnn_forward.1} parent=11 // pred_region
          _
        $region52: #{gnn_forward.1} parent=11 // pred_fallthru
          _
        // Predicated region
        $region53: #{gnn_forward.1} parent=11 // pred_check
          %p442 = pneg %p308
        $region54: #{gnn_forward.1} parent=11 // pred_check_branch
          %444 = sbr.rel (%p442) target = $region56
        $region55: #{gnn_forward.1} parent=11 // pred_region
          _
        $region56: #{gnn_forward.1} parent=11 // pred_fallthru
          _
        // Predicated region
        $region57: #{gnn_forward.1} parent=11 // pred_check
          %p445 = pneg %p329
        $region58: #{gnn_forward.1} parent=11 // pred_check_branch
          %447 = sbr.rel (%p445) target = $region60
        $region59: #{gnn_forward.1} parent=11 // pred_region
          _
        $region60: #{gnn_forward.1} parent=11 // pred_fallthru
          _
        // Predicated region
        $region61: #{gnn_forward.1} parent=11 // pred_check
          %p448 = pneg %p350
        $region62: #{gnn_forward.1} parent=11 // pred_check_branch
          %450 = sbr.rel (%p448) target = $region64
        $region63: #{gnn_forward.1} parent=11 // pred_region
          _
        $region64: #{gnn_forward.1} parent=11 // pred_fallthru
          _
        // Predicated region
        $region65: #{gnn_forward.1} parent=11 // pred_check
          %p451 = pneg %p371
        $region66: #{gnn_forward.1} parent=11 // pred_check_branch
          %453 = sbr.rel (%p451) target = $region68
        $region67: #{gnn_forward.1} parent=11 // pred_region
          _
        $region68: #{gnn_forward.1} parent=11 // pred_fallthru
          _
      $region12: #{gnn_forward.1} parent=5 // pred_fallthru
        _
      %p454 = scmp.lt.s32.totalorder %s25, 2
      // Predicated region
      $region69: #{gnn_forward.1} parent=5 // pred_check
        %p455 = pneg %p454
      $region70: #{gnn_forward.1} parent=5 // pred_check_branch
        %457 = sbr.rel (%p455) target = $region72
      $region71: #{gnn_forward.1} parent=5 // pred_region
        // Predicated region
        $region73: #{gnn_forward.1} parent=71 // pred_check
          %p458 = pneg %p45
        $region74: #{gnn_forward.1} parent=71 // pred_check_branch
          %460 = sbr.rel (%p458) target = $region76
        $region75: #{gnn_forward.1} parent=71 // pred_region
          %p461 = scmp.lt.s32.totalorder %s25, 1
          %s462 = scalar_select %p461, %s25, 1
          %s463 = smul.addr %s462, 24
          %s464 = smul.addr %s463, 4
          %s465 = scalar_lea.vmem %s0, %s464
        $region76: #{gnn_forward.1} parent=71 // pred_fallthru
          _
        // Predicated region
        $region77: #{gnn_forward.1} parent=71 // pred_check
          %p466 = pneg %p71
        $region78: #{gnn_forward.1} parent=71 // pred_check_branch
          %468 = sbr.rel (%p466) target = $region80
        $region79: #{gnn_forward.1} parent=71 // pred_region
          %p469 = scmp.lt.s32.totalorder %s25, 1
          %s470 = scalar_select %p469, %s25, 1
          %s471 = smul.addr %s470, 72
          %s472 = smul.addr %s471, 8
          %s473 = scalar_lea.vmem %s1, %s472
        $region80: #{gnn_forward.1} parent=71 // pred_fallthru
          _
      $region72: #{gnn_forward.1} parent=5 // pred_fallthru
        _
      %p474 = scmp.le.s32.totalorder 1, %s25
      %p475 = scmp.lt.s32.totalorder %s25, 3
      %p476 = pnand %p474, %p475
      %p477 = pneg %p476
      // Predicated region
      $region81: #{gnn_forward.1} parent=5 // pred_check
        _
      $region82: #{gnn_forward.1} parent=5 // pred_check_branch
        %479 = sbr.rel (%p476) target = $region84
      $region83: #{gnn_forward.1} parent=5 // pred_region
        %s480 = ssub.s32 %s25, 1
        %p481 = scmp.lt.s32.totalorder %s30, 1
        %s482 = scalar_select %p481, %s30, 1
        %s483 = smul.addr %s482, 24
        %s484 = smul.addr %s483, 4
        %s485 = scalar_lea.vmem %s0, %s484
        %p486 = pneg %p51
        %p487 = pneg %p48
        %p488 = scmp.lt.s32.totalorder %s30, 1
        %s489 = scalar_select %p488, %s30, 1
        %s490 = smul.addr %s489, 72
        %s491 = smul.addr %s490, 8
        %s492 = scalar_lea.vmem %s1, %s491
        %p493 = pneg %p77
        %p494 = pneg %p74
        %p495 = pneg %p98
        %p496 = pneg %p95
        %p497 = pneg %p119
        %p498 = pneg %p116
        %p499 = pneg %p140
        %p500 = pneg %p137
        %p501 = pneg %p161
        %p502 = pneg %p158
        %p503 = pneg %p182
        %p504 = pneg %p179
        %p505 = pneg %p203
        %p506 = pneg %p200
        %p507 = pneg %p224
        %p508 = pneg %p221
        %p509 = pneg %p245
        %p510 = pneg %p242
        %p511 = pneg %p266
        %p512 = pneg %p263
        %p513 = pneg %p287
        %p514 = pneg %p284
        %p515 = pneg %p308
        %p516 = pneg %p305
        %p517 = pneg %p329
        %p518 = pneg %p326
        %p519 = pneg %p350
        %p520 = pneg %p347
        %p521 = pneg %p371
        %p522 = pneg %p368
        %p523 = pneg %p397
        %p524 = pneg %p394
        %s525 = sand.u32 %s384, 1
        %s526 = scalar_lea.sflag [#allocation5], %s525
        %s527 = sand.u32 %s384, 1
        %s528 = scalar_lea.vmem [#allocation4], %s527
        %p529 = scmp.lt.s32.totalorder %s30, 1
        %s530 = scalar_select %p529, %s30, 1
        %s531 = smul.addr %s530, 24
        %s532 = smul.addr %s531, 4
        %s533 = scalar_lea.vmem %s0, %s532
        %p534 = scmp.lt.s32.totalorder %s30, 1
        %s535 = scalar_select %p534, %s30, 1
        %s536 = smul.addr %s535, 72
        %s537 = smul.addr %s536, 8
        %s538 = scalar_lea.vmem %s1, %s537
        %v540 = vld [vmem:[%s538] sm:$0xff]
        %v541 = vld [vmem:[%s538 + $0x8] sm:$0xff]
        %v542 = vld [vmem:[%s538 + $0x10] sm:$0xff]
        %v543 = vld [vmem:[%s538 + $0x18] sm:$0xff]
        %v544 = vld [vmem:[%s538 + $0x20] sm:$0xff]
        %v545 = vld [vmem:[%s538 + $0x28] sm:$0xff]
        %v546 = vld [vmem:[%s538 + $0x30] sm:$0xff]
        %v547 = vld [vmem:[%s538 + $0x38] sm:$0xff]
        %v548 = vld [vmem:[%s538 + $0x40] sm:$0xff]
        %v549 = vld [vmem:[%s538 + $0x48] sm:$0xff]
        %v550 = vld [vmem:[%s538 + $0x50] sm:$0xff]
        %v551 = vld [vmem:[%s538 + $0x58] sm:$0xff]
        %v552 = vld [vmem:[%s538 + $0x60] sm:$0xff]
        %v553 = vld [vmem:[%s538 + $0x68] sm:$0xff]
        %v554 = vld [vmem:[%s538 + $0x70] sm:$0xff]
        %v555 = vld [vmem:[%s538 + $0x78] sm:$0xff]
        %v556 = vld [vmem:[%s538 + $0x80] sm:$0xff]
        %v557 = vld [vmem:[%s538 + $0x88] sm:$0xff]
        %v558 = vld [vmem:[%s538 + $0x90] sm:$0xff]
        %v559 = vld [vmem:[%s538 + $0x98] sm:$0xff]
        %v560 = vld [vmem:[%s538 + $0xa0] sm:$0xff]
        %v561 = vld [vmem:[%s538 + $0xa8] sm:$0xff]
        %v562 = vld [vmem:[%s538 + $0xb0] sm:$0xff]
        %v563 = vld [vmem:[%s538 + $0xb8] sm:$0xff]
        %v564 = vld [vmem:[%s538 + $0xc0] sm:$0xff]
        %v565 = vld [vmem:[%s538 + $0xc8] sm:$0xff]
        %v566 = vld [vmem:[%s538 + $0xd0] sm:$0xff]
        %v567 = vld [vmem:[%s538 + $0xd8] sm:$0xff]
        %v568 = vld [vmem:[%s538 + $0xe0] sm:$0xff]
        %v569 = vld [vmem:[%s538 + $0xe8] sm:$0xff]
        %v570 = vld [vmem:[%s538 + $0xf0] sm:$0xff]
        %v571 = vld [vmem:[%s538 + $0xf8] sm:$0xff]
        %v572 = vld [vmem:[%s538 + $0x100] sm:$0xff]
        %v573 = vld [vmem:[%s538 + $0x108] sm:$0xff]
        %v574 = vld [vmem:[%s538 + $0x110] sm:$0xff]
        %v575 = vld [vmem:[%s538 + $0x118] sm:$0xff]
        %v576 = vld [vmem:[%s538 + $0x120] sm:$0xff]
        %v577 = vld [vmem:[%s538 + $0x128] sm:$0xff]
        %v578 = vld [vmem:[%s538 + $0x130] sm:$0xff]
        %v579 = vld [vmem:[%s538 + $0x138] sm:$0xff]
        %v580 = vld [vmem:[%s538 + $0x140] sm:$0xff]
        %v581 = vld [vmem:[%s538 + $0x148] sm:$0xff]
        %v582 = vld [vmem:[%s538 + $0x150] sm:$0xff]
        %v583 = vld [vmem:[%s538 + $0x158] sm:$0xff]
        %v584 = vld [vmem:[%s538 + $0x160] sm:$0xff]
        %v585 = vld [vmem:[%s538 + $0x168] sm:$0xff]
        %v586 = vld [vmem:[%s538 + $0x170] sm:$0xff]
        %v587 = vld [vmem:[%s538 + $0x178] sm:$0xff]
        %v588 = vld [vmem:[%s538 + $0x180] sm:$0xff]
        %v589 = vld [vmem:[%s538 + $0x188] sm:$0xff]
        %v590 = vld [vmem:[%s538 + $0x190] sm:$0xff]
        %v591 = vld [vmem:[%s538 + $0x198] sm:$0xff]
        %v592 = vld [vmem:[%s538 + $0x1a0] sm:$0xff]
        %v593 = vld [vmem:[%s538 + $0x1a8] sm:$0xff]
        %v594 = vld [vmem:[%s538 + $0x1b0] sm:$0xff]
        %v595 = vld [vmem:[%s538 + $0x1b8] sm:$0xff]
        %v596 = vld [vmem:[%s538 + $0x1c0] sm:$0xff]
        %v597 = vld [vmem:[%s538 + $0x1c8] sm:$0xff]
        %v598 = vld [vmem:[%s538 + $0x1d0] sm:$0xff]
        %v599 = vld [vmem:[%s538 + $0x1d8] sm:$0xff]
        %v600 = vld [vmem:[%s538 + $0x1e0] sm:$0xff]
        %v601 = vld [vmem:[%s538 + $0x1e8] sm:$0xff]
        %v602 = vld [vmem:[%s538 + $0x1f0] sm:$0xff]
        %v603 = vld [vmem:[%s538 + $0x1f8] sm:$0xff]
        %v604 = vld [vmem:[%s538 + $0x200] sm:$0xff]
        %v605 = vld [vmem:[%s538 + $0x208] sm:$0xff]
        %v606 = vld [vmem:[%s538 + $0x210] sm:$0xff]
        %v607 = vld [vmem:[%s538 + $0x218] sm:$0xff]
        %v608 = vld [vmem:[%s538 + $0x220] sm:$0xff]
        %v609 = vld [vmem:[%s538 + $0x228] sm:$0xff]
        %v610 = vld [vmem:[%s538 + $0x230] sm:$0xff]
        %v611 = vld [vmem:[%s538 + $0x238] sm:$0xff]
        %vm612 = vcmask 277504
        %613 = vst.msk [vmem:[#allocation2] sm:$0xff] %vm612, 0.0
        %614 = vst.msk [vmem:[#allocation2 + $0x8] sm:$0xff] %vm612, 0.0
        %615 = vst.msk [vmem:[#allocation2 + $0x10] sm:$0xff] %vm612, 0.0
        %616 = vst.msk [vmem:[#allocation2 + $0x18] sm:$0xff] %vm612, 0.0
        %617 = vst.msk [vmem:[#allocation2 + $0x20] sm:$0xff] %vm612, 0.0
        %618 = vst.msk [vmem:[#allocation2 + $0x28] sm:$0xff] %vm612, 0.0
        %619 = vst.msk [vmem:[#allocation2 + $0x30] sm:$0xff] %vm612, 0.0
        %620 = vst.msk [vmem:[#allocation2 + $0x38] sm:$0xff] %vm612, 0.0
        %621 = vst.msk [vmem:[#allocation2 + $0x40] sm:$0xff] %vm612, 0.0
        %622 = vst.msk [vmem:[#allocation2 + $0x48] sm:$0xff] %vm612, 0.0
        %623 = vst.msk [vmem:[#allocation2 + $0x50] sm:$0xff] %vm612, 0.0
        %624 = vst.msk [vmem:[#allocation2 + $0x58] sm:$0xff] %vm612, 0.0
        %625 = vst.msk [vmem:[#allocation2 + $0x60] sm:$0xff] %vm612, 0.0
        %626 = vst.msk [vmem:[#allocation2 + $0x68] sm:$0xff] %vm612, 0.0
        %627 = vst.msk [vmem:[#allocation2 + $0x70] sm:$0xff] %vm612, 0.0
        %628 = vst.msk [vmem:[#allocation2 + $0x78] sm:$0xff] %vm612, 0.0
        %629 = vst.msk [vmem:[#allocation2 + $0x80] sm:$0xff] %vm612, 0.0
        %630 = vst.msk [vmem:[#allocation2 + $0x88] sm:$0xff] %vm612, 0.0
        %631 = vst.msk [vmem:[#allocation2 + $0x90] sm:$0xff] %vm612, 0.0
        %632 = vst.msk [vmem:[#allocation2 + $0x98] sm:$0xff] %vm612, 0.0
        %633 = vst.msk [vmem:[#allocation2 + $0xa0] sm:$0xff] %vm612, 0.0
        %634 = vst.msk [vmem:[#allocation2 + $0xa8] sm:$0xff] %vm612, 0.0
        %635 = vst.msk [vmem:[#allocation2 + $0xb0] sm:$0xff] %vm612, 0.0
        %636 = vst.msk [vmem:[#allocation2 + $0xb8] sm:$0xff] %vm612, 0.0
        %637 = vst.msk [vmem:[#allocation2 + $0xc0] sm:$0xff] %vm612, 0.0
        %638 = vst.msk [vmem:[#allocation2 + $0xc8] sm:$0xff] %vm612, 0.0
        %639 = vst.msk [vmem:[#allocation2 + $0xd0] sm:$0xff] %vm612, 0.0
        %640 = vst.msk [vmem:[#allocation2 + $0xd8] sm:$0xff] %vm612, 0.0
        %641 = vst.msk [vmem:[#allocation2 + $0xe0] sm:$0xff] %vm612, 0.0
        %642 = vst.msk [vmem:[#allocation2 + $0xe8] sm:$0xff] %vm612, 0.0
        %643 = vst.msk [vmem:[#allocation2 + $0xf0] sm:$0xff] %vm612, 0.0
        %644 = vst.msk [vmem:[#allocation2 + $0xf8] sm:$0xff] %vm612, 0.0
        %645 = vst.msk [vmem:[#allocation2 + $0x100] sm:$0xff] %vm612, 0.0
        %646 = vst.msk [vmem:[#allocation2 + $0x108] sm:$0xff] %vm612, 0.0
        %647 = vst.msk [vmem:[#allocation2 + $0x110] sm:$0xff] %vm612, 0.0
        %648 = vst.msk [vmem:[#allocation2 + $0x118] sm:$0xff] %vm612, 0.0
        %649 = vst.msk [vmem:[#allocation2 + $0x120] sm:$0xff] %vm612, 0.0
        %650 = vst.msk [vmem:[#allocation2 + $0x128] sm:$0xff] %vm612, 0.0
        %651 = vst.msk [vmem:[#allocation2 + $0x130] sm:$0xff] %vm612, 0.0
        %652 = vst.msk [vmem:[#allocation2 + $0x138] sm:$0xff] %vm612, 0.0
        %653 = vst.msk [vmem:[#allocation2 + $0x140] sm:$0xff] %vm612, 0.0
        %654 = vst.msk [vmem:[#allocation2 + $0x148] sm:$0xff] %vm612, 0.0
        %655 = vst.msk [vmem:[#allocation2 + $0x150] sm:$0xff] %vm612, 0.0
        %656 = vst.msk [vmem:[#allocation2 + $0x158] sm:$0xff] %vm612, 0.0
        %657 = vst.msk [vmem:[#allocation2 + $0x160] sm:$0xff] %vm612, 0.0
        %658 = vst.msk [vmem:[#allocation2 + $0x168] sm:$0xff] %vm612, 0.0
        %659 = vst.msk [vmem:[#allocation2 + $0x170] sm:$0xff] %vm612, 0.0
        %660 = vst.msk [vmem:[#allocation2 + $0x178] sm:$0xff] %vm612, 0.0
        %vm661 = vcmask 269568
        %662 = vst.msk [vmem:[#allocation2] sm:$0xff] %vm661, 1.0
        %663 = vst.msk [vmem:[#allocation2 + $0x8] sm:$0xff] %vm661, 1.0
        %664 = vst.msk [vmem:[#allocation2 + $0x10] sm:$0xff] %vm661, 1.0
        %665 = vst.msk [vmem:[#allocation2 + $0x18] sm:$0xff] %vm661, 1.0
        %666 = vst.msk [vmem:[#allocation2 + $0x20] sm:$0xff] %vm661, 1.0
        %667 = vst.msk [vmem:[#allocation2 + $0x28] sm:$0xff] %vm661, 1.0
        %668 = vst.msk [vmem:[#allocation2 + $0x30] sm:$0xff] %vm661, 1.0
        %669 = vst.msk [vmem:[#allocation2 + $0x38] sm:$0xff] %vm661, 1.0
        %670 = vst.msk [vmem:[#allocation2 + $0x40] sm:$0xff] %vm661, 1.0
        %671 = vst.msk [vmem:[#allocation2 + $0x48] sm:$0xff] %vm661, 1.0
        %672 = vst.msk [vmem:[#allocation2 + $0x50] sm:$0xff] %vm661, 1.0
        %673 = vst.msk [vmem:[#allocation2 + $0x58] sm:$0xff] %vm661, 1.0
        %674 = vst.msk [vmem:[#allocation2 + $0x60] sm:$0xff] %vm661, 1.0
        %675 = vst.msk [vmem:[#allocation2 + $0x68] sm:$0xff] %vm661, 1.0
        %676 = vst.msk [vmem:[#allocation2 + $0x70] sm:$0xff] %vm661, 1.0
        %677 = vst.msk [vmem:[#allocation2 + $0x78] sm:$0xff] %vm661, 1.0
        %678 = vst.msk [vmem:[#allocation2 + $0x80] sm:$0xff] %vm661, 1.0
        %679 = vst.msk [vmem:[#allocation2 + $0x88] sm:$0xff] %vm661, 1.0
        %680 = vst.msk [vmem:[#allocation2 + $0x90] sm:$0xff] %vm661, 1.0
        %681 = vst.msk [vmem:[#allocation2 + $0x98] sm:$0xff] %vm661, 1.0
        %682 = vst.msk [vmem:[#allocation2 + $0xa0] sm:$0xff] %vm661, 1.0
        %683 = vst.msk [vmem:[#allocation2 + $0xa8] sm:$0xff] %vm661, 1.0
        %684 = vst.msk [vmem:[#allocation2 + $0xb0] sm:$0xff] %vm661, 1.0
        %685 = vst.msk [vmem:[#allocation2 + $0xb8] sm:$0xff] %vm661, 1.0
        %vm686 = vcmask 277768
        %687 = vst.msk [vmem:[#allocation2 + $0xc0] sm:$0xff] %vm686, 1.0
        %688 = vst.msk [vmem:[#allocation2 + $0xc8] sm:$0xff] %vm686, 1.0
        %689 = vst.msk [vmem:[#allocation2 + $0xd0] sm:$0xff] %vm686, 1.0
        %690 = vst.msk [vmem:[#allocation2 + $0xd8] sm:$0xff] %vm686, 1.0
        %691 = vst.msk [vmem:[#allocation2 + $0xe0] sm:$0xff] %vm686, 1.0
        %692 = vst.msk [vmem:[#allocation2 + $0xe8] sm:$0xff] %vm686, 1.0
        %693 = vst.msk [vmem:[#allocation2 + $0xf0] sm:$0xff] %vm686, 1.0
        %694 = vst.msk [vmem:[#allocation2 + $0xf8] sm:$0xff] %vm686, 1.0
        %695 = vst.msk [vmem:[#allocation2 + $0x100] sm:$0xff] %vm686, 1.0
        %696 = vst.msk [vmem:[#allocation2 + $0x108] sm:$0xff] %vm686, 1.0
        %697 = vst.msk [vmem:[#allocation2 + $0x110] sm:$0xff] %vm686, 1.0
        %698 = vst.msk [vmem:[#allocation2 + $0x118] sm:$0xff] %vm686, 1.0
        %699 = vst.msk [vmem:[#allocation2 + $0x120] sm:$0xff] %vm686, 1.0
        %700 = vst.msk [vmem:[#allocation2 + $0x128] sm:$0xff] %vm686, 1.0
        %701 = vst.msk [vmem:[#allocation2 + $0x130] sm:$0xff] %vm686, 1.0
        %702 = vst.msk [vmem:[#allocation2 + $0x138] sm:$0xff] %vm686, 1.0
        %703 = vst.msk [vmem:[#allocation2 + $0x140] sm:$0xff] %vm686, 1.0
        %704 = vst.msk [vmem:[#allocation2 + $0x148] sm:$0xff] %vm686, 1.0
        %705 = vst.msk [vmem:[#allocation2 + $0x150] sm:$0xff] %vm686, 1.0
        %706 = vst.msk [vmem:[#allocation2 + $0x158] sm:$0xff] %vm686, 1.0
        %707 = vst.msk [vmem:[#allocation2 + $0x160] sm:$0xff] %vm686, 1.0
        %708 = vst.msk [vmem:[#allocation2 + $0x168] sm:$0xff] %vm686, 1.0
        %709 = vst.msk [vmem:[#allocation2 + $0x170] sm:$0xff] %vm686, 1.0
        %710 = vst.msk [vmem:[#allocation2 + $0x178] sm:$0xff] %vm686, 1.0
        %v711 = vld [vmem:[%s533] sm:$0xf]
        %v712 = vld [vmem:[%s533 + $0x4] sm:$0xf]
        %v713 = vld [vmem:[%s533 + $0x8] sm:$0xf]
        %v714 = vld [vmem:[%s533 + $0xc] sm:$0xf]
        %v715 = vld [vmem:[%s533 + $0x10] sm:$0xf]
        %v716 = vld [vmem:[%s533 + $0x14] sm:$0xf]
        %v717 = vld [vmem:[%s533 + $0x18] sm:$0xf]
        %v718 = vld [vmem:[%s533 + $0x1c] sm:$0xf]
        %v719 = vld [vmem:[%s533 + $0x20] sm:$0xf]
        %v720 = vld [vmem:[%s533 + $0x24] sm:$0xf]
        %v721 = vld [vmem:[%s533 + $0x28] sm:$0xf]
        %v722 = vld [vmem:[%s533 + $0x2c] sm:$0xf]
        %v723 = vld [vmem:[%s533 + $0x30] sm:$0xf]
        %v724 = vld [vmem:[%s533 + $0x34] sm:$0xf]
        %v725 = vld [vmem:[%s533 + $0x38] sm:$0xf]
        %v726 = vld [vmem:[%s533 + $0x3c] sm:$0xf]
        %v727 = vld [vmem:[%s533 + $0x40] sm:$0xf]
        %v728 = vld [vmem:[%s533 + $0x44] sm:$0xf]
        %v729 = vld [vmem:[%s533 + $0x48] sm:$0xf]
        %v730 = vld [vmem:[%s533 + $0x4c] sm:$0xf]
        %v731 = vld [vmem:[%s533 + $0x50] sm:$0xf]
        %v732 = vld [vmem:[%s533 + $0x54] sm:$0xf]
        %v733 = vld [vmem:[%s533 + $0x58] sm:$0xf]
        %v734 = vld [vmem:[%s533 + $0x5c] sm:$0xf]
        %v735 = vld [vmem:[%s2] sm:$0xf]
        %v736 = vld [vmem:[%s2 + $0x4] sm:$0xf]
        %v737 = vld [vmem:[%s2 + $0x8] sm:$0xf]
        %v738 = vld [vmem:[%s2 + $0xc] sm:$0xf]
        %v739 = vld [vmem:[%s2 + $0x10] sm:$0xf]
        %v740 = vld [vmem:[%s2 + $0x14] sm:$0xf]
        %v741 = vld [vmem:[%s2 + $0x18] sm:$0xf]
        %v742 = vld [vmem:[%s2 + $0x1c] sm:$0xf]
        %v743 = vld [vmem:[%s2 + $0x20] sm:$0xf]
        %v744 = vld [vmem:[%s2 + $0x24] sm:$0xf]
        %v745 = vld [vmem:[%s2 + $0x28] sm:$0xf]
        %v746 = vld [vmem:[%s2 + $0x2c] sm:$0xf]
        %v747 = vld [vmem:[%s2 + $0x30] sm:$0xf]
        %v748 = vld [vmem:[%s2 + $0x34] sm:$0xf]
        %v749 = vld [vmem:[%s2 + $0x38] sm:$0xf]
        %v750 = vld [vmem:[%s2 + $0x3c] sm:$0xf]
        %v775 = vunpack.c.l.b16 %v711
        %v776 = vunpack.c.l.b16 %v712
        %v777 = vunpack.c.l.b16 %v713
        %v778 = vunpack.c.l.b16 %v714
        %v779 = vunpack.c.l.b16 %v715
        %v780 = vunpack.c.l.b16 %v716
        %v781 = vunpack.c.l.b16 %v717
        %v782 = vunpack.c.l.b16 %v718
        %v783 = vunpack.c.l.b16 %v719
        %v784 = vunpack.c.l.b16 %v720
        %v785 = vunpack.c.l.b16 %v721
        %v786 = vunpack.c.l.b16 %v722
        %v787 = vunpack.c.l.b16 %v723
        %v788 = vunpack.c.l.b16 %v724
        %v789 = vunpack.c.l.b16 %v725
        %v790 = vunpack.c.l.b16 %v726
        %v791 = vunpack.c.l.b16 %v727
        %v792 = vunpack.c.l.b16 %v728
        %v793 = vunpack.c.l.b16 %v729
        %v794 = vunpack.c.l.b16 %v730
        %v795 = vunpack.c.l.b16 %v731
        %v796 = vunpack.c.l.b16 %v732
        %v797 = vunpack.c.l.b16 %v733
        %v798 = vunpack.c.l.b16 %v734
        %v799 = vpack.c.b16 %v776, %v775
        %v800 = vpack.c.b16 %v778, %v777
        %v801 = vpack.c.b16 %v780, %v779
        %v802 = vpack.c.b16 %v782, %v781
        %v803 = vpack.c.b16 %v784, %v783
        %v804 = vpack.c.b16 %v786, %v785
        %v805 = vpack.c.b16 %v788, %v787
        %v806 = vpack.c.b16 %v790, %v789
        %v807 = vpack.c.b16 %v792, %v791
        %v808 = vpack.c.b16 %v794, %v793
        %v809 = vpack.c.b16 %v796, %v795
        %v810 = vpack.c.b16 %v798, %v797
        %v839 = vunpack.c.l.b16 %v735
        %v840 = vunpack.c.l.b16 %v736
        %v841 = vunpack.c.l.b16 %v737
        %v842 = vunpack.c.l.b16 %v738
        %v843 = vunpack.c.l.b16 %v739
        %v844 = vunpack.c.l.b16 %v740
        %v845 = vunpack.c.l.b16 %v741
        %v846 = vunpack.c.l.b16 %v742
        %v847 = vunpack.c.l.b16 %v743
        %v848 = vunpack.c.l.b16 %v744
        %v849 = vunpack.c.l.b16 %v745
        %v850 = vunpack.c.l.b16 %v746
        %v851 = vunpack.c.l.b16 %v747
        %v852 = vunpack.c.l.b16 %v748
        %v853 = vunpack.c.l.b16 %v749
        %v854 = vunpack.c.l.b16 %v750
        %v855 = vpack.c.b16 %v840, %v839
        %v856 = vpack.c.b16 %v842, %v841
        %v857 = vpack.c.b16 %v844, %v843
        %v858 = vpack.c.b16 %v846, %v845
        %v859 = vpack.c.b16 %v848, %v847
        %v860 = vpack.c.b16 %v850, %v849
        %v861 = vpack.c.b16 %v852, %v851
        %v862 = vpack.c.b16 %v854, %v853
        %871 = vmatprep.subr.bf16.mxu0 0
        %872 = vmatpush1.bf16.msra.mxu0 %v855
        %873 = vmatprep.subr.bf16.mxu0 0
        %874 = vmatpush1.bf16.msra.mxu0 %v856
        %875 = vmatprep.subr.bf16.mxu0 0
        %876 = vmatpush1.bf16.msra.mxu0 %v857
        %877 = vmatprep.subr.bf16.mxu0 0
        %878 = vmatpush1.bf16.msra.mxu0 %v858
        %879 = vmatprep.subr.bf16.mxu0 0
        %880 = vmatpush1.bf16.msra.mxu0 %v859
        %881 = vmatprep.subr.bf16.mxu0 0
        %882 = vmatpush1.bf16.msra.mxu0 %v860
        %883 = vmatprep.subr.bf16.mxu0 0
        %884 = vmatpush1.bf16.msra.mxu0 %v861
        %885 = vmatprep.subr.bf16.mxu0 0
        %886 = vmatpush1.bf16.msra.mxu0 %v862
        %887 = vmatprep.subr.bf16.mxu0 0
        %888 = vmatpush1.bf16.msra.mxu0 0
        %889 = vmatprep.subr.bf16.mxu0 0
        %890 = vmatpush1.bf16.msra.mxu0 0
        %891 = vmatprep.subr.bf16.mxu0 0
        %892 = vmatpush1.bf16.msra.mxu0 0
        %893 = vmatprep.subr.bf16.mxu0 0
        %894 = vmatpush1.bf16.msra.mxu0 0
        %895 = vmatprep.subr.bf16.mxu0 0
        %896 = vmatpush1.bf16.msra.mxu0 0
        %897 = vmatprep.subr.bf16.mxu0 0
        %898 = vmatpush1.bf16.msra.mxu0 0
        %899 = vmatprep.subr.bf16.mxu0 0
        %900 = vmatpush1.bf16.msra.mxu0 0
        %901 = vmatprep.subr.bf16.mxu0 0
        %902 = vmatpush1.bf16.msra.mxu0 0
        %903 = vmatprep.mubr.bf16.mxu0 0
        %904 = vmatmul.mubr.bf16.gmra.mrb[0].mxu0 %v799
        %v905 = vpop.f32.mrb[0].mxu0
        %v906 = vadd.f32 0.0, %v905
        %v907 = vpop.f32.mrb[0].mxu0
        %v908 = vpop.f32.mrb[0].mxu0
        %v909 = vadd.f32 0.0, %v908
        %v910 = vpop.f32.mrb[0].mxu0
        %911 = vmatprep.mubr.bf16.mxu0 0
        %912 = vmatmul.mubr.bf16.gmra.mrb[0].mxu0 %v800
        %v913 = vpop.f32.mrb[0].mxu0
        %v914 = vadd.f32 0.0, %v913
        %v915 = vpop.f32.mrb[0].mxu0
        %v916 = vpop.f32.mrb[0].mxu0
        %v917 = vadd.f32 0.0, %v916
        %v918 = vpop.f32.mrb[0].mxu0
        %919 = vmatprep.mubr.bf16.mxu0 0
        %920 = vmatmul.mubr.bf16.gmra.mrb[0].mxu0 %v801
        %v921 = vpop.f32.mrb[0].mxu0
        %v922 = vadd.f32 0.0, %v921
        %v923 = vpop.f32.mrb[0].mxu0
        %v924 = vpop.f32.mrb[0].mxu0
        %v925 = vadd.f32 0.0, %v924
        %v926 = vpop.f32.mrb[0].mxu0
        %927 = vmatprep.mubr.bf16.mxu0 0
        %928 = vmatmul.mubr.bf16.gmra.mrb[0].mxu0 %v802
        %v929 = vpop.f32.mrb[0].mxu0
        %v930 = vadd.f32 0.0, %v929
        %v931 = vpop.f32.mrb[0].mxu0
        %v932 = vpop.f32.mrb[0].mxu0
        %v933 = vadd.f32 0.0, %v932
        %v934 = vpop.f32.mrb[0].mxu0
        %935 = vmatprep.mubr.bf16.mxu0 0
        %936 = vmatmul.mubr.bf16.gmra.mrb[0].mxu0 %v803
        %v937 = vpop.f32.mrb[0].mxu0
        %v938 = vadd.f32 0.0, %v937
        %v939 = vpop.f32.mrb[0].mxu0
        %v940 = vpop.f32.mrb[0].mxu0
        %v941 = vadd.f32 0.0, %v940
        %v942 = vpop.f32.mrb[0].mxu0
        %943 = vmatprep.mubr.bf16.mxu0 0
        %944 = vmatmul.mubr.bf16.gmra.mrb[0].mxu0 %v804
        %v945 = vpop.f32.mrb[0].mxu0
        %v946 = vadd.f32 0.0, %v945
        %v947 = vpop.f32.mrb[0].mxu0
        %v948 = vpop.f32.mrb[0].mxu0
        %v949 = vadd.f32 0.0, %v948
        %v950 = vpop.f32.mrb[0].mxu0
        %951 = vmatprep.mubr.bf16.mxu0 0
        %952 = vmatmul.mubr.bf16.gmra.mrb[0].mxu0 %v805
        %v953 = vpop.f32.mrb[0].mxu0
        %v954 = vadd.f32 0.0, %v953
        %v955 = vpop.f32.mrb[0].mxu0
        %v956 = vpop.f32.mrb[0].mxu0
        %v957 = vadd.f32 0.0, %v956
        %v958 = vpop.f32.mrb[0].mxu0
        %959 = vmatprep.mubr.bf16.mxu0 0
        %960 = vmatmul.mubr.bf16.gmra.mrb[0].mxu0 %v806
        %v961 = vpop.f32.mrb[0].mxu0
        %v962 = vadd.f32 0.0, %v961
        %v963 = vpop.f32.mrb[0].mxu0
        %v964 = vpop.f32.mrb[0].mxu0
        %v965 = vadd.f32 0.0, %v964
        %v966 = vpop.f32.mrb[0].mxu0
        %967 = vmatprep.mubr.bf16.mxu0 0
        %968 = vmatmul.mubr.bf16.gmra.mrb[0].mxu0 %v807
        %v969 = vpop.f32.mrb[0].mxu0
        %v970 = vadd.f32 0.0, %v969
        %v971 = vpop.f32.mrb[0].mxu0
        %v972 = vpop.f32.mrb[0].mxu0
        %v973 = vadd.f32 0.0, %v972
        %v974 = vpop.f32.mrb[0].mxu0
        %975 = vmatprep.mubr.bf16.mxu0 0
        %976 = vmatmul.mubr.bf16.gmra.mrb[0].mxu0 %v808
        %v977 = vpop.f32.mrb[0].mxu0
        %v978 = vadd.f32 0.0, %v977
        %v979 = vpop.f32.mrb[0].mxu0
        %v980 = vpop.f32.mrb[0].mxu0
        %v981 = vadd.f32 0.0, %v980
        %v982 = vpop.f32.mrb[0].mxu0
        %983 = vmatprep.mubr.bf16.mxu0 0
        %984 = vmatmul.mubr.bf16.gmra.mrb[0].mxu0 %v809
        %v985 = vpop.f32.mrb[0].mxu0
        %v986 = vadd.f32 0.0, %v985
        %v987 = vpop.f32.mrb[0].mxu0
        %v988 = vpop.f32.mrb[0].mxu0
        %v989 = vadd.f32 0.0, %v988
        %v990 = vpop.f32.mrb[0].mxu0
        %991 = vmatprep.mubr.bf16.mxu0 0
        %992 = vmatmul.mubr.bf16.gmra.mrb[0].mxu0 %v810
        %v993 = vpop.f32.mrb[0].mxu0
        %v994 = vadd.f32 0.0, %v993
        %v995 = vpop.f32.mrb[0].mxu0
        %v996 = vpop.f32.mrb[0].mxu0
        %v997 = vadd.f32 0.0, %v996
        %v998 = vpop.f32.mrb[0].mxu0
        %999 = vdwg.mxu0
        %v1000 = vld [vmem:[%s4] sm:$0xff]
        %v1001 = vld [vmem:[%s4 + $0x8] sm:$0xff]
        %v1002 = vld [vmem:[%s4 + $0x10] sm:$0xff]
        %v1003 = vld [vmem:[%s4 + $0x18] sm:$0xff]
        %v1004 = vld [vmem:[%s4 + $0x20] sm:$0xff]
        %v1005 = vld [vmem:[%s4 + $0x28] sm:$0xff]
        %v1006 = vld [vmem:[%s4 + $0x30] sm:$0xff]
        %v1007 = vld [vmem:[%s4 + $0x38] sm:$0xff]
        %v1008 = vld [vmem:[%s4 + $0x40] sm:$0xff]
        %v1009 = vld [vmem:[%s4 + $0x48] sm:$0xff]
        %v1010 = vld [vmem:[%s4 + $0x50] sm:$0xff]
        %v1011 = vld [vmem:[%s4 + $0x58] sm:$0xff]
        %v1012 = vld [vmem:[%s3] sm:$0x3]
        %vm1013 = vcmask 261120
        %v1015 = vsel %vm1013, %v1012, 0
        %v1018 = vsel %vm1013, %v906, 0
        %v1021 = vsel %vm1013, %v909, 0
        %v1024 = vsel %vm1013, %v914, 0
        %v1027 = vsel %vm1013, %v917, 0
        %v1030 = vsel %vm1013, %v922, 0
        %v1033 = vsel %vm1013, %v925, 0
        %v1036 = vsel %vm1013, %v930, 0
        %v1039 = vsel %vm1013, %v933, 0
        %v1042 = vsel %vm1013, %v938, 0
        %v1045 = vsel %vm1013, %v941, 0
        %v1048 = vsel %vm1013, %v946, 0
        %v1051 = vsel %vm1013, %v949, 0
        %v1054 = vsel %vm1013, %v954, 0
        %v1057 = vsel %vm1013, %v957, 0
        %v1060 = vsel %vm1013, %v962, 0
        %v1063 = vsel %vm1013, %v965, 0
        %v1066 = vsel %vm1013, %v970, 0
        %v1069 = vsel %vm1013, %v973, 0
        %v1072 = vsel %vm1013, %v978, 0
        %v1075 = vsel %vm1013, %v981, 0
        %v1078 = vsel %vm1013, %v986, 0
        %v1081 = vsel %vm1013, %v989, 0
        %v1084 = vsel %vm1013, %v994, 0
        %v1087 = vsel %vm1013, %v997, 0
        %1089 = vmatprep.subr.mxu0 0.0
        %1090 = vmatpush1.xpose.msra.mxu0 %v1018
        %1091 = vmatprep.subr.mxu0 0.0
        %1092 = vmatpush1.xpose.msra.mxu0 %v1021
        %1093 = vmatprep.subr.mxu0 0.0
        %1094 = vmatpush1.xpose.msra.mxu0 %v1024
        %1095 = vmatprep.subr.mxu0 0.0
        %1096 = vmatpush1.xpose.msra.mxu0 %v1027
        %1097 = vmatprep.subr.mxu0 0.0
        %1098 = vmatpush1.xpose.msra.mxu0 %v1030
        %1099 = vmatprep.subr.mxu0 0.0
        %1100 = vmatpush1.xpose.msra.mxu0 %v1033
        %1101 = vmatprep.subr.mxu0 0.0
        %1102 = vmatpush1.xpose.msra.mxu0 %v1036
        %1103 = vmatprep.subr.mxu0 0.0
        %1104 = vmatpush1.xpose.msra.mxu0 %v1039
        %1105 = vmatprep.subr.mxu0 0.0
        %1106 = vmatpush1.xpose.msra.mxu0 %v1042
        %1107 = vmatprep.subr.mxu0 0.0
        %1108 = vmatpush1.xpose.msra.mxu0 %v1045
        %1109 = vmatprep.subr.mxu0 0.0
        %1110 = vmatpush1.xpose.msra.mxu0 %v1048
        %1111 = vmatprep.subr.mxu0 0.0
        %1112 = vmatpush1.xpose.msra.mxu0 %v1051
        %1113 = vmatprep.subr.mxu0 0.0
        %1114 = vmatpush1.xpose.msra.mxu0 %v1054
        %1115 = vmatprep.subr.mxu0 0.0
        %1116 = vmatpush1.xpose.msra.mxu0 %v1057
        %1117 = vmatprep.subr.mxu0 0.0
        %1118 = vmatpush1.xpose.msra.mxu0 %v1060
        %1119 = vmatprep.subr.mxu0 0.0
        %1120 = vmatpush1.xpose.msra.mxu0 %v1063
        %1121 = vmatprep.subr.mxu0 0.0
        %1122 = vmatpush1.xpose.msra.mxu0 %v1066
        %1123 = vmatprep.subr.mxu0 0.0
        %1124 = vmatpush1.xpose.msra.mxu0 %v1069
        %1125 = vmatprep.subr.mxu0 0.0
        %1126 = vmatpush1.xpose.msra.mxu0 %v1072
        %1127 = vmatprep.subr.mxu0 0.0
        %1128 = vmatpush1.xpose.msra.mxu0 %v1075
        %1129 = vmatprep.subr.mxu0 0.0
        %1130 = vmatpush1.xpose.msra.mxu0 %v1078
        %1131 = vmatprep.subr.mxu0 0.0
        %1132 = vmatpush1.xpose.msra.mxu0 %v1081
        %1133 = vmatprep.subr.mxu0 0.0
        %1134 = vmatpush1.xpose.msra.mxu0 %v1084
        %1135 = vmatprep.subr.mxu0 0.0
        %1136 = vmatpush1.xpose.msra.mxu0 %v1087
        %1137 = vmatprep.subr.mxu0 0.0
        %1138 = vmatpush1.xpose.msra.mxu0 0.0
        %1139 = vmatprep.subr.mxu0 0.0
        %1140 = vmatpush1.xpose.msra.mxu0 0.0
        %1141 = vmatprep.subr.mxu0 0.0
        %1142 = vmatpush1.xpose.msra.mxu0 0.0
        %1143 = vmatprep.subr.mxu0 0.0
        %1144 = vmatpush1.xpose.msra.mxu0 0.0
        %1145 = vmatprep.subr.mxu0 0.0
        %1146 = vmatpush1.xpose.msra.mxu0 0.0
        %1147 = vmatprep.subr.mxu0 0.0
        %1148 = vmatpush1.xpose.msra.mxu0 0.0
        %1149 = vmatprep.subr.mxu0 0.0
        %1150 = vmatpush1.xpose.msra.mxu0 0.0
        %1151 = vmatprep.subr.mxu0 0.0
        %1152 = vmatpush1.xpose.msra.mxu0 0.0
        %1153 = vmatprep.mubr.f32.mxu0 0.0
        %1154 = vmatmul.mubr.f32.gmra.mrb[0].mxu0 %v1015
        %v1155 = vpop.f32.mrb[0].mxu0
        %v1156 = vadd.f32 0.0, %v1155
        %v1157 = vpop.f32.mrb[0].mxu0
        %v1158 = vadd.f32 0.0, %v1157
        %1159 = vdwg.mxu0
        %v1162 = vcombine.low %v1156, %v1158
        %v1164 = vunpack.c.l.s4 1966171168
        %v1165 = vunpack.c.0.s8 %v1164
        %v1166 = vlaneseq
        %v1167 = vshrl.u32 %v1166, 7
        %v1168 = vsub.s32 %v1165, %v1167
        %v1169 = vrot.slane %v1162, %v1168
        %v1171 = vunpack.c.l.s4 1966171168
        %v1172 = vunpack.c.0.s8 %v1171
        %v1173 = vlaneseq
        %v1174 = vshrl.u32 %v1173, 7
        %v1175 = vsub.s32 %v1172, %v1174
        %v1176 = vrot.slane %v1169, %v1175
        %v1178 = vlaneseq
        %vm1179 = vcmp.ge.s32.totalorder %v1178, 0
        %vm1180 = vcmp.lt.s32.totalorder %v1178, 192
        %vm1181 = vmand %vm1179, %vm1180
        %1182 = vst.msk [vmem:[#allocation3] sm:$0x3] %vm1181, %v1176
        %v1183 = vcombine.high %v1169, %v1169
        %v1185 = vunpack.c.l.s4 1966171168
        %v1186 = vunpack.c.0.s8 %v1185
        %v1187 = vlaneseq
        %v1188 = vshrl.u32 %v1187, 7
        %v1189 = vsub.s32 %v1186, %v1188
        %v1190 = vrot.slane %v1183, %v1189
        %1191 = vrot.lane.b32.xlu0 %v1190, 64
        %v1192 = vpop.permute.xlu0 %1191
        %v1193 = vrot.slane %v1192, 7
        %vm1194 = vcmask 523264
        %v1195 = vsel %vm1194, %v1193, %v1192
        %vm1197 = vcmp.ge.s32.totalorder %v1178, 64
        %vm1198 = vcmp.lt.s32.totalorder %v1178, 256
        %vm1199 = vmand %vm1197, %vm1198
        %1200 = vst.msk [vmem:[#allocation3 + $0x1] sm:$0x3] %vm1199, %v1195
        %v1201 = vld [vmem:[#allocation3] sm:$0x7]
        %v1203 = vlaneseq
        %v1204 = vshrl.u32 %v1203, 7
        %v1205 = vsub.s32 0, %v1204
        %v1206 = vrot.slane %v1201, %v1205
        %v1207 = vlaneseq
        %v1208 = vshrl.u32 %v1207, 7
        %v1209 = vsub.s32 1, %v1208
        %v1210 = vrot.slane %v1201, %v1209
        %v1211 = vlaneseq
        %v1212 = vshrl.u32 %v1211, 7
        %v1213 = vsub.s32 2, %v1212
        %v1214 = vrot.slane %v1201, %v1213
        %1218 = vmatprep.subr.mxu0 %v1001
        %1219 = vmatpush1.msra.mxu0 %v1000
        %1220 = vmatprep.subr.mxu0 %v1004
        %1221 = vmatpush1.msra.mxu0 %v1003
        %1222 = vmatprep.subr.mxu0 %v1007
        %1223 = vmatpush1.msra.mxu0 %v1006
        %1224 = vmatprep.subr.mxu0 %v1010
        %1225 = vmatpush1.msra.mxu0 %v1009
        %1226 = vmatprep.subr.mxu0 0.0
        %1227 = vmatpush1.msra.mxu0 0.0
        %1228 = vmatprep.subr.mxu0 0.0
        %1229 = vmatpush1.msra.mxu0 0.0
        %1230 = vmatprep.subr.mxu0 0.0
        %1231 = vmatpush1.msra.mxu0 0.0
        %1232 = vmatprep.subr.mxu0 0.0
        %1233 = vmatpush1.msra.mxu0 0.0
        %1234 = vmatprep.subr.mxu0 0.0
        %1235 = vmatpush1.msra.mxu0 0.0
        %1236 = vmatprep.subr.mxu0 0.0
        %1237 = vmatpush1.msra.mxu0 0.0
        %1238 = vmatprep.subr.mxu0 0.0
        %1239 = vmatpush1.msra.mxu0 0.0
        %1240 = vmatprep.subr.mxu0 0.0
        %1241 = vmatpush1.msra.mxu0 0.0
        %1242 = vmatprep.subr.mxu0 0.0
        %1243 = vmatpush1.msra.mxu0 0.0
        %1244 = vmatprep.subr.mxu0 0.0
        %1245 = vmatpush1.msra.mxu0 0.0
        %1246 = vmatprep.subr.mxu0 0.0
        %1247 = vmatpush1.msra.mxu0 0.0
        %1248 = vmatprep.subr.mxu0 0.0
        %1249 = vmatpush1.msra.mxu0 0.0
        %1250 = vmatprep.subr.mxu0 0.0
        %1251 = vmatpush1.msra.mxu0 0.0
        %1252 = vmatprep.subr.mxu0 0.0
        %1253 = vmatpush1.msra.mxu0 0.0
        %1254 = vmatprep.subr.mxu0 0.0
        %1255 = vmatpush1.msra.mxu0 0.0
        %1256 = vmatprep.subr.mxu0 0.0
        %1257 = vmatpush1.msra.mxu0 0.0
        %1258 = vmatprep.subr.mxu0 0.0
        %1259 = vmatpush1.msra.mxu0 0.0
        %1260 = vmatprep.subr.mxu0 0.0
        %1261 = vmatpush1.msra.mxu0 0.0
        %1262 = vmatprep.subr.mxu0 0.0
        %1263 = vmatpush1.msra.mxu0 0.0
        %1264 = vmatprep.subr.mxu0 0.0
        %1265 = vmatpush1.msra.mxu0 0.0
        %1266 = vmatprep.subr.mxu0 0.0
        %1267 = vmatpush1.msra.mxu0 0.0
        %1268 = vmatprep.subr.mxu0 0.0
        %1269 = vmatpush1.msra.mxu0 0.0
        %1270 = vmatprep.subr.mxu0 0.0
        %1271 = vmatpush1.msra.mxu0 0.0
        %1272 = vmatprep.subr.mxu0 0.0
        %1273 = vmatpush1.msra.mxu0 0.0
        %1274 = vmatprep.subr.mxu0 0.0
        %1275 = vmatpush1.msra.mxu0 0.0
        %1276 = vmatprep.subr.mxu0 0.0
        %1277 = vmatpush1.msra.mxu0 0.0
        %1278 = vmatprep.subr.mxu0 0.0
        %1279 = vmatpush1.msra.mxu0 0.0
        %1280 = vmatprep.subr.mxu0 0.0
        %1281 = vmatpush1.msra.mxu0 0.0
        %1282 = vmatprep.mubr.f32.mxu0 0.0
        %1283 = vmatmul.mubr.f32.gmra.mrb[0].mxu0 %v1018
        %v1284 = vpop.f32.mrb[0].mxu0
        %v1285 = vadd.f32 %v1206, %v1284
        %v1286 = vpop.f32.mrb[0].mxu0
        %v1287 = vadd.f32 %v1210, %v1286
        %1288 = vmatprep.mubr.f32.mxu0 0.0
        %1289 = vmatmul.mubr.f32.gmra.mrb[0].mxu0 %v1021
        %v1290 = vpop.f32.mrb[0].mxu0
        %v1291 = vadd.f32 %v1206, %v1290
        %v1292 = vpop.f32.mrb[0].mxu0
        %v1293 = vadd.f32 %v1210, %v1292
        %1294 = vmatprep.mubr.f32.mxu0 0.0
        %1295 = vmatmul.mubr.f32.gmra.mrb[0].mxu0 %v1024
        %v1296 = vpop.f32.mrb[0].mxu0
        %v1297 = vadd.f32 %v1206, %v1296
        %v1298 = vpop.f32.mrb[0].mxu0
        %v1299 = vadd.f32 %v1210, %v1298
        %1300 = vmatprep.mubr.f32.mxu0 0.0
        %1301 = vmatmul.mubr.f32.gmra.mrb[0].mxu0 %v1027
        %v1302 = vpop.f32.mrb[0].mxu0
        %v1303 = vadd.f32 %v1206, %v1302
        %v1304 = vpop.f32.mrb[0].mxu0
        %v1305 = vadd.f32 %v1210, %v1304
        %1306 = vmatprep.mubr.f32.mxu0 0.0
        %1307 = vmatmul.mubr.f32.gmra.mrb[0].mxu0 %v1030
        %v1308 = vpop.f32.mrb[0].mxu0
        %v1309 = vadd.f32 %v1206, %v1308
        %v1310 = vpop.f32.mrb[0].mxu0
        %v1311 = vadd.f32 %v1210, %v1310
        %1312 = vmatprep.mubr.f32.mxu0 0.0
        %1313 = vmatmul.mubr.f32.gmra.mrb[0].mxu0 %v1033
        %v1314 = vpop.f32.mrb[0].mxu0
        %v1315 = vadd.f32 %v1206, %v1314
        %v1316 = vpop.f32.mrb[0].mxu0
        %v1317 = vadd.f32 %v1210, %v1316
        %1318 = vmatprep.mubr.f32.mxu0 0.0
        %1319 = vmatmul.mubr.f32.gmra.mrb[0].mxu0 %v1036
        %v1320 = vpop.f32.mrb[0].mxu0
        %v1321 = vadd.f32 %v1206, %v1320
        %v1322 = vpop.f32.mrb[0].mxu0
        %v1323 = vadd.f32 %v1210, %v1322
        %1324 = vmatprep.mubr.f32.mxu0 0.0
        %1325 = vmatmul.mubr.f32.gmra.mrb[0].mxu0 %v1039
        %v1326 = vpop.f32.mrb[0].mxu0
        %v1327 = vadd.f32 %v1206, %v1326
        %v1328 = vpop.f32.mrb[0].mxu0
        %v1329 = vadd.f32 %v1210, %v1328
        %1330 = vmatprep.mubr.f32.mxu0 0.0
        %1331 = vmatmul.mubr.f32.gmra.mrb[0].mxu0 %v1042
        %v1332 = vpop.f32.mrb[0].mxu0
        %v1333 = vadd.f32 %v1206, %v1332
        %v1334 = vpop.f32.mrb[0].mxu0
        %v1335 = vadd.f32 %v1210, %v1334
        %1336 = vmatprep.mubr.f32.mxu0 0.0
        %1337 = vmatmul.mubr.f32.gmra.mrb[0].mxu0 %v1045
        %v1338 = vpop.f32.mrb[0].mxu0
        %v1339 = vadd.f32 %v1206, %v1338
        %v1340 = vpop.f32.mrb[0].mxu0
        %v1341 = vadd.f32 %v1210, %v1340
        %1342 = vmatprep.mubr.f32.mxu0 0.0
        %1343 = vmatmul.mubr.f32.gmra.mrb[0].mxu0 %v1048
        %v1344 = vpop.f32.mrb[0].mxu0
        %v1345 = vadd.f32 %v1206, %v1344
        %v1346 = vpop.f32.mrb[0].mxu0
        %v1347 = vadd.f32 %v1210, %v1346
        %1348 = vmatprep.mubr.f32.mxu0 0.0
        %1349 = vmatmul.mubr.f32.gmra.mrb[0].mxu0 %v1051
        %v1350 = vpop.f32.mrb[0].mxu0
        %v1351 = vadd.f32 %v1206, %v1350
        %v1352 = vpop.f32.mrb[0].mxu0
        %v1353 = vadd.f32 %v1210, %v1352
        %1354 = vmatprep.mubr.f32.mxu0 0.0
        %1355 = vmatmul.mubr.f32.gmra.mrb[0].mxu0 %v1054
        %v1356 = vpop.f32.mrb[0].mxu0
        %v1357 = vadd.f32 %v1206, %v1356
        %v1358 = vpop.f32.mrb[0].mxu0
        %v1359 = vadd.f32 %v1210, %v1358
        %1360 = vmatprep.mubr.f32.mxu0 0.0
        %1361 = vmatmul.mubr.f32.gmra.mrb[0].mxu0 %v1057
        %v1362 = vpop.f32.mrb[0].mxu0
        %v1363 = vadd.f32 %v1206, %v1362
        %v1364 = vpop.f32.mrb[0].mxu0
        %v1365 = vadd.f32 %v1210, %v1364
        %1366 = vmatprep.mubr.f32.mxu0 0.0
        %1367 = vmatmul.mubr.f32.gmra.mrb[0].mxu0 %v1060
        %v1368 = vpop.f32.mrb[0].mxu0
        %v1369 = vadd.f32 %v1206, %v1368
        %v1370 = vpop.f32.mrb[0].mxu0
        %v1371 = vadd.f32 %v1210, %v1370
        %1372 = vmatprep.mubr.f32.mxu0 0.0
        %1373 = vmatmul.mubr.f32.gmra.mrb[0].mxu0 %v1063
        %v1374 = vpop.f32.mrb[0].mxu0
        %v1375 = vadd.f32 %v1206, %v1374
        %v1376 = vpop.f32.mrb[0].mxu0
        %v1377 = vadd.f32 %v1210, %v1376
        %1378 = vmatprep.mubr.f32.mxu0 0.0
        %1379 = vmatmul.mubr.f32.gmra.mrb[0].mxu0 %v1066
        %v1380 = vpop.f32.mrb[0].mxu0
        %v1381 = vadd.f32 %v1206, %v1380
        %v1382 = vpop.f32.mrb[0].mxu0
        %v1383 = vadd.f32 %v1210, %v1382
        %1384 = vmatprep.mubr.f32.mxu0 0.0
        %1385 = vmatmul.mubr.f32.gmra.mrb[0].mxu0 %v1069
        %v1386 = vpop.f32.mrb[0].mxu0
        %v1387 = vadd.f32 %v1206, %v1386
        %v1388 = vpop.f32.mrb[0].mxu0
        %v1389 = vadd.f32 %v1210, %v1388
        %1390 = vmatprep.mubr.f32.mxu0 0.0
        %1391 = vmatmul.mubr.f32.gmra.mrb[0].mxu0 %v1072
        %v1392 = vpop.f32.mrb[0].mxu0
        %v1393 = vadd.f32 %v1206, %v1392
        %v1394 = vpop.f32.mrb[0].mxu0
        %v1395 = vadd.f32 %v1210, %v1394
        %1396 = vmatprep.mubr.f32.mxu0 0.0
        %1397 = vmatmul.mubr.f32.gmra.mrb[0].mxu0 %v1075
        %v1398 = vpop.f32.mrb[0].mxu0
        %v1399 = vadd.f32 %v1206, %v1398
        %v1400 = vpop.f32.mrb[0].mxu0
        %v1401 = vadd.f32 %v1210, %v1400
        %1402 = vmatprep.mubr.f32.mxu0 0.0
        %1403 = vmatmul.mubr.f32.gmra.mrb[0].mxu0 %v1078
        %v1404 = vpop.f32.mrb[0].mxu0
        %v1405 = vadd.f32 %v1206, %v1404
        %v1406 = vpop.f32.mrb[0].mxu0
        %v1407 = vadd.f32 %v1210, %v1406
        %1408 = vmatprep.mubr.f32.mxu0 0.0
        %1409 = vmatmul.mubr.f32.gmra.mrb[0].mxu0 %v1081
        %v1410 = vpop.f32.mrb[0].mxu0
        %v1411 = vadd.f32 %v1206, %v1410
        %v1412 = vpop.f32.mrb[0].mxu0
        %v1413 = vadd.f32 %v1210, %v1412
        %1414 = vmatprep.mubr.f32.mxu0 0.0
        %1415 = vmatmul.mubr.f32.gmra.mrb[0].mxu0 %v1084
        %v1416 = vpop.f32.mrb[0].mxu0
        %v1417 = vadd.f32 %v1206, %v1416
        %v1418 = vpop.f32.mrb[0].mxu0
        %v1419 = vadd.f32 %v1210, %v1418
        %1420 = vmatprep.mubr.f32.mxu0 0.0
        %1421 = vmatmul.mubr.f32.gmra.mrb[0].mxu0 %v1087
        %v1422 = vpop.f32.mrb[0].mxu0
        %v1423 = vadd.f32 %v1206, %v1422
        %v1424 = vpop.f32.mrb[0].mxu0
        %v1425 = vadd.f32 %v1210, %v1424
        %1426 = vdwg.mxu0
        %1427 = vmatprep.subr.mxu0 0.0
        %1428 = vmatpush1.msra.mxu0 %v1002
        %1429 = vmatprep.subr.mxu0 0.0
        %1430 = vmatpush1.msra.mxu0 %v1005
        %1431 = vmatprep.subr.mxu0 0.0
        %1432 = vmatpush1.msra.mxu0 %v1008
        %1433 = vmatprep.subr.mxu0 0.0
        %1434 = vmatpush1.msra.mxu0 %v1011
        %1435 = vmatprep.subr.mxu0 0.0
        %1436 = vmatpush1.msra.mxu0 0.0
        %1437 = vmatprep.subr.mxu0 0.0
        %1438 = vmatpush1.msra.mxu0 0.0
        %1439 = vmatprep.subr.mxu0 0.0
        %1440 = vmatpush1.msra.mxu0 0.0
        %1441 = vmatprep.subr.mxu0 0.0
        %1442 = vmatpush1.msra.mxu0 0.0
        %1443 = vmatprep.subr.mxu0 0.0
        %1444 = vmatpush1.msra.mxu0 0.0
        %1445 = vmatprep.subr.mxu0 0.0
        %1446 = vmatpush1.msra.mxu0 0.0
        %1447 = vmatprep.subr.mxu0 0.0
        %1448 = vmatpush1.msra.mxu0 0.0
        %1449 = vmatprep.subr.mxu0 0.0
        %1450 = vmatpush1.msra.mxu0 0.0
        %1451 = vmatprep.subr.mxu0 0.0
        %1452 = vmatpush1.msra.mxu0 0.0
        %1453 = vmatprep.subr.mxu0 0.0
        %1454 = vmatpush1.msra.mxu0 0.0
        %1455 = vmatprep.subr.mxu0 0.0
        %1456 = vmatpush1.msra.mxu0 0.0
        %1457 = vmatprep.subr.mxu0 0.0
        %1458 = vmatpush1.msra.mxu0 0.0
        %1459 = vmatprep.subr.mxu0 0.0
        %1460 = vmatpush1.msra.mxu0 0.0
        %1461 = vmatprep.subr.mxu0 0.0
        %1462 = vmatpush1.msra.mxu0 0.0
        %1463 = vmatprep.subr.mxu0 0.0
        %1464 = vmatpush1.msra.mxu0 0.0
        %1465 = vmatprep.subr.mxu0 0.0
        %1466 = vmatpush1.msra.mxu0 0.0
        %1467 = vmatprep.subr.mxu0 0.0
        %1468 = vmatpush1.msra.mxu0 0.0
        %1469 = vmatprep.subr.mxu0 0.0
        %1470 = vmatpush1.msra.mxu0 0.0
        %1471 = vmatprep.subr.mxu0 0.0
        %1472 = vmatpush1.msra.mxu0 0.0
        %1473 = vmatprep.subr.mxu0 0.0
        %1474 = vmatpush1.msra.mxu0 0.0
        %1475 = vmatprep.subr.mxu0 0.0
        %1476 = vmatpush1.msra.mxu0 0.0
        %1477 = vmatprep.subr.mxu0 0.0
        %1478 = vmatpush1.msra.mxu0 0.0
        %1479 = vmatprep.subr.mxu0 0.0
        %1480 = vmatpush1.msra.mxu0 0.0
        %1481 = vmatprep.subr.mxu0 0.0
        %1482 = vmatpush1.msra.mxu0 0.0
        %1483 = vmatprep.subr.mxu0 0.0
        %1484 = vmatpush1.msra.mxu0 0.0
        %1485 = vmatprep.subr.mxu0 0.0
        %1486 = vmatpush1.msra.mxu0 0.0
        %1487 = vmatprep.subr.mxu0 0.0
        %1488 = vmatpush1.msra.mxu0 0.0
        %1489 = vmatprep.subr.mxu0 0.0
        %1490 = vmatpush1.msra.mxu0 0.0
        %1491 = vmatprep.mubr.f32.mxu0 0.0
        %1492 = vmatmul.mubr.f32.gmra.mrb[0].mxu0 %v1018
        %v1493 = vpop.f32.mrb[0].mxu0
        %v1494 = vadd.f32 %v1214, %v1493
        %v1495 = vpop.f32.mrb[0].mxu0
        %1496 = vmatprep.mubr.f32.mxu0 0.0
        %1497 = vmatmul.mubr.f32.gmra.mrb[0].mxu0 %v1021
        %v1498 = vpop.f32.mrb[0].mxu0
        %v1499 = vadd.f32 %v1214, %v1498
        %v1500 = vpop.f32.mrb[0].mxu0
        %1501 = vmatprep.mubr.f32.mxu0 0.0
        %1502 = vmatmul.mubr.f32.gmra.mrb[0].mxu0 %v1024
        %v1503 = vpop.f32.mrb[0].mxu0
        %v1504 = vadd.f32 %v1214, %v1503
        %v1505 = vpop.f32.mrb[0].mxu0
        %1506 = vmatprep.mubr.f32.mxu0 0.0
        %1507 = vmatmul.mubr.f32.gmra.mrb[0].mxu0 %v1027
        %v1508 = vpop.f32.mrb[0].mxu0
        %v1509 = vadd.f32 %v1214, %v1508
        %v1510 = vpop.f32.mrb[0].mxu0
        %1511 = vmatprep.mubr.f32.mxu0 0.0
        %1512 = vmatmul.mubr.f32.gmra.mrb[0].mxu0 %v1030
        %v1513 = vpop.f32.mrb[0].mxu0
        %v1514 = vadd.f32 %v1214, %v1513
        %v1515 = vpop.f32.mrb[0].mxu0
        %1516 = vmatprep.mubr.f32.mxu0 0.0
        %1517 = vmatmul.mubr.f32.gmra.mrb[0].mxu0 %v1033
        %v1518 = vpop.f32.mrb[0].mxu0
        %v1519 = vadd.f32 %v1214, %v1518
        %v1520 = vpop.f32.mrb[0].mxu0
        %1521 = vmatprep.mubr.f32.mxu0 0.0
        %1522 = vmatmul.mubr.f32.gmra.mrb[0].mxu0 %v1036
        %v1523 = vpop.f32.mrb[0].mxu0
        %v1524 = vadd.f32 %v1214, %v1523
        %v1525 = vpop.f32.mrb[0].mxu0
        %1526 = vmatprep.mubr.f32.mxu0 0.0
        %1527 = vmatmul.mubr.f32.gmra.mrb[0].mxu0 %v1039
        %v1528 = vpop.f32.mrb[0].mxu0
        %v1529 = vadd.f32 %v1214, %v1528
        %v1530 = vpop.f32.mrb[0].mxu0
        %1531 = vmatprep.mubr.f32.mxu0 0.0
        %1532 = vmatmul.mubr.f32.gmra.mrb[0].mxu0 %v1042
        %v1533 = vpop.f32.mrb[0].mxu0
        %v1534 = vadd.f32 %v1214, %v1533
        %v1535 = vpop.f32.mrb[0].mxu0
        %1536 = vmatprep.mubr.f32.mxu0 0.0
        %1537 = vmatmul.mubr.f32.gmra.mrb[0].mxu0 %v1045
        %v1538 = vpop.f32.mrb[0].mxu0
        %v1539 = vadd.f32 %v1214, %v1538
        %v1540 = vpop.f32.mrb[0].mxu0
        %1541 = vmatprep.mubr.f32.mxu0 0.0
        %1542 = vmatmul.mubr.f32.gmra.mrb[0].mxu0 %v1048
        %v1543 = vpop.f32.mrb[0].mxu0
        %v1544 = vadd.f32 %v1214, %v1543
        %v1545 = vpop.f32.mrb[0].mxu0
        %1546 = vmatprep.mubr.f32.mxu0 0.0
        %1547 = vmatmul.mubr.f32.gmra.mrb[0].mxu0 %v1051
        %v1548 = vpop.f32.mrb[0].mxu0
        %v1549 = vadd.f32 %v1214, %v1548
        %v1550 = vpop.f32.mrb[0].mxu0
        %1551 = vmatprep.mubr.f32.mxu0 0.0
        %1552 = vmatmul.mubr.f32.gmra.mrb[0].mxu0 %v1054
        %v1553 = vpop.f32.mrb[0].mxu0
        %v1554 = vadd.f32 %v1214, %v1553
        %v1555 = vpop.f32.mrb[0].mxu0
        %1556 = vmatprep.mubr.f32.mxu0 0.0
        %1557 = vmatmul.mubr.f32.gmra.mrb[0].mxu0 %v1057
        %v1558 = vpop.f32.mrb[0].mxu0
        %v1559 = vadd.f32 %v1214, %v1558
        %v1560 = vpop.f32.mrb[0].mxu0
        %1561 = vmatprep.mubr.f32.mxu0 0.0
        %1562 = vmatmul.mubr.f32.gmra.mrb[0].mxu0 %v1060
        %v1563 = vpop.f32.mrb[0].mxu0
        %v1564 = vadd.f32 %v1214, %v1563
        %v1565 = vpop.f32.mrb[0].mxu0
        %1566 = vmatprep.mubr.f32.mxu0 0.0
        %1567 = vmatmul.mubr.f32.gmra.mrb[0].mxu0 %v1063
        %v1568 = vpop.f32.mrb[0].mxu0
        %v1569 = vadd.f32 %v1214, %v1568
        %v1570 = vpop.f32.mrb[0].mxu0
        %1571 = vmatprep.mubr.f32.mxu0 0.0
        %1572 = vmatmul.mubr.f32.gmra.mrb[0].mxu0 %v1066
        %v1573 = vpop.f32.mrb[0].mxu0
        %v1574 = vadd.f32 %v1214, %v1573
        %v1575 = vpop.f32.mrb[0].mxu0
        %1576 = vmatprep.mubr.f32.mxu0 0.0
        %1577 = vmatmul.mubr.f32.gmra.mrb[0].mxu0 %v1069
        %v1578 = vpop.f32.mrb[0].mxu0
        %v1579 = vadd.f32 %v1214, %v1578
        %v1580 = vpop.f32.mrb[0].mxu0
        %1581 = vmatprep.mubr.f32.mxu0 0.0
        %1582 = vmatmul.mubr.f32.gmra.mrb[0].mxu0 %v1072
        %v1583 = vpop.f32.mrb[0].mxu0
        %v1584 = vadd.f32 %v1214, %v1583
        %v1585 = vpop.f32.mrb[0].mxu0
        %1586 = vmatprep.mubr.f32.mxu0 0.0
        %1587 = vmatmul.mubr.f32.gmra.mrb[0].mxu0 %v1075
        %v1588 = vpop.f32.mrb[0].mxu0
        %v1589 = vadd.f32 %v1214, %v1588
        %v1590 = vpop.f32.mrb[0].mxu0
        %1591 = vmatprep.mubr.f32.mxu0 0.0
        %1592 = vmatmul.mubr.f32.gmra.mrb[0].mxu0 %v1078
        %v1593 = vpop.f32.mrb[0].mxu0
        %v1594 = vadd.f32 %v1214, %v1593
        %v1595 = vpop.f32.mrb[0].mxu0
        %1596 = vmatprep.mubr.f32.mxu0 0.0
        %1597 = vmatmul.mubr.f32.gmra.mrb[0].mxu0 %v1081
        %v1598 = vpop.f32.mrb[0].mxu0
        %v1599 = vadd.f32 %v1214, %v1598
        %v1600 = vpop.f32.mrb[0].mxu0
        %1601 = vmatprep.mubr.f32.mxu0 0.0
        %1602 = vmatmul.mubr.f32.gmra.mrb[0].mxu0 %v1084
        %v1603 = vpop.f32.mrb[0].mxu0
        %v1604 = vadd.f32 %v1214, %v1603
        %v1605 = vpop.f32.mrb[0].mxu0
        %1606 = vmatprep.mubr.f32.mxu0 0.0
        %1607 = vmatmul.mubr.f32.gmra.mrb[0].mxu0 %v1087
        %v1608 = vpop.f32.mrb[0].mxu0
        %v1609 = vadd.f32 %v1214, %v1608
        %v1610 = vpop.f32.mrb[0].mxu0
        %1611 = vdwg.mxu0
        %v1612 = vmul.f32 %v1285, 0.2
        %v1613 = vmul.f32 %v1287, 0.2
        %v1614 = vmul.f32 %v1494, 0.2
        %v1615 = vmul.f32 %v1291, 0.2
        %v1616 = vmul.f32 %v1293, 0.2
        %v1617 = vmul.f32 %v1499, 0.2
        %v1618 = vmul.f32 %v1297, 0.2
        %v1619 = vmul.f32 %v1299, 0.2
        %v1620 = vmul.f32 %v1504, 0.2
        %v1621 = vmul.f32 %v1303, 0.2
        %v1622 = vmul.f32 %v1305, 0.2
        %v1623 = vmul.f32 %v1509, 0.2
        %v1624 = vmul.f32 %v1309, 0.2
        %v1625 = vmul.f32 %v1311, 0.2
        %v1626 = vmul.f32 %v1514, 0.2
        %v1627 = vmul.f32 %v1315, 0.2
        %v1628 = vmul.f32 %v1317, 0.2
        %v1629 = vmul.f32 %v1519, 0.2
        %v1630 = vmul.f32 %v1321, 0.2
        %v1631 = vmul.f32 %v1323, 0.2
        %v1632 = vmul.f32 %v1524, 0.2
        %v1633 = vmul.f32 %v1327, 0.2
        %v1634 = vmul.f32 %v1329, 0.2
        %v1635 = vmul.f32 %v1529, 0.2
        %v1636 = vmul.f32 %v1333, 0.2
        %v1637 = vmul.f32 %v1335, 0.2
        %v1638 = vmul.f32 %v1534, 0.2
        %v1639 = vmul.f32 %v1339, 0.2
        %v1640 = vmul.f32 %v1341, 0.2
        %v1641 = vmul.f32 %v1539, 0.2
        %v1642 = vmul.f32 %v1345, 0.2
        %v1643 = vmul.f32 %v1347, 0.2
        %v1644 = vmul.f32 %v1544, 0.2
        %v1645 = vmul.f32 %v1351, 0.2
        %v1646 = vmul.f32 %v1353, 0.2
        %v1647 = vmul.f32 %v1549, 0.2
        %v1648 = vmul.f32 %v1357, 0.2
        %v1649 = vmul.f32 %v1359, 0.2
        %v1650 = vmul.f32 %v1554, 0.2
        %v1651 = vmul.f32 %v1363, 0.2
        %v1652 = vmul.f32 %v1365, 0.2
        %v1653 = vmul.f32 %v1559, 0.2
        %v1654 = vmul.f32 %v1369, 0.2
        %v1655 = vmul.f32 %v1371, 0.2
        %v1656 = vmul.f32 %v1564, 0.2
        %v1657 = vmul.f32 %v1375, 0.2
        %v1658 = vmul.f32 %v1377, 0.2
        %v1659 = vmul.f32 %v1569, 0.2
        %v1660 = vmul.f32 %v1381, 0.2
        %v1661 = vmul.f32 %v1383, 0.2
        %v1662 = vmul.f32 %v1574, 0.2
        %v1663 = vmul.f32 %v1387, 0.2
        %v1664 = vmul.f32 %v1389, 0.2
        %v1665 = vmul.f32 %v1579, 0.2
        %v1666 = vmul.f32 %v1393, 0.2
        %v1667 = vmul.f32 %v1395, 0.2
        %v1668 = vmul.f32 %v1584, 0.2
        %v1669 = vmul.f32 %v1399, 0.2
        %v1670 = vmul.f32 %v1401, 0.2
        %v1671 = vmul.f32 %v1589, 0.2
        %v1672 = vmul.f32 %v1405, 0.2
        %v1673 = vmul.f32 %v1407, 0.2
        %v1674 = vmul.f32 %v1594, 0.2
        %v1675 = vmul.f32 %v1411, 0.2
        %v1676 = vmul.f32 %v1413, 0.2
        %v1677 = vmul.f32 %v1599, 0.2
        %v1678 = vmul.f32 %v1417, 0.2
        %v1679 = vmul.f32 %v1419, 0.2
        %v1680 = vmul.f32 %v1604, 0.2
        %v1681 = vmul.f32 %v1423, 0.2
        %v1682 = vmul.f32 %v1425, 0.2
        %v1683 = vmul.f32 %v1609, 0.2
        %v1684 = vmax.f32 %v1285, %v1612
        %v1685 = vmax.f32 %v1287, %v1613
        %v1686 = vmax.f32 %v1494, %v1614
        %v1687 = vmax.f32 %v1291, %v1615
        %v1688 = vmax.f32 %v1293, %v1616
        %v1689 = vmax.f32 %v1499, %v1617
        %v1690 = vmax.f32 %v1297, %v1618
        %v1691 = vmax.f32 %v1299, %v1619
        %v1692 = vmax.f32 %v1504, %v1620
        %v1693 = vmax.f32 %v1303, %v1621
        %v1694 = vmax.f32 %v1305, %v1622
        %v1695 = vmax.f32 %v1509, %v1623
        %v1696 = vmax.f32 %v1309, %v1624
        %v1697 = vmax.f32 %v1311, %v1625
        %v1698 = vmax.f32 %v1514, %v1626
        %v1699 = vmax.f32 %v1315, %v1627
        %v1700 = vmax.f32 %v1317, %v1628
        %v1701 = vmax.f32 %v1519, %v1629
        %v1702 = vmax.f32 %v1321, %v1630
        %v1703 = vmax.f32 %v1323, %v1631
        %v1704 = vmax.f32 %v1524, %v1632
        %v1705 = vmax.f32 %v1327, %v1633
        %v1706 = vmax.f32 %v1329, %v1634
        %v1707 = vmax.f32 %v1529, %v1635
        %v1708 = vmax.f32 %v1333, %v1636
        %v1709 = vmax.f32 %v1335, %v1637
        %v1710 = vmax.f32 %v1534, %v1638
        %v1711 = vmax.f32 %v1339, %v1639
        %v1712 = vmax.f32 %v1341, %v1640
        %v1713 = vmax.f32 %v1539, %v1641
        %v1714 = vmax.f32 %v1345, %v1642
        %v1715 = vmax.f32 %v1347, %v1643
        %v1716 = vmax.f32 %v1544, %v1644
        %v1717 = vmax.f32 %v1351, %v1645
        %v1718 = vmax.f32 %v1353, %v1646
        %v1719 = vmax.f32 %v1549, %v1647
        %v1720 = vmax.f32 %v1357, %v1648
        %v1721 = vmax.f32 %v1359, %v1649
        %v1722 = vmax.f32 %v1554, %v1650
        %v1723 = vmax.f32 %v1363, %v1651
        %v1724 = vmax.f32 %v1365, %v1652
        %v1725 = vmax.f32 %v1559, %v1653
        %v1726 = vmax.f32 %v1369, %v1654
        %v1727 = vmax.f32 %v1371, %v1655
        %v1728 = vmax.f32 %v1564, %v1656
        %v1729 = vmax.f32 %v1375, %v1657
        %v1730 = vmax.f32 %v1377, %v1658
        %v1731 = vmax.f32 %v1569, %v1659
        %v1732 = vmax.f32 %v1381, %v1660
        %v1733 = vmax.f32 %v1383, %v1661
        %v1734 = vmax.f32 %v1574, %v1662
        %v1735 = vmax.f32 %v1387, %v1663
        %v1736 = vmax.f32 %v1389, %v1664
        %v1737 = vmax.f32 %v1579, %v1665
        %v1738 = vmax.f32 %v1393, %v1666
        %v1739 = vmax.f32 %v1395, %v1667
        %v1740 = vmax.f32 %v1584, %v1668
        %v1741 = vmax.f32 %v1399, %v1669
        %v1742 = vmax.f32 %v1401, %v1670
        %v1743 = vmax.f32 %v1589, %v1671
        %v1744 = vmax.f32 %v1405, %v1672
        %v1745 = vmax.f32 %v1407, %v1673
        %v1746 = vmax.f32 %v1594, %v1674
        %v1747 = vmax.f32 %v1411, %v1675
        %v1748 = vmax.f32 %v1413, %v1676
        %v1749 = vmax.f32 %v1599, %v1677
        %v1750 = vmax.f32 %v1417, %v1678
        %v1751 = vmax.f32 %v1419, %v1679
        %v1752 = vmax.f32 %v1604, %v1680
        %v1753 = vmax.f32 %v1423, %v1681
        %v1754 = vmax.f32 %v1425, %v1682
        %v1755 = vmax.f32 %v1609, %v1683
        %v1756 = vmax.f32 %v1684, -30.0
        %v1757 = vmax.f32 %v1685, -30.0
        %v1758 = vmax.f32 %v1686, -30.0
        %v1759 = vmax.f32 %v1687, -30.0
        %v1760 = vmax.f32 %v1688, -30.0
        %v1761 = vmax.f32 %v1689, -30.0
        %v1762 = vmax.f32 %v1690, -30.0
        %v1763 = vmax.f32 %v1691, -30.0
        %v1764 = vmax.f32 %v1692, -30.0
        %v1765 = vmax.f32 %v1693, -30.0
        %v1766 = vmax.f32 %v1694, -30.0
        %v1767 = vmax.f32 %v1695, -30.0
        %v1768 = vmax.f32 %v1696, -30.0
        %v1769 = vmax.f32 %v1697, -30.0
        %v1770 = vmax.f32 %v1698, -30.0
        %v1771 = vmax.f32 %v1699, -30.0
        %v1772 = vmax.f32 %v1700, -30.0
        %v1773 = vmax.f32 %v1701, -30.0
        %v1774 = vmax.f32 %v1702, -30.0
        %v1775 = vmax.f32 %v1703, -30.0
        %v1776 = vmax.f32 %v1704, -30.0
        %v1777 = vmax.f32 %v1705, -30.0
        %v1778 = vmax.f32 %v1706, -30.0
        %v1779 = vmax.f32 %v1707, -30.0
        %v1780 = vmax.f32 %v1708, -30.0
        %v1781 = vmax.f32 %v1709, -30.0
        %v1782 = vmax.f32 %v1710, -30.0
        %v1783 = vmax.f32 %v1711, -30.0
        %v1784 = vmax.f32 %v1712, -30.0
        %v1785 = vmax.f32 %v1713, -30.0
        %v1786 = vmax.f32 %v1714, -30.0
        %v1787 = vmax.f32 %v1715, -30.0
        %v1788 = vmax.f32 %v1716, -30.0
        %v1789 = vmax.f32 %v1717, -30.0
        %v1790 = vmax.f32 %v1718, -30.0
        %v1791 = vmax.f32 %v1719, -30.0
        %v1792 = vmax.f32 %v1720, -30.0
        %v1793 = vmax.f32 %v1721, -30.0
        %v1794 = vmax.f32 %v1722, -30.0
        %v1795 = vmax.f32 %v1723, -30.0
        %v1796 = vmax.f32 %v1724, -30.0
        %v1797 = vmax.f32 %v1725, -30.0
        %v1798 = vmax.f32 %v1726, -30.0
        %v1799 = vmax.f32 %v1727, -30.0
        %v1800 = vmax.f32 %v1728, -30.0
        %v1801 = vmax.f32 %v1729, -30.0
        %v1802 = vmax.f32 %v1730, -30.0
        %v1803 = vmax.f32 %v1731, -30.0
        %v1804 = vmax.f32 %v1732, -30.0
        %v1805 = vmax.f32 %v1733, -30.0
        %v1806 = vmax.f32 %v1734, -30.0
        %v1807 = vmax.f32 %v1735, -30.0
        %v1808 = vmax.f32 %v1736, -30.0
        %v1809 = vmax.f32 %v1737, -30.0
        %v1810 = vmax.f32 %v1738, -30.0
        %v1811 = vmax.f32 %v1739, -30.0
        %v1812 = vmax.f32 %v1740, -30.0
        %v1813 = vmax.f32 %v1741, -30.0
        %v1814 = vmax.f32 %v1742, -30.0
        %v1815 = vmax.f32 %v1743, -30.0
        %v1816 = vmax.f32 %v1744, -30.0
        %v1817 = vmax.f32 %v1745, -30.0
        %v1818 = vmax.f32 %v1746, -30.0
        %v1819 = vmax.f32 %v1747, -30.0
        %v1820 = vmax.f32 %v1748, -30.0
        %v1821 = vmax.f32 %v1749, -30.0
        %v1822 = vmax.f32 %v1750, -30.0
        %v1823 = vmax.f32 %v1751, -30.0
        %v1824 = vmax.f32 %v1752, -30.0
        %v1825 = vmax.f32 %v1753, -30.0
        %v1826 = vmax.f32 %v1754, -30.0
        %v1827 = vmax.f32 %v1755, -30.0
        %v1828 = vmin.f32 %v1756, 30.0
        %v1829 = vmin.f32 %v1757, 30.0
        %v1830 = vmin.f32 %v1758, 30.0
        %v1831 = vmin.f32 %v1759, 30.0
        %v1832 = vmin.f32 %v1760, 30.0
        %v1833 = vmin.f32 %v1761, 30.0
        %v1834 = vmin.f32 %v1762, 30.0
        %v1835 = vmin.f32 %v1763, 30.0
        %v1836 = vmin.f32 %v1764, 30.0
        %v1837 = vmin.f32 %v1765, 30.0
        %v1838 = vmin.f32 %v1766, 30.0
        %v1839 = vmin.f32 %v1767, 30.0
        %v1840 = vmin.f32 %v1768, 30.0
        %v1841 = vmin.f32 %v1769, 30.0
        %v1842 = vmin.f32 %v1770, 30.0
        %v1843 = vmin.f32 %v1771, 30.0
        %v1844 = vmin.f32 %v1772, 30.0
        %v1845 = vmin.f32 %v1773, 30.0
        %v1846 = vmin.f32 %v1774, 30.0
        %v1847 = vmin.f32 %v1775, 30.0
        %v1848 = vmin.f32 %v1776, 30.0
        %v1849 = vmin.f32 %v1777, 30.0
        %v1850 = vmin.f32 %v1778, 30.0
        %v1851 = vmin.f32 %v1779, 30.0
        %v1852 = vmin.f32 %v1780, 30.0
        %v1853 = vmin.f32 %v1781, 30.0
        %v1854 = vmin.f32 %v1782, 30.0
        %v1855 = vmin.f32 %v1783, 30.0
        %v1856 = vmin.f32 %v1784, 30.0
        %v1857 = vmin.f32 %v1785, 30.0
        %v1858 = vmin.f32 %v1786, 30.0
        %v1859 = vmin.f32 %v1787, 30.0
        %v1860 = vmin.f32 %v1788, 30.0
        %v1861 = vmin.f32 %v1789, 30.0
        %v1862 = vmin.f32 %v1790, 30.0
        %v1863 = vmin.f32 %v1791, 30.0
        %v1864 = vmin.f32 %v1792, 30.0
        %v1865 = vmin.f32 %v1793, 30.0
        %v1866 = vmin.f32 %v1794, 30.0
        %v1867 = vmin.f32 %v1795, 30.0
        %v1868 = vmin.f32 %v1796, 30.0
        %v1869 = vmin.f32 %v1797, 30.0
        %v1870 = vmin.f32 %v1798, 30.0
        %v1871 = vmin.f32 %v1799, 30.0
        %v1872 = vmin.f32 %v1800, 30.0
        %v1873 = vmin.f32 %v1801, 30.0
        %v1874 = vmin.f32 %v1802, 30.0
        %v1875 = vmin.f32 %v1803, 30.0
        %v1876 = vmin.f32 %v1804, 30.0
        %v1877 = vmin.f32 %v1805, 30.0
        %v1878 = vmin.f32 %v1806, 30.0
        %v1879 = vmin.f32 %v1807, 30.0
        %v1880 = vmin.f32 %v1808, 30.0
        %v1881 = vmin.f32 %v1809, 30.0
        %v1882 = vmin.f32 %v1810, 30.0
        %v1883 = vmin.f32 %v1811, 30.0
        %v1884 = vmin.f32 %v1812, 30.0
        %v1885 = vmin.f32 %v1813, 30.0
        %v1886 = vmin.f32 %v1814, 30.0
        %v1887 = vmin.f32 %v1815, 30.0
        %v1888 = vmin.f32 %v1816, 30.0
        %v1889 = vmin.f32 %v1817, 30.0
        %v1890 = vmin.f32 %v1818, 30.0
        %v1891 = vmin.f32 %v1819, 30.0
        %v1892 = vmin.f32 %v1820, 30.0
        %v1893 = vmin.f32 %v1821, 30.0
        %v1894 = vmin.f32 %v1822, 30.0
        %v1895 = vmin.f32 %v1823, 30.0
        %v1896 = vmin.f32 %v1824, 30.0
        %v1897 = vmin.f32 %v1825, 30.0
        %v1898 = vmin.f32 %v1826, 30.0
        %v1899 = vmin.f32 %v1827, 30.0
        %v1900 = vmul.f32 %v1828, 1.442695
        %v1901 = vpow.pop %v1900
        %v1902 = vmul.f32 %v1829, 1.442695
        %v1903 = vpow.pop %v1902
        %v1904 = vmul.f32 %v1830, 1.442695
        %v1905 = vpow.pop %v1904
        %v1906 = vmul.f32 %v1831, 1.442695
        %v1907 = vpow.pop %v1906
        %v1908 = vmul.f32 %v1832, 1.442695
        %v1909 = vpow.pop %v1908
        %v1910 = vmul.f32 %v1833, 1.442695
        %v1911 = vpow.pop %v1910
        %v1912 = vmul.f32 %v1834, 1.442695
        %v1913 = vpow.pop %v1912
        %v1914 = vmul.f32 %v1835, 1.442695
        %v1915 = vpow.pop %v1914
        %v1916 = vmul.f32 %v1836, 1.442695
        %v1917 = vpow.pop %v1916
        %v1918 = vmul.f32 %v1837, 1.442695
        %v1919 = vpow.pop %v1918
        %v1920 = vmul.f32 %v1838, 1.442695
        %v1921 = vpow.pop %v1920
        %v1922 = vmul.f32 %v1839, 1.442695
        %v1923 = vpow.pop %v1922
        %v1924 = vmul.f32 %v1840, 1.442695
        %v1925 = vpow.pop %v1924
        %v1926 = vmul.f32 %v1841, 1.442695
        %v1927 = vpow.pop %v1926
        %v1928 = vmul.f32 %v1842, 1.442695
        %v1929 = vpow.pop %v1928
        %v1930 = vmul.f32 %v1843, 1.442695
        %v1931 = vpow.pop %v1930
        %v1932 = vmul.f32 %v1844, 1.442695
        %v1933 = vpow.pop %v1932
        %v1934 = vmul.f32 %v1845, 1.442695
        %v1935 = vpow.pop %v1934
        %v1936 = vmul.f32 %v1846, 1.442695
        %v1937 = vpow.pop %v1936
        %v1938 = vmul.f32 %v1847, 1.442695
        %v1939 = vpow.pop %v1938
        %v1940 = vmul.f32 %v1848, 1.442695
        %v1941 = vpow.pop %v1940
        %v1942 = vmul.f32 %v1849, 1.442695
        %v1943 = vpow.pop %v1942
        %v1944 = vmul.f32 %v1850, 1.442695
        %v1945 = vpow.pop %v1944
        %v1946 = vmul.f32 %v1851, 1.442695
        %v1947 = vpow.pop %v1946
        %v1948 = vmul.f32 %v1852, 1.442695
        %v1949 = vpow.pop %v1948
        %v1950 = vmul.f32 %v1853, 1.442695
        %v1951 = vpow.pop %v1950
        %v1952 = vmul.f32 %v1854, 1.442695
        %v1953 = vpow.pop %v1952
        %v1954 = vmul.f32 %v1855, 1.442695
        %v1955 = vpow.pop %v1954
        %v1956 = vmul.f32 %v1856, 1.442695
        %v1957 = vpow.pop %v1956
        %v1958 = vmul.f32 %v1857, 1.442695
        %v1959 = vpow.pop %v1958
        %v1960 = vmul.f32 %v1858, 1.442695
        %v1961 = vpow.pop %v1960
        %v1962 = vmul.f32 %v1859, 1.442695
        %v1963 = vpow.pop %v1962
        %v1964 = vmul.f32 %v1860, 1.442695
        %v1965 = vpow.pop %v1964
        %v1966 = vmul.f32 %v1861, 1.442695
        %v1967 = vpow.pop %v1966
        %v1968 = vmul.f32 %v1862, 1.442695
        %v1969 = vpow.pop %v1968
        %v1970 = vmul.f32 %v1863, 1.442695
        %v1971 = vpow.pop %v1970
        %v1972 = vmul.f32 %v1864, 1.442695
        %v1973 = vpow.pop %v1972
        %v1974 = vmul.f32 %v1865, 1.442695
        %v1975 = vpow.pop %v1974
        %v1976 = vmul.f32 %v1866, 1.442695
        %v1977 = vpow.pop %v1976
        %v1978 = vmul.f32 %v1867, 1.442695
        %v1979 = vpow.pop %v1978
        %v1980 = vmul.f32 %v1868, 1.442695
        %v1981 = vpow.pop %v1980
        %v1982 = vmul.f32 %v1869, 1.442695
        %v1983 = vpow.pop %v1982
        %v1984 = vmul.f32 %v1870, 1.442695
        %v1985 = vpow.pop %v1984
        %v1986 = vmul.f32 %v1871, 1.442695
        %v1987 = vpow.pop %v1986
        %v1988 = vmul.f32 %v1872, 1.442695
        %v1989 = vpow.pop %v1988
        %v1990 = vmul.f32 %v1873, 1.442695
        %v1991 = vpow.pop %v1990
        %v1992 = vmul.f32 %v1874, 1.442695
        %v1993 = vpow.pop %v1992
        %v1994 = vmul.f32 %v1875, 1.442695
        %v1995 = vpow.pop %v1994
        %v1996 = vmul.f32 %v1876, 1.442695
        %v1997 = vpow.pop %v1996
        %v1998 = vmul.f32 %v1877, 1.442695
        %v1999 = vpow.pop %v1998
        %v2000 = vmul.f32 %v1878, 1.442695
        %v2001 = vpow.pop %v2000
        %v2002 = vmul.f32 %v1879, 1.442695
        %v2003 = vpow.pop %v2002
        %v2004 = vmul.f32 %v1880, 1.442695
        %v2005 = vpow.pop %v2004
        %v2006 = vmul.f32 %v1881, 1.442695
        %v2007 = vpow.pop %v2006
        %v2008 = vmul.f32 %v1882, 1.442695
        %v2009 = vpow.pop %v2008
        %v2010 = vmul.f32 %v1883, 1.442695
        %v2011 = vpow.pop %v2010
        %v2012 = vmul.f32 %v1884, 1.442695
        %v2013 = vpow.pop %v2012
        %v2014 = vmul.f32 %v1885, 1.442695
        %v2015 = vpow.pop %v2014
        %v2016 = vmul.f32 %v1886, 1.442695
        %v2017 = vpow.pop %v2016
        %v2018 = vmul.f32 %v1887, 1.442695
        %v2019 = vpow.pop %v2018
        %v2020 = vmul.f32 %v1888, 1.442695
        %v2021 = vpow.pop %v2020
        %v2022 = vmul.f32 %v1889, 1.442695
        %v2023 = vpow.pop %v2022
        %v2024 = vmul.f32 %v1890, 1.442695
        %v2025 = vpow.pop %v2024
        %v2026 = vmul.f32 %v1891, 1.442695
        %v2027 = vpow.pop %v2026
        %v2028 = vmul.f32 %v1892, 1.442695
        %v2029 = vpow.pop %v2028
        %v2030 = vmul.f32 %v1893, 1.442695
        %v2031 = vpow.pop %v2030
        %v2032 = vmul.f32 %v1894, 1.442695
        %v2033 = vpow.pop %v2032
        %v2034 = vmul.f32 %v1895, 1.442695
        %v2035 = vpow.pop %v2034
        %v2036 = vmul.f32 %v1896, 1.442695
        %v2037 = vpow.pop %v2036
        %v2038 = vmul.f32 %v1897, 1.442695
        %v2039 = vpow.pop %v2038
        %v2040 = vmul.f32 %v1898, 1.442695
        %v2041 = vpow.pop %v2040
        %v2042 = vmul.f32 %v1899, 1.442695
        %v2043 = vpow.pop %v2042
        %v2044 = vmul.f32 %v1901, %v540
        %v2045 = vmul.f32 %v1903, %v541
        %v2046 = vmul.f32 %v1905, %v542
        %v2047 = vmul.f32 %v1907, %v543
        %v2048 = vmul.f32 %v1909, %v544
        %v2049 = vmul.f32 %v1911, %v545
        %v2050 = vmul.f32 %v1913, %v546
        %v2051 = vmul.f32 %v1915, %v547
        %v2052 = vmul.f32 %v1917, %v548
        %v2053 = vmul.f32 %v1919, %v549
        %v2054 = vmul.f32 %v1921, %v550
        %v2055 = vmul.f32 %v1923, %v551
        %v2056 = vmul.f32 %v1925, %v552
        %v2057 = vmul.f32 %v1927, %v553
        %v2058 = vmul.f32 %v1929, %v554
        %v2059 = vmul.f32 %v1931, %v555
        %v2060 = vmul.f32 %v1933, %v556
        %v2061 = vmul.f32 %v1935, %v557
        %v2062 = vmul.f32 %v1937, %v558
        %v2063 = vmul.f32 %v1939, %v559
        %v2064 = vmul.f32 %v1941, %v560
        %v2065 = vmul.f32 %v1943, %v561
        %v2066 = vmul.f32 %v1945, %v562
        %v2067 = vmul.f32 %v1947, %v563
        %v2068 = vmul.f32 %v1949, %v564
        %v2069 = vmul.f32 %v1951, %v565
        %v2070 = vmul.f32 %v1953, %v566
        %v2071 = vmul.f32 %v1955, %v567
        %v2072 = vmul.f32 %v1957, %v568
        %v2073 = vmul.f32 %v1959, %v569
        %v2074 = vmul.f32 %v1961, %v570
        %v2075 = vmul.f32 %v1963, %v571
        %v2076 = vmul.f32 %v1965, %v572
        %v2077 = vmul.f32 %v1967, %v573
        %v2078 = vmul.f32 %v1969, %v574
        %v2079 = vmul.f32 %v1971, %v575
        %v2080 = vmul.f32 %v1973, %v576
        %v2081 = vmul.f32 %v1975, %v577
        %v2082 = vmul.f32 %v1977, %v578
        %v2083 = vmul.f32 %v1979, %v579
        %v2084 = vmul.f32 %v1981, %v580
        %v2085 = vmul.f32 %v1983, %v581
        %v2086 = vmul.f32 %v1985, %v582
        %v2087 = vmul.f32 %v1987, %v583
        %v2088 = vmul.f32 %v1989, %v584
        %v2089 = vmul.f32 %v1991, %v585
        %v2090 = vmul.f32 %v1993, %v586
        %v2091 = vmul.f32 %v1995, %v587
        %v2092 = vmul.f32 %v1997, %v588
        %v2093 = vmul.f32 %v1999, %v589
        %v2094 = vmul.f32 %v2001, %v590
        %v2095 = vmul.f32 %v2003, %v591
        %v2096 = vmul.f32 %v2005, %v592
        %v2097 = vmul.f32 %v2007, %v593
        %v2098 = vmul.f32 %v2009, %v594
        %v2099 = vmul.f32 %v2011, %v595
        %v2100 = vmul.f32 %v2013, %v596
        %v2101 = vmul.f32 %v2015, %v597
        %v2102 = vmul.f32 %v2017, %v598
        %v2103 = vmul.f32 %v2019, %v599
        %v2104 = vmul.f32 %v2021, %v600
        %v2105 = vmul.f32 %v2023, %v601
        %v2106 = vmul.f32 %v2025, %v602
        %v2107 = vmul.f32 %v2027, %v603
        %v2108 = vmul.f32 %v2029, %v604
        %v2109 = vmul.f32 %v2031, %v605
        %v2110 = vmul.f32 %v2033, %v606
        %v2111 = vmul.f32 %v2035, %v607
        %v2112 = vmul.f32 %v2037, %v608
        %v2113 = vmul.f32 %v2039, %v609
        %v2114 = vmul.f32 %v2041, %v610
        %v2115 = vmul.f32 %v2043, %v611
        %vm2116 = vcmask 130048
        %2117 = vst.msk [vmem:[#allocation2] sm:$0xff] %vm2116, %v906
        %2118 = vst.msk [vmem:[#allocation2 + $0x8] sm:$0xff] %vm2116, %v909
        %2119 = vst.msk [vmem:[#allocation2 + $0x10] sm:$0xff] %vm2116, %v914
        %2120 = vst.msk [vmem:[#allocation2 + $0x18] sm:$0xff] %vm2116, %v917
        %2121 = vst.msk [vmem:[#allocation2 + $0x20] sm:$0xff] %vm2116, %v922
        %2122 = vst.msk [vmem:[#allocation2 + $0x28] sm:$0xff] %vm2116, %v925
        %2123 = vst.msk [vmem:[#allocation2 + $0x30] sm:$0xff] %vm2116, %v930
        %2124 = vst.msk [vmem:[#allocation2 + $0x38] sm:$0xff] %vm2116, %v933
        %2125 = vst.msk [vmem:[#allocation2 + $0x40] sm:$0xff] %vm2116, %v938
        %2126 = vst.msk [vmem:[#allocation2 + $0x48] sm:$0xff] %vm2116, %v941
        %2127 = vst.msk [vmem:[#allocation2 + $0x50] sm:$0xff] %vm2116, %v946
        %2128 = vst.msk [vmem:[#allocation2 + $0x58] sm:$0xff] %vm2116, %v949
        %2129 = vst.msk [vmem:[#allocation2 + $0x60] sm:$0xff] %vm2116, %v954
        %2130 = vst.msk [vmem:[#allocation2 + $0x68] sm:$0xff] %vm2116, %v957
        %2131 = vst.msk [vmem:[#allocation2 + $0x70] sm:$0xff] %vm2116, %v962
        %2132 = vst.msk [vmem:[#allocation2 + $0x78] sm:$0xff] %vm2116, %v965
        %2133 = vst.msk [vmem:[#allocation2 + $0x80] sm:$0xff] %vm2116, %v970
        %2134 = vst.msk [vmem:[#allocation2 + $0x88] sm:$0xff] %vm2116, %v973
        %2135 = vst.msk [vmem:[#allocation2 + $0x90] sm:$0xff] %vm2116, %v978
        %2136 = vst.msk [vmem:[#allocation2 + $0x98] sm:$0xff] %vm2116, %v981
        %2137 = vst.msk [vmem:[#allocation2 + $0xa0] sm:$0xff] %vm2116, %v986
        %2138 = vst.msk [vmem:[#allocation2 + $0xa8] sm:$0xff] %vm2116, %v989
        %2139 = vst.msk [vmem:[#allocation2 + $0xb0] sm:$0xff] %vm2116, %v994
        %2140 = vst.msk [vmem:[#allocation2 + $0xb8] sm:$0xff] %vm2116, %v997
        %vm2141 = vcmask 261248
        %2142 = vst.msk [vmem:[#allocation2 + $0xc0] sm:$0xff] %vm2141, %v906
        %2143 = vst.msk [vmem:[#allocation2 + $0xc8] sm:$0xff] %vm2141, %v909
        %2144 = vst.msk [vmem:[#allocation2 + $0xd0] sm:$0xff] %vm2141, %v914
        %2145 = vst.msk [vmem:[#allocation2 + $0xd8] sm:$0xff] %vm2141, %v917
        %2146 = vst.msk [vmem:[#allocation2 + $0xe0] sm:$0xff] %vm2141, %v922
        %2147 = vst.msk [vmem:[#allocation2 + $0xe8] sm:$0xff] %vm2141, %v925
        %2148 = vst.msk [vmem:[#allocation2 + $0xf0] sm:$0xff] %vm2141, %v930
        %2149 = vst.msk [vmem:[#allocation2 + $0xf8] sm:$0xff] %vm2141, %v933
        %2150 = vst.msk [vmem:[#allocation2 + $0x100] sm:$0xff] %vm2141, %v938
        %2151 = vst.msk [vmem:[#allocation2 + $0x108] sm:$0xff] %vm2141, %v941
        %2152 = vst.msk [vmem:[#allocation2 + $0x110] sm:$0xff] %vm2141, %v946
        %2153 = vst.msk [vmem:[#allocation2 + $0x118] sm:$0xff] %vm2141, %v949
        %2154 = vst.msk [vmem:[#allocation2 + $0x120] sm:$0xff] %vm2141, %v954
        %2155 = vst.msk [vmem:[#allocation2 + $0x128] sm:$0xff] %vm2141, %v957
        %2156 = vst.msk [vmem:[#allocation2 + $0x130] sm:$0xff] %vm2141, %v962
        %2157 = vst.msk [vmem:[#allocation2 + $0x138] sm:$0xff] %vm2141, %v965
        %2158 = vst.msk [vmem:[#allocation2 + $0x140] sm:$0xff] %vm2141, %v970
        %2159 = vst.msk [vmem:[#allocation2 + $0x148] sm:$0xff] %vm2141, %v973
        %2160 = vst.msk [vmem:[#allocation2 + $0x150] sm:$0xff] %vm2141, %v978
        %2161 = vst.msk [vmem:[#allocation2 + $0x158] sm:$0xff] %vm2141, %v981
        %2162 = vst.msk [vmem:[#allocation2 + $0x160] sm:$0xff] %vm2141, %v986
        %2163 = vst.msk [vmem:[#allocation2 + $0x168] sm:$0xff] %vm2141, %v989
        %2164 = vst.msk [vmem:[#allocation2 + $0x170] sm:$0xff] %vm2141, %v994
        %2165 = vst.msk [vmem:[#allocation2 + $0x178] sm:$0xff] %vm2141, %v997
        %v2166 = vld [vmem:[#allocation2] sm:$0xff]
        %v2167 = vld [vmem:[#allocation2 + $0x8] sm:$0xff]
        %v2168 = vld [vmem:[#allocation2 + $0x10] sm:$0xff]
        %v2169 = vld [vmem:[#allocation2 + $0x18] sm:$0xff]
        %v2170 = vld [vmem:[#allocation2 + $0x20] sm:$0xff]
        %v2171 = vld [vmem:[#allocation2 + $0x28] sm:$0xff]
        %v2172 = vld [vmem:[#allocation2 + $0x30] sm:$0xff]
        %v2173 = vld [vmem:[#allocation2 + $0x38] sm:$0xff]
        %v2174 = vld [vmem:[#allocation2 + $0x40] sm:$0xff]
        %v2175 = vld [vmem:[#allocation2 + $0x48] sm:$0xff]
        %v2176 = vld [vmem:[#allocation2 + $0x50] sm:$0xff]
        %v2177 = vld [vmem:[#allocation2 + $0x58] sm:$0xff]
        %v2178 = vld [vmem:[#allocation2 + $0x60] sm:$0xff]
        %v2179 = vld [vmem:[#allocation2 + $0x68] sm:$0xff]
        %v2180 = vld [vmem:[#allocation2 + $0x70] sm:$0xff]
        %v2181 = vld [vmem:[#allocation2 + $0x78] sm:$0xff]
        %v2182 = vld [vmem:[#allocation2 + $0x80] sm:$0xff]
        %v2183 = vld [vmem:[#allocation2 + $0x88] sm:$0xff]
        %v2184 = vld [vmem:[#allocation2 + $0x90] sm:$0xff]
        %v2185 = vld [vmem:[#allocation2 + $0x98] sm:$0xff]
        %v2186 = vld [vmem:[#allocation2 + $0xa0] sm:$0xff]
        %v2187 = vld [vmem:[#allocation2 + $0xa8] sm:$0xff]
        %v2188 = vld [vmem:[#allocation2 + $0xb0] sm:$0xff]
        %v2189 = vld [vmem:[#allocation2 + $0xb8] sm:$0xff]
        %v2190 = vld [vmem:[#allocation2 + $0xc0] sm:$0xff]
        %v2191 = vld [vmem:[#allocation2 + $0xc8] sm:$0xff]
        %v2192 = vld [vmem:[#allocation2 + $0xd0] sm:$0xff]
        %v2193 = vld [vmem:[#allocation2 + $0xd8] sm:$0xff]
        %v2194 = vld [vmem:[#allocation2 + $0xe0] sm:$0xff]
        %v2195 = vld [vmem:[#allocation2 + $0xe8] sm:$0xff]
        %v2196 = vld [vmem:[#allocation2 + $0xf0] sm:$0xff]
        %v2197 = vld [vmem:[#allocation2 + $0xf8] sm:$0xff]
        %v2198 = vld [vmem:[#allocation2 + $0x100] sm:$0xff]
        %v2199 = vld [vmem:[#allocation2 + $0x108] sm:$0xff]
        %v2200 = vld [vmem:[#allocation2 + $0x110] sm:$0xff]
        %v2201 = vld [vmem:[#allocation2 + $0x118] sm:$0xff]
        %v2202 = vld [vmem:[#allocation2 + $0x120] sm:$0xff]
        %v2203 = vld [vmem:[#allocation2 + $0x128] sm:$0xff]
        %v2204 = vld [vmem:[#allocation2 + $0x130] sm:$0xff]
        %v2205 = vld [vmem:[#allocation2 + $0x138] sm:$0xff]
        %v2206 = vld [vmem:[#allocation2 + $0x140] sm:$0xff]
        %v2207 = vld [vmem:[#allocation2 + $0x148] sm:$0xff]
        %v2208 = vld [vmem:[#allocation2 + $0x150] sm:$0xff]
        %v2209 = vld [vmem:[#allocation2 + $0x158] sm:$0xff]
        %v2210 = vld [vmem:[#allocation2 + $0x160] sm:$0xff]
        %v2211 = vld [vmem:[#allocation2 + $0x168] sm:$0xff]
        %v2212 = vld [vmem:[#allocation2 + $0x170] sm:$0xff]
        %v2213 = vld [vmem:[#allocation2 + $0x178] sm:$0xff]
        %2214 = vmatprep.subr.mxu0 0.0
        %2215 = vmatpush1.msra.mxu0 %v2166
        %2216 = vmatprep.subr.mxu0 0.0
        %2217 = vmatpush1.msra.mxu0 %v2167
        %2218 = vmatprep.subr.mxu0 0.0
        %2219 = vmatpush1.msra.mxu0 %v2168
        %2220 = vmatprep.subr.mxu0 0.0
        %2221 = vmatpush1.msra.mxu0 %v2169
        %2222 = vmatprep.subr.mxu0 0.0
        %2223 = vmatpush1.msra.mxu0 %v2170
        %2224 = vmatprep.subr.mxu0 0.0
        %2225 = vmatpush1.msra.mxu0 %v2171
        %2226 = vmatprep.subr.mxu0 0.0
        %2227 = vmatpush1.msra.mxu0 %v2172
        %2228 = vmatprep.subr.mxu0 0.0
        %2229 = vmatpush1.msra.mxu0 %v2173
        %2230 = vmatprep.subr.mxu0 0.0
        %2231 = vmatpush1.msra.mxu0 %v2174
        %2232 = vmatprep.subr.mxu0 0.0
        %2233 = vmatpush1.msra.mxu0 %v2175
        %2234 = vmatprep.subr.mxu0 0.0
        %2235 = vmatpush1.msra.mxu0 %v2176
        %2236 = vmatprep.subr.mxu0 0.0
        %2237 = vmatpush1.msra.mxu0 %v2177
        %2238 = vmatprep.subr.mxu0 0.0
        %2239 = vmatpush1.msra.mxu0 %v2178
        %2240 = vmatprep.subr.mxu0 0.0
        %2241 = vmatpush1.msra.mxu0 %v2179
        %2242 = vmatprep.subr.mxu0 0.0
        %2243 = vmatpush1.msra.mxu0 %v2180
        %2244 = vmatprep.subr.mxu0 0.0
        %2245 = vmatpush1.msra.mxu0 %v2181
        %2246 = vmatprep.subr.mxu0 0.0
        %2247 = vmatpush1.msra.mxu0 %v2182
        %2248 = vmatprep.subr.mxu0 0.0
        %2249 = vmatpush1.msra.mxu0 %v2183
        %2250 = vmatprep.subr.mxu0 0.0
        %2251 = vmatpush1.msra.mxu0 %v2184
        %2252 = vmatprep.subr.mxu0 0.0
        %2253 = vmatpush1.msra.mxu0 %v2185
        %2254 = vmatprep.subr.mxu0 0.0
        %2255 = vmatpush1.msra.mxu0 %v2186
        %2256 = vmatprep.subr.mxu0 0.0
        %2257 = vmatpush1.msra.mxu0 %v2187
        %2258 = vmatprep.subr.mxu0 0.0
        %2259 = vmatpush1.msra.mxu0 %v2188
        %2260 = vmatprep.subr.mxu0 0.0
        %2261 = vmatpush1.msra.mxu0 %v2189
        %2262 = vmatprep.subr.mxu0 0.0
        %2263 = vmatpush1.msra.mxu0 %v2190
        %2264 = vmatprep.subr.mxu0 0.0
        %2265 = vmatpush1.msra.mxu0 %v2191
        %2266 = vmatprep.subr.mxu0 0.0
        %2267 = vmatpush1.msra.mxu0 %v2192
        %2268 = vmatprep.subr.mxu0 0.0
        %2269 = vmatpush1.msra.mxu0 %v2193
        %2270 = vmatprep.subr.mxu0 0.0
        %2271 = vmatpush1.msra.mxu0 %v2194
        %2272 = vmatprep.subr.mxu0 0.0
        %2273 = vmatpush1.msra.mxu0 %v2195
        %2274 = vmatprep.subr.mxu0 0.0
        %2275 = vmatpush1.msra.mxu0 %v2196
        %2276 = vmatprep.subr.mxu0 0.0
        %2277 = vmatpush1.msra.mxu0 %v2197
        %2278 = vmatprep.mubr.f32.mxu0 %v2045
        %2279 = vmatmul.mubr.f32.gmra.mrb[0].mxu0 %v2044
        %v2280 = vpop.f32.mrb[0].mxu0
        %v2281 = vadd.f32 0.0, %v2280
        %v2282 = vpop.f32.mrb[0].mxu0
        %2283 = vmatprep.mubr.f32.mxu0 %v2048
        %2284 = vmatmul.mubr.f32.gmra.mrb[0].mxu0 %v2047
        %v2285 = vpop.f32.mrb[0].mxu0
        %v2286 = vadd.f32 0.0, %v2285
        %v2287 = vpop.f32.mrb[0].mxu0
        %2288 = vmatprep.mubr.f32.mxu0 %v2051
        %2289 = vmatmul.mubr.f32.gmra.mrb[0].mxu0 %v2050
        %v2290 = vpop.f32.mrb[0].mxu0
        %v2291 = vadd.f32 0.0, %v2290
        %v2292 = vpop.f32.mrb[0].mxu0
        %2293 = vmatprep.mubr.f32.mxu0 %v2054
        %2294 = vmatmul.mubr.f32.gmra.mrb[0].mxu0 %v2053
        %v2295 = vpop.f32.mrb[0].mxu0
        %v2296 = vadd.f32 0.0, %v2295
        %v2297 = vpop.f32.mrb[0].mxu0
        %2298 = vmatprep.mubr.f32.mxu0 %v2057
        %2299 = vmatmul.mubr.f32.gmra.mrb[0].mxu0 %v2056
        %v2300 = vpop.f32.mrb[0].mxu0
        %v2301 = vadd.f32 0.0, %v2300
        %v2302 = vpop.f32.mrb[0].mxu0
        %2303 = vmatprep.mubr.f32.mxu0 %v2060
        %2304 = vmatmul.mubr.f32.gmra.mrb[0].mxu0 %v2059
        %v2305 = vpop.f32.mrb[0].mxu0
        %v2306 = vadd.f32 0.0, %v2305
        %v2307 = vpop.f32.mrb[0].mxu0
        %2308 = vmatprep.mubr.f32.mxu0 %v2063
        %2309 = vmatmul.mubr.f32.gmra.mrb[0].mxu0 %v2062
        %v2310 = vpop.f32.mrb[0].mxu0
        %v2311 = vadd.f32 0.0, %v2310
        %v2312 = vpop.f32.mrb[0].mxu0
        %2313 = vmatprep.mubr.f32.mxu0 %v2066
        %2314 = vmatmul.mubr.f32.gmra.mrb[0].mxu0 %v2065
        %v2315 = vpop.f32.mrb[0].mxu0
        %v2316 = vadd.f32 0.0, %v2315
        %v2317 = vpop.f32.mrb[0].mxu0
        %2318 = vmatprep.mubr.f32.mxu0 %v2069
        %2319 = vmatmul.mubr.f32.gmra.mrb[0].mxu0 %v2068
        %v2320 = vpop.f32.mrb[0].mxu0
        %v2321 = vadd.f32 0.0, %v2320
        %v2322 = vpop.f32.mrb[0].mxu0
        %2323 = vmatprep.mubr.f32.mxu0 %v2072
        %2324 = vmatmul.mubr.f32.gmra.mrb[0].mxu0 %v2071
        %v2325 = vpop.f32.mrb[0].mxu0
        %v2326 = vadd.f32 0.0, %v2325
        %v2327 = vpop.f32.mrb[0].mxu0
        %2328 = vmatprep.mubr.f32.mxu0 %v2075
        %2329 = vmatmul.mubr.f32.gmra.mrb[0].mxu0 %v2074
        %v2330 = vpop.f32.mrb[0].mxu0
        %v2331 = vadd.f32 0.0, %v2330
        %v2332 = vpop.f32.mrb[0].mxu0
        %2333 = vmatprep.mubr.f32.mxu0 %v2078
        %2334 = vmatmul.mubr.f32.gmra.mrb[0].mxu0 %v2077
        %v2335 = vpop.f32.mrb[0].mxu0
        %v2336 = vadd.f32 0.0, %v2335
        %v2337 = vpop.f32.mrb[0].mxu0
        %2338 = vmatprep.mubr.f32.mxu0 %v2081
        %2339 = vmatmul.mubr.f32.gmra.mrb[0].mxu0 %v2080
        %v2340 = vpop.f32.mrb[0].mxu0
        %v2341 = vadd.f32 0.0, %v2340
        %v2342 = vpop.f32.mrb[0].mxu0
        %2343 = vmatprep.mubr.f32.mxu0 %v2084
        %2344 = vmatmul.mubr.f32.gmra.mrb[0].mxu0 %v2083
        %v2345 = vpop.f32.mrb[0].mxu0
        %v2346 = vadd.f32 0.0, %v2345
        %v2347 = vpop.f32.mrb[0].mxu0
        %2348 = vmatprep.mubr.f32.mxu0 %v2087
        %2349 = vmatmul.mubr.f32.gmra.mrb[0].mxu0 %v2086
        %v2350 = vpop.f32.mrb[0].mxu0
        %v2351 = vadd.f32 0.0, %v2350
        %v2352 = vpop.f32.mrb[0].mxu0
        %2353 = vmatprep.mubr.f32.mxu0 %v2090
        %2354 = vmatmul.mubr.f32.gmra.mrb[0].mxu0 %v2089
        %v2355 = vpop.f32.mrb[0].mxu0
        %v2356 = vadd.f32 0.0, %v2355
        %v2357 = vpop.f32.mrb[0].mxu0
        %2358 = vmatprep.mubr.f32.mxu0 %v2093
        %2359 = vmatmul.mubr.f32.gmra.mrb[0].mxu0 %v2092
        %v2360 = vpop.f32.mrb[0].mxu0
        %v2361 = vadd.f32 0.0, %v2360
        %v2362 = vpop.f32.mrb[0].mxu0
        %2363 = vmatprep.mubr.f32.mxu0 %v2096
        %2364 = vmatmul.mubr.f32.gmra.mrb[0].mxu0 %v2095
        %v2365 = vpop.f32.mrb[0].mxu0
        %v2366 = vadd.f32 0.0, %v2365
        %v2367 = vpop.f32.mrb[0].mxu0
        %2368 = vmatprep.mubr.f32.mxu0 %v2099
        %2369 = vmatmul.mubr.f32.gmra.mrb[0].mxu0 %v2098
        %v2370 = vpop.f32.mrb[0].mxu0
        %v2371 = vadd.f32 0.0, %v2370
        %v2372 = vpop.f32.mrb[0].mxu0
        %2373 = vmatprep.mubr.f32.mxu0 %v2102
        %2374 = vmatmul.mubr.f32.gmra.mrb[0].mxu0 %v2101
        %v2375 = vpop.f32.mrb[0].mxu0
        %v2376 = vadd.f32 0.0, %v2375
        %v2377 = vpop.f32.mrb[0].mxu0
        %2378 = vmatprep.mubr.f32.mxu0 %v2105
        %2379 = vmatmul.mubr.f32.gmra.mrb[0].mxu0 %v2104
        %v2380 = vpop.f32.mrb[0].mxu0
        %v2381 = vadd.f32 0.0, %v2380
        %v2382 = vpop.f32.mrb[0].mxu0
        %2383 = vmatprep.mubr.f32.mxu0 %v2108
        %2384 = vmatmul.mubr.f32.gmra.mrb[0].mxu0 %v2107
        %v2385 = vpop.f32.mrb[0].mxu0
        %v2386 = vadd.f32 0.0, %v2385
        %v2387 = vpop.f32.mrb[0].mxu0
        %2388 = vmatprep.mubr.f32.mxu0 %v2111
        %2389 = vmatmul.mubr.f32.gmra.mrb[0].mxu0 %v2110
        %v2390 = vpop.f32.mrb[0].mxu0
        %v2391 = vadd.f32 0.0, %v2390
        %v2392 = vpop.f32.mrb[0].mxu0
        %2393 = vmatprep.mubr.f32.mxu0 %v2114
        %2394 = vmatmul.mubr.f32.gmra.mrb[0].mxu0 %v2113
        %v2395 = vpop.f32.mrb[0].mxu0
        %v2396 = vadd.f32 0.0, %v2395
        %v2397 = vpop.f32.mrb[0].mxu0
        %2398 = vdwg.mxu0
        %2399 = vmatprep.subr.mxu0 0.0
        %2400 = vmatpush1.msra.mxu0 %v2198
        %2401 = vmatprep.subr.mxu0 0.0
        %2402 = vmatpush1.msra.mxu0 %v2199
        %2403 = vmatprep.subr.mxu0 0.0
        %2404 = vmatpush1.msra.mxu0 %v2200
        %2405 = vmatprep.subr.mxu0 0.0
        %2406 = vmatpush1.msra.mxu0 %v2201
        %2407 = vmatprep.subr.mxu0 0.0
        %2408 = vmatpush1.msra.mxu0 %v2202
        %2409 = vmatprep.subr.mxu0 0.0
        %2410 = vmatpush1.msra.mxu0 %v2203
        %2411 = vmatprep.subr.mxu0 0.0
        %2412 = vmatpush1.msra.mxu0 %v2204
        %2413 = vmatprep.subr.mxu0 0.0
        %2414 = vmatpush1.msra.mxu0 %v2205
        %2415 = vmatprep.subr.mxu0 0.0
        %2416 = vmatpush1.msra.mxu0 %v2206
        %2417 = vmatprep.subr.mxu0 0.0
        %2418 = vmatpush1.msra.mxu0 %v2207
        %2419 = vmatprep.subr.mxu0 0.0
        %2420 = vmatpush1.msra.mxu0 %v2208
        %2421 = vmatprep.subr.mxu0 0.0
        %2422 = vmatpush1.msra.mxu0 %v2209
        %2423 = vmatprep.subr.mxu0 0.0
        %2424 = vmatpush1.msra.mxu0 %v2210
        %2425 = vmatprep.subr.mxu0 0.0
        %2426 = vmatpush1.msra.mxu0 %v2211
        %2427 = vmatprep.subr.mxu0 0.0
        %2428 = vmatpush1.msra.mxu0 %v2212
        %2429 = vmatprep.subr.mxu0 0.0
        %2430 = vmatpush1.msra.mxu0 %v2213
        %2431 = vmatprep.subr.mxu0 0.0
        %2432 = vmatpush1.msra.mxu0 0.0
        %2433 = vmatprep.subr.mxu0 0.0
        %2434 = vmatpush1.msra.mxu0 0.0
        %2435 = vmatprep.subr.mxu0 0.0
        %2436 = vmatpush1.msra.mxu0 0.0
        %2437 = vmatprep.subr.mxu0 0.0
        %2438 = vmatpush1.msra.mxu0 0.0
        %2439 = vmatprep.subr.mxu0 0.0
        %2440 = vmatpush1.msra.mxu0 0.0
        %2441 = vmatprep.subr.mxu0 0.0
        %2442 = vmatpush1.msra.mxu0 0.0
        %2443 = vmatprep.subr.mxu0 0.0
        %2444 = vmatpush1.msra.mxu0 0.0
        %2445 = vmatprep.subr.mxu0 0.0
        %2446 = vmatpush1.msra.mxu0 0.0
        %2447 = vmatprep.subr.mxu0 0.0
        %2448 = vmatpush1.msra.mxu0 0.0
        %2449 = vmatprep.subr.mxu0 0.0
        %2450 = vmatpush1.msra.mxu0 0.0
        %2451 = vmatprep.subr.mxu0 0.0
        %2452 = vmatpush1.msra.mxu0 0.0
        %2453 = vmatprep.subr.mxu0 0.0
        %2454 = vmatpush1.msra.mxu0 0.0
        %2455 = vmatprep.subr.mxu0 0.0
        %2456 = vmatpush1.msra.mxu0 0.0
        %2457 = vmatprep.subr.mxu0 0.0
        %2458 = vmatpush1.msra.mxu0 0.0
        %2459 = vmatprep.subr.mxu0 0.0
        %2460 = vmatpush1.msra.mxu0 0.0
        %2461 = vmatprep.subr.mxu0 0.0
        %2462 = vmatpush1.msra.mxu0 0.0
        %2463 = vmatprep.mubr.f32.mxu0 0.0
        %2464 = vmatmul.mubr.f32.gmra.mrb[0].mxu0 %v2046
        %v2465 = vpop.f32.mrb[0].mxu0
        %v2466 = vadd.f32 %v2281, %v2465
        %v2467 = vpop.f32.mrb[0].mxu0
        %2468 = vmatprep.mubr.f32.mxu0 0.0
        %2469 = vmatmul.mubr.f32.gmra.mrb[0].mxu0 %v2049
        %v2470 = vpop.f32.mrb[0].mxu0
        %v2471 = vadd.f32 %v2286, %v2470
        %v2472 = vpop.f32.mrb[0].mxu0
        %2473 = vmatprep.mubr.f32.mxu0 0.0
        %2474 = vmatmul.mubr.f32.gmra.mrb[0].mxu0 %v2052
        %v2475 = vpop.f32.mrb[0].mxu0
        %v2476 = vadd.f32 %v2291, %v2475
        %v2477 = vpop.f32.mrb[0].mxu0
        %2478 = vmatprep.mubr.f32.mxu0 0.0
        %2479 = vmatmul.mubr.f32.gmra.mrb[0].mxu0 %v2055
        %v2480 = vpop.f32.mrb[0].mxu0
        %v2481 = vadd.f32 %v2296, %v2480
        %v2482 = vpop.f32.mrb[0].mxu0
        %2483 = vmatprep.mubr.f32.mxu0 0.0
        %2484 = vmatmul.mubr.f32.gmra.mrb[0].mxu0 %v2058
        %v2485 = vpop.f32.mrb[0].mxu0
        %v2486 = vadd.f32 %v2301, %v2485
        %v2487 = vpop.f32.mrb[0].mxu0
        %2488 = vmatprep.mubr.f32.mxu0 0.0
        %2489 = vmatmul.mubr.f32.gmra.mrb[0].mxu0 %v2061
        %v2490 = vpop.f32.mrb[0].mxu0
        %v2491 = vadd.f32 %v2306, %v2490
        %v2492 = vpop.f32.mrb[0].mxu0
        %2493 = vmatprep.mubr.f32.mxu0 0.0
        %2494 = vmatmul.mubr.f32.gmra.mrb[0].mxu0 %v2064
        %v2495 = vpop.f32.mrb[0].mxu0
        %v2496 = vadd.f32 %v2311, %v2495
        %v2497 = vpop.f32.mrb[0].mxu0
        %2498 = vmatprep.mubr.f32.mxu0 0.0
        %2499 = vmatmul.mubr.f32.gmra.mrb[0].mxu0 %v2067
        %v2500 = vpop.f32.mrb[0].mxu0
        %v2501 = vadd.f32 %v2316, %v2500
        %v2502 = vpop.f32.mrb[0].mxu0
        %2503 = vmatprep.mubr.f32.mxu0 0.0
        %2504 = vmatmul.mubr.f32.gmra.mrb[0].mxu0 %v2070
        %v2505 = vpop.f32.mrb[0].mxu0
        %v2506 = vadd.f32 %v2321, %v2505
        %v2507 = vpop.f32.mrb[0].mxu0
        %2508 = vmatprep.mubr.f32.mxu0 0.0
        %2509 = vmatmul.mubr.f32.gmra.mrb[0].mxu0 %v2073
        %v2510 = vpop.f32.mrb[0].mxu0
        %v2511 = vadd.f32 %v2326, %v2510
        %v2512 = vpop.f32.mrb[0].mxu0
        %2513 = vmatprep.mubr.f32.mxu0 0.0
        %2514 = vmatmul.mubr.f32.gmra.mrb[0].mxu0 %v2076
        %v2515 = vpop.f32.mrb[0].mxu0
        %v2516 = vadd.f32 %v2331, %v2515
        %v2517 = vpop.f32.mrb[0].mxu0
        %2518 = vmatprep.mubr.f32.mxu0 0.0
        %2519 = vmatmul.mubr.f32.gmra.mrb[0].mxu0 %v2079
        %v2520 = vpop.f32.mrb[0].mxu0
        %v2521 = vadd.f32 %v2336, %v2520
        %v2522 = vpop.f32.mrb[0].mxu0
        %2523 = vmatprep.mubr.f32.mxu0 0.0
        %2524 = vmatmul.mubr.f32.gmra.mrb[0].mxu0 %v2082
        %v2525 = vpop.f32.mrb[0].mxu0
        %v2526 = vadd.f32 %v2341, %v2525
        %v2527 = vpop.f32.mrb[0].mxu0
        %2528 = vmatprep.mubr.f32.mxu0 0.0
        %2529 = vmatmul.mubr.f32.gmra.mrb[0].mxu0 %v2085
        %v2530 = vpop.f32.mrb[0].mxu0
        %v2531 = vadd.f32 %v2346, %v2530
        %v2532 = vpop.f32.mrb[0].mxu0
        %2533 = vmatprep.mubr.f32.mxu0 0.0
        %2534 = vmatmul.mubr.f32.gmra.mrb[0].mxu0 %v2088
        %v2535 = vpop.f32.mrb[0].mxu0
        %v2536 = vadd.f32 %v2351, %v2535
        %v2537 = vpop.f32.mrb[0].mxu0
        %2538 = vmatprep.mubr.f32.mxu0 0.0
        %2539 = vmatmul.mubr.f32.gmra.mrb[0].mxu0 %v2091
        %v2540 = vpop.f32.mrb[0].mxu0
        %v2541 = vadd.f32 %v2356, %v2540
        %v2542 = vpop.f32.mrb[0].mxu0
        %2543 = vmatprep.mubr.f32.mxu0 0.0
        %2544 = vmatmul.mubr.f32.gmra.mrb[0].mxu0 %v2094
        %v2545 = vpop.f32.mrb[0].mxu0
        %v2546 = vadd.f32 %v2361, %v2545
        %v2547 = vpop.f32.mrb[0].mxu0
        %2548 = vmatprep.mubr.f32.mxu0 0.0
        %2549 = vmatmul.mubr.f32.gmra.mrb[0].mxu0 %v2097
        %v2550 = vpop.f32.mrb[0].mxu0
        %v2551 = vadd.f32 %v2366, %v2550
        %v2552 = vpop.f32.mrb[0].mxu0
        %2553 = vmatprep.mubr.f32.mxu0 0.0
        %2554 = vmatmul.mubr.f32.gmra.mrb[0].mxu0 %v2100
        %v2555 = vpop.f32.mrb[0].mxu0
        %v2556 = vadd.f32 %v2371, %v2555
        %v2557 = vpop.f32.mrb[0].mxu0
        %2558 = vmatprep.mubr.f32.mxu0 0.0
        %2559 = vmatmul.mubr.f32.gmra.mrb[0].mxu0 %v2103
        %v2560 = vpop.f32.mrb[0].mxu0
        %v2561 = vadd.f32 %v2376, %v2560
        %v2562 = vpop.f32.mrb[0].mxu0
        %2563 = vmatprep.mubr.f32.mxu0 0.0
        %2564 = vmatmul.mubr.f32.gmra.mrb[0].mxu0 %v2106
        %v2565 = vpop.f32.mrb[0].mxu0
        %v2566 = vadd.f32 %v2381, %v2565
        %v2567 = vpop.f32.mrb[0].mxu0
        %2568 = vmatprep.mubr.f32.mxu0 0.0
        %2569 = vmatmul.mubr.f32.gmra.mrb[0].mxu0 %v2109
        %v2570 = vpop.f32.mrb[0].mxu0
        %v2571 = vadd.f32 %v2386, %v2570
        %v2572 = vpop.f32.mrb[0].mxu0
        %2573 = vmatprep.mubr.f32.mxu0 0.0
        %2574 = vmatmul.mubr.f32.gmra.mrb[0].mxu0 %v2112
        %v2575 = vpop.f32.mrb[0].mxu0
        %v2576 = vadd.f32 %v2391, %v2575
        %v2577 = vpop.f32.mrb[0].mxu0
        %2578 = vmatprep.mubr.f32.mxu0 0.0
        %2579 = vmatmul.mubr.f32.gmra.mrb[0].mxu0 %v2115
        %v2580 = vpop.f32.mrb[0].mxu0
        %v2581 = vadd.f32 %v2396, %v2580
        %v2582 = vpop.f32.mrb[0].mxu0
        %2583 = vdwg.mxu0
        %v2584 = vrcp.pop %v2466
        %v2585 = vrcp.pop %v2471
        %v2586 = vrcp.pop %v2476
        %v2587 = vrcp.pop %v2481
        %v2588 = vrcp.pop %v2486
        %v2589 = vrcp.pop %v2491
        %v2590 = vrcp.pop %v2496
        %v2591 = vrcp.pop %v2501
        %v2592 = vrcp.pop %v2506
        %v2593 = vrcp.pop %v2511
        %v2594 = vrcp.pop %v2516
        %v2595 = vrcp.pop %v2521
        %v2596 = vrcp.pop %v2526
        %v2597 = vrcp.pop %v2531
        %v2598 = vrcp.pop %v2536
        %v2599 = vrcp.pop %v2541
        %v2600 = vrcp.pop %v2546
        %v2601 = vrcp.pop %v2551
        %v2602 = vrcp.pop %v2556
        %v2603 = vrcp.pop %v2561
        %v2604 = vrcp.pop %v2566
        %v2605 = vrcp.pop %v2571
        %v2606 = vrcp.pop %v2576
        %v2607 = vrcp.pop %v2581
        %2609 = vset.pattern.permute.xlu0 32
        %2610 = vperm.xlu0 %2609, %v2584
        %v2611 = vpop.permute.xlu0 %2610
        %2614 = vset.pattern.permute.xlu0 32
        %2615 = vperm.xlu0 %2614, %v2585
        %v2616 = vpop.permute.xlu0 %2615
        %2619 = vset.pattern.permute.xlu0 32
        %2620 = vperm.xlu0 %2619, %v2586
        %v2621 = vpop.permute.xlu0 %2620
        %2624 = vset.pattern.permute.xlu0 32
        %2625 = vperm.xlu0 %2624, %v2587
        %v2626 = vpop.permute.xlu0 %2625
        %2629 = vset.pattern.permute.xlu0 32
        %2630 = vperm.xlu0 %2629, %v2588
        %v2631 = vpop.permute.xlu0 %2630
        %2634 = vset.pattern.permute.xlu0 32
        %2635 = vperm.xlu0 %2634, %v2589
        %v2636 = vpop.permute.xlu0 %2635
        %2639 = vset.pattern.permute.xlu0 32
        %2640 = vperm.xlu0 %2639, %v2590
        %v2641 = vpop.permute.xlu0 %2640
        %2644 = vset.pattern.permute.xlu0 32
        %2645 = vperm.xlu0 %2644, %v2591
        %v2646 = vpop.permute.xlu0 %2645
        %2649 = vset.pattern.permute.xlu0 32
        %2650 = vperm.xlu0 %2649, %v2592
        %v2651 = vpop.permute.xlu0 %2650
        %2654 = vset.pattern.permute.xlu0 32
        %2655 = vperm.xlu0 %2654, %v2593
        %v2656 = vpop.permute.xlu0 %2655
        %2659 = vset.pattern.permute.xlu0 32
        %2660 = vperm.xlu0 %2659, %v2594
        %v2661 = vpop.permute.xlu0 %2660
        %2664 = vset.pattern.permute.xlu0 32
        %2665 = vperm.xlu0 %2664, %v2595
        %v2666 = vpop.permute.xlu0 %2665
        %2669 = vset.pattern.permute.xlu0 32
        %2670 = vperm.xlu0 %2669, %v2596
        %v2671 = vpop.permute.xlu0 %2670
        %2674 = vset.pattern.permute.xlu0 32
        %2675 = vperm.xlu0 %2674, %v2597
        %v2676 = vpop.permute.xlu0 %2675
        %2679 = vset.pattern.permute.xlu0 32
        %2680 = vperm.xlu0 %2679, %v2598
        %v2681 = vpop.permute.xlu0 %2680
        %2684 = vset.pattern.permute.xlu0 32
        %2685 = vperm.xlu0 %2684, %v2599
        %v2686 = vpop.permute.xlu0 %2685
        %2689 = vset.pattern.permute.xlu0 32
        %2690 = vperm.xlu0 %2689, %v2600
        %v2691 = vpop.permute.xlu0 %2690
        %2694 = vset.pattern.permute.xlu0 32
        %2695 = vperm.xlu0 %2694, %v2601
        %v2696 = vpop.permute.xlu0 %2695
        %2699 = vset.pattern.permute.xlu0 32
        %2700 = vperm.xlu0 %2699, %v2602
        %v2701 = vpop.permute.xlu0 %2700
        %2704 = vset.pattern.permute.xlu0 32
        %2705 = vperm.xlu0 %2704, %v2603
        %v2706 = vpop.permute.xlu0 %2705
        %2709 = vset.pattern.permute.xlu0 32
        %2710 = vperm.xlu0 %2709, %v2604
        %v2711 = vpop.permute.xlu0 %2710
        %2714 = vset.pattern.permute.xlu0 32
        %2715 = vperm.xlu0 %2714, %v2605
        %v2716 = vpop.permute.xlu0 %2715
        %2719 = vset.pattern.permute.xlu0 32
        %2720 = vperm.xlu0 %2719, %v2606
        %v2721 = vpop.permute.xlu0 %2720
        %2724 = vset.pattern.permute.xlu0 32
        %2725 = vperm.xlu0 %2724, %v2607
        %v2726 = vpop.permute.xlu0 %2725
        %2728 = vset.pattern.permute.xlu0 33
        %2729 = vperm.xlu0 %2728, %v2584
        %v2730 = vpop.permute.xlu0 %2729
        %2732 = vset.pattern.permute.xlu0 33
        %2733 = vperm.xlu0 %2732, %v2585
        %v2734 = vpop.permute.xlu0 %2733
        %2736 = vset.pattern.permute.xlu0 33
        %2737 = vperm.xlu0 %2736, %v2586
        %v2738 = vpop.permute.xlu0 %2737
        %2740 = vset.pattern.permute.xlu0 33
        %2741 = vperm.xlu0 %2740, %v2587
        %v2742 = vpop.permute.xlu0 %2741
        %2744 = vset.pattern.permute.xlu0 33
        %2745 = vperm.xlu0 %2744, %v2588
        %v2746 = vpop.permute.xlu0 %2745
        %2748 = vset.pattern.permute.xlu0 33
        %2749 = vperm.xlu0 %2748, %v2589
        %v2750 = vpop.permute.xlu0 %2749
        %2752 = vset.pattern.permute.xlu0 33
        %2753 = vperm.xlu0 %2752, %v2590
        %v2754 = vpop.permute.xlu0 %2753
        %2756 = vset.pattern.permute.xlu0 33
        %2757 = vperm.xlu0 %2756, %v2591
        %v2758 = vpop.permute.xlu0 %2757
        %2760 = vset.pattern.permute.xlu0 33
        %2761 = vperm.xlu0 %2760, %v2592
        %v2762 = vpop.permute.xlu0 %2761
        %2764 = vset.pattern.permute.xlu0 33
        %2765 = vperm.xlu0 %2764, %v2593
        %v2766 = vpop.permute.xlu0 %2765
        %2768 = vset.pattern.permute.xlu0 33
        %2769 = vperm.xlu0 %2768, %v2594
        %v2770 = vpop.permute.xlu0 %2769
        %2772 = vset.pattern.permute.xlu0 33
        %2773 = vperm.xlu0 %2772, %v2595
        %v2774 = vpop.permute.xlu0 %2773
        %2776 = vset.pattern.permute.xlu0 33
        %2777 = vperm.xlu0 %2776, %v2596
        %v2778 = vpop.permute.xlu0 %2777
        %2780 = vset.pattern.permute.xlu0 33
        %2781 = vperm.xlu0 %2780, %v2597
        %v2782 = vpop.permute.xlu0 %2781
        %2784 = vset.pattern.permute.xlu0 33
        %2785 = vperm.xlu0 %2784, %v2598
        %v2786 = vpop.permute.xlu0 %2785
        %2788 = vset.pattern.permute.xlu0 33
        %2789 = vperm.xlu0 %2788, %v2599
        %v2790 = vpop.permute.xlu0 %2789
        %2792 = vset.pattern.permute.xlu0 33
        %2793 = vperm.xlu0 %2792, %v2600
        %v2794 = vpop.permute.xlu0 %2793
        %2796 = vset.pattern.permute.xlu0 33
        %2797 = vperm.xlu0 %2796, %v2601
        %v2798 = vpop.permute.xlu0 %2797
        %2800 = vset.pattern.permute.xlu0 33
        %2801 = vperm.xlu0 %2800, %v2602
        %v2802 = vpop.permute.xlu0 %2801
        %2804 = vset.pattern.permute.xlu0 33
        %2805 = vperm.xlu0 %2804, %v2603
        %v2806 = vpop.permute.xlu0 %2805
        %2808 = vset.pattern.permute.xlu0 33
        %2809 = vperm.xlu0 %2808, %v2604
        %v2810 = vpop.permute.xlu0 %2809
        %2812 = vset.pattern.permute.xlu0 33
        %2813 = vperm.xlu0 %2812, %v2605
        %v2814 = vpop.permute.xlu0 %2813
        %2816 = vset.pattern.permute.xlu0 33
        %2817 = vperm.xlu0 %2816, %v2606
        %v2818 = vpop.permute.xlu0 %2817
        %2820 = vset.pattern.permute.xlu0 33
        %2821 = vperm.xlu0 %2820, %v2607
        %v2822 = vpop.permute.xlu0 %2821
        %v2824 = vsel %vm2116, %v2611, %v2730
        %v2825 = vsel %vm2116, %v2616, %v2734
        %v2826 = vsel %vm2116, %v2621, %v2738
        %v2827 = vsel %vm2116, %v2626, %v2742
        %v2828 = vsel %vm2116, %v2631, %v2746
        %v2829 = vsel %vm2116, %v2636, %v2750
        %v2830 = vsel %vm2116, %v2641, %v2754
        %v2831 = vsel %vm2116, %v2646, %v2758
        %v2832 = vsel %vm2116, %v2651, %v2762
        %v2833 = vsel %vm2116, %v2656, %v2766
        %v2834 = vsel %vm2116, %v2661, %v2770
        %v2835 = vsel %vm2116, %v2666, %v2774
        %v2836 = vsel %vm2116, %v2671, %v2778
        %v2837 = vsel %vm2116, %v2676, %v2782
        %v2838 = vsel %vm2116, %v2681, %v2786
        %v2839 = vsel %vm2116, %v2686, %v2790
        %v2840 = vsel %vm2116, %v2691, %v2794
        %v2841 = vsel %vm2116, %v2696, %v2798
        %v2842 = vsel %vm2116, %v2701, %v2802
        %v2843 = vsel %vm2116, %v2706, %v2806
        %v2844 = vsel %vm2116, %v2711, %v2810
        %v2845 = vsel %vm2116, %v2716, %v2814
        %v2846 = vsel %vm2116, %v2721, %v2818
        %v2847 = vsel %vm2116, %v2726, %v2822
        %v2848 = vmul.f32 %v2466, %v2824
        %v2849 = vmul.f32 %v2471, %v2825
        %v2850 = vmul.f32 %v2476, %v2826
        %v2851 = vmul.f32 %v2481, %v2827
        %v2852 = vmul.f32 %v2486, %v2828
        %v2853 = vmul.f32 %v2491, %v2829
        %v2854 = vmul.f32 %v2496, %v2830
        %v2855 = vmul.f32 %v2501, %v2831
        %v2856 = vmul.f32 %v2506, %v2832
        %v2857 = vmul.f32 %v2511, %v2833
        %v2858 = vmul.f32 %v2516, %v2834
        %v2859 = vmul.f32 %v2521, %v2835
        %v2860 = vmul.f32 %v2526, %v2836
        %v2861 = vmul.f32 %v2531, %v2837
        %v2862 = vmul.f32 %v2536, %v2838
        %v2863 = vmul.f32 %v2541, %v2839
        %v2864 = vmul.f32 %v2546, %v2840
        %v2865 = vmul.f32 %v2551, %v2841
        %v2866 = vmul.f32 %v2556, %v2842
        %v2867 = vmul.f32 %v2561, %v2843
        %v2868 = vmul.f32 %v2566, %v2844
        %v2869 = vmul.f32 %v2571, %v2845
        %v2870 = vmul.f32 %v2576, %v2846
        %v2871 = vmul.f32 %v2581, %v2847
        %v2872 = vld [vmem:[%s5] sm:$0x1]
        %v2874 = vlaneseq
        %v2875 = vshrl.u32 %v2874, 7
        %v2876 = vsub.s32 0, %v2875
        %v2877 = vrot.slane %v2872, %v2876
        %v2879 = vadd.f32 %v2848, %v2877
        %v2880 = vadd.f32 %v2849, %v2877
        %v2881 = vadd.f32 %v2850, %v2877
        %v2882 = vadd.f32 %v2851, %v2877
        %v2883 = vadd.f32 %v2852, %v2877
        %v2884 = vadd.f32 %v2853, %v2877
        %v2885 = vadd.f32 %v2854, %v2877
        %v2886 = vadd.f32 %v2855, %v2877
        %v2887 = vadd.f32 %v2856, %v2877
        %v2888 = vadd.f32 %v2857, %v2877
        %v2889 = vadd.f32 %v2858, %v2877
        %v2890 = vadd.f32 %v2859, %v2877
        %v2891 = vadd.f32 %v2860, %v2877
        %v2892 = vadd.f32 %v2861, %v2877
        %v2893 = vadd.f32 %v2862, %v2877
        %v2894 = vadd.f32 %v2863, %v2877
        %v2895 = vadd.f32 %v2864, %v2877
        %v2896 = vadd.f32 %v2865, %v2877
        %v2897 = vadd.f32 %v2866, %v2877
        %v2898 = vadd.f32 %v2867, %v2877
        %v2899 = vadd.f32 %v2868, %v2877
        %v2900 = vadd.f32 %v2869, %v2877
        %v2901 = vadd.f32 %v2870, %v2877
        %v2902 = vadd.f32 %v2871, %v2877
        %v2903 = vmax.f32 %v2879, 0.0
        %v2904 = vmax.f32 %v2880, 0.0
        %v2905 = vmax.f32 %v2881, 0.0
        %v2906 = vmax.f32 %v2882, 0.0
        %v2907 = vmax.f32 %v2883, 0.0
        %v2908 = vmax.f32 %v2884, 0.0
        %v2909 = vmax.f32 %v2885, 0.0
        %v2910 = vmax.f32 %v2886, 0.0
        %v2911 = vmax.f32 %v2887, 0.0
        %v2912 = vmax.f32 %v2888, 0.0
        %v2913 = vmax.f32 %v2889, 0.0
        %v2914 = vmax.f32 %v2890, 0.0
        %v2915 = vmax.f32 %v2891, 0.0
        %v2916 = vmax.f32 %v2892, 0.0
        %v2917 = vmax.f32 %v2893, 0.0
        %v2918 = vmax.f32 %v2894, 0.0
        %v2919 = vmax.f32 %v2895, 0.0
        %v2920 = vmax.f32 %v2896, 0.0
        %v2921 = vmax.f32 %v2897, 0.0
        %v2922 = vmax.f32 %v2898, 0.0
        %v2923 = vmax.f32 %v2899, 0.0
        %v2924 = vmax.f32 %v2900, 0.0
        %v2925 = vmax.f32 %v2901, 0.0
        %v2926 = vmax.f32 %v2902, 0.0
        %v2927 = vpack.c.bf16 %v2904, %v2903
        %v2928 = vpack.c.bf16 %v2906, %v2905
        %v2929 = vpack.c.bf16 %v2908, %v2907
        %v2930 = vpack.c.bf16 %v2910, %v2909
        %v2931 = vpack.c.bf16 %v2912, %v2911
        %v2932 = vpack.c.bf16 %v2914, %v2913
        %v2933 = vpack.c.bf16 %v2916, %v2915
        %v2934 = vpack.c.bf16 %v2918, %v2917
        %v2935 = vpack.c.bf16 %v2920, %v2919
        %v2936 = vpack.c.bf16 %v2922, %v2921
        %v2937 = vpack.c.bf16 %v2924, %v2923
        %v2938 = vpack.c.bf16 %v2926, %v2925
        %v2939 = vld [vmem:[%s6] sm:$0xf]
        %v2940 = vld [vmem:[%s6 + $0x4] sm:$0xf]
        %v2941 = vld [vmem:[%s6 + $0x8] sm:$0xf]
        %v2942 = vld [vmem:[%s6 + $0xc] sm:$0xf]
        %v2947 = vunpack.c.l.b16 %v2939
        %v2948 = vunpack.c.l.b16 %v2940
        %v2949 = vunpack.c.l.b16 %v2941
        %v2950 = vunpack.c.l.b16 %v2942
        %v2951 = vpack.c.b16 %v2948, %v2947
        %v2952 = vpack.c.b16 %v2950, %v2949
        %v2956 = vsel %vm1013, %v2927, 0
        %v2959 = vsel %vm1013, %v2928, 0
        %v2962 = vsel %vm1013, %v2929, 0
        %v2965 = vsel %vm1013, %v2930, 0
        %v2968 = vsel %vm1013, %v2931, 0
        %v2971 = vsel %vm1013, %v2932, 0
        %v2974 = vsel %vm1013, %v2933, 0
        %v2977 = vsel %vm1013, %v2934, 0
        %v2980 = vsel %vm1013, %v2935, 0
        %v2983 = vsel %vm1013, %v2936, 0
        %v2986 = vsel %vm1013, %v2937, 0
        %v2989 = vsel %vm1013, %v2938, 0
        %2991 = vmatprep.subr.bf16.mxu0 0
        %2992 = vmatpush1.bf16.msra.mxu0 %v2951
        %2993 = vmatprep.subr.bf16.mxu0 0
        %2994 = vmatpush1.bf16.msra.mxu0 %v2952
        %2995 = vmatprep.subr.bf16.mxu0 0
        %2996 = vmatpush1.bf16.msra.mxu0 0
        %2997 = vmatprep.subr.bf16.mxu0 0
        %2998 = vmatpush1.bf16.msra.mxu0 0
        %2999 = vmatprep.subr.bf16.mxu0 0
        %3000 = vmatpush1.bf16.msra.mxu0 0
        %3001 = vmatprep.subr.bf16.mxu0 0
        %3002 = vmatpush1.bf16.msra.mxu0 0
        %3003 = vmatprep.subr.bf16.mxu0 0
        %3004 = vmatpush1.bf16.msra.mxu0 0
        %3005 = vmatprep.subr.bf16.mxu0 0
        %3006 = vmatpush1.bf16.msra.mxu0 0
        %3007 = vmatprep.subr.bf16.mxu0 0
        %3008 = vmatpush1.bf16.msra.mxu0 0
        %3009 = vmatprep.subr.bf16.mxu0 0
        %3010 = vmatpush1.bf16.msra.mxu0 0
        %3011 = vmatprep.subr.bf16.mxu0 0
        %3012 = vmatpush1.bf16.msra.mxu0 0
        %3013 = vmatprep.subr.bf16.mxu0 0
        %3014 = vmatpush1.bf16.msra.mxu0 0
        %3015 = vmatprep.subr.bf16.mxu0 0
        %3016 = vmatpush1.bf16.msra.mxu0 0
        %3017 = vmatprep.subr.bf16.mxu0 0
        %3018 = vmatpush1.bf16.msra.mxu0 0
        %3019 = vmatprep.subr.bf16.mxu0 0
        %3020 = vmatpush1.bf16.msra.mxu0 0
        %3021 = vmatprep.subr.bf16.mxu0 0
        %3022 = vmatpush1.bf16.msra.mxu0 0
        %3023 = vmatprep.mubr.bf16.mxu0 0
        %3024 = vmatmul.mubr.bf16.gmra.mrb[0].mxu0 %v2956
        %v3025 = vpop.f32.mrb[0].mxu0
        %v3026 = vadd.f32 0.0, %v3025
        %v3027 = vpop.f32.mrb[0].mxu0
        %v3028 = vpop.f32.mrb[0].mxu0
        %v3029 = vadd.f32 0.0, %v3028
        %v3030 = vpop.f32.mrb[0].mxu0
        %3031 = vmatprep.mubr.bf16.mxu0 0
        %3032 = vmatmul.mubr.bf16.gmra.mrb[0].mxu0 %v2959
        %v3033 = vpop.f32.mrb[0].mxu0
        %v3034 = vadd.f32 0.0, %v3033
        %v3035 = vpop.f32.mrb[0].mxu0
        %v3036 = vpop.f32.mrb[0].mxu0
        %v3037 = vadd.f32 0.0, %v3036
        %v3038 = vpop.f32.mrb[0].mxu0
        %3039 = vmatprep.mubr.bf16.mxu0 0
        %3040 = vmatmul.mubr.bf16.gmra.mrb[0].mxu0 %v2962
        %v3041 = vpop.f32.mrb[0].mxu0
        %v3042 = vadd.f32 0.0, %v3041
        %v3043 = vpop.f32.mrb[0].mxu0
        %v3044 = vpop.f32.mrb[0].mxu0
        %v3045 = vadd.f32 0.0, %v3044
        %v3046 = vpop.f32.mrb[0].mxu0
        %3047 = vmatprep.mubr.bf16.mxu0 0
        %3048 = vmatmul.mubr.bf16.gmra.mrb[0].mxu0 %v2965
        %v3049 = vpop.f32.mrb[0].mxu0
        %v3050 = vadd.f32 0.0, %v3049
        %v3051 = vpop.f32.mrb[0].mxu0
        %v3052 = vpop.f32.mrb[0].mxu0
        %v3053 = vadd.f32 0.0, %v3052
        %v3054 = vpop.f32.mrb[0].mxu0
        %3055 = vmatprep.mubr.bf16.mxu0 0
        %3056 = vmatmul.mubr.bf16.gmra.mrb[0].mxu0 %v2968
        %v3057 = vpop.f32.mrb[0].mxu0
        %v3058 = vadd.f32 0.0, %v3057
        %v3059 = vpop.f32.mrb[0].mxu0
        %v3060 = vpop.f32.mrb[0].mxu0
        %v3061 = vadd.f32 0.0, %v3060
        %v3062 = vpop.f32.mrb[0].mxu0
        %3063 = vmatprep.mubr.bf16.mxu0 0
        %3064 = vmatmul.mubr.bf16.gmra.mrb[0].mxu0 %v2971
        %v3065 = vpop.f32.mrb[0].mxu0
        %v3066 = vadd.f32 0.0, %v3065
        %v3067 = vpop.f32.mrb[0].mxu0
        %v3068 = vpop.f32.mrb[0].mxu0
        %v3069 = vadd.f32 0.0, %v3068
        %v3070 = vpop.f32.mrb[0].mxu0
        %3071 = vmatprep.mubr.bf16.mxu0 0
        %3072 = vmatmul.mubr.bf16.gmra.mrb[0].mxu0 %v2974
        %v3073 = vpop.f32.mrb[0].mxu0
        %v3074 = vadd.f32 0.0, %v3073
        %v3075 = vpop.f32.mrb[0].mxu0
        %v3076 = vpop.f32.mrb[0].mxu0
        %v3077 = vadd.f32 0.0, %v3076
        %v3078 = vpop.f32.mrb[0].mxu0
        %3079 = vmatprep.mubr.bf16.mxu0 0
        %3080 = vmatmul.mubr.bf16.gmra.mrb[0].mxu0 %v2977
        %v3081 = vpop.f32.mrb[0].mxu0
        %v3082 = vadd.f32 0.0, %v3081
        %v3083 = vpop.f32.mrb[0].mxu0
        %v3084 = vpop.f32.mrb[0].mxu0
        %v3085 = vadd.f32 0.0, %v3084
        %v3086 = vpop.f32.mrb[0].mxu0
        %3087 = vmatprep.mubr.bf16.mxu0 0
        %3088 = vmatmul.mubr.bf16.gmra.mrb[0].mxu0 %v2980
        %v3089 = vpop.f32.mrb[0].mxu0
        %v3090 = vadd.f32 0.0, %v3089
        %v3091 = vpop.f32.mrb[0].mxu0
        %v3092 = vpop.f32.mrb[0].mxu0
        %v3093 = vadd.f32 0.0, %v3092
        %v3094 = vpop.f32.mrb[0].mxu0
        %3095 = vmatprep.mubr.bf16.mxu0 0
        %3096 = vmatmul.mubr.bf16.gmra.mrb[0].mxu0 %v2983
        %v3097 = vpop.f32.mrb[0].mxu0
        %v3098 = vadd.f32 0.0, %v3097
        %v3099 = vpop.f32.mrb[0].mxu0
        %v3100 = vpop.f32.mrb[0].mxu0
        %v3101 = vadd.f32 0.0, %v3100
        %v3102 = vpop.f32.mrb[0].mxu0
        %3103 = vmatprep.mubr.bf16.mxu0 0
        %3104 = vmatmul.mubr.bf16.gmra.mrb[0].mxu0 %v2986
        %v3105 = vpop.f32.mrb[0].mxu0
        %v3106 = vadd.f32 0.0, %v3105
        %v3107 = vpop.f32.mrb[0].mxu0
        %v3108 = vpop.f32.mrb[0].mxu0
        %v3109 = vadd.f32 0.0, %v3108
        %v3110 = vpop.f32.mrb[0].mxu0
        %3111 = vmatprep.mubr.bf16.mxu0 0
        %3112 = vmatmul.mubr.bf16.gmra.mrb[0].mxu0 %v2989
        %v3113 = vpop.f32.mrb[0].mxu0
        %v3114 = vadd.f32 0.0, %v3113
        %v3115 = vpop.f32.mrb[0].mxu0
        %v3116 = vpop.f32.mrb[0].mxu0
        %v3117 = vadd.f32 0.0, %v3116
        %v3118 = vpop.f32.mrb[0].mxu0
        %3119 = vdwg.mxu0
        %v3120 = vld [vmem:[%s8] sm:$0xff]
        %v3121 = vld [vmem:[%s8 + $0x8] sm:$0xff]
        %v3122 = vld [vmem:[%s8 + $0x10] sm:$0xff]
        %v3123 = vld [vmem:[%s8 + $0x18] sm:$0xff]
        %v3124 = vld [vmem:[%s8 + $0x20] sm:$0xff]
        %v3125 = vld [vmem:[%s8 + $0x28] sm:$0xff]
        %v3126 = vld [vmem:[%s8 + $0x30] sm:$0xff]
        %v3127 = vld [vmem:[%s8 + $0x38] sm:$0xff]
        %v3128 = vld [vmem:[%s8 + $0x40] sm:$0xff]
        %v3129 = vld [vmem:[%s8 + $0x48] sm:$0xff]
        %v3130 = vld [vmem:[%s8 + $0x50] sm:$0xff]
        %v3131 = vld [vmem:[%s8 + $0x58] sm:$0xff]
        %v3132 = vld [vmem:[%s7] sm:$0x3]
        %v3134 = vsel %vm1013, %v3132, 0
        %v3137 = vsel %vm1013, %v3026, 0
        %v3140 = vsel %vm1013, %v3029, 0
        %v3143 = vsel %vm1013, %v3034, 0
        %v3146 = vsel %vm1013, %v3037, 0
        %v3149 = vsel %vm1013, %v3042, 0
        %v3152 = vsel %vm1013, %v3045, 0
        %v3155 = vsel %vm1013, %v3050, 0
        %v3158 = vsel %vm1013, %v3053, 0
        %v3161 = vsel %vm1013, %v3058, 0
        %v3164 = vsel %vm1013, %v3061, 0
        %v3167 = vsel %vm1013, %v3066, 0
        %v3170 = vsel %vm1013, %v3069, 0
        %v3173 = vsel %vm1013, %v3074, 0
        %v3176 = vsel %vm1013, %v3077, 0
        %v3179 = vsel %vm1013, %v3082, 0
        %v3182 = vsel %vm1013, %v3085, 0
        %v3185 = vsel %vm1013, %v3090, 0
        %v3188 = vsel %vm1013, %v3093, 0
        %v3191 = vsel %vm1013, %v3098, 0
        %v3194 = vsel %vm1013, %v3101, 0
        %v3197 = vsel %vm1013, %v3106, 0
        %v3200 = vsel %vm1013, %v3109, 0
        %v3203 = vsel %vm1013, %v3114, 0
        %v3206 = vsel %vm1013, %v3117, 0
        %3208 = vmatprep.subr.mxu0 0.0
        %3209 = vmatpush1.xpose.msra.mxu0 %v3137
        %3210 = vmatprep.subr.mxu0 0.0
        %3211 = vmatpush1.xpose.msra.mxu0 %v3140
        %3212 = vmatprep.subr.mxu0 0.0
        %3213 = vmatpush1.xpose.msra.mxu0 %v3143
        %3214 = vmatprep.subr.mxu0 0.0
        %3215 = vmatpush1.xpose.msra.mxu0 %v3146
        %3216 = vmatprep.subr.mxu0 0.0
        %3217 = vmatpush1.xpose.msra.mxu0 %v3149
        %3218 = vmatprep.subr.mxu0 0.0
        %3219 = vmatpush1.xpose.msra.mxu0 %v3152
        %3220 = vmatprep.subr.mxu0 0.0
        %3221 = vmatpush1.xpose.msra.mxu0 %v3155
        %3222 = vmatprep.subr.mxu0 0.0
        %3223 = vmatpush1.xpose.msra.mxu0 %v3158
        %3224 = vmatprep.subr.mxu0 0.0
        %3225 = vmatpush1.xpose.msra.mxu0 %v3161
        %3226 = vmatprep.subr.mxu0 0.0
        %3227 = vmatpush1.xpose.msra.mxu0 %v3164
        %3228 = vmatprep.subr.mxu0 0.0
        %3229 = vmatpush1.xpose.msra.mxu0 %v3167
        %3230 = vmatprep.subr.mxu0 0.0
        %3231 = vmatpush1.xpose.msra.mxu0 %v3170
        %3232 = vmatprep.subr.mxu0 0.0
        %3233 = vmatpush1.xpose.msra.mxu0 %v3173
        %3234 = vmatprep.subr.mxu0 0.0
        %3235 = vmatpush1.xpose.msra.mxu0 %v3176
        %3236 = vmatprep.subr.mxu0 0.0
        %3237 = vmatpush1.xpose.msra.mxu0 %v3179
        %3238 = vmatprep.subr.mxu0 0.0
        %3239 = vmatpush1.xpose.msra.mxu0 %v3182
        %3240 = vmatprep.subr.mxu0 0.0
        %3241 = vmatpush1.xpose.msra.mxu0 %v3185
        %3242 = vmatprep.subr.mxu0 0.0
        %3243 = vmatpush1.xpose.msra.mxu0 %v3188
        %3244 = vmatprep.subr.mxu0 0.0
        %3245 = vmatpush1.xpose.msra.mxu0 %v3191
        %3246 = vmatprep.subr.mxu0 0.0
        %3247 = vmatpush1.xpose.msra.mxu0 %v3194
        %3248 = vmatprep.subr.mxu0 0.0
        %3249 = vmatpush1.xpose.msra.mxu0 %v3197
        %3250 = vmatprep.subr.mxu0 0.0
        %3251 = vmatpush1.xpose.msra.mxu0 %v3200
        %3252 = vmatprep.subr.mxu0 0.0
        %3253 = vmatpush1.xpose.msra.mxu0 %v3203
        %3254 = vmatprep.subr.mxu0 0.0
        %3255 = vmatpush1.xpose.msra.mxu0 %v3206
        %3256 = vmatprep.subr.mxu0 0.0
        %3257 = vmatpush1.xpose.msra.mxu0 0.0
        %3258 = vmatprep.subr.mxu0 0.0
        %3259 = vmatpush1.xpose.msra.mxu0 0.0
        %3260 = vmatprep.subr.mxu0 0.0
        %3261 = vmatpush1.xpose.msra.mxu0 0.0
        %3262 = vmatprep.subr.mxu0 0.0
        %3263 = vmatpush1.xpose.msra.mxu0 0.0
        %3264 = vmatprep.subr.mxu0 0.0
        %3265 = vmatpush1.xpose.msra.mxu0 0.0
        %3266 = vmatprep.subr.mxu0 0.0
        %3267 = vmatpush1.xpose.msra.mxu0 0.0
        %3268 = vmatprep.subr.mxu0 0.0
        %3269 = vmatpush1.xpose.msra.mxu0 0.0
        %3270 = vmatprep.subr.mxu0 0.0
        %3271 = vmatpush1.xpose.msra.mxu0 0.0
        %3272 = vmatprep.mubr.f32.mxu0 0.0
        %3273 = vmatmul.mubr.f32.gmra.mrb[0].mxu0 %v3134
        %v3274 = vpop.f32.mrb[0].mxu0
        %v3275 = vadd.f32 0.0, %v3274
        %v3276 = vpop.f32.mrb[0].mxu0
        %v3277 = vadd.f32 0.0, %v3276
        %3278 = vdwg.mxu0
        %v3281 = vcombine.low %v3275, %v3277
        %v3283 = vunpack.c.l.s4 1966171168
        %v3284 = vunpack.c.0.s8 %v3283
        %v3285 = vlaneseq
        %v3286 = vshrl.u32 %v3285, 7
        %v3287 = vsub.s32 %v3284, %v3286
        %v3288 = vrot.slane %v3281, %v3287
        %v3290 = vunpack.c.l.s4 1966171168
        %v3291 = vunpack.c.0.s8 %v3290
        %v3292 = vlaneseq
        %v3293 = vshrl.u32 %v3292, 7
        %v3294 = vsub.s32 %v3291, %v3293
        %v3295 = vrot.slane %v3288, %v3294
        %3297 = vst.msk [vmem:[#allocation3] sm:$0x3] %vm1181, %v3295
        %v3298 = vcombine.high %v3288, %v3288
        %v3300 = vunpack.c.l.s4 1966171168
        %v3301 = vunpack.c.0.s8 %v3300
        %v3302 = vlaneseq
        %v3303 = vshrl.u32 %v3302, 7
        %v3304 = vsub.s32 %v3301, %v3303
        %v3305 = vrot.slane %v3298, %v3304
        %3306 = vrot.lane.b32.xlu0 %v3305, 64
        %v3307 = vpop.permute.xlu0 %3306
        %v3308 = vrot.slane %v3307, 7
        %v3309 = vsel %vm1194, %v3308, %v3307
        %3311 = vst.msk [vmem:[#allocation3 + $0x1] sm:$0x3] %vm1199, %v3309
        %v3312 = vld [vmem:[#allocation3] sm:$0x7]
        %v3314 = vlaneseq
        %v3315 = vshrl.u32 %v3314, 7
        %v3316 = vsub.s32 0, %v3315
        %v3317 = vrot.slane %v3312, %v3316
        %v3318 = vlaneseq
        %v3319 = vshrl.u32 %v3318, 7
        %v3320 = vsub.s32 1, %v3319
        %v3321 = vrot.slane %v3312, %v3320
        %v3322 = vlaneseq
        %v3323 = vshrl.u32 %v3322, 7
        %v3324 = vsub.s32 2, %v3323
        %v3325 = vrot.slane %v3312, %v3324
        %3329 = vmatprep.subr.mxu0 %v3121
        %3330 = vmatpush1.msra.mxu0 %v3120
        %3331 = vmatprep.subr.mxu0 %v3124
        %3332 = vmatpush1.msra.mxu0 %v3123
        %3333 = vmatprep.subr.mxu0 %v3127
        %3334 = vmatpush1.msra.mxu0 %v3126
        %3335 = vmatprep.subr.mxu0 %v3130
        %3336 = vmatpush1.msra.mxu0 %v3129
        %3337 = vmatprep.subr.mxu0 0.0
        %3338 = vmatpush1.msra.mxu0 0.0
        %3339 = vmatprep.subr.mxu0 0.0
        %3340 = vmatpush1.msra.mxu0 0.0
        %3341 = vmatprep.subr.mxu0 0.0
        %3342 = vmatpush1.msra.mxu0 0.0
        %3343 = vmatprep.subr.mxu0 0.0
        %3344 = vmatpush1.msra.mxu0 0.0
        %3345 = vmatprep.subr.mxu0 0.0
        %3346 = vmatpush1.msra.mxu0 0.0
        %3347 = vmatprep.subr.mxu0 0.0
        %3348 = vmatpush1.msra.mxu0 0.0
        %3349 = vmatprep.subr.mxu0 0.0
        %3350 = vmatpush1.msra.mxu0 0.0
        %3351 = vmatprep.subr.mxu0 0.0
        %3352 = vmatpush1.msra.mxu0 0.0
        %3353 = vmatprep.subr.mxu0 0.0
        %3354 = vmatpush1.msra.mxu0 0.0
        %3355 = vmatprep.subr.mxu0 0.0
        %3356 = vmatpush1.msra.mxu0 0.0
        %3357 = vmatprep.subr.mxu0 0.0
        %3358 = vmatpush1.msra.mxu0 0.0
        %3359 = vmatprep.subr.mxu0 0.0
        %3360 = vmatpush1.msra.mxu0 0.0
        %3361 = vmatprep.subr.mxu0 0.0
        %3362 = vmatpush1.msra.mxu0 0.0
        %3363 = vmatprep.subr.mxu0 0.0
        %3364 = vmatpush1.msra.mxu0 0.0
        %3365 = vmatprep.subr.mxu0 0.0
        %3366 = vmatpush1.msra.mxu0 0.0
        %3367 = vmatprep.subr.mxu0 0.0
        %3368 = vmatpush1.msra.mxu0 0.0
        %3369 = vmatprep.subr.mxu0 0.0
        %3370 = vmatpush1.msra.mxu0 0.0
        %3371 = vmatprep.subr.mxu0 0.0
        %3372 = vmatpush1.msra.mxu0 0.0
        %3373 = vmatprep.subr.mxu0 0.0
        %3374 = vmatpush1.msra.mxu0 0.0
        %3375 = vmatprep.subr.mxu0 0.0
        %3376 = vmatpush1.msra.mxu0 0.0
        %3377 = vmatprep.subr.mxu0 0.0
        %3378 = vmatpush1.msra.mxu0 0.0
        %3379 = vmatprep.subr.mxu0 0.0
        %3380 = vmatpush1.msra.mxu0 0.0
        %3381 = vmatprep.subr.mxu0 0.0
        %3382 = vmatpush1.msra.mxu0 0.0
        %3383 = vmatprep.subr.mxu0 0.0
        %3384 = vmatpush1.msra.mxu0 0.0
        %3385 = vmatprep.subr.mxu0 0.0
        %3386 = vmatpush1.msra.mxu0 0.0
        %3387 = vmatprep.subr.mxu0 0.0
        %3388 = vmatpush1.msra.mxu0 0.0
        %3389 = vmatprep.subr.mxu0 0.0
        %3390 = vmatpush1.msra.mxu0 0.0
        %3391 = vmatprep.subr.mxu0 0.0
        %3392 = vmatpush1.msra.mxu0 0.0
        %3393 = vmatprep.mubr.f32.mxu0 0.0
        %3394 = vmatmul.mubr.f32.gmra.mrb[0].mxu0 %v3137
        %v3395 = vpop.f32.mrb[0].mxu0
        %v3396 = vadd.f32 %v3317, %v3395
        %v3397 = vpop.f32.mrb[0].mxu0
        %v3398 = vadd.f32 %v3321, %v3397
        %3399 = vmatprep.mubr.f32.mxu0 0.0
        %3400 = vmatmul.mubr.f32.gmra.mrb[0].mxu0 %v3140
        %v3401 = vpop.f32.mrb[0].mxu0
        %v3402 = vadd.f32 %v3317, %v3401
        %v3403 = vpop.f32.mrb[0].mxu0
        %v3404 = vadd.f32 %v3321, %v3403
        %3405 = vmatprep.mubr.f32.mxu0 0.0
        %3406 = vmatmul.mubr.f32.gmra.mrb[0].mxu0 %v3143
        %v3407 = vpop.f32.mrb[0].mxu0
        %v3408 = vadd.f32 %v3317, %v3407
        %v3409 = vpop.f32.mrb[0].mxu0
        %v3410 = vadd.f32 %v3321, %v3409
        %3411 = vmatprep.mubr.f32.mxu0 0.0
        %3412 = vmatmul.mubr.f32.gmra.mrb[0].mxu0 %v3146
        %v3413 = vpop.f32.mrb[0].mxu0
        %v3414 = vadd.f32 %v3317, %v3413
        %v3415 = vpop.f32.mrb[0].mxu0
        %v3416 = vadd.f32 %v3321, %v3415
        %3417 = vmatprep.mubr.f32.mxu0 0.0
        %3418 = vmatmul.mubr.f32.gmra.mrb[0].mxu0 %v3149
        %v3419 = vpop.f32.mrb[0].mxu0
        %v3420 = vadd.f32 %v3317, %v3419
        %v3421 = vpop.f32.mrb[0].mxu0
        %v3422 = vadd.f32 %v3321, %v3421
        %3423 = vmatprep.mubr.f32.mxu0 0.0
        %3424 = vmatmul.mubr.f32.gmra.mrb[0].mxu0 %v3152
        %v3425 = vpop.f32.mrb[0].mxu0
        %v3426 = vadd.f32 %v3317, %v3425
        %v3427 = vpop.f32.mrb[0].mxu0
        %v3428 = vadd.f32 %v3321, %v3427
        %3429 = vmatprep.mubr.f32.mxu0 0.0
        %3430 = vmatmul.mubr.f32.gmra.mrb[0].mxu0 %v3155
        %v3431 = vpop.f32.mrb[0].mxu0
        %v3432 = vadd.f32 %v3317, %v3431
        %v3433 = vpop.f32.mrb[0].mxu0
        %v3434 = vadd.f32 %v3321, %v3433
        %3435 = vmatprep.mubr.f32.mxu0 0.0
        %3436 = vmatmul.mubr.f32.gmra.mrb[0].mxu0 %v3158
        %v3437 = vpop.f32.mrb[0].mxu0
        %v3438 = vadd.f32 %v3317, %v3437
        %v3439 = vpop.f32.mrb[0].mxu0
        %v3440 = vadd.f32 %v3321, %v3439
        %3441 = vmatprep.mubr.f32.mxu0 0.0
        %3442 = vmatmul.mubr.f32.gmra.mrb[0].mxu0 %v3161
        %v3443 = vpop.f32.mrb[0].mxu0
        %v3444 = vadd.f32 %v3317, %v3443
        %v3445 = vpop.f32.mrb[0].mxu0
        %v3446 = vadd.f32 %v3321, %v3445
        %3447 = vmatprep.mubr.f32.mxu0 0.0
        %3448 = vmatmul.mubr.f32.gmra.mrb[0].mxu0 %v3164
        %v3449 = vpop.f32.mrb[0].mxu0
        %v3450 = vadd.f32 %v3317, %v3449
        %v3451 = vpop.f32.mrb[0].mxu0
        %v3452 = vadd.f32 %v3321, %v3451
        %3453 = vmatprep.mubr.f32.mxu0 0.0
        %3454 = vmatmul.mubr.f32.gmra.mrb[0].mxu0 %v3167
        %v3455 = vpop.f32.mrb[0].mxu0
        %v3456 = vadd.f32 %v3317, %v3455
        %v3457 = vpop.f32.mrb[0].mxu0
        %v3458 = vadd.f32 %v3321, %v3457
        %3459 = vmatprep.mubr.f32.mxu0 0.0
        %3460 = vmatmul.mubr.f32.gmra.mrb[0].mxu0 %v3170
        %v3461 = vpop.f32.mrb[0].mxu0
        %v3462 = vadd.f32 %v3317, %v3461
        %v3463 = vpop.f32.mrb[0].mxu0
        %v3464 = vadd.f32 %v3321, %v3463
        %3465 = vmatprep.mubr.f32.mxu0 0.0
        %3466 = vmatmul.mubr.f32.gmra.mrb[0].mxu0 %v3173
        %v3467 = vpop.f32.mrb[0].mxu0
        %v3468 = vadd.f32 %v3317, %v3467
        %v3469 = vpop.f32.mrb[0].mxu0
        %v3470 = vadd.f32 %v3321, %v3469
        %3471 = vmatprep.mubr.f32.mxu0 0.0
        %3472 = vmatmul.mubr.f32.gmra.mrb[0].mxu0 %v3176
        %v3473 = vpop.f32.mrb[0].mxu0
        %v3474 = vadd.f32 %v3317, %v3473
        %v3475 = vpop.f32.mrb[0].mxu0
        %v3476 = vadd.f32 %v3321, %v3475
        %3477 = vmatprep.mubr.f32.mxu0 0.0
        %3478 = vmatmul.mubr.f32.gmra.mrb[0].mxu0 %v3179
        %v3479 = vpop.f32.mrb[0].mxu0
        %v3480 = vadd.f32 %v3317, %v3479
        %v3481 = vpop.f32.mrb[0].mxu0
        %v3482 = vadd.f32 %v3321, %v3481
        %3483 = vmatprep.mubr.f32.mxu0 0.0
        %3484 = vmatmul.mubr.f32.gmra.mrb[0].mxu0 %v3182
        %v3485 = vpop.f32.mrb[0].mxu0
        %v3486 = vadd.f32 %v3317, %v3485
        %v3487 = vpop.f32.mrb[0].mxu0
        %v3488 = vadd.f32 %v3321, %v3487
        %3489 = vmatprep.mubr.f32.mxu0 0.0
        %3490 = vmatmul.mubr.f32.gmra.mrb[0].mxu0 %v3185
        %v3491 = vpop.f32.mrb[0].mxu0
        %v3492 = vadd.f32 %v3317, %v3491
        %v3493 = vpop.f32.mrb[0].mxu0
        %v3494 = vadd.f32 %v3321, %v3493
        %3495 = vmatprep.mubr.f32.mxu0 0.0
        %3496 = vmatmul.mubr.f32.gmra.mrb[0].mxu0 %v3188
        %v3497 = vpop.f32.mrb[0].mxu0
        %v3498 = vadd.f32 %v3317, %v3497
        %v3499 = vpop.f32.mrb[0].mxu0
        %v3500 = vadd.f32 %v3321, %v3499
        %3501 = vmatprep.mubr.f32.mxu0 0.0
        %3502 = vmatmul.mubr.f32.gmra.mrb[0].mxu0 %v3191
        %v3503 = vpop.f32.mrb[0].mxu0
        %v3504 = vadd.f32 %v3317, %v3503
        %v3505 = vpop.f32.mrb[0].mxu0
        %v3506 = vadd.f32 %v3321, %v3505
        %3507 = vmatprep.mubr.f32.mxu0 0.0
        %3508 = vmatmul.mubr.f32.gmra.mrb[0].mxu0 %v3194
        %v3509 = vpop.f32.mrb[0].mxu0
        %v3510 = vadd.f32 %v3317, %v3509
        %v3511 = vpop.f32.mrb[0].mxu0
        %v3512 = vadd.f32 %v3321, %v3511
        %3513 = vmatprep.mubr.f32.mxu0 0.0
        %3514 = vmatmul.mubr.f32.gmra.mrb[0].mxu0 %v3197
        %v3515 = vpop.f32.mrb[0].mxu0
        %v3516 = vadd.f32 %v3317, %v3515
        %v3517 = vpop.f32.mrb[0].mxu0
        %v3518 = vadd.f32 %v3321, %v3517
        %3519 = vmatprep.mubr.f32.mxu0 0.0
        %3520 = vmatmul.mubr.f32.gmra.mrb[0].mxu0 %v3200
        %v3521 = vpop.f32.mrb[0].mxu0
        %v3522 = vadd.f32 %v3317, %v3521
        %v3523 = vpop.f32.mrb[0].mxu0
        %v3524 = vadd.f32 %v3321, %v3523
        %3525 = vmatprep.mubr.f32.mxu0 0.0
        %3526 = vmatmul.mubr.f32.gmra.mrb[0].mxu0 %v3203
        %v3527 = vpop.f32.mrb[0].mxu0
        %v3528 = vadd.f32 %v3317, %v3527
        %v3529 = vpop.f32.mrb[0].mxu0
        %v3530 = vadd.f32 %v3321, %v3529
        %3531 = vmatprep.mubr.f32.mxu0 0.0
        %3532 = vmatmul.mubr.f32.gmra.mrb[0].mxu0 %v3206
        %v3533 = vpop.f32.mrb[0].mxu0
        %v3534 = vadd.f32 %v3317, %v3533
        %v3535 = vpop.f32.mrb[0].mxu0
        %v3536 = vadd.f32 %v3321, %v3535
        %3537 = vdwg.mxu0
        %3538 = vmatprep.subr.mxu0 0.0
        %3539 = vmatpush1.msra.mxu0 %v3122
        %3540 = vmatprep.subr.mxu0 0.0
        %3541 = vmatpush1.msra.mxu0 %v3125
        %3542 = vmatprep.subr.mxu0 0.0
        %3543 = vmatpush1.msra.mxu0 %v3128
        %3544 = vmatprep.subr.mxu0 0.0
        %3545 = vmatpush1.msra.mxu0 %v3131
        %3546 = vmatprep.subr.mxu0 0.0
        %3547 = vmatpush1.msra.mxu0 0.0
        %3548 = vmatprep.subr.mxu0 0.0
        %3549 = vmatpush1.msra.mxu0 0.0
        %3550 = vmatprep.subr.mxu0 0.0
        %3551 = vmatpush1.msra.mxu0 0.0
        %3552 = vmatprep.subr.mxu0 0.0
        %3553 = vmatpush1.msra.mxu0 0.0
        %3554 = vmatprep.subr.mxu0 0.0
        %3555 = vmatpush1.msra.mxu0 0.0
        %3556 = vmatprep.subr.mxu0 0.0
        %3557 = vmatpush1.msra.mxu0 0.0
        %3558 = vmatprep.subr.mxu0 0.0
        %3559 = vmatpush1.msra.mxu0 0.0
        %3560 = vmatprep.subr.mxu0 0.0
        %3561 = vmatpush1.msra.mxu0 0.0
        %3562 = vmatprep.subr.mxu0 0.0
        %3563 = vmatpush1.msra.mxu0 0.0
        %3564 = vmatprep.subr.mxu0 0.0
        %3565 = vmatpush1.msra.mxu0 0.0
        %3566 = vmatprep.subr.mxu0 0.0
        %3567 = vmatpush1.msra.mxu0 0.0
        %3568 = vmatprep.subr.mxu0 0.0
        %3569 = vmatpush1.msra.mxu0 0.0
        %3570 = vmatprep.subr.mxu0 0.0
        %3571 = vmatpush1.msra.mxu0 0.0
        %3572 = vmatprep.subr.mxu0 0.0
        %3573 = vmatpush1.msra.mxu0 0.0
        %3574 = vmatprep.subr.mxu0 0.0
        %3575 = vmatpush1.msra.mxu0 0.0
        %3576 = vmatprep.subr.mxu0 0.0
        %3577 = vmatpush1.msra.mxu0 0.0
        %3578 = vmatprep.subr.mxu0 0.0
        %3579 = vmatpush1.msra.mxu0 0.0
        %3580 = vmatprep.subr.mxu0 0.0
        %3581 = vmatpush1.msra.mxu0 0.0
        %3582 = vmatprep.subr.mxu0 0.0
        %3583 = vmatpush1.msra.mxu0 0.0
        %3584 = vmatprep.subr.mxu0 0.0
        %3585 = vmatpush1.msra.mxu0 0.0
        %3586 = vmatprep.subr.mxu0 0.0
        %3587 = vmatpush1.msra.mxu0 0.0
        %3588 = vmatprep.subr.mxu0 0.0
        %3589 = vmatpush1.msra.mxu0 0.0
        %3590 = vmatprep.subr.mxu0 0.0
        %3591 = vmatpush1.msra.mxu0 0.0
        %3592 = vmatprep.subr.mxu0 0.0
        %3593 = vmatpush1.msra.mxu0 0.0
        %3594 = vmatprep.subr.mxu0 0.0
        %3595 = vmatpush1.msra.mxu0 0.0
        %3596 = vmatprep.subr.mxu0 0.0
        %3597 = vmatpush1.msra.mxu0 0.0
        %3598 = vmatprep.subr.mxu0 0.0
        %3599 = vmatpush1.msra.mxu0 0.0
        %3600 = vmatprep.subr.mxu0 0.0
        %3601 = vmatpush1.msra.mxu0 0.0
        %3602 = vmatprep.mubr.f32.mxu0 0.0
        %3603 = vmatmul.mubr.f32.gmra.mrb[0].mxu0 %v3137
        %v3604 = vpop.f32.mrb[0].mxu0
        %v3605 = vadd.f32 %v3325, %v3604
        %v3606 = vpop.f32.mrb[0].mxu0
        %3607 = vmatprep.mubr.f32.mxu0 0.0
        %3608 = vmatmul.mubr.f32.gmra.mrb[0].mxu0 %v3140
        %v3609 = vpop.f32.mrb[0].mxu0
        %v3610 = vadd.f32 %v3325, %v3609
        %v3611 = vpop.f32.mrb[0].mxu0
        %3612 = vmatprep.mubr.f32.mxu0 0.0
        %3613 = vmatmul.mubr.f32.gmra.mrb[0].mxu0 %v3143
        %v3614 = vpop.f32.mrb[0].mxu0
        %v3615 = vadd.f32 %v3325, %v3614
        %v3616 = vpop.f32.mrb[0].mxu0
        %3617 = vmatprep.mubr.f32.mxu0 0.0
        %3618 = vmatmul.mubr.f32.gmra.mrb[0].mxu0 %v3146
        %v3619 = vpop.f32.mrb[0].mxu0
        %v3620 = vadd.f32 %v3325, %v3619
        %v3621 = vpop.f32.mrb[0].mxu0
        %3622 = vmatprep.mubr.f32.mxu0 0.0
        %3623 = vmatmul.mubr.f32.gmra.mrb[0].mxu0 %v3149
        %v3624 = vpop.f32.mrb[0].mxu0
        %v3625 = vadd.f32 %v3325, %v3624
        %v3626 = vpop.f32.mrb[0].mxu0
        %3627 = vmatprep.mubr.f32.mxu0 0.0
        %3628 = vmatmul.mubr.f32.gmra.mrb[0].mxu0 %v3152
        %v3629 = vpop.f32.mrb[0].mxu0
        %v3630 = vadd.f32 %v3325, %v3629
        %v3631 = vpop.f32.mrb[0].mxu0
        %3632 = vmatprep.mubr.f32.mxu0 0.0
        %3633 = vmatmul.mubr.f32.gmra.mrb[0].mxu0 %v3155
        %v3634 = vpop.f32.mrb[0].mxu0
        %v3635 = vadd.f32 %v3325, %v3634
        %v3636 = vpop.f32.mrb[0].mxu0
        %3637 = vmatprep.mubr.f32.mxu0 0.0
        %3638 = vmatmul.mubr.f32.gmra.mrb[0].mxu0 %v3158
        %v3639 = vpop.f32.mrb[0].mxu0
        %v3640 = vadd.f32 %v3325, %v3639
        %v3641 = vpop.f32.mrb[0].mxu0
        %3642 = vmatprep.mubr.f32.mxu0 0.0
        %3643 = vmatmul.mubr.f32.gmra.mrb[0].mxu0 %v3161
        %v3644 = vpop.f32.mrb[0].mxu0
        %v3645 = vadd.f32 %v3325, %v3644
        %v3646 = vpop.f32.mrb[0].mxu0
        %3647 = vmatprep.mubr.f32.mxu0 0.0
        %3648 = vmatmul.mubr.f32.gmra.mrb[0].mxu0 %v3164
        %v3649 = vpop.f32.mrb[0].mxu0
        %v3650 = vadd.f32 %v3325, %v3649
        %v3651 = vpop.f32.mrb[0].mxu0
        %3652 = vmatprep.mubr.f32.mxu0 0.0
        %3653 = vmatmul.mubr.f32.gmra.mrb[0].mxu0 %v3167
        %v3654 = vpop.f32.mrb[0].mxu0
        %v3655 = vadd.f32 %v3325, %v3654
        %v3656 = vpop.f32.mrb[0].mxu0
        %3657 = vmatprep.mubr.f32.mxu0 0.0
        %3658 = vmatmul.mubr.f32.gmra.mrb[0].mxu0 %v3170
        %v3659 = vpop.f32.mrb[0].mxu0
        %v3660 = vadd.f32 %v3325, %v3659
        %v3661 = vpop.f32.mrb[0].mxu0
        %3662 = vmatprep.mubr.f32.mxu0 0.0
        %3663 = vmatmul.mubr.f32.gmra.mrb[0].mxu0 %v3173
        %v3664 = vpop.f32.mrb[0].mxu0
        %v3665 = vadd.f32 %v3325, %v3664
        %v3666 = vpop.f32.mrb[0].mxu0
        %3667 = vmatprep.mubr.f32.mxu0 0.0
        %3668 = vmatmul.mubr.f32.gmra.mrb[0].mxu0 %v3176
        %v3669 = vpop.f32.mrb[0].mxu0
        %v3670 = vadd.f32 %v3325, %v3669
        %v3671 = vpop.f32.mrb[0].mxu0
        %3672 = vmatprep.mubr.f32.mxu0 0.0
        %3673 = vmatmul.mubr.f32.gmra.mrb[0].mxu0 %v3179
        %v3674 = vpop.f32.mrb[0].mxu0
        %v3675 = vadd.f32 %v3325, %v3674
        %v3676 = vpop.f32.mrb[0].mxu0
        %3677 = vmatprep.mubr.f32.mxu0 0.0
        %3678 = vmatmul.mubr.f32.gmra.mrb[0].mxu0 %v3182
        %v3679 = vpop.f32.mrb[0].mxu0
        %v3680 = vadd.f32 %v3325, %v3679
        %v3681 = vpop.f32.mrb[0].mxu0
        %3682 = vmatprep.mubr.f32.mxu0 0.0
        %3683 = vmatmul.mubr.f32.gmra.mrb[0].mxu0 %v3185
        %v3684 = vpop.f32.mrb[0].mxu0
        %v3685 = vadd.f32 %v3325, %v3684
        %v3686 = vpop.f32.mrb[0].mxu0
        %3687 = vmatprep.mubr.f32.mxu0 0.0
        %3688 = vmatmul.mubr.f32.gmra.mrb[0].mxu0 %v3188
        %v3689 = vpop.f32.mrb[0].mxu0
        %v3690 = vadd.f32 %v3325, %v3689
        %v3691 = vpop.f32.mrb[0].mxu0
        %3692 = vmatprep.mubr.f32.mxu0 0.0
        %3693 = vmatmul.mubr.f32.gmra.mrb[0].mxu0 %v3191
        %v3694 = vpop.f32.mrb[0].mxu0
        %v3695 = vadd.f32 %v3325, %v3694
        %v3696 = vpop.f32.mrb[0].mxu0
        %3697 = vmatprep.mubr.f32.mxu0 0.0
        %3698 = vmatmul.mubr.f32.gmra.mrb[0].mxu0 %v3194
        %v3699 = vpop.f32.mrb[0].mxu0
        %v3700 = vadd.f32 %v3325, %v3699
        %v3701 = vpop.f32.mrb[0].mxu0
        %3702 = vmatprep.mubr.f32.mxu0 0.0
        %3703 = vmatmul.mubr.f32.gmra.mrb[0].mxu0 %v3197
        %v3704 = vpop.f32.mrb[0].mxu0
        %v3705 = vadd.f32 %v3325, %v3704
        %v3706 = vpop.f32.mrb[0].mxu0
        %3707 = vmatprep.mubr.f32.mxu0 0.0
        %3708 = vmatmul.mubr.f32.gmra.mrb[0].mxu0 %v3200
        %v3709 = vpop.f32.mrb[0].mxu0
        %v3710 = vadd.f32 %v3325, %v3709
        %v3711 = vpop.f32.mrb[0].mxu0
        %3712 = vmatprep.mubr.f32.mxu0 0.0
        %3713 = vmatmul.mubr.f32.gmra.mrb[0].mxu0 %v3203
        %v3714 = vpop.f32.mrb[0].mxu0
        %v3715 = vadd.f32 %v3325, %v3714
        %v3716 = vpop.f32.mrb[0].mxu0
        %3717 = vmatprep.mubr.f32.mxu0 0.0
        %3718 = vmatmul.mubr.f32.gmra.mrb[0].mxu0 %v3206
        %v3719 = vpop.f32.mrb[0].mxu0
        %v3720 = vadd.f32 %v3325, %v3719
        %v3721 = vpop.f32.mrb[0].mxu0
        %3722 = vdwg.mxu0
        %v3723 = vmul.f32 %v3396, 0.2
        %v3724 = vmul.f32 %v3398, 0.2
        %v3725 = vmul.f32 %v3605, 0.2
        %v3726 = vmul.f32 %v3402, 0.2
        %v3727 = vmul.f32 %v3404, 0.2
        %v3728 = vmul.f32 %v3610, 0.2
        %v3729 = vmul.f32 %v3408, 0.2
        %v3730 = vmul.f32 %v3410, 0.2
        %v3731 = vmul.f32 %v3615, 0.2
        %v3732 = vmul.f32 %v3414, 0.2
        %v3733 = vmul.f32 %v3416, 0.2
        %v3734 = vmul.f32 %v3620, 0.2
        %v3735 = vmul.f32 %v3420, 0.2
        %v3736 = vmul.f32 %v3422, 0.2
        %v3737 = vmul.f32 %v3625, 0.2
        %v3738 = vmul.f32 %v3426, 0.2
        %v3739 = vmul.f32 %v3428, 0.2
        %v3740 = vmul.f32 %v3630, 0.2
        %v3741 = vmul.f32 %v3432, 0.2
        %v3742 = vmul.f32 %v3434, 0.2
        %v3743 = vmul.f32 %v3635, 0.2
        %v3744 = vmul.f32 %v3438, 0.2
        %v3745 = vmul.f32 %v3440, 0.2
        %v3746 = vmul.f32 %v3640, 0.2
        %v3747 = vmul.f32 %v3444, 0.2
        %v3748 = vmul.f32 %v3446, 0.2
        %v3749 = vmul.f32 %v3645, 0.2
        %v3750 = vmul.f32 %v3450, 0.2
        %v3751 = vmul.f32 %v3452, 0.2
        %v3752 = vmul.f32 %v3650, 0.2
        %v3753 = vmul.f32 %v3456, 0.2
        %v3754 = vmul.f32 %v3458, 0.2
        %v3755 = vmul.f32 %v3655, 0.2
        %v3756 = vmul.f32 %v3462, 0.2
        %v3757 = vmul.f32 %v3464, 0.2
        %v3758 = vmul.f32 %v3660, 0.2
        %v3759 = vmul.f32 %v3468, 0.2
        %v3760 = vmul.f32 %v3470, 0.2
        %v3761 = vmul.f32 %v3665, 0.2
        %v3762 = vmul.f32 %v3474, 0.2
        %v3763 = vmul.f32 %v3476, 0.2
        %v3764 = vmul.f32 %v3670, 0.2
        %v3765 = vmul.f32 %v3480, 0.2
        %v3766 = vmul.f32 %v3482, 0.2
        %v3767 = vmul.f32 %v3675, 0.2
        %v3768 = vmul.f32 %v3486, 0.2
        %v3769 = vmul.f32 %v3488, 0.2
        %v3770 = vmul.f32 %v3680, 0.2
        %v3771 = vmul.f32 %v3492, 0.2
        %v3772 = vmul.f32 %v3494, 0.2
        %v3773 = vmul.f32 %v3685, 0.2
        %v3774 = vmul.f32 %v3498, 0.2
        %v3775 = vmul.f32 %v3500, 0.2
        %v3776 = vmul.f32 %v3690, 0.2
        %v3777 = vmul.f32 %v3504, 0.2
        %v3778 = vmul.f32 %v3506, 0.2
        %v3779 = vmul.f32 %v3695, 0.2
        %v3780 = vmul.f32 %v3510, 0.2
        %v3781 = vmul.f32 %v3512, 0.2
        %v3782 = vmul.f32 %v3700, 0.2
        %v3783 = vmul.f32 %v3516, 0.2
        %v3784 = vmul.f32 %v3518, 0.2
        %v3785 = vmul.f32 %v3705, 0.2
        %v3786 = vmul.f32 %v3522, 0.2
        %v3787 = vmul.f32 %v3524, 0.2
        %v3788 = vmul.f32 %v3710, 0.2
        %v3789 = vmul.f32 %v3528, 0.2
        %v3790 = vmul.f32 %v3530, 0.2
        %v3791 = vmul.f32 %v3715, 0.2
        %v3792 = vmul.f32 %v3534, 0.2
        %v3793 = vmul.f32 %v3536, 0.2
        %v3794 = vmul.f32 %v3720, 0.2
        %v3795 = vmax.f32 %v3396, %v3723
        %v3796 = vmax.f32 %v3398, %v3724
        %v3797 = vmax.f32 %v3605, %v3725
        %v3798 = vmax.f32 %v3402, %v3726
        %v3799 = vmax.f32 %v3404, %v3727
        %v3800 = vmax.f32 %v3610, %v3728
        %v3801 = vmax.f32 %v3408, %v3729
        %v3802 = vmax.f32 %v3410, %v3730
        %v3803 = vmax.f32 %v3615, %v3731
        %v3804 = vmax.f32 %v3414, %v3732
        %v3805 = vmax.f32 %v3416, %v3733
        %v3806 = vmax.f32 %v3620, %v3734
        %v3807 = vmax.f32 %v3420, %v3735
        %v3808 = vmax.f32 %v3422, %v3736
        %v3809 = vmax.f32 %v3625, %v3737
        %v3810 = vmax.f32 %v3426, %v3738
        %v3811 = vmax.f32 %v3428, %v3739
        %v3812 = vmax.f32 %v3630, %v3740
        %v3813 = vmax.f32 %v3432, %v3741
        %v3814 = vmax.f32 %v3434, %v3742
        %v3815 = vmax.f32 %v3635, %v3743
        %v3816 = vmax.f32 %v3438, %v3744
        %v3817 = vmax.f32 %v3440, %v3745
        %v3818 = vmax.f32 %v3640, %v3746
        %v3819 = vmax.f32 %v3444, %v3747
        %v3820 = vmax.f32 %v3446, %v3748
        %v3821 = vmax.f32 %v3645, %v3749
        %v3822 = vmax.f32 %v3450, %v3750
        %v3823 = vmax.f32 %v3452, %v3751
        %v3824 = vmax.f32 %v3650, %v3752
        %v3825 = vmax.f32 %v3456, %v3753
        %v3826 = vmax.f32 %v3458, %v3754
        %v3827 = vmax.f32 %v3655, %v3755
        %v3828 = vmax.f32 %v3462, %v3756
        %v3829 = vmax.f32 %v3464, %v3757
        %v3830 = vmax.f32 %v3660, %v3758
        %v3831 = vmax.f32 %v3468, %v3759
        %v3832 = vmax.f32 %v3470, %v3760
        %v3833 = vmax.f32 %v3665, %v3761
        %v3834 = vmax.f32 %v3474, %v3762
        %v3835 = vmax.f32 %v3476, %v3763
        %v3836 = vmax.f32 %v3670, %v3764
        %v3837 = vmax.f32 %v3480, %v3765
        %v3838 = vmax.f32 %v3482, %v3766
        %v3839 = vmax.f32 %v3675, %v3767
        %v3840 = vmax.f32 %v3486, %v3768
        %v3841 = vmax.f32 %v3488, %v3769
        %v3842 = vmax.f32 %v3680, %v3770
        %v3843 = vmax.f32 %v3492, %v3771
        %v3844 = vmax.f32 %v3494, %v3772
        %v3845 = vmax.f32 %v3685, %v3773
        %v3846 = vmax.f32 %v3498, %v3774
        %v3847 = vmax.f32 %v3500, %v3775
        %v3848 = vmax.f32 %v3690, %v3776
        %v3849 = vmax.f32 %v3504, %v3777
        %v3850 = vmax.f32 %v3506, %v3778
        %v3851 = vmax.f32 %v3695, %v3779
        %v3852 = vmax.f32 %v3510, %v3780
        %v3853 = vmax.f32 %v3512, %v3781
        %v3854 = vmax.f32 %v3700, %v3782
        %v3855 = vmax.f32 %v3516, %v3783
        %v3856 = vmax.f32 %v3518, %v3784
        %v3857 = vmax.f32 %v3705, %v3785
        %v3858 = vmax.f32 %v3522, %v3786
        %v3859 = vmax.f32 %v3524, %v3787
        %v3860 = vmax.f32 %v3710, %v3788
        %v3861 = vmax.f32 %v3528, %v3789
        %v3862 = vmax.f32 %v3530, %v3790
        %v3863 = vmax.f32 %v3715, %v3791
        %v3864 = vmax.f32 %v3534, %v3792
        %v3865 = vmax.f32 %v3536, %v3793
        %v3866 = vmax.f32 %v3720, %v3794
        %v3867 = vmax.f32 %v3795, -30.0
        %v3868 = vmax.f32 %v3796, -30.0
        %v3869 = vmax.f32 %v3797, -30.0
        %v3870 = vmax.f32 %v3798, -30.0
        %v3871 = vmax.f32 %v3799, -30.0
        %v3872 = vmax.f32 %v3800, -30.0
        %v3873 = vmax.f32 %v3801, -30.0
        %v3874 = vmax.f32 %v3802, -30.0
        %v3875 = vmax.f32 %v3803, -30.0
        %v3876 = vmax.f32 %v3804, -30.0
        %v3877 = vmax.f32 %v3805, -30.0
        %v3878 = vmax.f32 %v3806, -30.0
        %v3879 = vmax.f32 %v3807, -30.0
        %v3880 = vmax.f32 %v3808, -30.0
        %v3881 = vmax.f32 %v3809, -30.0
        %v3882 = vmax.f32 %v3810, -30.0
        %v3883 = vmax.f32 %v3811, -30.0
        %v3884 = vmax.f32 %v3812, -30.0
        %v3885 = vmax.f32 %v3813, -30.0
        %v3886 = vmax.f32 %v3814, -30.0
        %v3887 = vmax.f32 %v3815, -30.0
        %v3888 = vmax.f32 %v3816, -30.0
        %v3889 = vmax.f32 %v3817, -30.0
        %v3890 = vmax.f32 %v3818, -30.0
        %v3891 = vmax.f32 %v3819, -30.0
        %v3892 = vmax.f32 %v3820, -30.0
        %v3893 = vmax.f32 %v3821, -30.0
        %v3894 = vmax.f32 %v3822, -30.0
        %v3895 = vmax.f32 %v3823, -30.0
        %v3896 = vmax.f32 %v3824, -30.0
        %v3897 = vmax.f32 %v3825, -30.0
        %v3898 = vmax.f32 %v3826, -30.0
        %v3899 = vmax.f32 %v3827, -30.0
        %v3900 = vmax.f32 %v3828, -30.0
        %v3901 = vmax.f32 %v3829, -30.0
        %v3902 = vmax.f32 %v3830, -30.0
        %v3903 = vmax.f32 %v3831, -30.0
        %v3904 = vmax.f32 %v3832, -30.0
        %v3905 = vmax.f32 %v3833, -30.0
        %v3906 = vmax.f32 %v3834, -30.0
        %v3907 = vmax.f32 %v3835, -30.0
        %v3908 = vmax.f32 %v3836, -30.0
        %v3909 = vmax.f32 %v3837, -30.0
        %v3910 = vmax.f32 %v3838, -30.0
        %v3911 = vmax.f32 %v3839, -30.0
        %v3912 = vmax.f32 %v3840, -30.0
        %v3913 = vmax.f32 %v3841, -30.0
        %v3914 = vmax.f32 %v3842, -30.0
        %v3915 = vmax.f32 %v3843, -30.0
        %v3916 = vmax.f32 %v3844, -30.0
        %v3917 = vmax.f32 %v3845, -30.0
        %v3918 = vmax.f32 %v3846, -30.0
        %v3919 = vmax.f32 %v3847, -30.0
        %v3920 = vmax.f32 %v3848, -30.0
        %v3921 = vmax.f32 %v3849, -30.0
        %v3922 = vmax.f32 %v3850, -30.0
        %v3923 = vmax.f32 %v3851, -30.0
        %v3924 = vmax.f32 %v3852, -30.0
        %v3925 = vmax.f32 %v3853, -30.0
        %v3926 = vmax.f32 %v3854, -30.0
        %v3927 = vmax.f32 %v3855, -30.0
        %v3928 = vmax.f32 %v3856, -30.0
        %v3929 = vmax.f32 %v3857, -30.0
        %v3930 = vmax.f32 %v3858, -30.0
        %v3931 = vmax.f32 %v3859, -30.0
        %v3932 = vmax.f32 %v3860, -30.0
        %v3933 = vmax.f32 %v3861, -30.0
        %v3934 = vmax.f32 %v3862, -30.0
        %v3935 = vmax.f32 %v3863, -30.0
        %v3936 = vmax.f32 %v3864, -30.0
        %v3937 = vmax.f32 %v3865, -30.0
        %v3938 = vmax.f32 %v3866, -30.0
        %v3939 = vmin.f32 %v3867, 30.0
        %v3940 = vmin.f32 %v3868, 30.0
        %v3941 = vmin.f32 %v3869, 30.0
        %v3942 = vmin.f32 %v3870, 30.0
        %v3943 = vmin.f32 %v3871, 30.0
        %v3944 = vmin.f32 %v3872, 30.0
        %v3945 = vmin.f32 %v3873, 30.0
        %v3946 = vmin.f32 %v3874, 30.0
        %v3947 = vmin.f32 %v3875, 30.0
        %v3948 = vmin.f32 %v3876, 30.0
        %v3949 = vmin.f32 %v3877, 30.0
        %v3950 = vmin.f32 %v3878, 30.0
        %v3951 = vmin.f32 %v3879, 30.0
        %v3952 = vmin.f32 %v3880, 30.0
        %v3953 = vmin.f32 %v3881, 30.0
        %v3954 = vmin.f32 %v3882, 30.0
        %v3955 = vmin.f32 %v3883, 30.0
        %v3956 = vmin.f32 %v3884, 30.0
        %v3957 = vmin.f32 %v3885, 30.0
        %v3958 = vmin.f32 %v3886, 30.0
        %v3959 = vmin.f32 %v3887, 30.0
        %v3960 = vmin.f32 %v3888, 30.0
        %v3961 = vmin.f32 %v3889, 30.0
        %v3962 = vmin.f32 %v3890, 30.0
        %v3963 = vmin.f32 %v3891, 30.0
        %v3964 = vmin.f32 %v3892, 30.0
        %v3965 = vmin.f32 %v3893, 30.0
        %v3966 = vmin.f32 %v3894, 30.0
        %v3967 = vmin.f32 %v3895, 30.0
        %v3968 = vmin.f32 %v3896, 30.0
        %v3969 = vmin.f32 %v3897, 30.0
        %v3970 = vmin.f32 %v3898, 30.0
        %v3971 = vmin.f32 %v3899, 30.0
        %v3972 = vmin.f32 %v3900, 30.0
        %v3973 = vmin.f32 %v3901, 30.0
        %v3974 = vmin.f32 %v3902, 30.0
        %v3975 = vmin.f32 %v3903, 30.0
        %v3976 = vmin.f32 %v3904, 30.0
        %v3977 = vmin.f32 %v3905, 30.0
        %v3978 = vmin.f32 %v3906, 30.0
        %v3979 = vmin.f32 %v3907, 30.0
        %v3980 = vmin.f32 %v3908, 30.0
        %v3981 = vmin.f32 %v3909, 30.0
        %v3982 = vmin.f32 %v3910, 30.0
        %v3983 = vmin.f32 %v3911, 30.0
        %v3984 = vmin.f32 %v3912, 30.0
        %v3985 = vmin.f32 %v3913, 30.0
        %v3986 = vmin.f32 %v3914, 30.0
        %v3987 = vmin.f32 %v3915, 30.0
        %v3988 = vmin.f32 %v3916, 30.0
        %v3989 = vmin.f32 %v3917, 30.0
        %v3990 = vmin.f32 %v3918, 30.0
        %v3991 = vmin.f32 %v3919, 30.0
        %v3992 = vmin.f32 %v3920, 30.0
        %v3993 = vmin.f32 %v3921, 30.0
        %v3994 = vmin.f32 %v3922, 30.0
        %v3995 = vmin.f32 %v3923, 30.0
        %v3996 = vmin.f32 %v3924, 30.0
        %v3997 = vmin.f32 %v3925, 30.0
        %v3998 = vmin.f32 %v3926, 30.0
        %v3999 = vmin.f32 %v3927, 30.0
        %v4000 = vmin.f32 %v3928, 30.0
        %v4001 = vmin.f32 %v3929, 30.0
        %v4002 = vmin.f32 %v3930, 30.0
        %v4003 = vmin.f32 %v3931, 30.0
        %v4004 = vmin.f32 %v3932, 30.0
        %v4005 = vmin.f32 %v3933, 30.0
        %v4006 = vmin.f32 %v3934, 30.0
        %v4007 = vmin.f32 %v3935, 30.0
        %v4008 = vmin.f32 %v3936, 30.0
        %v4009 = vmin.f32 %v3937, 30.0
        %v4010 = vmin.f32 %v3938, 30.0
        %v4011 = vmul.f32 %v3939, 1.442695
        %v4012 = vpow.pop %v4011
        %v4013 = vmul.f32 %v3940, 1.442695
        %v4014 = vpow.pop %v4013
        %v4015 = vmul.f32 %v3941, 1.442695
        %v4016 = vpow.pop %v4015
        %v4017 = vmul.f32 %v3942, 1.442695
        %v4018 = vpow.pop %v4017
        %v4019 = vmul.f32 %v3943, 1.442695
        %v4020 = vpow.pop %v4019
        %v4021 = vmul.f32 %v3944, 1.442695
        %v4022 = vpow.pop %v4021
        %v4023 = vmul.f32 %v3945, 1.442695
        %v4024 = vpow.pop %v4023
        %v4025 = vmul.f32 %v3946, 1.442695
        %v4026 = vpow.pop %v4025
        %v4027 = vmul.f32 %v3947, 1.442695
        %v4028 = vpow.pop %v4027
        %v4029 = vmul.f32 %v3948, 1.442695
        %v4030 = vpow.pop %v4029
        %v4031 = vmul.f32 %v3949, 1.442695
        %v4032 = vpow.pop %v4031
        %v4033 = vmul.f32 %v3950, 1.442695
        %v4034 = vpow.pop %v4033
        %v4035 = vmul.f32 %v3951, 1.442695
        %v4036 = vpow.pop %v4035
        %v4037 = vmul.f32 %v3952, 1.442695
        %v4038 = vpow.pop %v4037
        %v4039 = vmul.f32 %v3953, 1.442695
        %v4040 = vpow.pop %v4039
        %v4041 = vmul.f32 %v3954, 1.442695
        %v4042 = vpow.pop %v4041
        %v4043 = vmul.f32 %v3955, 1.442695
        %v4044 = vpow.pop %v4043
        %v4045 = vmul.f32 %v3956, 1.442695
        %v4046 = vpow.pop %v4045
        %v4047 = vmul.f32 %v3957, 1.442695
        %v4048 = vpow.pop %v4047
        %v4049 = vmul.f32 %v3958, 1.442695
        %v4050 = vpow.pop %v4049
        %v4051 = vmul.f32 %v3959, 1.442695
        %v4052 = vpow.pop %v4051
        %v4053 = vmul.f32 %v3960, 1.442695
        %v4054 = vpow.pop %v4053
        %v4055 = vmul.f32 %v3961, 1.442695
        %v4056 = vpow.pop %v4055
        %v4057 = vmul.f32 %v3962, 1.442695
        %v4058 = vpow.pop %v4057
        %v4059 = vmul.f32 %v3963, 1.442695
        %v4060 = vpow.pop %v4059
        %v4061 = vmul.f32 %v3964, 1.442695
        %v4062 = vpow.pop %v4061
        %v4063 = vmul.f32 %v3965, 1.442695
        %v4064 = vpow.pop %v4063
        %v4065 = vmul.f32 %v3966, 1.442695
        %v4066 = vpow.pop %v4065
        %v4067 = vmul.f32 %v3967, 1.442695
        %v4068 = vpow.pop %v4067
        %v4069 = vmul.f32 %v3968, 1.442695
        %v4070 = vpow.pop %v4069
        %v4071 = vmul.f32 %v3969, 1.442695
        %v4072 = vpow.pop %v4071
        %v4073 = vmul.f32 %v3970, 1.442695
        %v4074 = vpow.pop %v4073
        %v4075 = vmul.f32 %v3971, 1.442695
        %v4076 = vpow.pop %v4075
        %v4077 = vmul.f32 %v3972, 1.442695
        %v4078 = vpow.pop %v4077
        %v4079 = vmul.f32 %v3973, 1.442695
        %v4080 = vpow.pop %v4079
        %v4081 = vmul.f32 %v3974, 1.442695
        %v4082 = vpow.pop %v4081
        %v4083 = vmul.f32 %v3975, 1.442695
        %v4084 = vpow.pop %v4083
        %v4085 = vmul.f32 %v3976, 1.442695
        %v4086 = vpow.pop %v4085
        %v4087 = vmul.f32 %v3977, 1.442695
        %v4088 = vpow.pop %v4087
        %v4089 = vmul.f32 %v3978, 1.442695
        %v4090 = vpow.pop %v4089
        %v4091 = vmul.f32 %v3979, 1.442695
        %v4092 = vpow.pop %v4091
        %v4093 = vmul.f32 %v3980, 1.442695
        %v4094 = vpow.pop %v4093
        %v4095 = vmul.f32 %v3981, 1.442695
        %v4096 = vpow.pop %v4095
        %v4097 = vmul.f32 %v3982, 1.442695
        %v4098 = vpow.pop %v4097
        %v4099 = vmul.f32 %v3983, 1.442695
        %v4100 = vpow.pop %v4099
        %v4101 = vmul.f32 %v3984, 1.442695
        %v4102 = vpow.pop %v4101
        %v4103 = vmul.f32 %v3985, 1.442695
        %v4104 = vpow.pop %v4103
        %v4105 = vmul.f32 %v3986, 1.442695
        %v4106 = vpow.pop %v4105
        %v4107 = vmul.f32 %v3987, 1.442695
        %v4108 = vpow.pop %v4107
        %v4109 = vmul.f32 %v3988, 1.442695
        %v4110 = vpow.pop %v4109
        %v4111 = vmul.f32 %v3989, 1.442695
        %v4112 = vpow.pop %v4111
        %v4113 = vmul.f32 %v3990, 1.442695
        %v4114 = vpow.pop %v4113
        %v4115 = vmul.f32 %v3991, 1.442695
        %v4116 = vpow.pop %v4115
        %v4117 = vmul.f32 %v3992, 1.442695
        %v4118 = vpow.pop %v4117
        %v4119 = vmul.f32 %v3993, 1.442695
        %v4120 = vpow.pop %v4119
        %v4121 = vmul.f32 %v3994, 1.442695
        %v4122 = vpow.pop %v4121
        %v4123 = vmul.f32 %v3995, 1.442695
        %v4124 = vpow.pop %v4123
        %v4125 = vmul.f32 %v3996, 1.442695
        %v4126 = vpow.pop %v4125
        %v4127 = vmul.f32 %v3997, 1.442695
        %v4128 = vpow.pop %v4127
        %v4129 = vmul.f32 %v3998, 1.442695
        %v4130 = vpow.pop %v4129
        %v4131 = vmul.f32 %v3999, 1.442695
        %v4132 = vpow.pop %v4131
        %v4133 = vmul.f32 %v4000, 1.442695
        %v4134 = vpow.pop %v4133
        %v4135 = vmul.f32 %v4001, 1.442695
        %v4136 = vpow.pop %v4135
        %v4137 = vmul.f32 %v4002, 1.442695
        %v4138 = vpow.pop %v4137
        %v4139 = vmul.f32 %v4003, 1.442695
        %v4140 = vpow.pop %v4139
        %v4141 = vmul.f32 %v4004, 1.442695
        %v4142 = vpow.pop %v4141
        %v4143 = vmul.f32 %v4005, 1.442695
        %v4144 = vpow.pop %v4143
        %v4145 = vmul.f32 %v4006, 1.442695
        %v4146 = vpow.pop %v4145
        %v4147 = vmul.f32 %v4007, 1.442695
        %v4148 = vpow.pop %v4147
        %v4149 = vmul.f32 %v4008, 1.442695
        %v4150 = vpow.pop %v4149
        %v4151 = vmul.f32 %v4009, 1.442695
        %v4152 = vpow.pop %v4151
        %v4153 = vmul.f32 %v4010, 1.442695
        %v4154 = vpow.pop %v4153
        %v4155 = vmul.f32 %v4012, %v540
        %v4156 = vmul.f32 %v4014, %v541
        %v4157 = vmul.f32 %v4016, %v542
        %v4158 = vmul.f32 %v4018, %v543
        %v4159 = vmul.f32 %v4020, %v544
        %v4160 = vmul.f32 %v4022, %v545
        %v4161 = vmul.f32 %v4024, %v546
        %v4162 = vmul.f32 %v4026, %v547
        %v4163 = vmul.f32 %v4028, %v548
        %v4164 = vmul.f32 %v4030, %v549
        %v4165 = vmul.f32 %v4032, %v550
        %v4166 = vmul.f32 %v4034, %v551
        %v4167 = vmul.f32 %v4036, %v552
        %v4168 = vmul.f32 %v4038, %v553
        %v4169 = vmul.f32 %v4040, %v554
        %v4170 = vmul.f32 %v4042, %v555
        %v4171 = vmul.f32 %v4044, %v556
        %v4172 = vmul.f32 %v4046, %v557
        %v4173 = vmul.f32 %v4048, %v558
        %v4174 = vmul.f32 %v4050, %v559
        %v4175 = vmul.f32 %v4052, %v560
        %v4176 = vmul.f32 %v4054, %v561
        %v4177 = vmul.f32 %v4056, %v562
        %v4178 = vmul.f32 %v4058, %v563
        %v4179 = vmul.f32 %v4060, %v564
        %v4180 = vmul.f32 %v4062, %v565
        %v4181 = vmul.f32 %v4064, %v566
        %v4182 = vmul.f32 %v4066, %v567
        %v4183 = vmul.f32 %v4068, %v568
        %v4184 = vmul.f32 %v4070, %v569
        %v4185 = vmul.f32 %v4072, %v570
        %v4186 = vmul.f32 %v4074, %v571
        %v4187 = vmul.f32 %v4076, %v572
        %v4188 = vmul.f32 %v4078, %v573
        %v4189 = vmul.f32 %v4080, %v574
        %v4190 = vmul.f32 %v4082, %v575
        %v4191 = vmul.f32 %v4084, %v576
        %v4192 = vmul.f32 %v4086, %v577
        %v4193 = vmul.f32 %v4088, %v578
        %v4194 = vmul.f32 %v4090, %v579
        %v4195 = vmul.f32 %v4092, %v580
        %v4196 = vmul.f32 %v4094, %v581
        %v4197 = vmul.f32 %v4096, %v582
        %v4198 = vmul.f32 %v4098, %v583
        %v4199 = vmul.f32 %v4100, %v584
        %v4200 = vmul.f32 %v4102, %v585
        %v4201 = vmul.f32 %v4104, %v586
        %v4202 = vmul.f32 %v4106, %v587
        %v4203 = vmul.f32 %v4108, %v588
        %v4204 = vmul.f32 %v4110, %v589
        %v4205 = vmul.f32 %v4112, %v590
        %v4206 = vmul.f32 %v4114, %v591
        %v4207 = vmul.f32 %v4116, %v592
        %v4208 = vmul.f32 %v4118, %v593
        %v4209 = vmul.f32 %v4120, %v594
        %v4210 = vmul.f32 %v4122, %v595
        %v4211 = vmul.f32 %v4124, %v596
        %v4212 = vmul.f32 %v4126, %v597
        %v4213 = vmul.f32 %v4128, %v598
        %v4214 = vmul.f32 %v4130, %v599
        %v4215 = vmul.f32 %v4132, %v600
        %v4216 = vmul.f32 %v4134, %v601
        %v4217 = vmul.f32 %v4136, %v602
        %v4218 = vmul.f32 %v4138, %v603
        %v4219 = vmul.f32 %v4140, %v604
        %v4220 = vmul.f32 %v4142, %v605
        %v4221 = vmul.f32 %v4144, %v606
        %v4222 = vmul.f32 %v4146, %v607
        %v4223 = vmul.f32 %v4148, %v608
        %v4224 = vmul.f32 %v4150, %v609
        %v4225 = vmul.f32 %v4152, %v610
        %v4226 = vmul.f32 %v4154, %v611
        %4227 = vst.msk [vmem:[#allocation2] sm:$0xff] %vm2116, %v3026
        %4228 = vst.msk [vmem:[#allocation2 + $0x8] sm:$0xff] %vm2116, %v3029
        %4229 = vst.msk [vmem:[#allocation2 + $0x10] sm:$0xff] %vm2116, %v3034
        %4230 = vst.msk [vmem:[#allocation2 + $0x18] sm:$0xff] %vm2116, %v3037
        %4231 = vst.msk [vmem:[#allocation2 + $0x20] sm:$0xff] %vm2116, %v3042
        %4232 = vst.msk [vmem:[#allocation2 + $0x28] sm:$0xff] %vm2116, %v3045
        %4233 = vst.msk [vmem:[#allocation2 + $0x30] sm:$0xff] %vm2116, %v3050
        %4234 = vst.msk [vmem:[#allocation2 + $0x38] sm:$0xff] %vm2116, %v3053
        %4235 = vst.msk [vmem:[#allocation2 + $0x40] sm:$0xff] %vm2116, %v3058
        %4236 = vst.msk [vmem:[#allocation2 + $0x48] sm:$0xff] %vm2116, %v3061
        %4237 = vst.msk [vmem:[#allocation2 + $0x50] sm:$0xff] %vm2116, %v3066
        %4238 = vst.msk [vmem:[#allocation2 + $0x58] sm:$0xff] %vm2116, %v3069
        %4239 = vst.msk [vmem:[#allocation2 + $0x60] sm:$0xff] %vm2116, %v3074
        %4240 = vst.msk [vmem:[#allocation2 + $0x68] sm:$0xff] %vm2116, %v3077
        %4241 = vst.msk [vmem:[#allocation2 + $0x70] sm:$0xff] %vm2116, %v3082
        %4242 = vst.msk [vmem:[#allocation2 + $0x78] sm:$0xff] %vm2116, %v3085
        %4243 = vst.msk [vmem:[#allocation2 + $0x80] sm:$0xff] %vm2116, %v3090
        %4244 = vst.msk [vmem:[#allocation2 + $0x88] sm:$0xff] %vm2116, %v3093
        %4245 = vst.msk [vmem:[#allocation2 + $0x90] sm:$0xff] %vm2116, %v3098
        %4246 = vst.msk [vmem:[#allocation2 + $0x98] sm:$0xff] %vm2116, %v3101
        %4247 = vst.msk [vmem:[#allocation2 + $0xa0] sm:$0xff] %vm2116, %v3106
        %4248 = vst.msk [vmem:[#allocation2 + $0xa8] sm:$0xff] %vm2116, %v3109
        %4249 = vst.msk [vmem:[#allocation2 + $0xb0] sm:$0xff] %vm2116, %v3114
        %4250 = vst.msk [vmem:[#allocation2 + $0xb8] sm:$0xff] %vm2116, %v3117
        %4251 = vst.msk [vmem:[#allocation2 + $0xc0] sm:$0xff] %vm2141, %v3026
        %4252 = vst.msk [vmem:[#allocation2 + $0xc8] sm:$0xff] %vm2141, %v3029
        %4253 = vst.msk [vmem:[#allocation2 + $0xd0] sm:$0xff] %vm2141, %v3034
        %4254 = vst.msk [vmem:[#allocation2 + $0xd8] sm:$0xff] %vm2141, %v3037
        %4255 = vst.msk [vmem:[#allocation2 + $0xe0] sm:$0xff] %vm2141, %v3042
        %4256 = vst.msk [vmem:[#allocation2 + $0xe8] sm:$0xff] %vm2141, %v3045
        %4257 = vst.msk [vmem:[#allocation2 + $0xf0] sm:$0xff] %vm2141, %v3050
        %4258 = vst.msk [vmem:[#allocation2 + $0xf8] sm:$0xff] %vm2141, %v3053
        %4259 = vst.msk [vmem:[#allocation2 + $0x100] sm:$0xff] %vm2141, %v3058
        %4260 = vst.msk [vmem:[#allocation2 + $0x108] sm:$0xff] %vm2141, %v3061
        %4261 = vst.msk [vmem:[#allocation2 + $0x110] sm:$0xff] %vm2141, %v3066
        %4262 = vst.msk [vmem:[#allocation2 + $0x118] sm:$0xff] %vm2141, %v3069
        %4263 = vst.msk [vmem:[#allocation2 + $0x120] sm:$0xff] %vm2141, %v3074
        %4264 = vst.msk [vmem:[#allocation2 + $0x128] sm:$0xff] %vm2141, %v3077
        %4265 = vst.msk [vmem:[#allocation2 + $0x130] sm:$0xff] %vm2141, %v3082
        %4266 = vst.msk [vmem:[#allocation2 + $0x138] sm:$0xff] %vm2141, %v3085
        %4267 = vst.msk [vmem:[#allocation2 + $0x140] sm:$0xff] %vm2141, %v3090
        %4268 = vst.msk [vmem:[#allocation2 + $0x148] sm:$0xff] %vm2141, %v3093
        %4269 = vst.msk [vmem:[#allocation2 + $0x150] sm:$0xff] %vm2141, %v3098
        %4270 = vst.msk [vmem:[#allocation2 + $0x158] sm:$0xff] %vm2141, %v3101
        %4271 = vst.msk [vmem:[#allocation2 + $0x160] sm:$0xff] %vm2141, %v3106
        %4272 = vst.msk [vmem:[#allocation2 + $0x168] sm:$0xff] %vm2141, %v3109
        %4273 = vst.msk [vmem:[#allocation2 + $0x170] sm:$0xff] %vm2141, %v3114
        %4274 = vst.msk [vmem:[#allocation2 + $0x178] sm:$0xff] %vm2141, %v3117
        %v4275 = vld [vmem:[#allocation2] sm:$0xff]
        %v4276 = vld [vmem:[#allocation2 + $0x8] sm:$0xff]
        %v4277 = vld [vmem:[#allocation2 + $0x10] sm:$0xff]
        %v4278 = vld [vmem:[#allocation2 + $0x18] sm:$0xff]
        %v4279 = vld [vmem:[#allocation2 + $0x20] sm:$0xff]
        %v4280 = vld [vmem:[#allocation2 + $0x28] sm:$0xff]
        %v4281 = vld [vmem:[#allocation2 + $0x30] sm:$0xff]
        %v4282 = vld [vmem:[#allocation2 + $0x38] sm:$0xff]
        %v4283 = vld [vmem:[#allocation2 + $0x40] sm:$0xff]
        %v4284 = vld [vmem:[#allocation2 + $0x48] sm:$0xff]
        %v4285 = vld [vmem:[#allocation2 + $0x50] sm:$0xff]
        %v4286 = vld [vmem:[#allocation2 + $0x58] sm:$0xff]
        %v4287 = vld [vmem:[#allocation2 + $0x60] sm:$0xff]
        %v4288 = vld [vmem:[#allocation2 + $0x68] sm:$0xff]
        %v4289 = vld [vmem:[#allocation2 + $0x70] sm:$0xff]
        %v4290 = vld [vmem:[#allocation2 + $0x78] sm:$0xff]
        %v4291 = vld [vmem:[#allocation2 + $0x80] sm:$0xff]
        %v4292 = vld [vmem:[#allocation2 + $0x88] sm:$0xff]
        %v4293 = vld [vmem:[#allocation2 + $0x90] sm:$0xff]
        %v4294 = vld [vmem:[#allocation2 + $0x98] sm:$0xff]
        %v4295 = vld [vmem:[#allocation2 + $0xa0] sm:$0xff]
        %v4296 = vld [vmem:[#allocation2 + $0xa8] sm:$0xff]
        %v4297 = vld [vmem:[#allocation2 + $0xb0] sm:$0xff]
        %v4298 = vld [vmem:[#allocation2 + $0xb8] sm:$0xff]
        %v4299 = vld [vmem:[#allocation2 + $0xc0] sm:$0xff]
        %v4300 = vld [vmem:[#allocation2 + $0xc8] sm:$0xff]
        %v4301 = vld [vmem:[#allocation2 + $0xd0] sm:$0xff]
        %v4302 = vld [vmem:[#allocation2 + $0xd8] sm:$0xff]
        %v4303 = vld [vmem:[#allocation2 + $0xe0] sm:$0xff]
        %v4304 = vld [vmem:[#allocation2 + $0xe8] sm:$0xff]
        %v4305 = vld [vmem:[#allocation2 + $0xf0] sm:$0xff]
        %v4306 = vld [vmem:[#allocation2 + $0xf8] sm:$0xff]
        %v4307 = vld [vmem:[#allocation2 + $0x100] sm:$0xff]
        %v4308 = vld [vmem:[#allocation2 + $0x108] sm:$0xff]
        %v4309 = vld [vmem:[#allocation2 + $0x110] sm:$0xff]
        %v4310 = vld [vmem:[#allocation2 + $0x118] sm:$0xff]
        %v4311 = vld [vmem:[#allocation2 + $0x120] sm:$0xff]
        %v4312 = vld [vmem:[#allocation2 + $0x128] sm:$0xff]
        %v4313 = vld [vmem:[#allocation2 + $0x130] sm:$0xff]
        %v4314 = vld [vmem:[#allocation2 + $0x138] sm:$0xff]
        %v4315 = vld [vmem:[#allocation2 + $0x140] sm:$0xff]
        %v4316 = vld [vmem:[#allocation2 + $0x148] sm:$0xff]
        %v4317 = vld [vmem:[#allocation2 + $0x150] sm:$0xff]
        %v4318 = vld [vmem:[#allocation2 + $0x158] sm:$0xff]
        %v4319 = vld [vmem:[#allocation2 + $0x160] sm:$0xff]
        %v4320 = vld [vmem:[#allocation2 + $0x168] sm:$0xff]
        %v4321 = vld [vmem:[#allocation2 + $0x170] sm:$0xff]
        %v4322 = vld [vmem:[#allocation2 + $0x178] sm:$0xff]
        %4323 = vmatprep.subr.mxu0 0.0
        %4324 = vmatpush1.msra.mxu0 %v4275
        %4325 = vmatprep.subr.mxu0 0.0
        %4326 = vmatpush1.msra.mxu0 %v4276
        %4327 = vmatprep.subr.mxu0 0.0
        %4328 = vmatpush1.msra.mxu0 %v4277
        %4329 = vmatprep.subr.mxu0 0.0
        %4330 = vmatpush1.msra.mxu0 %v4278
        %4331 = vmatprep.subr.mxu0 0.0
        %4332 = vmatpush1.msra.mxu0 %v4279
        %4333 = vmatprep.subr.mxu0 0.0
        %4334 = vmatpush1.msra.mxu0 %v4280
        %4335 = vmatprep.subr.mxu0 0.0
        %4336 = vmatpush1.msra.mxu0 %v4281
        %4337 = vmatprep.subr.mxu0 0.0
        %4338 = vmatpush1.msra.mxu0 %v4282
        %4339 = vmatprep.subr.mxu0 0.0
        %4340 = vmatpush1.msra.mxu0 %v4283
        %4341 = vmatprep.subr.mxu0 0.0
        %4342 = vmatpush1.msra.mxu0 %v4284
        %4343 = vmatprep.subr.mxu0 0.0
        %4344 = vmatpush1.msra.mxu0 %v4285
        %4345 = vmatprep.subr.mxu0 0.0
        %4346 = vmatpush1.msra.mxu0 %v4286
        %4347 = vmatprep.subr.mxu0 0.0
        %4348 = vmatpush1.msra.mxu0 %v4287
        %4349 = vmatprep.subr.mxu0 0.0
        %4350 = vmatpush1.msra.mxu0 %v4288
        %4351 = vmatprep.subr.mxu0 0.0
        %4352 = vmatpush1.msra.mxu0 %v4289
        %4353 = vmatprep.subr.mxu0 0.0
        %4354 = vmatpush1.msra.mxu0 %v4290
        %4355 = vmatprep.subr.mxu0 0.0
        %4356 = vmatpush1.msra.mxu0 %v4291
        %4357 = vmatprep.subr.mxu0 0.0
        %4358 = vmatpush1.msra.mxu0 %v4292
        %4359 = vmatprep.subr.mxu0 0.0
        %4360 = vmatpush1.msra.mxu0 %v4293
        %4361 = vmatprep.subr.mxu0 0.0
        %4362 = vmatpush1.msra.mxu0 %v4294
        %4363 = vmatprep.subr.mxu0 0.0
        %4364 = vmatpush1.msra.mxu0 %v4295
        %4365 = vmatprep.subr.mxu0 0.0
        %4366 = vmatpush1.msra.mxu0 %v4296
        %4367 = vmatprep.subr.mxu0 0.0
        %4368 = vmatpush1.msra.mxu0 %v4297
        %4369 = vmatprep.subr.mxu0 0.0
        %4370 = vmatpush1.msra.mxu0 %v4298
        %4371 = vmatprep.subr.mxu0 0.0
        %4372 = vmatpush1.msra.mxu0 %v4299
        %4373 = vmatprep.subr.mxu0 0.0
        %4374 = vmatpush1.msra.mxu0 %v4300
        %4375 = vmatprep.subr.mxu0 0.0
        %4376 = vmatpush1.msra.mxu0 %v4301
        %4377 = vmatprep.subr.mxu0 0.0
        %4378 = vmatpush1.msra.mxu0 %v4302
        %4379 = vmatprep.subr.mxu0 0.0
        %4380 = vmatpush1.msra.mxu0 %v4303
        %4381 = vmatprep.subr.mxu0 0.0
        %4382 = vmatpush1.msra.mxu0 %v4304
        %4383 = vmatprep.subr.mxu0 0.0
        %4384 = vmatpush1.msra.mxu0 %v4305
        %4385 = vmatprep.subr.mxu0 0.0
        %4386 = vmatpush1.msra.mxu0 %v4306
        %4387 = vmatprep.mubr.f32.mxu0 %v4156
        %4388 = vmatmul.mubr.f32.gmra.mrb[0].mxu0 %v4155
        %v4389 = vpop.f32.mrb[0].mxu0
        %v4390 = vadd.f32 0.0, %v4389
        %v4391 = vpop.f32.mrb[0].mxu0
        %4392 = vmatprep.mubr.f32.mxu0 %v4159
        %4393 = vmatmul.mubr.f32.gmra.mrb[0].mxu0 %v4158
        %v4394 = vpop.f32.mrb[0].mxu0
        %v4395 = vadd.f32 0.0, %v4394
        %v4396 = vpop.f32.mrb[0].mxu0
        %4397 = vmatprep.mubr.f32.mxu0 %v4162
        %4398 = vmatmul.mubr.f32.gmra.mrb[0].mxu0 %v4161
        %v4399 = vpop.f32.mrb[0].mxu0
        %v4400 = vadd.f32 0.0, %v4399
        %v4401 = vpop.f32.mrb[0].mxu0
        %4402 = vmatprep.mubr.f32.mxu0 %v4165
        %4403 = vmatmul.mubr.f32.gmra.mrb[0].mxu0 %v4164
        %v4404 = vpop.f32.mrb[0].mxu0
        %v4405 = vadd.f32 0.0, %v4404
        %v4406 = vpop.f32.mrb[0].mxu0
        %4407 = vmatprep.mubr.f32.mxu0 %v4168
        %4408 = vmatmul.mubr.f32.gmra.mrb[0].mxu0 %v4167
        %v4409 = vpop.f32.mrb[0].mxu0
        %v4410 = vadd.f32 0.0, %v4409
        %v4411 = vpop.f32.mrb[0].mxu0
        %4412 = vmatprep.mubr.f32.mxu0 %v4171
        %4413 = vmatmul.mubr.f32.gmra.mrb[0].mxu0 %v4170
        %v4414 = vpop.f32.mrb[0].mxu0
        %v4415 = vadd.f32 0.0, %v4414
        %v4416 = vpop.f32.mrb[0].mxu0
        %4417 = vmatprep.mubr.f32.mxu0 %v4174
        %4418 = vmatmul.mubr.f32.gmra.mrb[0].mxu0 %v4173
        %v4419 = vpop.f32.mrb[0].mxu0
        %v4420 = vadd.f32 0.0, %v4419
        %v4421 = vpop.f32.mrb[0].mxu0
        %4422 = vmatprep.mubr.f32.mxu0 %v4177
        %4423 = vmatmul.mubr.f32.gmra.mrb[0].mxu0 %v4176
        %v4424 = vpop.f32.mrb[0].mxu0
        %v4425 = vadd.f32 0.0, %v4424
        %v4426 = vpop.f32.mrb[0].mxu0
        %4427 = vmatprep.mubr.f32.mxu0 %v4180
        %4428 = vmatmul.mubr.f32.gmra.mrb[0].mxu0 %v4179
        %v4429 = vpop.f32.mrb[0].mxu0
        %v4430 = vadd.f32 0.0, %v4429
        %v4431 = vpop.f32.mrb[0].mxu0
        %4432 = vmatprep.mubr.f32.mxu0 %v4183
        %4433 = vmatmul.mubr.f32.gmra.mrb[0].mxu0 %v4182
        %v4434 = vpop.f32.mrb[0].mxu0
        %v4435 = vadd.f32 0.0, %v4434
        %v4436 = vpop.f32.mrb[0].mxu0
        %4437 = vmatprep.mubr.f32.mxu0 %v4186
        %4438 = vmatmul.mubr.f32.gmra.mrb[0].mxu0 %v4185
        %v4439 = vpop.f32.mrb[0].mxu0
        %v4440 = vadd.f32 0.0, %v4439
        %v4441 = vpop.f32.mrb[0].mxu0
        %4442 = vmatprep.mubr.f32.mxu0 %v4189
        %4443 = vmatmul.mubr.f32.gmra.mrb[0].mxu0 %v4188
        %v4444 = vpop.f32.mrb[0].mxu0
        %v4445 = vadd.f32 0.0, %v4444
        %v4446 = vpop.f32.mrb[0].mxu0
        %4447 = vmatprep.mubr.f32.mxu0 %v4192
        %4448 = vmatmul.mubr.f32.gmra.mrb[0].mxu0 %v4191
        %v4449 = vpop.f32.mrb[0].mxu0
        %v4450 = vadd.f32 0.0, %v4449
        %v4451 = vpop.f32.mrb[0].mxu0
        %4452 = vmatprep.mubr.f32.mxu0 %v4195
        %4453 = vmatmul.mubr.f32.gmra.mrb[0].mxu0 %v4194
        %v4454 = vpop.f32.mrb[0].mxu0
        %v4455 = vadd.f32 0.0, %v4454
        %v4456 = vpop.f32.mrb[0].mxu0
        %4457 = vmatprep.mubr.f32.mxu0 %v4198
        %4458 = vmatmul.mubr.f32.gmra.mrb[0].mxu0 %v4197
        %v4459 = vpop.f32.mrb[0].mxu0
        %v4460 = vadd.f32 0.0, %v4459
        %v4461 = vpop.f32.mrb[0].mxu0
        %4462 = vmatprep.mubr.f32.mxu0 %v4201
        %4463 = vmatmul.mubr.f32.gmra.mrb[0].mxu0 %v4200
        %v4464 = vpop.f32.mrb[0].mxu0
        %v4465 = vadd.f32 0.0, %v4464
        %v4466 = vpop.f32.mrb[0].mxu0
        %4467 = vmatprep.mubr.f32.mxu0 %v4204
        %4468 = vmatmul.mubr.f32.gmra.mrb[0].mxu0 %v4203
        %v4469 = vpop.f32.mrb[0].mxu0
        %v4470 = vadd.f32 0.0, %v4469
        %v4471 = vpop.f32.mrb[0].mxu0
        %4472 = vmatprep.mubr.f32.mxu0 %v4207
        %4473 = vmatmul.mubr.f32.gmra.mrb[0].mxu0 %v4206
        %v4474 = vpop.f32.mrb[0].mxu0
        %v4475 = vadd.f32 0.0, %v4474
        %v4476 = vpop.f32.mrb[0].mxu0
        %4477 = vmatprep.mubr.f32.mxu0 %v4210
        %4478 = vmatmul.mubr.f32.gmra.mrb[0].mxu0 %v4209
        %v4479 = vpop.f32.mrb[0].mxu0
        %v4480 = vadd.f32 0.0, %v4479
        %v4481 = vpop.f32.mrb[0].mxu0
        %4482 = vmatprep.mubr.f32.mxu0 %v4213
        %4483 = vmatmul.mubr.f32.gmra.mrb[0].mxu0 %v4212
        %v4484 = vpop.f32.mrb[0].mxu0
        %v4485 = vadd.f32 0.0, %v4484
        %v4486 = vpop.f32.mrb[0].mxu0
        %4487 = vmatprep.mubr.f32.mxu0 %v4216
        %4488 = vmatmul.mubr.f32.gmra.mrb[0].mxu0 %v4215
        %v4489 = vpop.f32.mrb[0].mxu0
        %v4490 = vadd.f32 0.0, %v4489
        %v4491 = vpop.f32.mrb[0].mxu0
        %4492 = vmatprep.mubr.f32.mxu0 %v4219
        %4493 = vmatmul.mubr.f32.gmra.mrb[0].mxu0 %v4218
        %v4494 = vpop.f32.mrb[0].mxu0
        %v4495 = vadd.f32 0.0, %v4494
        %v4496 = vpop.f32.mrb[0].mxu0
        %4497 = vmatprep.mubr.f32.mxu0 %v4222
        %4498 = vmatmul.mubr.f32.gmra.mrb[0].mxu0 %v4221
        %v4499 = vpop.f32.mrb[0].mxu0
        %v4500 = vadd.f32 0.0, %v4499
        %v4501 = vpop.f32.mrb[0].mxu0
        %4502 = vmatprep.mubr.f32.mxu0 %v4225
        %4503 = vmatmul.mubr.f32.gmra.mrb[0].mxu0 %v4224
        %v4504 = vpop.f32.mrb[0].mxu0
        %v4505 = vadd.f32 0.0, %v4504
        %v4506 = vpop.f32.mrb[0].mxu0
        %4507 = vdwg.mxu0
        %4508 = vmatprep.subr.mxu0 0.0
        %4509 = vmatpush1.msra.mxu0 %v4307
        %4510 = vmatprep.subr.mxu0 0.0
        %4511 = vmatpush1.msra.mxu0 %v4308
        %4512 = vmatprep.subr.mxu0 0.0
        %4513 = vmatpush1.msra.mxu0 %v4309
        %4514 = vmatprep.subr.mxu0 0.0
        %4515 = vmatpush1.msra.mxu0 %v4310
        %4516 = vmatprep.subr.mxu0 0.0
        %4517 = vmatpush1.msra.mxu0 %v4311
        %4518 = vmatprep.subr.mxu0 0.0
        %4519 = vmatpush1.msra.mxu0 %v4312
        %4520 = vmatprep.subr.mxu0 0.0
        %4521 = vmatpush1.msra.mxu0 %v4313
        %4522 = vmatprep.subr.mxu0 0.0
        %4523 = vmatpush1.msra.mxu0 %v4314
        %4524 = vmatprep.subr.mxu0 0.0
        %4525 = vmatpush1.msra.mxu0 %v4315
        %4526 = vmatprep.subr.mxu0 0.0
        %4527 = vmatpush1.msra.mxu0 %v4316
        %4528 = vmatprep.subr.mxu0 0.0
        %4529 = vmatpush1.msra.mxu0 %v4317
        %4530 = vmatprep.subr.mxu0 0.0
        %4531 = vmatpush1.msra.mxu0 %v4318
        %4532 = vmatprep.subr.mxu0 0.0
        %4533 = vmatpush1.msra.mxu0 %v4319
        %4534 = vmatprep.subr.mxu0 0.0
        %4535 = vmatpush1.msra.mxu0 %v4320
        %4536 = vmatprep.subr.mxu0 0.0
        %4537 = vmatpush1.msra.mxu0 %v4321
        %4538 = vmatprep.subr.mxu0 0.0
        %4539 = vmatpush1.msra.mxu0 %v4322
        %4540 = vmatprep.subr.mxu0 0.0
        %4541 = vmatpush1.msra.mxu0 0.0
        %4542 = vmatprep.subr.mxu0 0.0
        %4543 = vmatpush1.msra.mxu0 0.0
        %4544 = vmatprep.subr.mxu0 0.0
        %4545 = vmatpush1.msra.mxu0 0.0
        %4546 = vmatprep.subr.mxu0 0.0
        %4547 = vmatpush1.msra.mxu0 0.0
        %4548 = vmatprep.subr.mxu0 0.0
        %4549 = vmatpush1.msra.mxu0 0.0
        %4550 = vmatprep.subr.mxu0 0.0
        %4551 = vmatpush1.msra.mxu0 0.0
        %4552 = vmatprep.subr.mxu0 0.0
        %4553 = vmatpush1.msra.mxu0 0.0
        %4554 = vmatprep.subr.mxu0 0.0
        %4555 = vmatpush1.msra.mxu0 0.0
        %4556 = vmatprep.subr.mxu0 0.0
        %4557 = vmatpush1.msra.mxu0 0.0
        %4558 = vmatprep.subr.mxu0 0.0
        %4559 = vmatpush1.msra.mxu0 0.0
        %4560 = vmatprep.subr.mxu0 0.0
        %4561 = vmatpush1.msra.mxu0 0.0
        %4562 = vmatprep.subr.mxu0 0.0
        %4563 = vmatpush1.msra.mxu0 0.0
        %4564 = vmatprep.subr.mxu0 0.0
        %4565 = vmatpush1.msra.mxu0 0.0
        %4566 = vmatprep.subr.mxu0 0.0
        %4567 = vmatpush1.msra.mxu0 0.0
        %4568 = vmatprep.subr.mxu0 0.0
        %4569 = vmatpush1.msra.mxu0 0.0
        %4570 = vmatprep.subr.mxu0 0.0
        %4571 = vmatpush1.msra.mxu0 0.0
        %4572 = vmatprep.mubr.f32.mxu0 0.0
        %4573 = vmatmul.mubr.f32.gmra.mrb[0].mxu0 %v4157
        %v4574 = vpop.f32.mrb[0].mxu0
        %v4575 = vadd.f32 %v4390, %v4574
        %v4576 = vpop.f32.mrb[0].mxu0
        %4577 = vmatprep.mubr.f32.mxu0 0.0
        %4578 = vmatmul.mubr.f32.gmra.mrb[0].mxu0 %v4160
        %v4579 = vpop.f32.mrb[0].mxu0
        %v4580 = vadd.f32 %v4395, %v4579
        %v4581 = vpop.f32.mrb[0].mxu0
        %4582 = vmatprep.mubr.f32.mxu0 0.0
        %4583 = vmatmul.mubr.f32.gmra.mrb[0].mxu0 %v4163
        %v4584 = vpop.f32.mrb[0].mxu0
        %v4585 = vadd.f32 %v4400, %v4584
        %v4586 = vpop.f32.mrb[0].mxu0
        %4587 = vmatprep.mubr.f32.mxu0 0.0
        %4588 = vmatmul.mubr.f32.gmra.mrb[0].mxu0 %v4166
        %v4589 = vpop.f32.mrb[0].mxu0
        %v4590 = vadd.f32 %v4405, %v4589
        %v4591 = vpop.f32.mrb[0].mxu0
        %4592 = vmatprep.mubr.f32.mxu0 0.0
        %4593 = vmatmul.mubr.f32.gmra.mrb[0].mxu0 %v4169
        %v4594 = vpop.f32.mrb[0].mxu0
        %v4595 = vadd.f32 %v4410, %v4594
        %v4596 = vpop.f32.mrb[0].mxu0
        %4597 = vmatprep.mubr.f32.mxu0 0.0
        %4598 = vmatmul.mubr.f32.gmra.mrb[0].mxu0 %v4172
        %v4599 = vpop.f32.mrb[0].mxu0
        %v4600 = vadd.f32 %v4415, %v4599
        %v4601 = vpop.f32.mrb[0].mxu0
        %4602 = vmatprep.mubr.f32.mxu0 0.0
        %4603 = vmatmul.mubr.f32.gmra.mrb[0].mxu0 %v4175
        %v4604 = vpop.f32.mrb[0].mxu0
        %v4605 = vadd.f32 %v4420, %v4604
        %v4606 = vpop.f32.mrb[0].mxu0
        %4607 = vmatprep.mubr.f32.mxu0 0.0
        %4608 = vmatmul.mubr.f32.gmra.mrb[0].mxu0 %v4178
        %v4609 = vpop.f32.mrb[0].mxu0
        %v4610 = vadd.f32 %v4425, %v4609
        %v4611 = vpop.f32.mrb[0].mxu0
        %4612 = vmatprep.mubr.f32.mxu0 0.0
        %4613 = vmatmul.mubr.f32.gmra.mrb[0].mxu0 %v4181
        %v4614 = vpop.f32.mrb[0].mxu0
        %v4615 = vadd.f32 %v4430, %v4614
        %v4616 = vpop.f32.mrb[0].mxu0
        %4617 = vmatprep.mubr.f32.mxu0 0.0
        %4618 = vmatmul.mubr.f32.gmra.mrb[0].mxu0 %v4184
        %v4619 = vpop.f32.mrb[0].mxu0
        %v4620 = vadd.f32 %v4435, %v4619
        %v4621 = vpop.f32.mrb[0].mxu0
        %4622 = vmatprep.mubr.f32.mxu0 0.0
        %4623 = vmatmul.mubr.f32.gmra.mrb[0].mxu0 %v4187
        %v4624 = vpop.f32.mrb[0].mxu0
        %v4625 = vadd.f32 %v4440, %v4624
        %v4626 = vpop.f32.mrb[0].mxu0
        %4627 = vmatprep.mubr.f32.mxu0 0.0
        %4628 = vmatmul.mubr.f32.gmra.mrb[0].mxu0 %v4190
        %v4629 = vpop.f32.mrb[0].mxu0
        %v4630 = vadd.f32 %v4445, %v4629
        %v4631 = vpop.f32.mrb[0].mxu0
        %4632 = vmatprep.mubr.f32.mxu0 0.0
        %4633 = vmatmul.mubr.f32.gmra.mrb[0].mxu0 %v4193
        %v4634 = vpop.f32.mrb[0].mxu0
        %v4635 = vadd.f32 %v4450, %v4634
        %v4636 = vpop.f32.mrb[0].mxu0
        %4637 = vmatprep.mubr.f32.mxu0 0.0
        %4638 = vmatmul.mubr.f32.gmra.mrb[0].mxu0 %v4196
        %v4639 = vpop.f32.mrb[0].mxu0
        %v4640 = vadd.f32 %v4455, %v4639
        %v4641 = vpop.f32.mrb[0].mxu0
        %4642 = vmatprep.mubr.f32.mxu0 0.0
        %4643 = vmatmul.mubr.f32.gmra.mrb[0].mxu0 %v4199
        %v4644 = vpop.f32.mrb[0].mxu0
        %v4645 = vadd.f32 %v4460, %v4644
        %v4646 = vpop.f32.mrb[0].mxu0
        %4647 = vmatprep.mubr.f32.mxu0 0.0
        %4648 = vmatmul.mubr.f32.gmra.mrb[0].mxu0 %v4202
        %v4649 = vpop.f32.mrb[0].mxu0
        %v4650 = vadd.f32 %v4465, %v4649
        %v4651 = vpop.f32.mrb[0].mxu0
        %4652 = vmatprep.mubr.f32.mxu0 0.0
        %4653 = vmatmul.mubr.f32.gmra.mrb[0].mxu0 %v4205
        %v4654 = vpop.f32.mrb[0].mxu0
        %v4655 = vadd.f32 %v4470, %v4654
        %v4656 = vpop.f32.mrb[0].mxu0
        %4657 = vmatprep.mubr.f32.mxu0 0.0
        %4658 = vmatmul.mubr.f32.gmra.mrb[0].mxu0 %v4208
        %v4659 = vpop.f32.mrb[0].mxu0
        %v4660 = vadd.f32 %v4475, %v4659
        %v4661 = vpop.f32.mrb[0].mxu0
        %4662 = vmatprep.mubr.f32.mxu0 0.0
        %4663 = vmatmul.mubr.f32.gmra.mrb[0].mxu0 %v4211
        %v4664 = vpop.f32.mrb[0].mxu0
        %v4665 = vadd.f32 %v4480, %v4664
        %v4666 = vpop.f32.mrb[0].mxu0
        %4667 = vmatprep.mubr.f32.mxu0 0.0
        %4668 = vmatmul.mubr.f32.gmra.mrb[0].mxu0 %v4214
        %v4669 = vpop.f32.mrb[0].mxu0
        %v4670 = vadd.f32 %v4485, %v4669
        %v4671 = vpop.f32.mrb[0].mxu0
        %4672 = vmatprep.mubr.f32.mxu0 0.0
        %4673 = vmatmul.mubr.f32.gmra.mrb[0].mxu0 %v4217
        %v4674 = vpop.f32.mrb[0].mxu0
        %v4675 = vadd.f32 %v4490, %v4674
        %v4676 = vpop.f32.mrb[0].mxu0
        %4677 = vmatprep.mubr.f32.mxu0 0.0
        %4678 = vmatmul.mubr.f32.gmra.mrb[0].mxu0 %v4220
        %v4679 = vpop.f32.mrb[0].mxu0
        %v4680 = vadd.f32 %v4495, %v4679
        %v4681 = vpop.f32.mrb[0].mxu0
        %4682 = vmatprep.mubr.f32.mxu0 0.0
        %4683 = vmatmul.mubr.f32.gmra.mrb[0].mxu0 %v4223
        %v4684 = vpop.f32.mrb[0].mxu0
        %v4685 = vadd.f32 %v4500, %v4684
        %v4686 = vpop.f32.mrb[0].mxu0
        %4687 = vmatprep.mubr.f32.mxu0 0.0
        %4688 = vmatmul.mubr.f32.gmra.mrb[0].mxu0 %v4226
        %v4689 = vpop.f32.mrb[0].mxu0
        %v4690 = vadd.f32 %v4505, %v4689
        %v4691 = vpop.f32.mrb[0].mxu0
        %4692 = vdwg.mxu0
        %v4693 = vrcp.pop %v4575
        %v4694 = vrcp.pop %v4580
        %v4695 = vrcp.pop %v4585
        %v4696 = vrcp.pop %v4590
        %v4697 = vrcp.pop %v4595
        %v4698 = vrcp.pop %v4600
        %v4699 = vrcp.pop %v4605
        %v4700 = vrcp.pop %v4610
        %v4701 = vrcp.pop %v4615
        %v4702 = vrcp.pop %v4620
        %v4703 = vrcp.pop %v4625
        %v4704 = vrcp.pop %v4630
        %v4705 = vrcp.pop %v4635
        %v4706 = vrcp.pop %v4640
        %v4707 = vrcp.pop %v4645
        %v4708 = vrcp.pop %v4650
        %v4709 = vrcp.pop %v4655
        %v4710 = vrcp.pop %v4660
        %v4711 = vrcp.pop %v4665
        %v4712 = vrcp.pop %v4670
        %v4713 = vrcp.pop %v4675
        %v4714 = vrcp.pop %v4680
        %v4715 = vrcp.pop %v4685
        %v4716 = vrcp.pop %v4690
        %4718 = vset.pattern.permute.xlu0 32
        %4719 = vperm.xlu0 %4718, %v4693
        %v4720 = vpop.permute.xlu0 %4719
        %4723 = vset.pattern.permute.xlu0 32
        %4724 = vperm.xlu0 %4723, %v4694
        %v4725 = vpop.permute.xlu0 %4724
        %4728 = vset.pattern.permute.xlu0 32
        %4729 = vperm.xlu0 %4728, %v4695
        %v4730 = vpop.permute.xlu0 %4729
        %4733 = vset.pattern.permute.xlu0 32
        %4734 = vperm.xlu0 %4733, %v4696
        %v4735 = vpop.permute.xlu0 %4734
        %4738 = vset.pattern.permute.xlu0 32
        %4739 = vperm.xlu0 %4738, %v4697
        %v4740 = vpop.permute.xlu0 %4739
        %4743 = vset.pattern.permute.xlu0 32
        %4744 = vperm.xlu0 %4743, %v4698
        %v4745 = vpop.permute.xlu0 %4744
        %4748 = vset.pattern.permute.xlu0 32
        %4749 = vperm.xlu0 %4748, %v4699
        %v4750 = vpop.permute.xlu0 %4749
        %4753 = vset.pattern.permute.xlu0 32
        %4754 = vperm.xlu0 %4753, %v4700
        %v4755 = vpop.permute.xlu0 %4754
        %4758 = vset.pattern.permute.xlu0 32
        %4759 = vperm.xlu0 %4758, %v4701
        %v4760 = vpop.permute.xlu0 %4759
        %4763 = vset.pattern.permute.xlu0 32
        %4764 = vperm.xlu0 %4763, %v4702
        %v4765 = vpop.permute.xlu0 %4764
        %4768 = vset.pattern.permute.xlu0 32
        %4769 = vperm.xlu0 %4768, %v4703
        %v4770 = vpop.permute.xlu0 %4769
        %4773 = vset.pattern.permute.xlu0 32
        %4774 = vperm.xlu0 %4773, %v4704
        %v4775 = vpop.permute.xlu0 %4774
        %4778 = vset.pattern.permute.xlu0 32
        %4779 = vperm.xlu0 %4778, %v4705
        %v4780 = vpop.permute.xlu0 %4779
        %4783 = vset.pattern.permute.xlu0 32
        %4784 = vperm.xlu0 %4783, %v4706
        %v4785 = vpop.permute.xlu0 %4784
        %4788 = vset.pattern.permute.xlu0 32
        %4789 = vperm.xlu0 %4788, %v4707
        %v4790 = vpop.permute.xlu0 %4789
        %4793 = vset.pattern.permute.xlu0 32
        %4794 = vperm.xlu0 %4793, %v4708
        %v4795 = vpop.permute.xlu0 %4794
        %4798 = vset.pattern.permute.xlu0 32
        %4799 = vperm.xlu0 %4798, %v4709
        %v4800 = vpop.permute.xlu0 %4799
        %4803 = vset.pattern.permute.xlu0 32
        %4804 = vperm.xlu0 %4803, %v4710
        %v4805 = vpop.permute.xlu0 %4804
        %4808 = vset.pattern.permute.xlu0 32
        %4809 = vperm.xlu0 %4808, %v4711
        %v4810 = vpop.permute.xlu0 %4809
        %4813 = vset.pattern.permute.xlu0 32
        %4814 = vperm.xlu0 %4813, %v4712
        %v4815 = vpop.permute.xlu0 %4814
        %4818 = vset.pattern.permute.xlu0 32
        %4819 = vperm.xlu0 %4818, %v4713
        %v4820 = vpop.permute.xlu0 %4819
        %4823 = vset.pattern.permute.xlu0 32
        %4824 = vperm.xlu0 %4823, %v4714
        %v4825 = vpop.permute.xlu0 %4824
        %4828 = vset.pattern.permute.xlu0 32
        %4829 = vperm.xlu0 %4828, %v4715
        %v4830 = vpop.permute.xlu0 %4829
        %4833 = vset.pattern.permute.xlu0 32
        %4834 = vperm.xlu0 %4833, %v4716
        %v4835 = vpop.permute.xlu0 %4834
        %4837 = vset.pattern.permute.xlu0 33
        %4838 = vperm.xlu0 %4837, %v4693
        %v4839 = vpop.permute.xlu0 %4838
        %4841 = vset.pattern.permute.xlu0 33
        %4842 = vperm.xlu0 %4841, %v4694
        %v4843 = vpop.permute.xlu0 %4842
        %4845 = vset.pattern.permute.xlu0 33
        %4846 = vperm.xlu0 %4845, %v4695
        %v4847 = vpop.permute.xlu0 %4846
        %4849 = vset.pattern.permute.xlu0 33
        %4850 = vperm.xlu0 %4849, %v4696
        %v4851 = vpop.permute.xlu0 %4850
        %4853 = vset.pattern.permute.xlu0 33
        %4854 = vperm.xlu0 %4853, %v4697
        %v4855 = vpop.permute.xlu0 %4854
        %4857 = vset.pattern.permute.xlu0 33
        %4858 = vperm.xlu0 %4857, %v4698
        %v4859 = vpop.permute.xlu0 %4858
        %4861 = vset.pattern.permute.xlu0 33
        %4862 = vperm.xlu0 %4861, %v4699
        %v4863 = vpop.permute.xlu0 %4862
        %4865 = vset.pattern.permute.xlu0 33
        %4866 = vperm.xlu0 %4865, %v4700
        %v4867 = vpop.permute.xlu0 %4866
        %4869 = vset.pattern.permute.xlu0 33
        %4870 = vperm.xlu0 %4869, %v4701
        %v4871 = vpop.permute.xlu0 %4870
        %4873 = vset.pattern.permute.xlu0 33
        %4874 = vperm.xlu0 %4873, %v4702
        %v4875 = vpop.permute.xlu0 %4874
        %4877 = vset.pattern.permute.xlu0 33
        %4878 = vperm.xlu0 %4877, %v4703
        %v4879 = vpop.permute.xlu0 %4878
        %4881 = vset.pattern.permute.xlu0 33
        %4882 = vperm.xlu0 %4881, %v4704
        %v4883 = vpop.permute.xlu0 %4882
        %4885 = vset.pattern.permute.xlu0 33
        %4886 = vperm.xlu0 %4885, %v4705
        %v4887 = vpop.permute.xlu0 %4886
        %4889 = vset.pattern.permute.xlu0 33
        %4890 = vperm.xlu0 %4889, %v4706
        %v4891 = vpop.permute.xlu0 %4890
        %4893 = vset.pattern.permute.xlu0 33
        %4894 = vperm.xlu0 %4893, %v4707
        %v4895 = vpop.permute.xlu0 %4894
        %4897 = vset.pattern.permute.xlu0 33
        %4898 = vperm.xlu0 %4897, %v4708
        %v4899 = vpop.permute.xlu0 %4898
        %4901 = vset.pattern.permute.xlu0 33
        %4902 = vperm.xlu0 %4901, %v4709
        %v4903 = vpop.permute.xlu0 %4902
        %4905 = vset.pattern.permute.xlu0 33
        %4906 = vperm.xlu0 %4905, %v4710
        %v4907 = vpop.permute.xlu0 %4906
        %4909 = vset.pattern.permute.xlu0 33
        %4910 = vperm.xlu0 %4909, %v4711
        %v4911 = vpop.permute.xlu0 %4910
        %4913 = vset.pattern.permute.xlu0 33
        %4914 = vperm.xlu0 %4913, %v4712
        %v4915 = vpop.permute.xlu0 %4914
        %4917 = vset.pattern.permute.xlu0 33
        %4918 = vperm.xlu0 %4917, %v4713
        %v4919 = vpop.permute.xlu0 %4918
        %4921 = vset.pattern.permute.xlu0 33
        %4922 = vperm.xlu0 %4921, %v4714
        %v4923 = vpop.permute.xlu0 %4922
        %4925 = vset.pattern.permute.xlu0 33
        %4926 = vperm.xlu0 %4925, %v4715
        %v4927 = vpop.permute.xlu0 %4926
        %4929 = vset.pattern.permute.xlu0 33
        %4930 = vperm.xlu0 %4929, %v4716
        %v4931 = vpop.permute.xlu0 %4930
        %v4933 = vsel %vm2116, %v4720, %v4839
        %v4934 = vsel %vm2116, %v4725, %v4843
        %v4935 = vsel %vm2116, %v4730, %v4847
        %v4936 = vsel %vm2116, %v4735, %v4851
        %v4937 = vsel %vm2116, %v4740, %v4855
        %v4938 = vsel %vm2116, %v4745, %v4859
        %v4939 = vsel %vm2116, %v4750, %v4863
        %v4940 = vsel %vm2116, %v4755, %v4867
        %v4941 = vsel %vm2116, %v4760, %v4871
        %v4942 = vsel %vm2116, %v4765, %v4875
        %v4943 = vsel %vm2116, %v4770, %v4879
        %v4944 = vsel %vm2116, %v4775, %v4883
        %v4945 = vsel %vm2116, %v4780, %v4887
        %v4946 = vsel %vm2116, %v4785, %v4891
        %v4947 = vsel %vm2116, %v4790, %v4895
        %v4948 = vsel %vm2116, %v4795, %v4899
        %v4949 = vsel %vm2116, %v4800, %v4903
        %v4950 = vsel %vm2116, %v4805, %v4907
        %v4951 = vsel %vm2116, %v4810, %v4911
        %v4952 = vsel %vm2116, %v4815, %v4915
        %v4953 = vsel %vm2116, %v4820, %v4919
        %v4954 = vsel %vm2116, %v4825, %v4923
        %v4955 = vsel %vm2116, %v4830, %v4927
        %v4956 = vsel %vm2116, %v4835, %v4931
        %v4957 = vmul.f32 %v4575, %v4933
        %v4958 = vmul.f32 %v4580, %v4934
        %v4959 = vmul.f32 %v4585, %v4935
        %v4960 = vmul.f32 %v4590, %v4936
        %v4961 = vmul.f32 %v4595, %v4937
        %v4962 = vmul.f32 %v4600, %v4938
        %v4963 = vmul.f32 %v4605, %v4939
        %v4964 = vmul.f32 %v4610, %v4940
        %v4965 = vmul.f32 %v4615, %v4941
        %v4966 = vmul.f32 %v4620, %v4942
        %v4967 = vmul.f32 %v4625, %v4943
        %v4968 = vmul.f32 %v4630, %v4944
        %v4969 = vmul.f32 %v4635, %v4945
        %v4970 = vmul.f32 %v4640, %v4946
        %v4971 = vmul.f32 %v4645, %v4947
        %v4972 = vmul.f32 %v4650, %v4948
        %v4973 = vmul.f32 %v4655, %v4949
        %v4974 = vmul.f32 %v4660, %v4950
        %v4975 = vmul.f32 %v4665, %v4951
        %v4976 = vmul.f32 %v4670, %v4952
        %v4977 = vmul.f32 %v4675, %v4953
        %v4978 = vmul.f32 %v4680, %v4954
        %v4979 = vmul.f32 %v4685, %v4955
        %v4980 = vmul.f32 %v4690, %v4956
        %v4981 = vld [vmem:[%s9] sm:$0x1]
        %v4983 = vlaneseq
        %v4984 = vshrl.u32 %v4983, 7
        %v4985 = vsub.s32 0, %v4984
        %v4986 = vrot.slane %v4981, %v4985
        %v4988 = vadd.f32 %v4957, %v4986
        %v4989 = vadd.f32 %v4958, %v4986
        %v4990 = vadd.f32 %v4959, %v4986
        %v4991 = vadd.f32 %v4960, %v4986
        %v4992 = vadd.f32 %v4961, %v4986
        %v4993 = vadd.f32 %v4962, %v4986
        %v4994 = vadd.f32 %v4963, %v4986
        %v4995 = vadd.f32 %v4964, %v4986
        %v4996 = vadd.f32 %v4965, %v4986
        %v4997 = vadd.f32 %v4966, %v4986
        %v4998 = vadd.f32 %v4967, %v4986
        %v4999 = vadd.f32 %v4968, %v4986
        %v5000 = vadd.f32 %v4969, %v4986
        %v5001 = vadd.f32 %v4970, %v4986
        %v5002 = vadd.f32 %v4971, %v4986
        %v5003 = vadd.f32 %v4972, %v4986
        %v5004 = vadd.f32 %v4973, %v4986
        %v5005 = vadd.f32 %v4974, %v4986
        %v5006 = vadd.f32 %v4975, %v4986
        %v5007 = vadd.f32 %v4976, %v4986
        %v5008 = vadd.f32 %v4977, %v4986
        %v5009 = vadd.f32 %v4978, %v4986
        %v5010 = vadd.f32 %v4979, %v4986
        %v5011 = vadd.f32 %v4980, %v4986
        %v5012 = vmax.f32 %v4988, 0.0
        %v5013 = vmax.f32 %v4989, 0.0
        %v5014 = vmax.f32 %v4990, 0.0
        %v5015 = vmax.f32 %v4991, 0.0
        %v5016 = vmax.f32 %v4992, 0.0
        %v5017 = vmax.f32 %v4993, 0.0
        %v5018 = vmax.f32 %v4994, 0.0
        %v5019 = vmax.f32 %v4995, 0.0
        %v5020 = vmax.f32 %v4996, 0.0
        %v5021 = vmax.f32 %v4997, 0.0
        %v5022 = vmax.f32 %v4998, 0.0
        %v5023 = vmax.f32 %v4999, 0.0
        %v5024 = vmax.f32 %v5000, 0.0
        %v5025 = vmax.f32 %v5001, 0.0
        %v5026 = vmax.f32 %v5002, 0.0
        %v5027 = vmax.f32 %v5003, 0.0
        %v5028 = vmax.f32 %v5004, 0.0
        %v5029 = vmax.f32 %v5005, 0.0
        %v5030 = vmax.f32 %v5006, 0.0
        %v5031 = vmax.f32 %v5007, 0.0
        %v5032 = vmax.f32 %v5008, 0.0
        %v5033 = vmax.f32 %v5009, 0.0
        %v5034 = vmax.f32 %v5010, 0.0
        %v5035 = vmax.f32 %v5011, 0.0
        %v5036 = vpack.c.bf16 %v5013, %v5012
        %v5037 = vpack.c.bf16 %v5015, %v5014
        %v5038 = vpack.c.bf16 %v5017, %v5016
        %v5039 = vpack.c.bf16 %v5019, %v5018
        %v5040 = vpack.c.bf16 %v5021, %v5020
        %v5041 = vpack.c.bf16 %v5023, %v5022
        %v5042 = vpack.c.bf16 %v5025, %v5024
        %v5043 = vpack.c.bf16 %v5027, %v5026
        %v5044 = vpack.c.bf16 %v5029, %v5028
        %v5045 = vpack.c.bf16 %v5031, %v5030
        %v5046 = vpack.c.bf16 %v5033, %v5032
        %v5047 = vpack.c.bf16 %v5035, %v5034
        %v5048 = vld [vmem:[%s10] sm:$0xf]
        %v5049 = vld [vmem:[%s10 + $0x4] sm:$0xf]
        %v5050 = vld [vmem:[%s10 + $0x8] sm:$0xf]
        %v5051 = vld [vmem:[%s10 + $0xc] sm:$0xf]
        %v5056 = vunpack.c.l.b16 %v5048
        %v5057 = vunpack.c.l.b16 %v5049
        %v5058 = vunpack.c.l.b16 %v5050
        %v5059 = vunpack.c.l.b16 %v5051
        %v5060 = vpack.c.b16 %v5057, %v5056
        %v5061 = vpack.c.b16 %v5059, %v5058
        %v5065 = vsel %vm1013, %v5036, 0
        %v5068 = vsel %vm1013, %v5037, 0
        %v5071 = vsel %vm1013, %v5038, 0
        %v5074 = vsel %vm1013, %v5039, 0
        %v5077 = vsel %vm1013, %v5040, 0
        %v5080 = vsel %vm1013, %v5041, 0
        %v5083 = vsel %vm1013, %v5042, 0
        %v5086 = vsel %vm1013, %v5043, 0
        %v5089 = vsel %vm1013, %v5044, 0
        %v5092 = vsel %vm1013, %v5045, 0
        %v5095 = vsel %vm1013, %v5046, 0
        %v5098 = vsel %vm1013, %v5047, 0
        %5100 = vmatprep.subr.bf16.mxu0 0
        %5101 = vmatpush1.bf16.msra.mxu0 %v5060
        %5102 = vmatprep.subr.bf16.mxu0 0
        %5103 = vmatpush1.bf16.msra.mxu0 %v5061
        %5104 = vmatprep.subr.bf16.mxu0 0
        %5105 = vmatpush1.bf16.msra.mxu0 0
        %5106 = vmatprep.subr.bf16.mxu0 0
        %5107 = vmatpush1.bf16.msra.mxu0 0
        %5108 = vmatprep.subr.bf16.mxu0 0
        %5109 = vmatpush1.bf16.msra.mxu0 0
        %5110 = vmatprep.subr.bf16.mxu0 0
        %5111 = vmatpush1.bf16.msra.mxu0 0
        %5112 = vmatprep.subr.bf16.mxu0 0
        %5113 = vmatpush1.bf16.msra.mxu0 0
        %5114 = vmatprep.subr.bf16.mxu0 0
        %5115 = vmatpush1.bf16.msra.mxu0 0
        %5116 = vmatprep.subr.bf16.mxu0 0
        %5117 = vmatpush1.bf16.msra.mxu0 0
        %5118 = vmatprep.subr.bf16.mxu0 0
        %5119 = vmatpush1.bf16.msra.mxu0 0
        %5120 = vmatprep.subr.bf16.mxu0 0
        %5121 = vmatpush1.bf16.msra.mxu0 0
        %5122 = vmatprep.subr.bf16.mxu0 0
        %5123 = vmatpush1.bf16.msra.mxu0 0
        %5124 = vmatprep.subr.bf16.mxu0 0
        %5125 = vmatpush1.bf16.msra.mxu0 0
        %5126 = vmatprep.subr.bf16.mxu0 0
        %5127 = vmatpush1.bf16.msra.mxu0 0
        %5128 = vmatprep.subr.bf16.mxu0 0
        %5129 = vmatpush1.bf16.msra.mxu0 0
        %5130 = vmatprep.subr.bf16.mxu0 0
        %5131 = vmatpush1.bf16.msra.mxu0 0
        %5132 = vmatprep.mubr.bf16.mxu0 0
        %5133 = vmatmul.mubr.bf16.gmra.mrb[0].mxu0 %v5065
        %v5134 = vpop.f32.mrb[0].mxu0
        %v5135 = vadd.f32 0.0, %v5134
        %v5136 = vpop.f32.mrb[0].mxu0
        %v5137 = vpop.f32.mrb[0].mxu0
        %v5138 = vadd.f32 0.0, %v5137
        %v5139 = vpop.f32.mrb[0].mxu0
        %5140 = vmatprep.mubr.bf16.mxu0 0
        %5141 = vmatmul.mubr.bf16.gmra.mrb[0].mxu0 %v5068
        %v5142 = vpop.f32.mrb[0].mxu0
        %v5143 = vadd.f32 0.0, %v5142
        %v5144 = vpop.f32.mrb[0].mxu0
        %v5145 = vpop.f32.mrb[0].mxu0
        %v5146 = vadd.f32 0.0, %v5145
        %v5147 = vpop.f32.mrb[0].mxu0
        %5148 = vmatprep.mubr.bf16.mxu0 0
        %5149 = vmatmul.mubr.bf16.gmra.mrb[0].mxu0 %v5071
        %v5150 = vpop.f32.mrb[0].mxu0
        %v5151 = vadd.f32 0.0, %v5150
        %v5152 = vpop.f32.mrb[0].mxu0
        %v5153 = vpop.f32.mrb[0].mxu0
        %v5154 = vadd.f32 0.0, %v5153
        %v5155 = vpop.f32.mrb[0].mxu0
        %5156 = vmatprep.mubr.bf16.mxu0 0
        %5157 = vmatmul.mubr.bf16.gmra.mrb[0].mxu0 %v5074
        %v5158 = vpop.f32.mrb[0].mxu0
        %v5159 = vadd.f32 0.0, %v5158
        %v5160 = vpop.f32.mrb[0].mxu0
        %v5161 = vpop.f32.mrb[0].mxu0
        %v5162 = vadd.f32 0.0, %v5161
        %v5163 = vpop.f32.mrb[0].mxu0
        %5164 = vmatprep.mubr.bf16.mxu0 0
        %5165 = vmatmul.mubr.bf16.gmra.mrb[0].mxu0 %v5077
        %v5166 = vpop.f32.mrb[0].mxu0
        %v5167 = vadd.f32 0.0, %v5166
        %v5168 = vpop.f32.mrb[0].mxu0
        %v5169 = vpop.f32.mrb[0].mxu0
        %v5170 = vadd.f32 0.0, %v5169
        %v5171 = vpop.f32.mrb[0].mxu0
        %5172 = vmatprep.mubr.bf16.mxu0 0
        %5173 = vmatmul.mubr.bf16.gmra.mrb[0].mxu0 %v5080
        %v5174 = vpop.f32.mrb[0].mxu0
        %v5175 = vadd.f32 0.0, %v5174
        %v5176 = vpop.f32.mrb[0].mxu0
        %v5177 = vpop.f32.mrb[0].mxu0
        %v5178 = vadd.f32 0.0, %v5177
        %v5179 = vpop.f32.mrb[0].mxu0
        %5180 = vmatprep.mubr.bf16.mxu0 0
        %5181 = vmatmul.mubr.bf16.gmra.mrb[0].mxu0 %v5083
        %v5182 = vpop.f32.mrb[0].mxu0
        %v5183 = vadd.f32 0.0, %v5182
        %v5184 = vpop.f32.mrb[0].mxu0
        %v5185 = vpop.f32.mrb[0].mxu0
        %v5186 = vadd.f32 0.0, %v5185
        %v5187 = vpop.f32.mrb[0].mxu0
        %5188 = vmatprep.mubr.bf16.mxu0 0
        %5189 = vmatmul.mubr.bf16.gmra.mrb[0].mxu0 %v5086
        %v5190 = vpop.f32.mrb[0].mxu0
        %v5191 = vadd.f32 0.0, %v5190
        %v5192 = vpop.f32.mrb[0].mxu0
        %v5193 = vpop.f32.mrb[0].mxu0
        %v5194 = vadd.f32 0.0, %v5193
        %v5195 = vpop.f32.mrb[0].mxu0
        %5196 = vmatprep.mubr.bf16.mxu0 0
        %5197 = vmatmul.mubr.bf16.gmra.mrb[0].mxu0 %v5089
        %v5198 = vpop.f32.mrb[0].mxu0
        %v5199 = vadd.f32 0.0, %v5198
        %v5200 = vpop.f32.mrb[0].mxu0
        %v5201 = vpop.f32.mrb[0].mxu0
        %v5202 = vadd.f32 0.0, %v5201
        %v5203 = vpop.f32.mrb[0].mxu0
        %5204 = vmatprep.mubr.bf16.mxu0 0
        %5205 = vmatmul.mubr.bf16.gmra.mrb[0].mxu0 %v5092
        %v5206 = vpop.f32.mrb[0].mxu0
        %v5207 = vadd.f32 0.0, %v5206
        %v5208 = vpop.f32.mrb[0].mxu0
        %v5209 = vpop.f32.mrb[0].mxu0
        %v5210 = vadd.f32 0.0, %v5209
        %v5211 = vpop.f32.mrb[0].mxu0
        %5212 = vmatprep.mubr.bf16.mxu0 0
        %5213 = vmatmul.mubr.bf16.gmra.mrb[0].mxu0 %v5095
        %v5214 = vpop.f32.mrb[0].mxu0
        %v5215 = vadd.f32 0.0, %v5214
        %v5216 = vpop.f32.mrb[0].mxu0
        %v5217 = vpop.f32.mrb[0].mxu0
        %v5218 = vadd.f32 0.0, %v5217
        %v5219 = vpop.f32.mrb[0].mxu0
        %5220 = vmatprep.mubr.bf16.mxu0 0
        %5221 = vmatmul.mubr.bf16.gmra.mrb[0].mxu0 %v5098
        %v5222 = vpop.f32.mrb[0].mxu0
        %v5223 = vadd.f32 0.0, %v5222
        %v5224 = vpop.f32.mrb[0].mxu0
        %v5225 = vpop.f32.mrb[0].mxu0
        %v5226 = vadd.f32 0.0, %v5225
        %v5227 = vpop.f32.mrb[0].mxu0
        %5228 = vdwg.mxu0
        %v5229 = vld [vmem:[%s12] sm:$0xff]
        %v5230 = vld [vmem:[%s12 + $0x8] sm:$0xff]
        %v5231 = vld [vmem:[%s12 + $0x10] sm:$0xff]
        %v5232 = vld [vmem:[%s12 + $0x18] sm:$0xff]
        %v5233 = vld [vmem:[%s12 + $0x20] sm:$0xff]
        %v5234 = vld [vmem:[%s12 + $0x28] sm:$0xff]
        %v5235 = vld [vmem:[%s12 + $0x30] sm:$0xff]
        %v5236 = vld [vmem:[%s12 + $0x38] sm:$0xff]
        %v5237 = vld [vmem:[%s12 + $0x40] sm:$0xff]
        %v5238 = vld [vmem:[%s12 + $0x48] sm:$0xff]
        %v5239 = vld [vmem:[%s12 + $0x50] sm:$0xff]
        %v5240 = vld [vmem:[%s12 + $0x58] sm:$0xff]
        %v5241 = vld [vmem:[%s11] sm:$0x3]
        %v5243 = vsel %vm1013, %v5241, 0
        %v5246 = vsel %vm1013, %v5135, 0
        %v5249 = vsel %vm1013, %v5138, 0
        %v5252 = vsel %vm1013, %v5143, 0
        %v5255 = vsel %vm1013, %v5146, 0
        %v5258 = vsel %vm1013, %v5151, 0
        %v5261 = vsel %vm1013, %v5154, 0
        %v5264 = vsel %vm1013, %v5159, 0
        %v5267 = vsel %vm1013, %v5162, 0
        %v5270 = vsel %vm1013, %v5167, 0
        %v5273 = vsel %vm1013, %v5170, 0
        %v5276 = vsel %vm1013, %v5175, 0
        %v5279 = vsel %vm1013, %v5178, 0
        %v5282 = vsel %vm1013, %v5183, 0
        %v5285 = vsel %vm1013, %v5186, 0
        %v5288 = vsel %vm1013, %v5191, 0
        %v5291 = vsel %vm1013, %v5194, 0
        %v5294 = vsel %vm1013, %v5199, 0
        %v5297 = vsel %vm1013, %v5202, 0
        %v5300 = vsel %vm1013, %v5207, 0
        %v5303 = vsel %vm1013, %v5210, 0
        %v5306 = vsel %vm1013, %v5215, 0
        %v5309 = vsel %vm1013, %v5218, 0
        %v5312 = vsel %vm1013, %v5223, 0
        %v5315 = vsel %vm1013, %v5226, 0
        %5317 = vmatprep.subr.mxu0 0.0
        %5318 = vmatpush1.xpose.msra.mxu0 %v5246
        %5319 = vmatprep.subr.mxu0 0.0
        %5320 = vmatpush1.xpose.msra.mxu0 %v5249
        %5321 = vmatprep.subr.mxu0 0.0
        %5322 = vmatpush1.xpose.msra.mxu0 %v5252
        %5323 = vmatprep.subr.mxu0 0.0
        %5324 = vmatpush1.xpose.msra.mxu0 %v5255
        %5325 = vmatprep.subr.mxu0 0.0
        %5326 = vmatpush1.xpose.msra.mxu0 %v5258
        %5327 = vmatprep.subr.mxu0 0.0
        %5328 = vmatpush1.xpose.msra.mxu0 %v5261
        %5329 = vmatprep.subr.mxu0 0.0
        %5330 = vmatpush1.xpose.msra.mxu0 %v5264
        %5331 = vmatprep.subr.mxu0 0.0
        %5332 = vmatpush1.xpose.msra.mxu0 %v5267
        %5333 = vmatprep.subr.mxu0 0.0
        %5334 = vmatpush1.xpose.msra.mxu0 %v5270
        %5335 = vmatprep.subr.mxu0 0.0
        %5336 = vmatpush1.xpose.msra.mxu0 %v5273
        %5337 = vmatprep.subr.mxu0 0.0
        %5338 = vmatpush1.xpose.msra.mxu0 %v5276
        %5339 = vmatprep.subr.mxu0 0.0
        %5340 = vmatpush1.xpose.msra.mxu0 %v5279
        %5341 = vmatprep.subr.mxu0 0.0
        %5342 = vmatpush1.xpose.msra.mxu0 %v5282
        %5343 = vmatprep.subr.mxu0 0.0
        %5344 = vmatpush1.xpose.msra.mxu0 %v5285
        %5345 = vmatprep.subr.mxu0 0.0
        %5346 = vmatpush1.xpose.msra.mxu0 %v5288
        %5347 = vmatprep.subr.mxu0 0.0
        %5348 = vmatpush1.xpose.msra.mxu0 %v5291
        %5349 = vmatprep.subr.mxu0 0.0
        %5350 = vmatpush1.xpose.msra.mxu0 %v5294
        %5351 = vmatprep.subr.mxu0 0.0
        %5352 = vmatpush1.xpose.msra.mxu0 %v5297
        %5353 = vmatprep.subr.mxu0 0.0
        %5354 = vmatpush1.xpose.msra.mxu0 %v5300
        %5355 = vmatprep.subr.mxu0 0.0
        %5356 = vmatpush1.xpose.msra.mxu0 %v5303
        %5357 = vmatprep.subr.mxu0 0.0
        %5358 = vmatpush1.xpose.msra.mxu0 %v5306
        %5359 = vmatprep.subr.mxu0 0.0
        %5360 = vmatpush1.xpose.msra.mxu0 %v5309
        %5361 = vmatprep.subr.mxu0 0.0
        %5362 = vmatpush1.xpose.msra.mxu0 %v5312
        %5363 = vmatprep.subr.mxu0 0.0
        %5364 = vmatpush1.xpose.msra.mxu0 %v5315
        %5365 = vmatprep.subr.mxu0 0.0
        %5366 = vmatpush1.xpose.msra.mxu0 0.0
        %5367 = vmatprep.subr.mxu0 0.0
        %5368 = vmatpush1.xpose.msra.mxu0 0.0
        %5369 = vmatprep.subr.mxu0 0.0
        %5370 = vmatpush1.xpose.msra.mxu0 0.0
        %5371 = vmatprep.subr.mxu0 0.0
        %5372 = vmatpush1.xpose.msra.mxu0 0.0
        %5373 = vmatprep.subr.mxu0 0.0
        %5374 = vmatpush1.xpose.msra.mxu0 0.0
        %5375 = vmatprep.subr.mxu0 0.0
        %5376 = vmatpush1.xpose.msra.mxu0 0.0
        %5377 = vmatprep.subr.mxu0 0.0
        %5378 = vmatpush1.xpose.msra.mxu0 0.0
        %5379 = vmatprep.subr.mxu0 0.0
        %5380 = vmatpush1.xpose.msra.mxu0 0.0
        %5381 = vmatprep.mubr.f32.mxu0 0.0
        %5382 = vmatmul.mubr.f32.gmra.mrb[0].mxu0 %v5243
        %v5383 = vpop.f32.mrb[0].mxu0
        %v5384 = vadd.f32 0.0, %v5383
        %v5385 = vpop.f32.mrb[0].mxu0
        %v5386 = vadd.f32 0.0, %v5385
        %5387 = vdwg.mxu0
        %v5390 = vcombine.low %v5384, %v5386
        %v5392 = vunpack.c.l.s4 1966171168
        %v5393 = vunpack.c.0.s8 %v5392
        %v5394 = vlaneseq
        %v5395 = vshrl.u32 %v5394, 7
        %v5396 = vsub.s32 %v5393, %v5395
        %v5397 = vrot.slane %v5390, %v5396
        %v5399 = vunpack.c.l.s4 1966171168
        %v5400 = vunpack.c.0.s8 %v5399
        %v5401 = vlaneseq
        %v5402 = vshrl.u32 %v5401, 7
        %v5403 = vsub.s32 %v5400, %v5402
        %v5404 = vrot.slane %v5397, %v5403
        %5406 = vst.msk [vmem:[#allocation3] sm:$0x3] %vm1181, %v5404
        %v5407 = vcombine.high %v5397, %v5397
        %v5409 = vunpack.c.l.s4 1966171168
        %v5410 = vunpack.c.0.s8 %v5409
        %v5411 = vlaneseq
        %v5412 = vshrl.u32 %v5411, 7
        %v5413 = vsub.s32 %v5410, %v5412
        %v5414 = vrot.slane %v5407, %v5413
        %5415 = vrot.lane.b32.xlu0 %v5414, 64
        %v5416 = vpop.permute.xlu0 %5415
        %v5417 = vrot.slane %v5416, 7
        %v5418 = vsel %vm1194, %v5417, %v5416
        %5420 = vst.msk [vmem:[#allocation3 + $0x1] sm:$0x3] %vm1199, %v5418
        %v5421 = vld [vmem:[#allocation3] sm:$0x7]
        %v5423 = vlaneseq
        %v5424 = vshrl.u32 %v5423, 7
        %v5425 = vsub.s32 0, %v5424
        %v5426 = vrot.slane %v5421, %v5425
        %v5427 = vlaneseq
        %v5428 = vshrl.u32 %v5427, 7
        %v5429 = vsub.s32 1, %v5428
        %v5430 = vrot.slane %v5421, %v5429
        %v5431 = vlaneseq
        %v5432 = vshrl.u32 %v5431, 7
        %v5433 = vsub.s32 2, %v5432
        %v5434 = vrot.slane %v5421, %v5433
        %5438 = vmatprep.subr.mxu0 %v5230
        %5439 = vmatpush1.msra.mxu0 %v5229
        %5440 = vmatprep.subr.mxu0 %v5233
        %5441 = vmatpush1.msra.mxu0 %v5232
        %5442 = vmatprep.subr.mxu0 %v5236
        %5443 = vmatpush1.msra.mxu0 %v5235
        %5444 = vmatprep.subr.mxu0 %v5239
        %5445 = vmatpush1.msra.mxu0 %v5238
        %5446 = vmatprep.subr.mxu0 0.0
        %5447 = vmatpush1.msra.mxu0 0.0
        %5448 = vmatprep.subr.mxu0 0.0
        %5449 = vmatpush1.msra.mxu0 0.0
        %5450 = vmatprep.subr.mxu0 0.0
        %5451 = vmatpush1.msra.mxu0 0.0
        %5452 = vmatprep.subr.mxu0 0.0
        %5453 = vmatpush1.msra.mxu0 0.0
        %5454 = vmatprep.subr.mxu0 0.0
        %5455 = vmatpush1.msra.mxu0 0.0
        %5456 = vmatprep.subr.mxu0 0.0
        %5457 = vmatpush1.msra.mxu0 0.0
        %5458 = vmatprep.subr.mxu0 0.0
        %5459 = vmatpush1.msra.mxu0 0.0
        %5460 = vmatprep.subr.mxu0 0.0
        %5461 = vmatpush1.msra.mxu0 0.0
        %5462 = vmatprep.subr.mxu0 0.0
        %5463 = vmatpush1.msra.mxu0 0.0
        %5464 = vmatprep.subr.mxu0 0.0
        %5465 = vmatpush1.msra.mxu0 0.0
        %5466 = vmatprep.subr.mxu0 0.0
        %5467 = vmatpush1.msra.mxu0 0.0
        %5468 = vmatprep.subr.mxu0 0.0
        %5469 = vmatpush1.msra.mxu0 0.0
        %5470 = vmatprep.subr.mxu0 0.0
        %5471 = vmatpush1.msra.mxu0 0.0
        %5472 = vmatprep.subr.mxu0 0.0
        %5473 = vmatpush1.msra.mxu0 0.0
        %5474 = vmatprep.subr.mxu0 0.0
        %5475 = vmatpush1.msra.mxu0 0.0
        %5476 = vmatprep.subr.mxu0 0.0
        %5477 = vmatpush1.msra.mxu0 0.0
        %5478 = vmatprep.subr.mxu0 0.0
        %5479 = vmatpush1.msra.mxu0 0.0
        %5480 = vmatprep.subr.mxu0 0.0
        %5481 = vmatpush1.msra.mxu0 0.0
        %5482 = vmatprep.subr.mxu0 0.0
        %5483 = vmatpush1.msra.mxu0 0.0
        %5484 = vmatprep.subr.mxu0 0.0
        %5485 = vmatpush1.msra.mxu0 0.0
        %5486 = vmatprep.subr.mxu0 0.0
        %5487 = vmatpush1.msra.mxu0 0.0
        %5488 = vmatprep.subr.mxu0 0.0
        %5489 = vmatpush1.msra.mxu0 0.0
        %5490 = vmatprep.subr.mxu0 0.0
        %5491 = vmatpush1.msra.mxu0 0.0
        %5492 = vmatprep.subr.mxu0 0.0
        %5493 = vmatpush1.msra.mxu0 0.0
        %5494 = vmatprep.subr.mxu0 0.0
        %5495 = vmatpush1.msra.mxu0 0.0
        %5496 = vmatprep.subr.mxu0 0.0
        %5497 = vmatpush1.msra.mxu0 0.0
        %5498 = vmatprep.subr.mxu0 0.0
        %5499 = vmatpush1.msra.mxu0 0.0
        %5500 = vmatprep.subr.mxu0 0.0
        %5501 = vmatpush1.msra.mxu0 0.0
        %5502 = vmatprep.mubr.f32.mxu0 0.0
        %5503 = vmatmul.mubr.f32.gmra.mrb[0].mxu0 %v5246
        %v5504 = vpop.f32.mrb[0].mxu0
        %v5505 = vadd.f32 %v5426, %v5504
        %v5506 = vpop.f32.mrb[0].mxu0
        %v5507 = vadd.f32 %v5430, %v5506
        %5508 = vmatprep.mubr.f32.mxu0 0.0
        %5509 = vmatmul.mubr.f32.gmra.mrb[0].mxu0 %v5249
        %v5510 = vpop.f32.mrb[0].mxu0
        %v5511 = vadd.f32 %v5426, %v5510
        %v5512 = vpop.f32.mrb[0].mxu0
        %v5513 = vadd.f32 %v5430, %v5512
        %5514 = vmatprep.mubr.f32.mxu0 0.0
        %5515 = vmatmul.mubr.f32.gmra.mrb[0].mxu0 %v5252
        %v5516 = vpop.f32.mrb[0].mxu0
        %v5517 = vadd.f32 %v5426, %v5516
        %v5518 = vpop.f32.mrb[0].mxu0
        %v5519 = vadd.f32 %v5430, %v5518
        %5520 = vmatprep.mubr.f32.mxu0 0.0
        %5521 = vmatmul.mubr.f32.gmra.mrb[0].mxu0 %v5255
        %v5522 = vpop.f32.mrb[0].mxu0
        %v5523 = vadd.f32 %v5426, %v5522
        %v5524 = vpop.f32.mrb[0].mxu0
        %v5525 = vadd.f32 %v5430, %v5524
        %5526 = vmatprep.mubr.f32.mxu0 0.0
        %5527 = vmatmul.mubr.f32.gmra.mrb[0].mxu0 %v5258
        %v5528 = vpop.f32.mrb[0].mxu0
        %v5529 = vadd.f32 %v5426, %v5528
        %v5530 = vpop.f32.mrb[0].mxu0
        %v5531 = vadd.f32 %v5430, %v5530
        %5532 = vmatprep.mubr.f32.mxu0 0.0
        %5533 = vmatmul.mubr.f32.gmra.mrb[0].mxu0 %v5261
        %v5534 = vpop.f32.mrb[0].mxu0
        %v5535 = vadd.f32 %v5426, %v5534
        %v5536 = vpop.f32.mrb[0].mxu0
        %v5537 = vadd.f32 %v5430, %v5536
        %5538 = vmatprep.mubr.f32.mxu0 0.0
        %5539 = vmatmul.mubr.f32.gmra.mrb[0].mxu0 %v5264
        %v5540 = vpop.f32.mrb[0].mxu0
        %v5541 = vadd.f32 %v5426, %v5540
        %v5542 = vpop.f32.mrb[0].mxu0
        %v5543 = vadd.f32 %v5430, %v5542
        %5544 = vmatprep.mubr.f32.mxu0 0.0
        %5545 = vmatmul.mubr.f32.gmra.mrb[0].mxu0 %v5267
        %v5546 = vpop.f32.mrb[0].mxu0
        %v5547 = vadd.f32 %v5426, %v5546
        %v5548 = vpop.f32.mrb[0].mxu0
        %v5549 = vadd.f32 %v5430, %v5548
        %5550 = vmatprep.mubr.f32.mxu0 0.0
        %5551 = vmatmul.mubr.f32.gmra.mrb[0].mxu0 %v5270
        %v5552 = vpop.f32.mrb[0].mxu0
        %v5553 = vadd.f32 %v5426, %v5552
        %v5554 = vpop.f32.mrb[0].mxu0
        %v5555 = vadd.f32 %v5430, %v5554
        %5556 = vmatprep.mubr.f32.mxu0 0.0
        %5557 = vmatmul.mubr.f32.gmra.mrb[0].mxu0 %v5273
        %v5558 = vpop.f32.mrb[0].mxu0
        %v5559 = vadd.f32 %v5426, %v5558
        %v5560 = vpop.f32.mrb[0].mxu0
        %v5561 = vadd.f32 %v5430, %v5560
        %5562 = vmatprep.mubr.f32.mxu0 0.0
        %5563 = vmatmul.mubr.f32.gmra.mrb[0].mxu0 %v5276
        %v5564 = vpop.f32.mrb[0].mxu0
        %v5565 = vadd.f32 %v5426, %v5564
        %v5566 = vpop.f32.mrb[0].mxu0
        %v5567 = vadd.f32 %v5430, %v5566
        %5568 = vmatprep.mubr.f32.mxu0 0.0
        %5569 = vmatmul.mubr.f32.gmra.mrb[0].mxu0 %v5279
        %v5570 = vpop.f32.mrb[0].mxu0
        %v5571 = vadd.f32 %v5426, %v5570
        %v5572 = vpop.f32.mrb[0].mxu0
        %v5573 = vadd.f32 %v5430, %v5572
        %5574 = vmatprep.mubr.f32.mxu0 0.0
        %5575 = vmatmul.mubr.f32.gmra.mrb[0].mxu0 %v5282
        %v5576 = vpop.f32.mrb[0].mxu0
        %v5577 = vadd.f32 %v5426, %v5576
        %v5578 = vpop.f32.mrb[0].mxu0
        %v5579 = vadd.f32 %v5430, %v5578
        %5580 = vmatprep.mubr.f32.mxu0 0.0
        %5581 = vmatmul.mubr.f32.gmra.mrb[0].mxu0 %v5285
        %v5582 = vpop.f32.mrb[0].mxu0
        %v5583 = vadd.f32 %v5426, %v5582
        %v5584 = vpop.f32.mrb[0].mxu0
        %v5585 = vadd.f32 %v5430, %v5584
        %5586 = vmatprep.mubr.f32.mxu0 0.0
        %5587 = vmatmul.mubr.f32.gmra.mrb[0].mxu0 %v5288
        %v5588 = vpop.f32.mrb[0].mxu0
        %v5589 = vadd.f32 %v5426, %v5588
        %v5590 = vpop.f32.mrb[0].mxu0
        %v5591 = vadd.f32 %v5430, %v5590
        %5592 = vmatprep.mubr.f32.mxu0 0.0
        %5593 = vmatmul.mubr.f32.gmra.mrb[0].mxu0 %v5291
        %v5594 = vpop.f32.mrb[0].mxu0
        %v5595 = vadd.f32 %v5426, %v5594
        %v5596 = vpop.f32.mrb[0].mxu0
        %v5597 = vadd.f32 %v5430, %v5596
        %5598 = vmatprep.mubr.f32.mxu0 0.0
        %5599 = vmatmul.mubr.f32.gmra.mrb[0].mxu0 %v5294
        %v5600 = vpop.f32.mrb[0].mxu0
        %v5601 = vadd.f32 %v5426, %v5600
        %v5602 = vpop.f32.mrb[0].mxu0
        %v5603 = vadd.f32 %v5430, %v5602
        %5604 = vmatprep.mubr.f32.mxu0 0.0
        %5605 = vmatmul.mubr.f32.gmra.mrb[0].mxu0 %v5297
        %v5606 = vpop.f32.mrb[0].mxu0
        %v5607 = vadd.f32 %v5426, %v5606
        %v5608 = vpop.f32.mrb[0].mxu0
        %v5609 = vadd.f32 %v5430, %v5608
        %5610 = vmatprep.mubr.f32.mxu0 0.0
        %5611 = vmatmul.mubr.f32.gmra.mrb[0].mxu0 %v5300
        %v5612 = vpop.f32.mrb[0].mxu0
        %v5613 = vadd.f32 %v5426, %v5612
        %v5614 = vpop.f32.mrb[0].mxu0
        %v5615 = vadd.f32 %v5430, %v5614
        %5616 = vmatprep.mubr.f32.mxu0 0.0
        %5617 = vmatmul.mubr.f32.gmra.mrb[0].mxu0 %v5303
        %v5618 = vpop.f32.mrb[0].mxu0
        %v5619 = vadd.f32 %v5426, %v5618
        %v5620 = vpop.f32.mrb[0].mxu0
        %v5621 = vadd.f32 %v5430, %v5620
        %5622 = vmatprep.mubr.f32.mxu0 0.0
        %5623 = vmatmul.mubr.f32.gmra.mrb[0].mxu0 %v5306
        %v5624 = vpop.f32.mrb[0].mxu0
        %v5625 = vadd.f32 %v5426, %v5624
        %v5626 = vpop.f32.mrb[0].mxu0
        %v5627 = vadd.f32 %v5430, %v5626
        %5628 = vmatprep.mubr.f32.mxu0 0.0
        %5629 = vmatmul.mubr.f32.gmra.mrb[0].mxu0 %v5309
        %v5630 = vpop.f32.mrb[0].mxu0
        %v5631 = vadd.f32 %v5426, %v5630
        %v5632 = vpop.f32.mrb[0].mxu0
        %v5633 = vadd.f32 %v5430, %v5632
        %5634 = vmatprep.mubr.f32.mxu0 0.0
        %5635 = vmatmul.mubr.f32.gmra.mrb[0].mxu0 %v5312
        %v5636 = vpop.f32.mrb[0].mxu0
        %v5637 = vadd.f32 %v5426, %v5636
        %v5638 = vpop.f32.mrb[0].mxu0
        %v5639 = vadd.f32 %v5430, %v5638
        %5640 = vmatprep.mubr.f32.mxu0 0.0
        %5641 = vmatmul.mubr.f32.gmra.mrb[0].mxu0 %v5315
        %v5642 = vpop.f32.mrb[0].mxu0
        %v5643 = vadd.f32 %v5426, %v5642
        %v5644 = vpop.f32.mrb[0].mxu0
        %v5645 = vadd.f32 %v5430, %v5644
        %5646 = vdwg.mxu0
        %5647 = vmatprep.subr.mxu0 0.0
        %5648 = vmatpush1.msra.mxu0 %v5231
        %5649 = vmatprep.subr.mxu0 0.0
        %5650 = vmatpush1.msra.mxu0 %v5234
        %5651 = vmatprep.subr.mxu0 0.0
        %5652 = vmatpush1.msra.mxu0 %v5237
        %5653 = vmatprep.subr.mxu0 0.0
        %5654 = vmatpush1.msra.mxu0 %v5240
        %5655 = vmatprep.subr.mxu0 0.0
        %5656 = vmatpush1.msra.mxu0 0.0
        %5657 = vmatprep.subr.mxu0 0.0
        %5658 = vmatpush1.msra.mxu0 0.0
        %5659 = vmatprep.subr.mxu0 0.0
        %5660 = vmatpush1.msra.mxu0 0.0
        %5661 = vmatprep.subr.mxu0 0.0
        %5662 = vmatpush1.msra.mxu0 0.0
        %5663 = vmatprep.subr.mxu0 0.0
        %5664 = vmatpush1.msra.mxu0 0.0
        %5665 = vmatprep.subr.mxu0 0.0
        %5666 = vmatpush1.msra.mxu0 0.0
        %5667 = vmatprep.subr.mxu0 0.0
        %5668 = vmatpush1.msra.mxu0 0.0
        %5669 = vmatprep.subr.mxu0 0.0
        %5670 = vmatpush1.msra.mxu0 0.0
        %5671 = vmatprep.subr.mxu0 0.0
        %5672 = vmatpush1.msra.mxu0 0.0
        %5673 = vmatprep.subr.mxu0 0.0
        %5674 = vmatpush1.msra.mxu0 0.0
        %5675 = vmatprep.subr.mxu0 0.0
        %5676 = vmatpush1.msra.mxu0 0.0
        %5677 = vmatprep.subr.mxu0 0.0
        %5678 = vmatpush1.msra.mxu0 0.0
        %5679 = vmatprep.subr.mxu0 0.0
        %5680 = vmatpush1.msra.mxu0 0.0
        %5681 = vmatprep.subr.mxu0 0.0
        %5682 = vmatpush1.msra.mxu0 0.0
        %5683 = vmatprep.subr.mxu0 0.0
        %5684 = vmatpush1.msra.mxu0 0.0
        %5685 = vmatprep.subr.mxu0 0.0
        %5686 = vmatpush1.msra.mxu0 0.0
        %5687 = vmatprep.subr.mxu0 0.0
        %5688 = vmatpush1.msra.mxu0 0.0
        %5689 = vmatprep.subr.mxu0 0.0
        %5690 = vmatpush1.msra.mxu0 0.0
        %5691 = vmatprep.subr.mxu0 0.0
        %5692 = vmatpush1.msra.mxu0 0.0
        %5693 = vmatprep.subr.mxu0 0.0
        %5694 = vmatpush1.msra.mxu0 0.0
        %5695 = vmatprep.subr.mxu0 0.0
        %5696 = vmatpush1.msra.mxu0 0.0
        %5697 = vmatprep.subr.mxu0 0.0
        %5698 = vmatpush1.msra.mxu0 0.0
        %5699 = vmatprep.subr.mxu0 0.0
        %5700 = vmatpush1.msra.mxu0 0.0
        %5701 = vmatprep.subr.mxu0 0.0
        %5702 = vmatpush1.msra.mxu0 0.0
        %5703 = vmatprep.subr.mxu0 0.0
        %5704 = vmatpush1.msra.mxu0 0.0
        %5705 = vmatprep.subr.mxu0 0.0
        %5706 = vmatpush1.msra.mxu0 0.0
        %5707 = vmatprep.subr.mxu0 0.0
        %5708 = vmatpush1.msra.mxu0 0.0
        %5709 = vmatprep.subr.mxu0 0.0
        %5710 = vmatpush1.msra.mxu0 0.0
        %5711 = vmatprep.mubr.f32.mxu0 0.0
        %5712 = vmatmul.mubr.f32.gmra.mrb[0].mxu0 %v5246
        %v5713 = vpop.f32.mrb[0].mxu0
        %v5714 = vadd.f32 %v5434, %v5713
        %v5715 = vpop.f32.mrb[0].mxu0
        %5716 = vmatprep.mubr.f32.mxu0 0.0
        %5717 = vmatmul.mubr.f32.gmra.mrb[0].mxu0 %v5249
        %v5718 = vpop.f32.mrb[0].mxu0
        %v5719 = vadd.f32 %v5434, %v5718
        %v5720 = vpop.f32.mrb[0].mxu0
        %5721 = vmatprep.mubr.f32.mxu0 0.0
        %5722 = vmatmul.mubr.f32.gmra.mrb[0].mxu0 %v5252
        %v5723 = vpop.f32.mrb[0].mxu0
        %v5724 = vadd.f32 %v5434, %v5723
        %v5725 = vpop.f32.mrb[0].mxu0
        %5726 = vmatprep.mubr.f32.mxu0 0.0
        %5727 = vmatmul.mubr.f32.gmra.mrb[0].mxu0 %v5255
        %v5728 = vpop.f32.mrb[0].mxu0
        %v5729 = vadd.f32 %v5434, %v5728
        %v5730 = vpop.f32.mrb[0].mxu0
        %5731 = vmatprep.mubr.f32.mxu0 0.0
        %5732 = vmatmul.mubr.f32.gmra.mrb[0].mxu0 %v5258
        %v5733 = vpop.f32.mrb[0].mxu0
        %v5734 = vadd.f32 %v5434, %v5733
        %v5735 = vpop.f32.mrb[0].mxu0
        %5736 = vmatprep.mubr.f32.mxu0 0.0
        %5737 = vmatmul.mubr.f32.gmra.mrb[0].mxu0 %v5261
        %v5738 = vpop.f32.mrb[0].mxu0
        %v5739 = vadd.f32 %v5434, %v5738
        %v5740 = vpop.f32.mrb[0].mxu0
        %5741 = vmatprep.mubr.f32.mxu0 0.0
        %5742 = vmatmul.mubr.f32.gmra.mrb[0].mxu0 %v5264
        %v5743 = vpop.f32.mrb[0].mxu0
        %v5744 = vadd.f32 %v5434, %v5743
        %v5745 = vpop.f32.mrb[0].mxu0
        %5746 = vmatprep.mubr.f32.mxu0 0.0
        %5747 = vmatmul.mubr.f32.gmra.mrb[0].mxu0 %v5267
        %v5748 = vpop.f32.mrb[0].mxu0
        %v5749 = vadd.f32 %v5434, %v5748
        %v5750 = vpop.f32.mrb[0].mxu0
        %5751 = vmatprep.mubr.f32.mxu0 0.0
        %5752 = vmatmul.mubr.f32.gmra.mrb[0].mxu0 %v5270
        %v5753 = vpop.f32.mrb[0].mxu0
        %v5754 = vadd.f32 %v5434, %v5753
        %v5755 = vpop.f32.mrb[0].mxu0
        %5756 = vmatprep.mubr.f32.mxu0 0.0
        %5757 = vmatmul.mubr.f32.gmra.mrb[0].mxu0 %v5273
        %v5758 = vpop.f32.mrb[0].mxu0
        %v5759 = vadd.f32 %v5434, %v5758
        %v5760 = vpop.f32.mrb[0].mxu0
        %5761 = vmatprep.mubr.f32.mxu0 0.0
        %5762 = vmatmul.mubr.f32.gmra.mrb[0].mxu0 %v5276
        %v5763 = vpop.f32.mrb[0].mxu0
        %v5764 = vadd.f32 %v5434, %v5763
        %v5765 = vpop.f32.mrb[0].mxu0
        %5766 = vmatprep.mubr.f32.mxu0 0.0
        %5767 = vmatmul.mubr.f32.gmra.mrb[0].mxu0 %v5279
        %v5768 = vpop.f32.mrb[0].mxu0
        %v5769 = vadd.f32 %v5434, %v5768
        %v5770 = vpop.f32.mrb[0].mxu0
        %5771 = vmatprep.mubr.f32.mxu0 0.0
        %5772 = vmatmul.mubr.f32.gmra.mrb[0].mxu0 %v5282
        %v5773 = vpop.f32.mrb[0].mxu0
        %v5774 = vadd.f32 %v5434, %v5773
        %v5775 = vpop.f32.mrb[0].mxu0
        %5776 = vmatprep.mubr.f32.mxu0 0.0
        %5777 = vmatmul.mubr.f32.gmra.mrb[0].mxu0 %v5285
        %v5778 = vpop.f32.mrb[0].mxu0
        %v5779 = vadd.f32 %v5434, %v5778
        %v5780 = vpop.f32.mrb[0].mxu0
        %5781 = vmatprep.mubr.f32.mxu0 0.0
        %5782 = vmatmul.mubr.f32.gmra.mrb[0].mxu0 %v5288
        %v5783 = vpop.f32.mrb[0].mxu0
        %v5784 = vadd.f32 %v5434, %v5783
        %v5785 = vpop.f32.mrb[0].mxu0
        %5786 = vmatprep.mubr.f32.mxu0 0.0
        %5787 = vmatmul.mubr.f32.gmra.mrb[0].mxu0 %v5291
        %v5788 = vpop.f32.mrb[0].mxu0
        %v5789 = vadd.f32 %v5434, %v5788
        %v5790 = vpop.f32.mrb[0].mxu0
        %5791 = vmatprep.mubr.f32.mxu0 0.0
        %5792 = vmatmul.mubr.f32.gmra.mrb[0].mxu0 %v5294
        %v5793 = vpop.f32.mrb[0].mxu0
        %v5794 = vadd.f32 %v5434, %v5793
        %v5795 = vpop.f32.mrb[0].mxu0
        %5796 = vmatprep.mubr.f32.mxu0 0.0
        %5797 = vmatmul.mubr.f32.gmra.mrb[0].mxu0 %v5297
        %v5798 = vpop.f32.mrb[0].mxu0
        %v5799 = vadd.f32 %v5434, %v5798
        %v5800 = vpop.f32.mrb[0].mxu0
        %5801 = vmatprep.mubr.f32.mxu0 0.0
        %5802 = vmatmul.mubr.f32.gmra.mrb[0].mxu0 %v5300
        %v5803 = vpop.f32.mrb[0].mxu0
        %v5804 = vadd.f32 %v5434, %v5803
        %v5805 = vpop.f32.mrb[0].mxu0
        %5806 = vmatprep.mubr.f32.mxu0 0.0
        %5807 = vmatmul.mubr.f32.gmra.mrb[0].mxu0 %v5303
        %v5808 = vpop.f32.mrb[0].mxu0
        %v5809 = vadd.f32 %v5434, %v5808
        %v5810 = vpop.f32.mrb[0].mxu0
        %5811 = vmatprep.mubr.f32.mxu0 0.0
        %5812 = vmatmul.mubr.f32.gmra.mrb[0].mxu0 %v5306
        %v5813 = vpop.f32.mrb[0].mxu0
        %v5814 = vadd.f32 %v5434, %v5813
        %v5815 = vpop.f32.mrb[0].mxu0
        %5816 = vmatprep.mubr.f32.mxu0 0.0
        %5817 = vmatmul.mubr.f32.gmra.mrb[0].mxu0 %v5309
        %v5818 = vpop.f32.mrb[0].mxu0
        %v5819 = vadd.f32 %v5434, %v5818
        %v5820 = vpop.f32.mrb[0].mxu0
        %5821 = vmatprep.mubr.f32.mxu0 0.0
        %5822 = vmatmul.mubr.f32.gmra.mrb[0].mxu0 %v5312
        %v5823 = vpop.f32.mrb[0].mxu0
        %v5824 = vadd.f32 %v5434, %v5823
        %v5825 = vpop.f32.mrb[0].mxu0
        %5826 = vmatprep.mubr.f32.mxu0 0.0
        %5827 = vmatmul.mubr.f32.gmra.mrb[0].mxu0 %v5315
        %v5828 = vpop.f32.mrb[0].mxu0
        %v5829 = vadd.f32 %v5434, %v5828
        %v5830 = vpop.f32.mrb[0].mxu0
        %5831 = vdwg.mxu0
        %v5832 = vmul.f32 %v5505, 0.2
        %v5833 = vmul.f32 %v5507, 0.2
        %v5834 = vmul.f32 %v5714, 0.2
        %v5835 = vmul.f32 %v5511, 0.2
        %v5836 = vmul.f32 %v5513, 0.2
        %v5837 = vmul.f32 %v5719, 0.2
        %v5838 = vmul.f32 %v5517, 0.2
        %v5839 = vmul.f32 %v5519, 0.2
        %v5840 = vmul.f32 %v5724, 0.2
        %v5841 = vmul.f32 %v5523, 0.2
        %v5842 = vmul.f32 %v5525, 0.2
        %v5843 = vmul.f32 %v5729, 0.2
        %v5844 = vmul.f32 %v5529, 0.2
        %v5845 = vmul.f32 %v5531, 0.2
        %v5846 = vmul.f32 %v5734, 0.2
        %v5847 = vmul.f32 %v5535, 0.2
        %v5848 = vmul.f32 %v5537, 0.2
        %v5849 = vmul.f32 %v5739, 0.2
        %v5850 = vmul.f32 %v5541, 0.2
        %v5851 = vmul.f32 %v5543, 0.2
        %v5852 = vmul.f32 %v5744, 0.2
        %v5853 = vmul.f32 %v5547, 0.2
        %v5854 = vmul.f32 %v5549, 0.2
        %v5855 = vmul.f32 %v5749, 0.2
        %v5856 = vmul.f32 %v5553, 0.2
        %v5857 = vmul.f32 %v5555, 0.2
        %v5858 = vmul.f32 %v5754, 0.2
        %v5859 = vmul.f32 %v5559, 0.2
        %v5860 = vmul.f32 %v5561, 0.2
        %v5861 = vmul.f32 %v5759, 0.2
        %v5862 = vmul.f32 %v5565, 0.2
        %v5863 = vmul.f32 %v5567, 0.2
        %v5864 = vmul.f32 %v5764, 0.2
        %v5865 = vmul.f32 %v5571, 0.2
        %v5866 = vmul.f32 %v5573, 0.2
        %v5867 = vmul.f32 %v5769, 0.2
        %v5868 = vmul.f32 %v5577, 0.2
        %v5869 = vmul.f32 %v5579, 0.2
        %v5870 = vmul.f32 %v5774, 0.2
        %v5871 = vmul.f32 %v5583, 0.2
        %v5872 = vmul.f32 %v5585, 0.2
        %v5873 = vmul.f32 %v5779, 0.2
        %v5874 = vmul.f32 %v5589, 0.2
        %v5875 = vmul.f32 %v5591, 0.2
        %v5876 = vmul.f32 %v5784, 0.2
        %v5877 = vmul.f32 %v5595, 0.2
        %v5878 = vmul.f32 %v5597, 0.2
        %v5879 = vmul.f32 %v5789, 0.2
        %v5880 = vmul.f32 %v5601, 0.2
        %v5881 = vmul.f32 %v5603, 0.2
        %v5882 = vmul.f32 %v5794, 0.2
        %v5883 = vmul.f32 %v5607, 0.2
        %v5884 = vmul.f32 %v5609, 0.2
        %v5885 = vmul.f32 %v5799, 0.2
        %v5886 = vmul.f32 %v5613, 0.2
        %v5887 = vmul.f32 %v5615, 0.2
        %v5888 = vmul.f32 %v5804, 0.2
        %v5889 = vmul.f32 %v5619, 0.2
        %v5890 = vmul.f32 %v5621, 0.2
        %v5891 = vmul.f32 %v5809, 0.2
        %v5892 = vmul.f32 %v5625, 0.2
        %v5893 = vmul.f32 %v5627, 0.2
        %v5894 = vmul.f32 %v5814, 0.2
        %v5895 = vmul.f32 %v5631, 0.2
        %v5896 = vmul.f32 %v5633, 0.2
        %v5897 = vmul.f32 %v5819, 0.2
        %v5898 = vmul.f32 %v5637, 0.2
        %v5899 = vmul.f32 %v5639, 0.2
        %v5900 = vmul.f32 %v5824, 0.2
        %v5901 = vmul.f32 %v5643, 0.2
        %v5902 = vmul.f32 %v5645, 0.2
        %v5903 = vmul.f32 %v5829, 0.2
        %v5904 = vmax.f32 %v5505, %v5832
        %v5905 = vmax.f32 %v5507, %v5833
        %v5906 = vmax.f32 %v5714, %v5834
        %v5907 = vmax.f32 %v5511, %v5835
        %v5908 = vmax.f32 %v5513, %v5836
        %v5909 = vmax.f32 %v5719, %v5837
        %v5910 = vmax.f32 %v5517, %v5838
        %v5911 = vmax.f32 %v5519, %v5839
        %v5912 = vmax.f32 %v5724, %v5840
        %v5913 = vmax.f32 %v5523, %v5841
        %v5914 = vmax.f32 %v5525, %v5842
        %v5915 = vmax.f32 %v5729, %v5843
        %v5916 = vmax.f32 %v5529, %v5844
        %v5917 = vmax.f32 %v5531, %v5845
        %v5918 = vmax.f32 %v5734, %v5846
        %v5919 = vmax.f32 %v5535, %v5847
        %v5920 = vmax.f32 %v5537, %v5848
        %v5921 = vmax.f32 %v5739, %v5849
        %v5922 = vmax.f32 %v5541, %v5850
        %v5923 = vmax.f32 %v5543, %v5851
        %v5924 = vmax.f32 %v5744, %v5852
        %v5925 = vmax.f32 %v5547, %v5853
        %v5926 = vmax.f32 %v5549, %v5854
        %v5927 = vmax.f32 %v5749, %v5855
        %v5928 = vmax.f32 %v5553, %v5856
        %v5929 = vmax.f32 %v5555, %v5857
        %v5930 = vmax.f32 %v5754, %v5858
        %v5931 = vmax.f32 %v5559, %v5859
        %v5932 = vmax.f32 %v5561, %v5860
        %v5933 = vmax.f32 %v5759, %v5861
        %v5934 = vmax.f32 %v5565, %v5862
        %v5935 = vmax.f32 %v5567, %v5863
        %v5936 = vmax.f32 %v5764, %v5864
        %v5937 = vmax.f32 %v5571, %v5865
        %v5938 = vmax.f32 %v5573, %v5866
        %v5939 = vmax.f32 %v5769, %v5867
        %v5940 = vmax.f32 %v5577, %v5868
        %v5941 = vmax.f32 %v5579, %v5869
        %v5942 = vmax.f32 %v5774, %v5870
        %v5943 = vmax.f32 %v5583, %v5871
        %v5944 = vmax.f32 %v5585, %v5872
        %v5945 = vmax.f32 %v5779, %v5873
        %v5946 = vmax.f32 %v5589, %v5874
        %v5947 = vmax.f32 %v5591, %v5875
        %v5948 = vmax.f32 %v5784, %v5876
        %v5949 = vmax.f32 %v5595, %v5877
        %v5950 = vmax.f32 %v5597, %v5878
        %v5951 = vmax.f32 %v5789, %v5879
        %v5952 = vmax.f32 %v5601, %v5880
        %v5953 = vmax.f32 %v5603, %v5881
        %v5954 = vmax.f32 %v5794, %v5882
        %v5955 = vmax.f32 %v5607, %v5883
        %v5956 = vmax.f32 %v5609, %v5884
        %v5957 = vmax.f32 %v5799, %v5885
        %v5958 = vmax.f32 %v5613, %v5886
        %v5959 = vmax.f32 %v5615, %v5887
        %v5960 = vmax.f32 %v5804, %v5888
        %v5961 = vmax.f32 %v5619, %v5889
        %v5962 = vmax.f32 %v5621, %v5890
        %v5963 = vmax.f32 %v5809, %v5891
        %v5964 = vmax.f32 %v5625, %v5892
        %v5965 = vmax.f32 %v5627, %v5893
        %v5966 = vmax.f32 %v5814, %v5894
        %v5967 = vmax.f32 %v5631, %v5895
        %v5968 = vmax.f32 %v5633, %v5896
        %v5969 = vmax.f32 %v5819, %v5897
        %v5970 = vmax.f32 %v5637, %v5898
        %v5971 = vmax.f32 %v5639, %v5899
        %v5972 = vmax.f32 %v5824, %v5900
        %v5973 = vmax.f32 %v5643, %v5901
        %v5974 = vmax.f32 %v5645, %v5902
        %v5975 = vmax.f32 %v5829, %v5903
        %v5976 = vmax.f32 %v5904, -30.0
        %v5977 = vmax.f32 %v5905, -30.0
        %v5978 = vmax.f32 %v5906, -30.0
        %v5979 = vmax.f32 %v5907, -30.0
        %v5980 = vmax.f32 %v5908, -30.0
        %v5981 = vmax.f32 %v5909, -30.0
        %v5982 = vmax.f32 %v5910, -30.0
        %v5983 = vmax.f32 %v5911, -30.0
        %v5984 = vmax.f32 %v5912, -30.0
        %v5985 = vmax.f32 %v5913, -30.0
        %v5986 = vmax.f32 %v5914, -30.0
        %v5987 = vmax.f32 %v5915, -30.0
        %v5988 = vmax.f32 %v5916, -30.0
        %v5989 = vmax.f32 %v5917, -30.0
        %v5990 = vmax.f32 %v5918, -30.0
        %v5991 = vmax.f32 %v5919, -30.0
        %v5992 = vmax.f32 %v5920, -30.0
        %v5993 = vmax.f32 %v5921, -30.0
        %v5994 = vmax.f32 %v5922, -30.0
        %v5995 = vmax.f32 %v5923, -30.0
        %v5996 = vmax.f32 %v5924, -30.0
        %v5997 = vmax.f32 %v5925, -30.0
        %v5998 = vmax.f32 %v5926, -30.0
        %v5999 = vmax.f32 %v5927, -30.0
        %v6000 = vmax.f32 %v5928, -30.0
        %v6001 = vmax.f32 %v5929, -30.0
        %v6002 = vmax.f32 %v5930, -30.0
        %v6003 = vmax.f32 %v5931, -30.0
        %v6004 = vmax.f32 %v5932, -30.0
        %v6005 = vmax.f32 %v5933, -30.0
        %v6006 = vmax.f32 %v5934, -30.0
        %v6007 = vmax.f32 %v5935, -30.0
        %v6008 = vmax.f32 %v5936, -30.0
        %v6009 = vmax.f32 %v5937, -30.0
        %v6010 = vmax.f32 %v5938, -30.0
        %v6011 = vmax.f32 %v5939, -30.0
        %v6012 = vmax.f32 %v5940, -30.0
        %v6013 = vmax.f32 %v5941, -30.0
        %v6014 = vmax.f32 %v5942, -30.0
        %v6015 = vmax.f32 %v5943, -30.0
        %v6016 = vmax.f32 %v5944, -30.0
        %v6017 = vmax.f32 %v5945, -30.0
        %v6018 = vmax.f32 %v5946, -30.0
        %v6019 = vmax.f32 %v5947, -30.0
        %v6020 = vmax.f32 %v5948, -30.0
        %v6021 = vmax.f32 %v5949, -30.0
        %v6022 = vmax.f32 %v5950, -30.0
        %v6023 = vmax.f32 %v5951, -30.0
        %v6024 = vmax.f32 %v5952, -30.0
        %v6025 = vmax.f32 %v5953, -30.0
        %v6026 = vmax.f32 %v5954, -30.0
        %v6027 = vmax.f32 %v5955, -30.0
        %v6028 = vmax.f32 %v5956, -30.0
        %v6029 = vmax.f32 %v5957, -30.0
        %v6030 = vmax.f32 %v5958, -30.0
        %v6031 = vmax.f32 %v5959, -30.0
        %v6032 = vmax.f32 %v5960, -30.0
        %v6033 = vmax.f32 %v5961, -30.0
        %v6034 = vmax.f32 %v5962, -30.0
        %v6035 = vmax.f32 %v5963, -30.0
        %v6036 = vmax.f32 %v5964, -30.0
        %v6037 = vmax.f32 %v5965, -30.0
        %v6038 = vmax.f32 %v5966, -30.0
        %v6039 = vmax.f32 %v5967, -30.0
        %v6040 = vmax.f32 %v5968, -30.0
        %v6041 = vmax.f32 %v5969, -30.0
        %v6042 = vmax.f32 %v5970, -30.0
        %v6043 = vmax.f32 %v5971, -30.0
        %v6044 = vmax.f32 %v5972, -30.0
        %v6045 = vmax.f32 %v5973, -30.0
        %v6046 = vmax.f32 %v5974, -30.0
        %v6047 = vmax.f32 %v5975, -30.0
        %v6048 = vmin.f32 %v5976, 30.0
        %v6049 = vmin.f32 %v5977, 30.0
        %v6050 = vmin.f32 %v5978, 30.0
        %v6051 = vmin.f32 %v5979, 30.0
        %v6052 = vmin.f32 %v5980, 30.0
        %v6053 = vmin.f32 %v5981, 30.0
        %v6054 = vmin.f32 %v5982, 30.0
        %v6055 = vmin.f32 %v5983, 30.0
        %v6056 = vmin.f32 %v5984, 30.0
        %v6057 = vmin.f32 %v5985, 30.0
        %v6058 = vmin.f32 %v5986, 30.0
        %v6059 = vmin.f32 %v5987, 30.0
        %v6060 = vmin.f32 %v5988, 30.0
        %v6061 = vmin.f32 %v5989, 30.0
        %v6062 = vmin.f32 %v5990, 30.0
        %v6063 = vmin.f32 %v5991, 30.0
        %v6064 = vmin.f32 %v5992, 30.0
        %v6065 = vmin.f32 %v5993, 30.0
        %v6066 = vmin.f32 %v5994, 30.0
        %v6067 = vmin.f32 %v5995, 30.0
        %v6068 = vmin.f32 %v5996, 30.0
        %v6069 = vmin.f32 %v5997, 30.0
        %v6070 = vmin.f32 %v5998, 30.0
        %v6071 = vmin.f32 %v5999, 30.0
        %v6072 = vmin.f32 %v6000, 30.0
        %v6073 = vmin.f32 %v6001, 30.0
        %v6074 = vmin.f32 %v6002, 30.0
        %v6075 = vmin.f32 %v6003, 30.0
        %v6076 = vmin.f32 %v6004, 30.0
        %v6077 = vmin.f32 %v6005, 30.0
        %v6078 = vmin.f32 %v6006, 30.0
        %v6079 = vmin.f32 %v6007, 30.0
        %v6080 = vmin.f32 %v6008, 30.0
        %v6081 = vmin.f32 %v6009, 30.0
        %v6082 = vmin.f32 %v6010, 30.0
        %v6083 = vmin.f32 %v6011, 30.0
        %v6084 = vmin.f32 %v6012, 30.0
        %v6085 = vmin.f32 %v6013, 30.0
        %v6086 = vmin.f32 %v6014, 30.0
        %v6087 = vmin.f32 %v6015, 30.0
        %v6088 = vmin.f32 %v6016, 30.0
        %v6089 = vmin.f32 %v6017, 30.0
        %v6090 = vmin.f32 %v6018, 30.0
        %v6091 = vmin.f32 %v6019, 30.0
        %v6092 = vmin.f32 %v6020, 30.0
        %v6093 = vmin.f32 %v6021, 30.0
        %v6094 = vmin.f32 %v6022, 30.0
        %v6095 = vmin.f32 %v6023, 30.0
        %v6096 = vmin.f32 %v6024, 30.0
        %v6097 = vmin.f32 %v6025, 30.0
        %v6098 = vmin.f32 %v6026, 30.0
        %v6099 = vmin.f32 %v6027, 30.0
        %v6100 = vmin.f32 %v6028, 30.0
        %v6101 = vmin.f32 %v6029, 30.0
        %v6102 = vmin.f32 %v6030, 30.0
        %v6103 = vmin.f32 %v6031, 30.0
        %v6104 = vmin.f32 %v6032, 30.0
        %v6105 = vmin.f32 %v6033, 30.0
        %v6106 = vmin.f32 %v6034, 30.0
        %v6107 = vmin.f32 %v6035, 30.0
        %v6108 = vmin.f32 %v6036, 30.0
        %v6109 = vmin.f32 %v6037, 30.0
        %v6110 = vmin.f32 %v6038, 30.0
        %v6111 = vmin.f32 %v6039, 30.0
        %v6112 = vmin.f32 %v6040, 30.0
        %v6113 = vmin.f32 %v6041, 30.0
        %v6114 = vmin.f32 %v6042, 30.0
        %v6115 = vmin.f32 %v6043, 30.0
        %v6116 = vmin.f32 %v6044, 30.0
        %v6117 = vmin.f32 %v6045, 30.0
        %v6118 = vmin.f32 %v6046, 30.0
        %v6119 = vmin.f32 %v6047, 30.0
        %v6120 = vmul.f32 %v6048, 1.442695
        %v6121 = vpow.pop %v6120
        %v6122 = vmul.f32 %v6049, 1.442695
        %v6123 = vpow.pop %v6122
        %v6124 = vmul.f32 %v6050, 1.442695
        %v6125 = vpow.pop %v6124
        %v6126 = vmul.f32 %v6051, 1.442695
        %v6127 = vpow.pop %v6126
        %v6128 = vmul.f32 %v6052, 1.442695
        %v6129 = vpow.pop %v6128
        %v6130 = vmul.f32 %v6053, 1.442695
        %v6131 = vpow.pop %v6130
        %v6132 = vmul.f32 %v6054, 1.442695
        %v6133 = vpow.pop %v6132
        %v6134 = vmul.f32 %v6055, 1.442695
        %v6135 = vpow.pop %v6134
        %v6136 = vmul.f32 %v6056, 1.442695
        %v6137 = vpow.pop %v6136
        %v6138 = vmul.f32 %v6057, 1.442695
        %v6139 = vpow.pop %v6138
        %v6140 = vmul.f32 %v6058, 1.442695
        %v6141 = vpow.pop %v6140
        %v6142 = vmul.f32 %v6059, 1.442695
        %v6143 = vpow.pop %v6142
        %v6144 = vmul.f32 %v6060, 1.442695
        %v6145 = vpow.pop %v6144
        %v6146 = vmul.f32 %v6061, 1.442695
        %v6147 = vpow.pop %v6146
        %v6148 = vmul.f32 %v6062, 1.442695
        %v6149 = vpow.pop %v6148
        %v6150 = vmul.f32 %v6063, 1.442695
        %v6151 = vpow.pop %v6150
        %v6152 = vmul.f32 %v6064, 1.442695
        %v6153 = vpow.pop %v6152
        %v6154 = vmul.f32 %v6065, 1.442695
        %v6155 = vpow.pop %v6154
        %v6156 = vmul.f32 %v6066, 1.442695
        %v6157 = vpow.pop %v6156
        %v6158 = vmul.f32 %v6067, 1.442695
        %v6159 = vpow.pop %v6158
        %v6160 = vmul.f32 %v6068, 1.442695
        %v6161 = vpow.pop %v6160
        %v6162 = vmul.f32 %v6069, 1.442695
        %v6163 = vpow.pop %v6162
        %v6164 = vmul.f32 %v6070, 1.442695
        %v6165 = vpow.pop %v6164
        %v6166 = vmul.f32 %v6071, 1.442695
        %v6167 = vpow.pop %v6166
        %v6168 = vmul.f32 %v6072, 1.442695
        %v6169 = vpow.pop %v6168
        %v6170 = vmul.f32 %v6073, 1.442695
        %v6171 = vpow.pop %v6170
        %v6172 = vmul.f32 %v6074, 1.442695
        %v6173 = vpow.pop %v6172
        %v6174 = vmul.f32 %v6075, 1.442695
        %v6175 = vpow.pop %v6174
        %v6176 = vmul.f32 %v6076, 1.442695
        %v6177 = vpow.pop %v6176
        %v6178 = vmul.f32 %v6077, 1.442695
        %v6179 = vpow.pop %v6178
        %v6180 = vmul.f32 %v6078, 1.442695
        %v6181 = vpow.pop %v6180
        %v6182 = vmul.f32 %v6079, 1.442695
        %v6183 = vpow.pop %v6182
        %v6184 = vmul.f32 %v6080, 1.442695
        %v6185 = vpow.pop %v6184
        %v6186 = vmul.f32 %v6081, 1.442695
        %v6187 = vpow.pop %v6186
        %v6188 = vmul.f32 %v6082, 1.442695
        %v6189 = vpow.pop %v6188
        %v6190 = vmul.f32 %v6083, 1.442695
        %v6191 = vpow.pop %v6190
        %v6192 = vmul.f32 %v6084, 1.442695
        %v6193 = vpow.pop %v6192
        %v6194 = vmul.f32 %v6085, 1.442695
        %v6195 = vpow.pop %v6194
        %v6196 = vmul.f32 %v6086, 1.442695
        %v6197 = vpow.pop %v6196
        %v6198 = vmul.f32 %v6087, 1.442695
        %v6199 = vpow.pop %v6198
        %v6200 = vmul.f32 %v6088, 1.442695
        %v6201 = vpow.pop %v6200
        %v6202 = vmul.f32 %v6089, 1.442695
        %v6203 = vpow.pop %v6202
        %v6204 = vmul.f32 %v6090, 1.442695
        %v6205 = vpow.pop %v6204
        %v6206 = vmul.f32 %v6091, 1.442695
        %v6207 = vpow.pop %v6206
        %v6208 = vmul.f32 %v6092, 1.442695
        %v6209 = vpow.pop %v6208
        %v6210 = vmul.f32 %v6093, 1.442695
        %v6211 = vpow.pop %v6210
        %v6212 = vmul.f32 %v6094, 1.442695
        %v6213 = vpow.pop %v6212
        %v6214 = vmul.f32 %v6095, 1.442695
        %v6215 = vpow.pop %v6214
        %v6216 = vmul.f32 %v6096, 1.442695
        %v6217 = vpow.pop %v6216
        %v6218 = vmul.f32 %v6097, 1.442695
        %v6219 = vpow.pop %v6218
        %v6220 = vmul.f32 %v6098, 1.442695
        %v6221 = vpow.pop %v6220
        %v6222 = vmul.f32 %v6099, 1.442695
        %v6223 = vpow.pop %v6222
        %v6224 = vmul.f32 %v6100, 1.442695
        %v6225 = vpow.pop %v6224
        %v6226 = vmul.f32 %v6101, 1.442695
        %v6227 = vpow.pop %v6226
        %v6228 = vmul.f32 %v6102, 1.442695
        %v6229 = vpow.pop %v6228
        %v6230 = vmul.f32 %v6103, 1.442695
        %v6231 = vpow.pop %v6230
        %v6232 = vmul.f32 %v6104, 1.442695
        %v6233 = vpow.pop %v6232
        %v6234 = vmul.f32 %v6105, 1.442695
        %v6235 = vpow.pop %v6234
        %v6236 = vmul.f32 %v6106, 1.442695
        %v6237 = vpow.pop %v6236
        %v6238 = vmul.f32 %v6107, 1.442695
        %v6239 = vpow.pop %v6238
        %v6240 = vmul.f32 %v6108, 1.442695
        %v6241 = vpow.pop %v6240
        %v6242 = vmul.f32 %v6109, 1.442695
        %v6243 = vpow.pop %v6242
        %v6244 = vmul.f32 %v6110, 1.442695
        %v6245 = vpow.pop %v6244
        %v6246 = vmul.f32 %v6111, 1.442695
        %v6247 = vpow.pop %v6246
        %v6248 = vmul.f32 %v6112, 1.442695
        %v6249 = vpow.pop %v6248
        %v6250 = vmul.f32 %v6113, 1.442695
        %v6251 = vpow.pop %v6250
        %v6252 = vmul.f32 %v6114, 1.442695
        %v6253 = vpow.pop %v6252
        %v6254 = vmul.f32 %v6115, 1.442695
        %v6255 = vpow.pop %v6254
        %v6256 = vmul.f32 %v6116, 1.442695
        %v6257 = vpow.pop %v6256
        %v6258 = vmul.f32 %v6117, 1.442695
        %v6259 = vpow.pop %v6258
        %v6260 = vmul.f32 %v6118, 1.442695
        %v6261 = vpow.pop %v6260
        %v6262 = vmul.f32 %v6119, 1.442695
        %v6263 = vpow.pop %v6262
        %v6264 = vmul.f32 %v6121, %v540
        %v6265 = vmul.f32 %v6123, %v541
        %v6266 = vmul.f32 %v6125, %v542
        %v6267 = vmul.f32 %v6127, %v543
        %v6268 = vmul.f32 %v6129, %v544
        %v6269 = vmul.f32 %v6131, %v545
        %v6270 = vmul.f32 %v6133, %v546
        %v6271 = vmul.f32 %v6135, %v547
        %v6272 = vmul.f32 %v6137, %v548
        %v6273 = vmul.f32 %v6139, %v549
        %v6274 = vmul.f32 %v6141, %v550
        %v6275 = vmul.f32 %v6143, %v551
        %v6276 = vmul.f32 %v6145, %v552
        %v6277 = vmul.f32 %v6147, %v553
        %v6278 = vmul.f32 %v6149, %v554
        %v6279 = vmul.f32 %v6151, %v555
        %v6280 = vmul.f32 %v6153, %v556
        %v6281 = vmul.f32 %v6155, %v557
        %v6282 = vmul.f32 %v6157, %v558
        %v6283 = vmul.f32 %v6159, %v559
        %v6284 = vmul.f32 %v6161, %v560
        %v6285 = vmul.f32 %v6163, %v561
        %v6286 = vmul.f32 %v6165, %v562
        %v6287 = vmul.f32 %v6167, %v563
        %v6288 = vmul.f32 %v6169, %v564
        %v6289 = vmul.f32 %v6171, %v565
        %v6290 = vmul.f32 %v6173, %v566
        %v6291 = vmul.f32 %v6175, %v567
        %v6292 = vmul.f32 %v6177, %v568
        %v6293 = vmul.f32 %v6179, %v569
        %v6294 = vmul.f32 %v6181, %v570
        %v6295 = vmul.f32 %v6183, %v571
        %v6296 = vmul.f32 %v6185, %v572
        %v6297 = vmul.f32 %v6187, %v573
        %v6298 = vmul.f32 %v6189, %v574
        %v6299 = vmul.f32 %v6191, %v575
        %v6300 = vmul.f32 %v6193, %v576
        %v6301 = vmul.f32 %v6195, %v577
        %v6302 = vmul.f32 %v6197, %v578
        %v6303 = vmul.f32 %v6199, %v579
        %v6304 = vmul.f32 %v6201, %v580
        %v6305 = vmul.f32 %v6203, %v581
        %v6306 = vmul.f32 %v6205, %v582
        %v6307 = vmul.f32 %v6207, %v583
        %v6308 = vmul.f32 %v6209, %v584
        %v6309 = vmul.f32 %v6211, %v585
        %v6310 = vmul.f32 %v6213, %v586
        %v6311 = vmul.f32 %v6215, %v587
        %v6312 = vmul.f32 %v6217, %v588
        %v6313 = vmul.f32 %v6219, %v589
        %v6314 = vmul.f32 %v6221, %v590
        %v6315 = vmul.f32 %v6223, %v591
        %v6316 = vmul.f32 %v6225, %v592
        %v6317 = vmul.f32 %v6227, %v593
        %v6318 = vmul.f32 %v6229, %v594
        %v6319 = vmul.f32 %v6231, %v595
        %v6320 = vmul.f32 %v6233, %v596
        %v6321 = vmul.f32 %v6235, %v597
        %v6322 = vmul.f32 %v6237, %v598
        %v6323 = vmul.f32 %v6239, %v599
        %v6324 = vmul.f32 %v6241, %v600
        %v6325 = vmul.f32 %v6243, %v601
        %v6326 = vmul.f32 %v6245, %v602
        %v6327 = vmul.f32 %v6247, %v603
        %v6328 = vmul.f32 %v6249, %v604
        %v6329 = vmul.f32 %v6251, %v605
        %v6330 = vmul.f32 %v6253, %v606
        %v6331 = vmul.f32 %v6255, %v607
        %v6332 = vmul.f32 %v6257, %v608
        %v6333 = vmul.f32 %v6259, %v609
        %v6334 = vmul.f32 %v6261, %v610
        %v6335 = vmul.f32 %v6263, %v611
        %6336 = vst.msk [vmem:[#allocation2] sm:$0xff] %vm2116, %v5135
        %6337 = vst.msk [vmem:[#allocation2 + $0x8] sm:$0xff] %vm2116, %v5138
        %6338 = vst.msk [vmem:[#allocation2 + $0x10] sm:$0xff] %vm2116, %v5143
        %6339 = vst.msk [vmem:[#allocation2 + $0x18] sm:$0xff] %vm2116, %v5146
        %6340 = vst.msk [vmem:[#allocation2 + $0x20] sm:$0xff] %vm2116, %v5151
        %6341 = vst.msk [vmem:[#allocation2 + $0x28] sm:$0xff] %vm2116, %v5154
        %6342 = vst.msk [vmem:[#allocation2 + $0x30] sm:$0xff] %vm2116, %v5159
        %6343 = vst.msk [vmem:[#allocation2 + $0x38] sm:$0xff] %vm2116, %v5162
        %6344 = vst.msk [vmem:[#allocation2 + $0x40] sm:$0xff] %vm2116, %v5167
        %6345 = vst.msk [vmem:[#allocation2 + $0x48] sm:$0xff] %vm2116, %v5170
        %6346 = vst.msk [vmem:[#allocation2 + $0x50] sm:$0xff] %vm2116, %v5175
        %6347 = vst.msk [vmem:[#allocation2 + $0x58] sm:$0xff] %vm2116, %v5178
        %6348 = vst.msk [vmem:[#allocation2 + $0x60] sm:$0xff] %vm2116, %v5183
        %6349 = vst.msk [vmem:[#allocation2 + $0x68] sm:$0xff] %vm2116, %v5186
        %6350 = vst.msk [vmem:[#allocation2 + $0x70] sm:$0xff] %vm2116, %v5191
        %6351 = vst.msk [vmem:[#allocation2 + $0x78] sm:$0xff] %vm2116, %v5194
        %6352 = vst.msk [vmem:[#allocation2 + $0x80] sm:$0xff] %vm2116, %v5199
        %6353 = vst.msk [vmem:[#allocation2 + $0x88] sm:$0xff] %vm2116, %v5202
        %6354 = vst.msk [vmem:[#allocation2 + $0x90] sm:$0xff] %vm2116, %v5207
        %6355 = vst.msk [vmem:[#allocation2 + $0x98] sm:$0xff] %vm2116, %v5210
        %6356 = vst.msk [vmem:[#allocation2 + $0xa0] sm:$0xff] %vm2116, %v5215
        %6357 = vst.msk [vmem:[#allocation2 + $0xa8] sm:$0xff] %vm2116, %v5218
        %6358 = vst.msk [vmem:[#allocation2 + $0xb0] sm:$0xff] %vm2116, %v5223
        %6359 = vst.msk [vmem:[#allocation2 + $0xb8] sm:$0xff] %vm2116, %v5226
        %6360 = vst.msk [vmem:[#allocation2 + $0xc0] sm:$0xff] %vm2141, %v5135
        %6361 = vst.msk [vmem:[#allocation2 + $0xc8] sm:$0xff] %vm2141, %v5138
        %6362 = vst.msk [vmem:[#allocation2 + $0xd0] sm:$0xff] %vm2141, %v5143
        %6363 = vst.msk [vmem:[#allocation2 + $0xd8] sm:$0xff] %vm2141, %v5146
        %6364 = vst.msk [vmem:[#allocation2 + $0xe0] sm:$0xff] %vm2141, %v5151
        %6365 = vst.msk [vmem:[#allocation2 + $0xe8] sm:$0xff] %vm2141, %v5154
        %6366 = vst.msk [vmem:[#allocation2 + $0xf0] sm:$0xff] %vm2141, %v5159
        %6367 = vst.msk [vmem:[#allocation2 + $0xf8] sm:$0xff] %vm2141, %v5162
        %6368 = vst.msk [vmem:[#allocation2 + $0x100] sm:$0xff] %vm2141, %v5167
        %6369 = vst.msk [vmem:[#allocation2 + $0x108] sm:$0xff] %vm2141, %v5170
        %6370 = vst.msk [vmem:[#allocation2 + $0x110] sm:$0xff] %vm2141, %v5175
        %6371 = vst.msk [vmem:[#allocation2 + $0x118] sm:$0xff] %vm2141, %v5178
        %6372 = vst.msk [vmem:[#allocation2 + $0x120] sm:$0xff] %vm2141, %v5183
        %6373 = vst.msk [vmem:[#allocation2 + $0x128] sm:$0xff] %vm2141, %v5186
        %6374 = vst.msk [vmem:[#allocation2 + $0x130] sm:$0xff] %vm2141, %v5191
        %6375 = vst.msk [vmem:[#allocation2 + $0x138] sm:$0xff] %vm2141, %v5194
        %6376 = vst.msk [vmem:[#allocation2 + $0x140] sm:$0xff] %vm2141, %v5199
        %6377 = vst.msk [vmem:[#allocation2 + $0x148] sm:$0xff] %vm2141, %v5202
        %6378 = vst.msk [vmem:[#allocation2 + $0x150] sm:$0xff] %vm2141, %v5207
        %6379 = vst.msk [vmem:[#allocation2 + $0x158] sm:$0xff] %vm2141, %v5210
        %6380 = vst.msk [vmem:[#allocation2 + $0x160] sm:$0xff] %vm2141, %v5215
        %6381 = vst.msk [vmem:[#allocation2 + $0x168] sm:$0xff] %vm2141, %v5218
        %6382 = vst.msk [vmem:[#allocation2 + $0x170] sm:$0xff] %vm2141, %v5223
        %6383 = vst.msk [vmem:[#allocation2 + $0x178] sm:$0xff] %vm2141, %v5226
        %v6384 = vld [vmem:[#allocation2] sm:$0xff]
        %v6385 = vld [vmem:[#allocation2 + $0x8] sm:$0xff]
        %v6386 = vld [vmem:[#allocation2 + $0x10] sm:$0xff]
        %v6387 = vld [vmem:[#allocation2 + $0x18] sm:$0xff]
        %v6388 = vld [vmem:[#allocation2 + $0x20] sm:$0xff]
        %v6389 = vld [vmem:[#allocation2 + $0x28] sm:$0xff]
        %v6390 = vld [vmem:[#allocation2 + $0x30] sm:$0xff]
        %v6391 = vld [vmem:[#allocation2 + $0x38] sm:$0xff]
        %v6392 = vld [vmem:[#allocation2 + $0x40] sm:$0xff]
        %v6393 = vld [vmem:[#allocation2 + $0x48] sm:$0xff]
        %v6394 = vld [vmem:[#allocation2 + $0x50] sm:$0xff]
        %v6395 = vld [vmem:[#allocation2 + $0x58] sm:$0xff]
        %v6396 = vld [vmem:[#allocation2 + $0x60] sm:$0xff]
        %v6397 = vld [vmem:[#allocation2 + $0x68] sm:$0xff]
        %v6398 = vld [vmem:[#allocation2 + $0x70] sm:$0xff]
        %v6399 = vld [vmem:[#allocation2 + $0x78] sm:$0xff]
        %v6400 = vld [vmem:[#allocation2 + $0x80] sm:$0xff]
        %v6401 = vld [vmem:[#allocation2 + $0x88] sm:$0xff]
        %v6402 = vld [vmem:[#allocation2 + $0x90] sm:$0xff]
        %v6403 = vld [vmem:[#allocation2 + $0x98] sm:$0xff]
        %v6404 = vld [vmem:[#allocation2 + $0xa0] sm:$0xff]
        %v6405 = vld [vmem:[#allocation2 + $0xa8] sm:$0xff]
        %v6406 = vld [vmem:[#allocation2 + $0xb0] sm:$0xff]
        %v6407 = vld [vmem:[#allocation2 + $0xb8] sm:$0xff]
        %v6408 = vld [vmem:[#allocation2 + $0xc0] sm:$0xff]
        %v6409 = vld [vmem:[#allocation2 + $0xc8] sm:$0xff]
        %v6410 = vld [vmem:[#allocation2 + $0xd0] sm:$0xff]
        %v6411 = vld [vmem:[#allocation2 + $0xd8] sm:$0xff]
        %v6412 = vld [vmem:[#allocation2 + $0xe0] sm:$0xff]
        %v6413 = vld [vmem:[#allocation2 + $0xe8] sm:$0xff]
        %v6414 = vld [vmem:[#allocation2 + $0xf0] sm:$0xff]
        %v6415 = vld [vmem:[#allocation2 + $0xf8] sm:$0xff]
        %v6416 = vld [vmem:[#allocation2 + $0x100] sm:$0xff]
        %v6417 = vld [vmem:[#allocation2 + $0x108] sm:$0xff]
        %v6418 = vld [vmem:[#allocation2 + $0x110] sm:$0xff]
        %v6419 = vld [vmem:[#allocation2 + $0x118] sm:$0xff]
        %v6420 = vld [vmem:[#allocation2 + $0x120] sm:$0xff]
        %v6421 = vld [vmem:[#allocation2 + $0x128] sm:$0xff]
        %v6422 = vld [vmem:[#allocation2 + $0x130] sm:$0xff]
        %v6423 = vld [vmem:[#allocation2 + $0x138] sm:$0xff]
        %v6424 = vld [vmem:[#allocation2 + $0x140] sm:$0xff]
        %v6425 = vld [vmem:[#allocation2 + $0x148] sm:$0xff]
        %v6426 = vld [vmem:[#allocation2 + $0x150] sm:$0xff]
        %v6427 = vld [vmem:[#allocation2 + $0x158] sm:$0xff]
        %v6428 = vld [vmem:[#allocation2 + $0x160] sm:$0xff]
        %v6429 = vld [vmem:[#allocation2 + $0x168] sm:$0xff]
        %v6430 = vld [vmem:[#allocation2 + $0x170] sm:$0xff]
        %v6431 = vld [vmem:[#allocation2 + $0x178] sm:$0xff]
        %6432 = vmatprep.subr.mxu0 0.0
        %6433 = vmatpush1.msra.mxu0 %v6384
        %6434 = vmatprep.subr.mxu0 0.0
        %6435 = vmatpush1.msra.mxu0 %v6385
        %6436 = vmatprep.subr.mxu0 0.0
        %6437 = vmatpush1.msra.mxu0 %v6386
        %6438 = vmatprep.subr.mxu0 0.0
        %6439 = vmatpush1.msra.mxu0 %v6387
        %6440 = vmatprep.subr.mxu0 0.0
        %6441 = vmatpush1.msra.mxu0 %v6388
        %6442 = vmatprep.subr.mxu0 0.0
        %6443 = vmatpush1.msra.mxu0 %v6389
        %6444 = vmatprep.subr.mxu0 0.0
        %6445 = vmatpush1.msra.mxu0 %v6390
        %6446 = vmatprep.subr.mxu0 0.0
        %6447 = vmatpush1.msra.mxu0 %v6391
        %6448 = vmatprep.subr.mxu0 0.0
        %6449 = vmatpush1.msra.mxu0 %v6392
        %6450 = vmatprep.subr.mxu0 0.0
        %6451 = vmatpush1.msra.mxu0 %v6393
        %6452 = vmatprep.subr.mxu0 0.0
        %6453 = vmatpush1.msra.mxu0 %v6394
        %6454 = vmatprep.subr.mxu0 0.0
        %6455 = vmatpush1.msra.mxu0 %v6395
        %6456 = vmatprep.subr.mxu0 0.0
        %6457 = vmatpush1.msra.mxu0 %v6396
        %6458 = vmatprep.subr.mxu0 0.0
        %6459 = vmatpush1.msra.mxu0 %v6397
        %6460 = vmatprep.subr.mxu0 0.0
        %6461 = vmatpush1.msra.mxu0 %v6398
        %6462 = vmatprep.subr.mxu0 0.0
        %6463 = vmatpush1.msra.mxu0 %v6399
        %6464 = vmatprep.subr.mxu0 0.0
        %6465 = vmatpush1.msra.mxu0 %v6400
        %6466 = vmatprep.subr.mxu0 0.0
        %6467 = vmatpush1.msra.mxu0 %v6401
        %6468 = vmatprep.subr.mxu0 0.0
        %6469 = vmatpush1.msra.mxu0 %v6402
        %6470 = vmatprep.subr.mxu0 0.0
        %6471 = vmatpush1.msra.mxu0 %v6403
        %6472 = vmatprep.subr.mxu0 0.0
        %6473 = vmatpush1.msra.mxu0 %v6404
        %6474 = vmatprep.subr.mxu0 0.0
        %6475 = vmatpush1.msra.mxu0 %v6405
        %6476 = vmatprep.subr.mxu0 0.0
        %6477 = vmatpush1.msra.mxu0 %v6406
        %6478 = vmatprep.subr.mxu0 0.0
        %6479 = vmatpush1.msra.mxu0 %v6407
        %6480 = vmatprep.subr.mxu0 0.0
        %6481 = vmatpush1.msra.mxu0 %v6408
        %6482 = vmatprep.subr.mxu0 0.0
        %6483 = vmatpush1.msra.mxu0 %v6409
        %6484 = vmatprep.subr.mxu0 0.0
        %6485 = vmatpush1.msra.mxu0 %v6410
        %6486 = vmatprep.subr.mxu0 0.0
        %6487 = vmatpush1.msra.mxu0 %v6411
        %6488 = vmatprep.subr.mxu0 0.0
        %6489 = vmatpush1.msra.mxu0 %v6412
        %6490 = vmatprep.subr.mxu0 0.0
        %6491 = vmatpush1.msra.mxu0 %v6413
        %6492 = vmatprep.subr.mxu0 0.0
        %6493 = vmatpush1.msra.mxu0 %v6414
        %6494 = vmatprep.subr.mxu0 0.0
        %6495 = vmatpush1.msra.mxu0 %v6415
        %6496 = vmatprep.mubr.f32.mxu0 %v6265
        %6497 = vmatmul.mubr.f32.gmra.mrb[0].mxu0 %v6264
        %v6498 = vpop.f32.mrb[0].mxu0
        %v6499 = vadd.f32 0.0, %v6498
        %v6500 = vpop.f32.mrb[0].mxu0
        %6501 = vmatprep.mubr.f32.mxu0 %v6268
        %6502 = vmatmul.mubr.f32.gmra.mrb[0].mxu0 %v6267
        %v6503 = vpop.f32.mrb[0].mxu0
        %v6504 = vadd.f32 0.0, %v6503
        %v6505 = vpop.f32.mrb[0].mxu0
        %6506 = vmatprep.mubr.f32.mxu0 %v6271
        %6507 = vmatmul.mubr.f32.gmra.mrb[0].mxu0 %v6270
        %v6508 = vpop.f32.mrb[0].mxu0
        %v6509 = vadd.f32 0.0, %v6508
        %v6510 = vpop.f32.mrb[0].mxu0
        %6511 = vmatprep.mubr.f32.mxu0 %v6274
        %6512 = vmatmul.mubr.f32.gmra.mrb[0].mxu0 %v6273
        %v6513 = vpop.f32.mrb[0].mxu0
        %v6514 = vadd.f32 0.0, %v6513
        %v6515 = vpop.f32.mrb[0].mxu0
        %6516 = vmatprep.mubr.f32.mxu0 %v6277
        %6517 = vmatmul.mubr.f32.gmra.mrb[0].mxu0 %v6276
        %v6518 = vpop.f32.mrb[0].mxu0
        %v6519 = vadd.f32 0.0, %v6518
        %v6520 = vpop.f32.mrb[0].mxu0
        %6521 = vmatprep.mubr.f32.mxu0 %v6280
        %6522 = vmatmul.mubr.f32.gmra.mrb[0].mxu0 %v6279
        %v6523 = vpop.f32.mrb[0].mxu0
        %v6524 = vadd.f32 0.0, %v6523
        %v6525 = vpop.f32.mrb[0].mxu0
        %6526 = vmatprep.mubr.f32.mxu0 %v6283
        %6527 = vmatmul.mubr.f32.gmra.mrb[0].mxu0 %v6282
        %v6528 = vpop.f32.mrb[0].mxu0
        %v6529 = vadd.f32 0.0, %v6528
        %v6530 = vpop.f32.mrb[0].mxu0
        %6531 = vmatprep.mubr.f32.mxu0 %v6286
        %6532 = vmatmul.mubr.f32.gmra.mrb[0].mxu0 %v6285
        %v6533 = vpop.f32.mrb[0].mxu0
        %v6534 = vadd.f32 0.0, %v6533
        %v6535 = vpop.f32.mrb[0].mxu0
        %6536 = vmatprep.mubr.f32.mxu0 %v6289
        %6537 = vmatmul.mubr.f32.gmra.mrb[0].mxu0 %v6288
        %v6538 = vpop.f32.mrb[0].mxu0
        %v6539 = vadd.f32 0.0, %v6538
        %v6540 = vpop.f32.mrb[0].mxu0
        %6541 = vmatprep.mubr.f32.mxu0 %v6292
        %6542 = vmatmul.mubr.f32.gmra.mrb[0].mxu0 %v6291
        %v6543 = vpop.f32.mrb[0].mxu0
        %v6544 = vadd.f32 0.0, %v6543
        %v6545 = vpop.f32.mrb[0].mxu0
        %6546 = vmatprep.mubr.f32.mxu0 %v6295
        %6547 = vmatmul.mubr.f32.gmra.mrb[0].mxu0 %v6294
        %v6548 = vpop.f32.mrb[0].mxu0
        %v6549 = vadd.f32 0.0, %v6548
        %v6550 = vpop.f32.mrb[0].mxu0
        %6551 = vmatprep.mubr.f32.mxu0 %v6298
        %6552 = vmatmul.mubr.f32.gmra.mrb[0].mxu0 %v6297
        %v6553 = vpop.f32.mrb[0].mxu0
        %v6554 = vadd.f32 0.0, %v6553
        %v6555 = vpop.f32.mrb[0].mxu0
        %6556 = vmatprep.mubr.f32.mxu0 %v6301
        %6557 = vmatmul.mubr.f32.gmra.mrb[0].mxu0 %v6300
        %v6558 = vpop.f32.mrb[0].mxu0
        %v6559 = vadd.f32 0.0, %v6558
        %v6560 = vpop.f32.mrb[0].mxu0
        %6561 = vmatprep.mubr.f32.mxu0 %v6304
        %6562 = vmatmul.mubr.f32.gmra.mrb[0].mxu0 %v6303
        %v6563 = vpop.f32.mrb[0].mxu0
        %v6564 = vadd.f32 0.0, %v6563
        %v6565 = vpop.f32.mrb[0].mxu0
        %6566 = vmatprep.mubr.f32.mxu0 %v6307
        %6567 = vmatmul.mubr.f32.gmra.mrb[0].mxu0 %v6306
        %v6568 = vpop.f32.mrb[0].mxu0
        %v6569 = vadd.f32 0.0, %v6568
        %v6570 = vpop.f32.mrb[0].mxu0
        %6571 = vmatprep.mubr.f32.mxu0 %v6310
        %6572 = vmatmul.mubr.f32.gmra.mrb[0].mxu0 %v6309
        %v6573 = vpop.f32.mrb[0].mxu0
        %v6574 = vadd.f32 0.0, %v6573
        %v6575 = vpop.f32.mrb[0].mxu0
        %6576 = vmatprep.mubr.f32.mxu0 %v6313
        %6577 = vmatmul.mubr.f32.gmra.mrb[0].mxu0 %v6312
        %v6578 = vpop.f32.mrb[0].mxu0
        %v6579 = vadd.f32 0.0, %v6578
        %v6580 = vpop.f32.mrb[0].mxu0
        %6581 = vmatprep.mubr.f32.mxu0 %v6316
        %6582 = vmatmul.mubr.f32.gmra.mrb[0].mxu0 %v6315
        %v6583 = vpop.f32.mrb[0].mxu0
        %v6584 = vadd.f32 0.0, %v6583
        %v6585 = vpop.f32.mrb[0].mxu0
        %6586 = vmatprep.mubr.f32.mxu0 %v6319
        %6587 = vmatmul.mubr.f32.gmra.mrb[0].mxu0 %v6318
        %v6588 = vpop.f32.mrb[0].mxu0
        %v6589 = vadd.f32 0.0, %v6588
        %v6590 = vpop.f32.mrb[0].mxu0
        %6591 = vmatprep.mubr.f32.mxu0 %v6322
        %6592 = vmatmul.mubr.f32.gmra.mrb[0].mxu0 %v6321
        %v6593 = vpop.f32.mrb[0].mxu0
        %v6594 = vadd.f32 0.0, %v6593
        %v6595 = vpop.f32.mrb[0].mxu0
        %6596 = vmatprep.mubr.f32.mxu0 %v6325
        %6597 = vmatmul.mubr.f32.gmra.mrb[0].mxu0 %v6324
        %v6598 = vpop.f32.mrb[0].mxu0
        %v6599 = vadd.f32 0.0, %v6598
        %v6600 = vpop.f32.mrb[0].mxu0
        %6601 = vmatprep.mubr.f32.mxu0 %v6328
        %6602 = vmatmul.mubr.f32.gmra.mrb[0].mxu0 %v6327
        %v6603 = vpop.f32.mrb[0].mxu0
        %v6604 = vadd.f32 0.0, %v6603
        %v6605 = vpop.f32.mrb[0].mxu0
        %6606 = vmatprep.mubr.f32.mxu0 %v6331
        %6607 = vmatmul.mubr.f32.gmra.mrb[0].mxu0 %v6330
        %v6608 = vpop.f32.mrb[0].mxu0
        %v6609 = vadd.f32 0.0, %v6608
        %v6610 = vpop.f32.mrb[0].mxu0
        %6611 = vmatprep.mubr.f32.mxu0 %v6334
        %6612 = vmatmul.mubr.f32.gmra.mrb[0].mxu0 %v6333
        %v6613 = vpop.f32.mrb[0].mxu0
        %v6614 = vadd.f32 0.0, %v6613
        %v6615 = vpop.f32.mrb[0].mxu0
        %6616 = vdwg.mxu0
        %6617 = vmatprep.subr.mxu0 0.0
        %6618 = vmatpush1.msra.mxu0 %v6416
        %6619 = vmatprep.subr.mxu0 0.0
        %6620 = vmatpush1.msra.mxu0 %v6417
        %6621 = vmatprep.subr.mxu0 0.0
        %6622 = vmatpush1.msra.mxu0 %v6418
        %6623 = vmatprep.subr.mxu0 0.0
        %6624 = vmatpush1.msra.mxu0 %v6419
        %6625 = vmatprep.subr.mxu0 0.0
        %6626 = vmatpush1.msra.mxu0 %v6420
        %6627 = vmatprep.subr.mxu0 0.0
        %6628 = vmatpush1.msra.mxu0 %v6421
        %6629 = vmatprep.subr.mxu0 0.0
        %6630 = vmatpush1.msra.mxu0 %v6422
        %6631 = vmatprep.subr.mxu0 0.0
        %6632 = vmatpush1.msra.mxu0 %v6423
        %6633 = vmatprep.subr.mxu0 0.0
        %6634 = vmatpush1.msra.mxu0 %v6424
        %6635 = vmatprep.subr.mxu0 0.0
        %6636 = vmatpush1.msra.mxu0 %v6425
        %6637 = vmatprep.subr.mxu0 0.0
        %6638 = vmatpush1.msra.mxu0 %v6426
        %6639 = vmatprep.subr.mxu0 0.0
        %6640 = vmatpush1.msra.mxu0 %v6427
        %6641 = vmatprep.subr.mxu0 0.0
        %6642 = vmatpush1.msra.mxu0 %v6428
        %6643 = vmatprep.subr.mxu0 0.0
        %6644 = vmatpush1.msra.mxu0 %v6429
        %6645 = vmatprep.subr.mxu0 0.0
        %6646 = vmatpush1.msra.mxu0 %v6430
        %6647 = vmatprep.subr.mxu0 0.0
        %6648 = vmatpush1.msra.mxu0 %v6431
        %6649 = vmatprep.subr.mxu0 0.0
        %6650 = vmatpush1.msra.mxu0 0.0
        %6651 = vmatprep.subr.mxu0 0.0
        %6652 = vmatpush1.msra.mxu0 0.0
        %6653 = vmatprep.subr.mxu0 0.0
        %6654 = vmatpush1.msra.mxu0 0.0
        %6655 = vmatprep.subr.mxu0 0.0
        %6656 = vmatpush1.msra.mxu0 0.0
        %6657 = vmatprep.subr.mxu0 0.0
        %6658 = vmatpush1.msra.mxu0 0.0
        %6659 = vmatprep.subr.mxu0 0.0
        %6660 = vmatpush1.msra.mxu0 0.0
        %6661 = vmatprep.subr.mxu0 0.0
        %6662 = vmatpush1.msra.mxu0 0.0
        %6663 = vmatprep.subr.mxu0 0.0
        %6664 = vmatpush1.msra.mxu0 0.0
        %6665 = vmatprep.subr.mxu0 0.0
        %6666 = vmatpush1.msra.mxu0 0.0
        %6667 = vmatprep.subr.mxu0 0.0
        %6668 = vmatpush1.msra.mxu0 0.0
        %6669 = vmatprep.subr.mxu0 0.0
        %6670 = vmatpush1.msra.mxu0 0.0
        %6671 = vmatprep.subr.mxu0 0.0
        %6672 = vmatpush1.msra.mxu0 0.0
        %6673 = vmatprep.subr.mxu0 0.0
        %6674 = vmatpush1.msra.mxu0 0.0
        %6675 = vmatprep.subr.mxu0 0.0
        %6676 = vmatpush1.msra.mxu0 0.0
        %6677 = vmatprep.subr.mxu0 0.0
        %6678 = vmatpush1.msra.mxu0 0.0
        %6679 = vmatprep.subr.mxu0 0.0
        %6680 = vmatpush1.msra.mxu0 0.0
        %6681 = vmatprep.mubr.f32.mxu0 0.0
        %6682 = vmatmul.mubr.f32.gmra.mrb[0].mxu0 %v6266
        %v6683 = vpop.f32.mrb[0].mxu0
        %v6684 = vadd.f32 %v6499, %v6683
        %v6685 = vpop.f32.mrb[0].mxu0
        %6686 = vmatprep.mubr.f32.mxu0 0.0
        %6687 = vmatmul.mubr.f32.gmra.mrb[0].mxu0 %v6269
        %v6688 = vpop.f32.mrb[0].mxu0
        %v6689 = vadd.f32 %v6504, %v6688
        %v6690 = vpop.f32.mrb[0].mxu0
        %6691 = vmatprep.mubr.f32.mxu0 0.0
        %6692 = vmatmul.mubr.f32.gmra.mrb[0].mxu0 %v6272
        %v6693 = vpop.f32.mrb[0].mxu0
        %v6694 = vadd.f32 %v6509, %v6693
        %v6695 = vpop.f32.mrb[0].mxu0
        %6696 = vmatprep.mubr.f32.mxu0 0.0
        %6697 = vmatmul.mubr.f32.gmra.mrb[0].mxu0 %v6275
        %v6698 = vpop.f32.mrb[0].mxu0
        %v6699 = vadd.f32 %v6514, %v6698
        %v6700 = vpop.f32.mrb[0].mxu0
        %6701 = vmatprep.mubr.f32.mxu0 0.0
        %6702 = vmatmul.mubr.f32.gmra.mrb[0].mxu0 %v6278
        %v6703 = vpop.f32.mrb[0].mxu0
        %v6704 = vadd.f32 %v6519, %v6703
        %v6705 = vpop.f32.mrb[0].mxu0
        %6706 = vmatprep.mubr.f32.mxu0 0.0
        %6707 = vmatmul.mubr.f32.gmra.mrb[0].mxu0 %v6281
        %v6708 = vpop.f32.mrb[0].mxu0
        %v6709 = vadd.f32 %v6524, %v6708
        %v6710 = vpop.f32.mrb[0].mxu0
        %6711 = vmatprep.mubr.f32.mxu0 0.0
        %6712 = vmatmul.mubr.f32.gmra.mrb[0].mxu0 %v6284
        %v6713 = vpop.f32.mrb[0].mxu0
        %v6714 = vadd.f32 %v6529, %v6713
        %v6715 = vpop.f32.mrb[0].mxu0
        %6716 = vmatprep.mubr.f32.mxu0 0.0
        %6717 = vmatmul.mubr.f32.gmra.mrb[0].mxu0 %v6287
        %v6718 = vpop.f32.mrb[0].mxu0
        %v6719 = vadd.f32 %v6534, %v6718
        %v6720 = vpop.f32.mrb[0].mxu0
        %6721 = vmatprep.mubr.f32.mxu0 0.0
        %6722 = vmatmul.mubr.f32.gmra.mrb[0].mxu0 %v6290
        %v6723 = vpop.f32.mrb[0].mxu0
        %v6724 = vadd.f32 %v6539, %v6723
        %v6725 = vpop.f32.mrb[0].mxu0
        %6726 = vmatprep.mubr.f32.mxu0 0.0
        %6727 = vmatmul.mubr.f32.gmra.mrb[0].mxu0 %v6293
        %v6728 = vpop.f32.mrb[0].mxu0
        %v6729 = vadd.f32 %v6544, %v6728
        %v6730 = vpop.f32.mrb[0].mxu0
        %6731 = vmatprep.mubr.f32.mxu0 0.0
        %6732 = vmatmul.mubr.f32.gmra.mrb[0].mxu0 %v6296
        %v6733 = vpop.f32.mrb[0].mxu0
        %v6734 = vadd.f32 %v6549, %v6733
        %v6735 = vpop.f32.mrb[0].mxu0
        %6736 = vmatprep.mubr.f32.mxu0 0.0
        %6737 = vmatmul.mubr.f32.gmra.mrb[0].mxu0 %v6299
        %v6738 = vpop.f32.mrb[0].mxu0
        %v6739 = vadd.f32 %v6554, %v6738
        %v6740 = vpop.f32.mrb[0].mxu0
        %6741 = vmatprep.mubr.f32.mxu0 0.0
        %6742 = vmatmul.mubr.f32.gmra.mrb[0].mxu0 %v6302
        %v6743 = vpop.f32.mrb[0].mxu0
        %v6744 = vadd.f32 %v6559, %v6743
        %v6745 = vpop.f32.mrb[0].mxu0
        %6746 = vmatprep.mubr.f32.mxu0 0.0
        %6747 = vmatmul.mubr.f32.gmra.mrb[0].mxu0 %v6305
        %v6748 = vpop.f32.mrb[0].mxu0
        %v6749 = vadd.f32 %v6564, %v6748
        %v6750 = vpop.f32.mrb[0].mxu0
        %6751 = vmatprep.mubr.f32.mxu0 0.0
        %6752 = vmatmul.mubr.f32.gmra.mrb[0].mxu0 %v6308
        %v6753 = vpop.f32.mrb[0].mxu0
        %v6754 = vadd.f32 %v6569, %v6753
        %v6755 = vpop.f32.mrb[0].mxu0
        %6756 = vmatprep.mubr.f32.mxu0 0.0
        %6757 = vmatmul.mubr.f32.gmra.mrb[0].mxu0 %v6311
        %v6758 = vpop.f32.mrb[0].mxu0
        %v6759 = vadd.f32 %v6574, %v6758
        %v6760 = vpop.f32.mrb[0].mxu0
        %6761 = vmatprep.mubr.f32.mxu0 0.0
        %6762 = vmatmul.mubr.f32.gmra.mrb[0].mxu0 %v6314
        %v6763 = vpop.f32.mrb[0].mxu0
        %v6764 = vadd.f32 %v6579, %v6763
        %v6765 = vpop.f32.mrb[0].mxu0
        %6766 = vmatprep.mubr.f32.mxu0 0.0
        %6767 = vmatmul.mubr.f32.gmra.mrb[0].mxu0 %v6317
        %v6768 = vpop.f32.mrb[0].mxu0
        %v6769 = vadd.f32 %v6584, %v6768
        %v6770 = vpop.f32.mrb[0].mxu0
        %6771 = vmatprep.mubr.f32.mxu0 0.0
        %6772 = vmatmul.mubr.f32.gmra.mrb[0].mxu0 %v6320
        %v6773 = vpop.f32.mrb[0].mxu0
        %v6774 = vadd.f32 %v6589, %v6773
        %v6775 = vpop.f32.mrb[0].mxu0
        %6776 = vmatprep.mubr.f32.mxu0 0.0
        %6777 = vmatmul.mubr.f32.gmra.mrb[0].mxu0 %v6323
        %v6778 = vpop.f32.mrb[0].mxu0
        %v6779 = vadd.f32 %v6594, %v6778
        %v6780 = vpop.f32.mrb[0].mxu0
        %6781 = vmatprep.mubr.f32.mxu0 0.0
        %6782 = vmatmul.mubr.f32.gmra.mrb[0].mxu0 %v6326
        %v6783 = vpop.f32.mrb[0].mxu0
        %v6784 = vadd.f32 %v6599, %v6783
        %v6785 = vpop.f32.mrb[0].mxu0
        %6786 = vmatprep.mubr.f32.mxu0 0.0
        %6787 = vmatmul.mubr.f32.gmra.mrb[0].mxu0 %v6329
        %v6788 = vpop.f32.mrb[0].mxu0
        %v6789 = vadd.f32 %v6604, %v6788
        %v6790 = vpop.f32.mrb[0].mxu0
        %6791 = vmatprep.mubr.f32.mxu0 0.0
        %6792 = vmatmul.mubr.f32.gmra.mrb[0].mxu0 %v6332
        %v6793 = vpop.f32.mrb[0].mxu0
        %v6794 = vadd.f32 %v6609, %v6793
        %v6795 = vpop.f32.mrb[0].mxu0
        %6796 = vmatprep.mubr.f32.mxu0 0.0
        %6797 = vmatmul.mubr.f32.gmra.mrb[0].mxu0 %v6335
        %v6798 = vpop.f32.mrb[0].mxu0
        %v6799 = vadd.f32 %v6614, %v6798
        %v6800 = vpop.f32.mrb[0].mxu0
        %6801 = vdwg.mxu0
        %v6802 = vrcp.pop %v6684
        %v6803 = vrcp.pop %v6689
        %v6804 = vrcp.pop %v6694
        %v6805 = vrcp.pop %v6699
        %v6806 = vrcp.pop %v6704
        %v6807 = vrcp.pop %v6709
        %v6808 = vrcp.pop %v6714
        %v6809 = vrcp.pop %v6719
        %v6810 = vrcp.pop %v6724
        %v6811 = vrcp.pop %v6729
        %v6812 = vrcp.pop %v6734
        %v6813 = vrcp.pop %v6739
        %v6814 = vrcp.pop %v6744
        %v6815 = vrcp.pop %v6749
        %v6816 = vrcp.pop %v6754
        %v6817 = vrcp.pop %v6759
        %v6818 = vrcp.pop %v6764
        %v6819 = vrcp.pop %v6769
        %v6820 = vrcp.pop %v6774
        %v6821 = vrcp.pop %v6779
        %v6822 = vrcp.pop %v6784
        %v6823 = vrcp.pop %v6789
        %v6824 = vrcp.pop %v6794
        %v6825 = vrcp.pop %v6799
        %6827 = vset.pattern.permute.xlu0 32
        %6828 = vperm.xlu0 %6827, %v6802
        %v6829 = vpop.permute.xlu0 %6828
        %6832 = vset.pattern.permute.xlu0 32
        %6833 = vperm.xlu0 %6832, %v6803
        %v6834 = vpop.permute.xlu0 %6833
        %6837 = vset.pattern.permute.xlu0 32
        %6838 = vperm.xlu0 %6837, %v6804
        %v6839 = vpop.permute.xlu0 %6838
        %6842 = vset.pattern.permute.xlu0 32
        %6843 = vperm.xlu0 %6842, %v6805
        %v6844 = vpop.permute.xlu0 %6843
        %6847 = vset.pattern.permute.xlu0 32
        %6848 = vperm.xlu0 %6847, %v6806
        %v6849 = vpop.permute.xlu0 %6848
        %6852 = vset.pattern.permute.xlu0 32
        %6853 = vperm.xlu0 %6852, %v6807
        %v6854 = vpop.permute.xlu0 %6853
        %6857 = vset.pattern.permute.xlu0 32
        %6858 = vperm.xlu0 %6857, %v6808
        %v6859 = vpop.permute.xlu0 %6858
        %6862 = vset.pattern.permute.xlu0 32
        %6863 = vperm.xlu0 %6862, %v6809
        %v6864 = vpop.permute.xlu0 %6863
        %6867 = vset.pattern.permute.xlu0 32
        %6868 = vperm.xlu0 %6867, %v6810
        %v6869 = vpop.permute.xlu0 %6868
        %6872 = vset.pattern.permute.xlu0 32
        %6873 = vperm.xlu0 %6872, %v6811
        %v6874 = vpop.permute.xlu0 %6873
        %6877 = vset.pattern.permute.xlu0 32
        %6878 = vperm.xlu0 %6877, %v6812
        %v6879 = vpop.permute.xlu0 %6878
        %6882 = vset.pattern.permute.xlu0 32
        %6883 = vperm.xlu0 %6882, %v6813
        %v6884 = vpop.permute.xlu0 %6883
        %6887 = vset.pattern.permute.xlu0 32
        %6888 = vperm.xlu0 %6887, %v6814
        %v6889 = vpop.permute.xlu0 %6888
        %6892 = vset.pattern.permute.xlu0 32
        %6893 = vperm.xlu0 %6892, %v6815
        %v6894 = vpop.permute.xlu0 %6893
        %6897 = vset.pattern.permute.xlu0 32
        %6898 = vperm.xlu0 %6897, %v6816
        %v6899 = vpop.permute.xlu0 %6898
        %6902 = vset.pattern.permute.xlu0 32
        %6903 = vperm.xlu0 %6902, %v6817
        %v6904 = vpop.permute.xlu0 %6903
        %6907 = vset.pattern.permute.xlu0 32
        %6908 = vperm.xlu0 %6907, %v6818
        %v6909 = vpop.permute.xlu0 %6908
        %6912 = vset.pattern.permute.xlu0 32
        %6913 = vperm.xlu0 %6912, %v6819
        %v6914 = vpop.permute.xlu0 %6913
        %6917 = vset.pattern.permute.xlu0 32
        %6918 = vperm.xlu0 %6917, %v6820
        %v6919 = vpop.permute.xlu0 %6918
        %6922 = vset.pattern.permute.xlu0 32
        %6923 = vperm.xlu0 %6922, %v6821
        %v6924 = vpop.permute.xlu0 %6923
        %6927 = vset.pattern.permute.xlu0 32
        %6928 = vperm.xlu0 %6927, %v6822
        %v6929 = vpop.permute.xlu0 %6928
        %6932 = vset.pattern.permute.xlu0 32
        %6933 = vperm.xlu0 %6932, %v6823
        %v6934 = vpop.permute.xlu0 %6933
        %6937 = vset.pattern.permute.xlu0 32
        %6938 = vperm.xlu0 %6937, %v6824
        %v6939 = vpop.permute.xlu0 %6938
        %6942 = vset.pattern.permute.xlu0 32
        %6943 = vperm.xlu0 %6942, %v6825
        %v6944 = vpop.permute.xlu0 %6943
        %6946 = vset.pattern.permute.xlu0 33
        %6947 = vperm.xlu0 %6946, %v6802
        %v6948 = vpop.permute.xlu0 %6947
        %6950 = vset.pattern.permute.xlu0 33
        %6951 = vperm.xlu0 %6950, %v6803
        %v6952 = vpop.permute.xlu0 %6951
        %6954 = vset.pattern.permute.xlu0 33
        %6955 = vperm.xlu0 %6954, %v6804
        %v6956 = vpop.permute.xlu0 %6955
        %6958 = vset.pattern.permute.xlu0 33
        %6959 = vperm.xlu0 %6958, %v6805
        %v6960 = vpop.permute.xlu0 %6959
        %6962 = vset.pattern.permute.xlu0 33
        %6963 = vperm.xlu0 %6962, %v6806
        %v6964 = vpop.permute.xlu0 %6963
        %6966 = vset.pattern.permute.xlu0 33
        %6967 = vperm.xlu0 %6966, %v6807
        %v6968 = vpop.permute.xlu0 %6967
        %6970 = vset.pattern.permute.xlu0 33
        %6971 = vperm.xlu0 %6970, %v6808
        %v6972 = vpop.permute.xlu0 %6971
        %6974 = vset.pattern.permute.xlu0 33
        %6975 = vperm.xlu0 %6974, %v6809
        %v6976 = vpop.permute.xlu0 %6975
        %6978 = vset.pattern.permute.xlu0 33
        %6979 = vperm.xlu0 %6978, %v6810
        %v6980 = vpop.permute.xlu0 %6979
        %6982 = vset.pattern.permute.xlu0 33
        %6983 = vperm.xlu0 %6982, %v6811
        %v6984 = vpop.permute.xlu0 %6983
        %6986 = vset.pattern.permute.xlu0 33
        %6987 = vperm.xlu0 %6986, %v6812
        %v6988 = vpop.permute.xlu0 %6987
        %6990 = vset.pattern.permute.xlu0 33
        %6991 = vperm.xlu0 %6990, %v6813
        %v6992 = vpop.permute.xlu0 %6991
        %6994 = vset.pattern.permute.xlu0 33
        %6995 = vperm.xlu0 %6994, %v6814
        %v6996 = vpop.permute.xlu0 %6995
        %6998 = vset.pattern.permute.xlu0 33
        %6999 = vperm.xlu0 %6998, %v6815
        %v7000 = vpop.permute.xlu0 %6999
        %7002 = vset.pattern.permute.xlu0 33
        %7003 = vperm.xlu0 %7002, %v6816
        %v7004 = vpop.permute.xlu0 %7003
        %7006 = vset.pattern.permute.xlu0 33
        %7007 = vperm.xlu0 %7006, %v6817
        %v7008 = vpop.permute.xlu0 %7007
        %7010 = vset.pattern.permute.xlu0 33
        %7011 = vperm.xlu0 %7010, %v6818
        %v7012 = vpop.permute.xlu0 %7011
        %7014 = vset.pattern.permute.xlu0 33
        %7015 = vperm.xlu0 %7014, %v6819
        %v7016 = vpop.permute.xlu0 %7015
        %7018 = vset.pattern.permute.xlu0 33
        %7019 = vperm.xlu0 %7018, %v6820
        %v7020 = vpop.permute.xlu0 %7019
        %7022 = vset.pattern.permute.xlu0 33
        %7023 = vperm.xlu0 %7022, %v6821
        %v7024 = vpop.permute.xlu0 %7023
        %7026 = vset.pattern.permute.xlu0 33
        %7027 = vperm.xlu0 %7026, %v6822
        %v7028 = vpop.permute.xlu0 %7027
        %7030 = vset.pattern.permute.xlu0 33
        %7031 = vperm.xlu0 %7030, %v6823
        %v7032 = vpop.permute.xlu0 %7031
        %7034 = vset.pattern.permute.xlu0 33
        %7035 = vperm.xlu0 %7034, %v6824
        %v7036 = vpop.permute.xlu0 %7035
        %7038 = vset.pattern.permute.xlu0 33
        %7039 = vperm.xlu0 %7038, %v6825
        %v7040 = vpop.permute.xlu0 %7039
        %v7042 = vsel %vm2116, %v6829, %v6948
        %v7043 = vsel %vm2116, %v6834, %v6952
        %v7044 = vsel %vm2116, %v6839, %v6956
        %v7045 = vsel %vm2116, %v6844, %v6960
        %v7046 = vsel %vm2116, %v6849, %v6964
        %v7047 = vsel %vm2116, %v6854, %v6968
        %v7048 = vsel %vm2116, %v6859, %v6972
        %v7049 = vsel %vm2116, %v6864, %v6976
        %v7050 = vsel %vm2116, %v6869, %v6980
        %v7051 = vsel %vm2116, %v6874, %v6984
        %v7052 = vsel %vm2116, %v6879, %v6988
        %v7053 = vsel %vm2116, %v6884, %v6992
        %v7054 = vsel %vm2116, %v6889, %v6996
        %v7055 = vsel %vm2116, %v6894, %v7000
        %v7056 = vsel %vm2116, %v6899, %v7004
        %v7057 = vsel %vm2116, %v6904, %v7008
        %v7058 = vsel %vm2116, %v6909, %v7012
        %v7059 = vsel %vm2116, %v6914, %v7016
        %v7060 = vsel %vm2116, %v6919, %v7020
        %v7061 = vsel %vm2116, %v6924, %v7024
        %v7062 = vsel %vm2116, %v6929, %v7028
        %v7063 = vsel %vm2116, %v6934, %v7032
        %v7064 = vsel %vm2116, %v6939, %v7036
        %v7065 = vsel %vm2116, %v6944, %v7040
        %v7066 = vmul.f32 %v6684, %v7042
        %v7067 = vmul.f32 %v6689, %v7043
        %v7068 = vmul.f32 %v6694, %v7044
        %v7069 = vmul.f32 %v6699, %v7045
        %v7070 = vmul.f32 %v6704, %v7046
        %v7071 = vmul.f32 %v6709, %v7047
        %v7072 = vmul.f32 %v6714, %v7048
        %v7073 = vmul.f32 %v6719, %v7049
        %v7074 = vmul.f32 %v6724, %v7050
        %v7075 = vmul.f32 %v6729, %v7051
        %v7076 = vmul.f32 %v6734, %v7052
        %v7077 = vmul.f32 %v6739, %v7053
        %v7078 = vmul.f32 %v6744, %v7054
        %v7079 = vmul.f32 %v6749, %v7055
        %v7080 = vmul.f32 %v6754, %v7056
        %v7081 = vmul.f32 %v6759, %v7057
        %v7082 = vmul.f32 %v6764, %v7058
        %v7083 = vmul.f32 %v6769, %v7059
        %v7084 = vmul.f32 %v6774, %v7060
        %v7085 = vmul.f32 %v6779, %v7061
        %v7086 = vmul.f32 %v6784, %v7062
        %v7087 = vmul.f32 %v6789, %v7063
        %v7088 = vmul.f32 %v6794, %v7064
        %v7089 = vmul.f32 %v6799, %v7065
        %v7090 = vld [vmem:[%s13] sm:$0x1]
        %v7092 = vlaneseq
        %v7093 = vshrl.u32 %v7092, 7
        %v7094 = vsub.s32 0, %v7093
        %v7095 = vrot.slane %v7090, %v7094
        %v7097 = vadd.f32 %v7066, %v7095
        %v7098 = vadd.f32 %v7067, %v7095
        %v7099 = vadd.f32 %v7068, %v7095
        %v7100 = vadd.f32 %v7069, %v7095
        %v7101 = vadd.f32 %v7070, %v7095
        %v7102 = vadd.f32 %v7071, %v7095
        %v7103 = vadd.f32 %v7072, %v7095
        %v7104 = vadd.f32 %v7073, %v7095
        %v7105 = vadd.f32 %v7074, %v7095
        %v7106 = vadd.f32 %v7075, %v7095
        %v7107 = vadd.f32 %v7076, %v7095
        %v7108 = vadd.f32 %v7077, %v7095
        %v7109 = vadd.f32 %v7078, %v7095
        %v7110 = vadd.f32 %v7079, %v7095
        %v7111 = vadd.f32 %v7080, %v7095
        %v7112 = vadd.f32 %v7081, %v7095
        %v7113 = vadd.f32 %v7082, %v7095
        %v7114 = vadd.f32 %v7083, %v7095
        %v7115 = vadd.f32 %v7084, %v7095
        %v7116 = vadd.f32 %v7085, %v7095
        %v7117 = vadd.f32 %v7086, %v7095
        %v7118 = vadd.f32 %v7087, %v7095
        %v7119 = vadd.f32 %v7088, %v7095
        %v7120 = vadd.f32 %v7089, %v7095
        %v7121 = vmax.f32 %v7097, 0.0
        %v7122 = vmax.f32 %v7098, 0.0
        %v7123 = vmax.f32 %v7099, 0.0
        %v7124 = vmax.f32 %v7100, 0.0
        %v7125 = vmax.f32 %v7101, 0.0
        %v7126 = vmax.f32 %v7102, 0.0
        %v7127 = vmax.f32 %v7103, 0.0
        %v7128 = vmax.f32 %v7104, 0.0
        %v7129 = vmax.f32 %v7105, 0.0
        %v7130 = vmax.f32 %v7106, 0.0
        %v7131 = vmax.f32 %v7107, 0.0
        %v7132 = vmax.f32 %v7108, 0.0
        %v7133 = vmax.f32 %v7109, 0.0
        %v7134 = vmax.f32 %v7110, 0.0
        %v7135 = vmax.f32 %v7111, 0.0
        %v7136 = vmax.f32 %v7112, 0.0
        %v7137 = vmax.f32 %v7113, 0.0
        %v7138 = vmax.f32 %v7114, 0.0
        %v7139 = vmax.f32 %v7115, 0.0
        %v7140 = vmax.f32 %v7116, 0.0
        %v7141 = vmax.f32 %v7117, 0.0
        %v7142 = vmax.f32 %v7118, 0.0
        %v7143 = vmax.f32 %v7119, 0.0
        %v7144 = vmax.f32 %v7120, 0.0
        %v7145 = vld [vmem:[%s14] sm:$0xff]
        %v7146 = vld [vmem:[%s14 + $0x8] sm:$0xff]
        %v7147 = vld [vmem:[%s14 + $0x10] sm:$0xff]
        %v7148 = vld [vmem:[%s14 + $0x18] sm:$0xff]
        %v7149 = vld [vmem:[%s14 + $0x20] sm:$0xff]
        %v7150 = vld [vmem:[%s14 + $0x28] sm:$0xff]
        %v7151 = vld [vmem:[%s14 + $0x30] sm:$0xff]
        %v7152 = vld [vmem:[%s14 + $0x38] sm:$0xff]
        %v7153 = vld [vmem:[%s14 + $0x40] sm:$0xff]
        %v7154 = vld [vmem:[%s14 + $0x48] sm:$0xff]
        %v7155 = vld [vmem:[%s14 + $0x50] sm:$0xff]
        %v7156 = vld [vmem:[%s14 + $0x58] sm:$0xff]
        %v7157 = vld [vmem:[%s14 + $0x60] sm:$0xff]
        %v7158 = vld [vmem:[%s14 + $0x68] sm:$0xff]
        %v7159 = vld [vmem:[%s14 + $0x70] sm:$0xff]
        %v7160 = vld [vmem:[%s14 + $0x78] sm:$0xff]
        %v7161 = vld [vmem:[%s14 + $0x80] sm:$0xff]
        %v7162 = vld [vmem:[%s14 + $0x88] sm:$0xff]
        %v7163 = vld [vmem:[%s14 + $0x90] sm:$0xff]
        %v7164 = vld [vmem:[%s14 + $0x98] sm:$0xff]
        %v7165 = vld [vmem:[%s14 + $0xa0] sm:$0xff]
        %v7166 = vld [vmem:[%s14 + $0xa8] sm:$0xff]
        %v7167 = vld [vmem:[%s14 + $0xb0] sm:$0xff]
        %v7168 = vld [vmem:[%s14 + $0xb8] sm:$0xff]
        %v7169 = vmul.f32 %v7121, %v7145
        %v7170 = vmul.f32 %v7122, %v7146
        %v7171 = vmul.f32 %v7123, %v7147
        %v7172 = vmul.f32 %v7124, %v7148
        %v7173 = vmul.f32 %v7125, %v7149
        %v7174 = vmul.f32 %v7126, %v7150
        %v7175 = vmul.f32 %v7127, %v7151
        %v7176 = vmul.f32 %v7128, %v7152
        %v7177 = vmul.f32 %v7129, %v7153
        %v7178 = vmul.f32 %v7130, %v7154
        %v7179 = vmul.f32 %v7131, %v7155
        %v7180 = vmul.f32 %v7132, %v7156
        %v7181 = vmul.f32 %v7133, %v7157
        %v7182 = vmul.f32 %v7134, %v7158
        %v7183 = vmul.f32 %v7135, %v7159
        %v7184 = vmul.f32 %v7136, %v7160
        %v7185 = vmul.f32 %v7137, %v7161
        %v7186 = vmul.f32 %v7138, %v7162
        %v7187 = vmul.f32 %v7139, %v7163
        %v7188 = vmul.f32 %v7140, %v7164
        %v7189 = vmul.f32 %v7141, %v7165
        %v7190 = vmul.f32 %v7142, %v7166
        %v7191 = vmul.f32 %v7143, %v7167
        %v7192 = vmul.f32 %v7144, %v7168
        %v7193 = vsel %vm1013, %v7169, 0.0
        %v7194 = vsel %vm1013, %v7170, 0.0
        %v7195 = vadd.f32 %v7193, %v7194
        %v7196 = vsel %vm1013, %v7171, 0.0
        %v7197 = vadd.f32 %v7195, %v7196
        %v7198 = vsel %vm1013, %v7172, 0.0
        %v7199 = vadd.f32 %v7197, %v7198
        %v7200 = vsel %vm1013, %v7173, 0.0
        %v7201 = vadd.f32 %v7199, %v7200
        %v7202 = vsel %vm1013, %v7174, 0.0
        %v7203 = vadd.f32 %v7201, %v7202
        %v7204 = vsel %vm1013, %v7175, 0.0
        %v7205 = vadd.f32 %v7203, %v7204
        %v7206 = vsel %vm1013, %v7176, 0.0
        %v7207 = vadd.f32 %v7205, %v7206
        %v7208 = vsel %vm1013, %v7177, 0.0
        %v7209 = vadd.f32 %v7207, %v7208
        %v7210 = vsel %vm1013, %v7178, 0.0
        %v7211 = vadd.f32 %v7209, %v7210
        %v7212 = vsel %vm1013, %v7179, 0.0
        %v7213 = vadd.f32 %v7211, %v7212
        %v7214 = vsel %vm1013, %v7180, 0.0
        %v7215 = vadd.f32 %v7213, %v7214
        %v7216 = vsel %vm1013, %v7181, 0.0
        %v7217 = vadd.f32 %v7215, %v7216
        %v7218 = vsel %vm1013, %v7182, 0.0
        %v7219 = vadd.f32 %v7217, %v7218
        %v7220 = vsel %vm1013, %v7183, 0.0
        %v7221 = vadd.f32 %v7219, %v7220
        %v7222 = vsel %vm1013, %v7184, 0.0
        %v7223 = vadd.f32 %v7221, %v7222
        %v7224 = vsel %vm1013, %v7185, 0.0
        %v7225 = vadd.f32 %v7223, %v7224
        %v7226 = vsel %vm1013, %v7186, 0.0
        %v7227 = vadd.f32 %v7225, %v7226
        %v7228 = vsel %vm1013, %v7187, 0.0
        %v7229 = vadd.f32 %v7227, %v7228
        %v7230 = vsel %vm1013, %v7188, 0.0
        %v7231 = vadd.f32 %v7229, %v7230
        %v7232 = vsel %vm1013, %v7189, 0.0
        %v7233 = vadd.f32 %v7231, %v7232
        %v7234 = vsel %vm1013, %v7190, 0.0
        %v7235 = vadd.f32 %v7233, %v7234
        %v7236 = vsel %vm1013, %v7191, 0.0
        %v7237 = vadd.f32 %v7235, %v7236
        %v7238 = vsel %vm1013, %v7192, 0.0
        %v7239 = vadd.f32 %v7237, %v7238
        %v7240 = vrot.slane %v7239, 4
        %v7241 = vadd.f32 %v7239, %v7240
        %v7242 = vrot.slane %v7241, 2
        %v7243 = vadd.f32 %v7241, %v7242
        %v7244 = vrot.slane %v7243, 1
        %v7245 = vadd.f32 %v7243, %v7244
        %v7246 = vsel %vm1013, %v7245, 0.0
        %7247 = vadd.xlane.f32.xlu0 %v7246
        %v7248 = vpop.xlane.xlu0 %7247
        %s7249 = scalar_lea.vmem %s14, 192
        %v7250 = vld [vmem:[%s7249] sm:$0xff]
        %v7251 = vld [vmem:[%s7249 + $0x8] sm:$0xff]
        %v7252 = vld [vmem:[%s7249 + $0x10] sm:$0xff]
        %v7253 = vld [vmem:[%s7249 + $0x18] sm:$0xff]
        %v7254 = vld [vmem:[%s7249 + $0x20] sm:$0xff]
        %v7255 = vld [vmem:[%s7249 + $0x28] sm:$0xff]
        %v7256 = vld [vmem:[%s7249 + $0x30] sm:$0xff]
        %v7257 = vld [vmem:[%s7249 + $0x38] sm:$0xff]
        %v7258 = vld [vmem:[%s7249 + $0x40] sm:$0xff]
        %v7259 = vld [vmem:[%s7249 + $0x48] sm:$0xff]
        %v7260 = vld [vmem:[%s7249 + $0x50] sm:$0xff]
        %v7261 = vld [vmem:[%s7249 + $0x58] sm:$0xff]
        %v7262 = vld [vmem:[%s7249 + $0x60] sm:$0xff]
        %v7263 = vld [vmem:[%s7249 + $0x68] sm:$0xff]
        %v7264 = vld [vmem:[%s7249 + $0x70] sm:$0xff]
        %v7265 = vld [vmem:[%s7249 + $0x78] sm:$0xff]
        %v7266 = vld [vmem:[%s7249 + $0x80] sm:$0xff]
        %v7267 = vld [vmem:[%s7249 + $0x88] sm:$0xff]
        %v7268 = vld [vmem:[%s7249 + $0x90] sm:$0xff]
        %v7269 = vld [vmem:[%s7249 + $0x98] sm:$0xff]
        %v7270 = vld [vmem:[%s7249 + $0xa0] sm:$0xff]
        %v7271 = vld [vmem:[%s7249 + $0xa8] sm:$0xff]
        %v7272 = vld [vmem:[%s7249 + $0xb0] sm:$0xff]
        %v7273 = vld [vmem:[%s7249 + $0xb8] sm:$0xff]
        %v7274 = vmul.f32 %v7121, %v7250
        %v7275 = vmul.f32 %v7122, %v7251
        %v7276 = vmul.f32 %v7123, %v7252
        %v7277 = vmul.f32 %v7124, %v7253
        %v7278 = vmul.f32 %v7125, %v7254
        %v7279 = vmul.f32 %v7126, %v7255
        %v7280 = vmul.f32 %v7127, %v7256
        %v7281 = vmul.f32 %v7128, %v7257
        %v7282 = vmul.f32 %v7129, %v7258
        %v7283 = vmul.f32 %v7130, %v7259
        %v7284 = vmul.f32 %v7131, %v7260
        %v7285 = vmul.f32 %v7132, %v7261
        %v7286 = vmul.f32 %v7133, %v7262
        %v7287 = vmul.f32 %v7134, %v7263
        %v7288 = vmul.f32 %v7135, %v7264
        %v7289 = vmul.f32 %v7136, %v7265
        %v7290 = vmul.f32 %v7137, %v7266
        %v7291 = vmul.f32 %v7138, %v7267
        %v7292 = vmul.f32 %v7139, %v7268
        %v7293 = vmul.f32 %v7140, %v7269
        %v7294 = vmul.f32 %v7141, %v7270
        %v7295 = vmul.f32 %v7142, %v7271
        %v7296 = vmul.f32 %v7143, %v7272
        %v7297 = vmul.f32 %v7144, %v7273
        %v7298 = vsel %vm1013, %v7274, 0.0
        %v7299 = vsel %vm1013, %v7275, 0.0
        %v7300 = vadd.f32 %v7298, %v7299
        %v7301 = vsel %vm1013, %v7276, 0.0
        %v7302 = vadd.f32 %v7300, %v7301
        %v7303 = vsel %vm1013, %v7277, 0.0
        %v7304 = vadd.f32 %v7302, %v7303
        %v7305 = vsel %vm1013, %v7278, 0.0
        %v7306 = vadd.f32 %v7304, %v7305
        %v7307 = vsel %vm1013, %v7279, 0.0
        %v7308 = vadd.f32 %v7306, %v7307
        %v7309 = vsel %vm1013, %v7280, 0.0
        %v7310 = vadd.f32 %v7308, %v7309
        %v7311 = vsel %vm1013, %v7281, 0.0
        %v7312 = vadd.f32 %v7310, %v7311
        %v7313 = vsel %vm1013, %v7282, 0.0
        %v7314 = vadd.f32 %v7312, %v7313
        %v7315 = vsel %vm1013, %v7283, 0.0
        %v7316 = vadd.f32 %v7314, %v7315
        %v7317 = vsel %vm1013, %v7284, 0.0
        %v7318 = vadd.f32 %v7316, %v7317
        %v7319 = vsel %vm1013, %v7285, 0.0
        %v7320 = vadd.f32 %v7318, %v7319
        %v7321 = vsel %vm1013, %v7286, 0.0
        %v7322 = vadd.f32 %v7320, %v7321
        %v7323 = vsel %vm1013, %v7287, 0.0
        %v7324 = vadd.f32 %v7322, %v7323
        %v7325 = vsel %vm1013, %v7288, 0.0
        %v7326 = vadd.f32 %v7324, %v7325
        %v7327 = vsel %vm1013, %v7289, 0.0
        %v7328 = vadd.f32 %v7326, %v7327
        %v7329 = vsel %vm1013, %v7290, 0.0
        %v7330 = vadd.f32 %v7328, %v7329
        %v7331 = vsel %vm1013, %v7291, 0.0
        %v7332 = vadd.f32 %v7330, %v7331
        %v7333 = vsel %vm1013, %v7292, 0.0
        %v7334 = vadd.f32 %v7332, %v7333
        %v7335 = vsel %vm1013, %v7293, 0.0
        %v7336 = vadd.f32 %v7334, %v7335
        %v7337 = vsel %vm1013, %v7294, 0.0
        %v7338 = vadd.f32 %v7336, %v7337
        %v7339 = vsel %vm1013, %v7295, 0.0
        %v7340 = vadd.f32 %v7338, %v7339
        %v7341 = vsel %vm1013, %v7296, 0.0
        %v7342 = vadd.f32 %v7340, %v7341
        %v7343 = vsel %vm1013, %v7297, 0.0
        %v7344 = vadd.f32 %v7342, %v7343
        %v7345 = vrot.slane %v7344, 4
        %v7346 = vadd.f32 %v7344, %v7345
        %v7347 = vrot.slane %v7346, 2
        %v7348 = vadd.f32 %v7346, %v7347
        %v7349 = vrot.slane %v7348, 1
        %v7350 = vadd.f32 %v7348, %v7349
        %v7351 = vsel %vm1013, %v7350, 0.0
        %7352 = vadd.xlane.f32.xlu0 %v7351
        %v7353 = vpop.xlane.xlu0 %7352
        %s7354 = scalar_lea.vmem %s14, 384
        %v7355 = vld [vmem:[%s7354] sm:$0xff]
        %v7356 = vld [vmem:[%s7354 + $0x8] sm:$0xff]
        %v7357 = vld [vmem:[%s7354 + $0x10] sm:$0xff]
        %v7358 = vld [vmem:[%s7354 + $0x18] sm:$0xff]
        %v7359 = vld [vmem:[%s7354 + $0x20] sm:$0xff]
        %v7360 = vld [vmem:[%s7354 + $0x28] sm:$0xff]
        %v7361 = vld [vmem:[%s7354 + $0x30] sm:$0xff]
        %v7362 = vld [vmem:[%s7354 + $0x38] sm:$0xff]
        %v7363 = vld [vmem:[%s7354 + $0x40] sm:$0xff]
        %v7364 = vld [vmem:[%s7354 + $0x48] sm:$0xff]
        %v7365 = vld [vmem:[%s7354 + $0x50] sm:$0xff]
        %v7366 = vld [vmem:[%s7354 + $0x58] sm:$0xff]
        %v7367 = vld [vmem:[%s7354 + $0x60] sm:$0xff]
        %v7368 = vld [vmem:[%s7354 + $0x68] sm:$0xff]
        %v7369 = vld [vmem:[%s7354 + $0x70] sm:$0xff]
        %v7370 = vld [vmem:[%s7354 + $0x78] sm:$0xff]
        %v7371 = vld [vmem:[%s7354 + $0x80] sm:$0xff]
        %v7372 = vld [vmem:[%s7354 + $0x88] sm:$0xff]
        %v7373 = vld [vmem:[%s7354 + $0x90] sm:$0xff]
        %v7374 = vld [vmem:[%s7354 + $0x98] sm:$0xff]
        %v7375 = vld [vmem:[%s7354 + $0xa0] sm:$0xff]
        %v7376 = vld [vmem:[%s7354 + $0xa8] sm:$0xff]
        %v7377 = vld [vmem:[%s7354 + $0xb0] sm:$0xff]
        %v7378 = vld [vmem:[%s7354 + $0xb8] sm:$0xff]
        %v7379 = vmul.f32 %v7121, %v7355
        %v7380 = vmul.f32 %v7122, %v7356
        %v7381 = vmul.f32 %v7123, %v7357
        %v7382 = vmul.f32 %v7124, %v7358
        %v7383 = vmul.f32 %v7125, %v7359
        %v7384 = vmul.f32 %v7126, %v7360
        %v7385 = vmul.f32 %v7127, %v7361
        %v7386 = vmul.f32 %v7128, %v7362
        %v7387 = vmul.f32 %v7129, %v7363
        %v7388 = vmul.f32 %v7130, %v7364
        %v7389 = vmul.f32 %v7131, %v7365
        %v7390 = vmul.f32 %v7132, %v7366
        %v7391 = vmul.f32 %v7133, %v7367
        %v7392 = vmul.f32 %v7134, %v7368
        %v7393 = vmul.f32 %v7135, %v7369
        %v7394 = vmul.f32 %v7136, %v7370
        %v7395 = vmul.f32 %v7137, %v7371
        %v7396 = vmul.f32 %v7138, %v7372
        %v7397 = vmul.f32 %v7139, %v7373
        %v7398 = vmul.f32 %v7140, %v7374
        %v7399 = vmul.f32 %v7141, %v7375
        %v7400 = vmul.f32 %v7142, %v7376
        %v7401 = vmul.f32 %v7143, %v7377
        %v7402 = vmul.f32 %v7144, %v7378
        %v7403 = vsel %vm1013, %v7379, 0.0
        %v7404 = vsel %vm1013, %v7380, 0.0
        %v7405 = vadd.f32 %v7403, %v7404
        %v7406 = vsel %vm1013, %v7381, 0.0
        %v7407 = vadd.f32 %v7405, %v7406
        %v7408 = vsel %vm1013, %v7382, 0.0
        %v7409 = vadd.f32 %v7407, %v7408
        %v7410 = vsel %vm1013, %v7383, 0.0
        %v7411 = vadd.f32 %v7409, %v7410
        %v7412 = vsel %vm1013, %v7384, 0.0
        %v7413 = vadd.f32 %v7411, %v7412
        %v7414 = vsel %vm1013, %v7385, 0.0
        %v7415 = vadd.f32 %v7413, %v7414
        %v7416 = vsel %vm1013, %v7386, 0.0
        %v7417 = vadd.f32 %v7415, %v7416
        %v7418 = vsel %vm1013, %v7387, 0.0
        %v7419 = vadd.f32 %v7417, %v7418
        %v7420 = vsel %vm1013, %v7388, 0.0
        %v7421 = vadd.f32 %v7419, %v7420
        %v7422 = vsel %vm1013, %v7389, 0.0
        %v7423 = vadd.f32 %v7421, %v7422
        %v7424 = vsel %vm1013, %v7390, 0.0
        %v7425 = vadd.f32 %v7423, %v7424
        %v7426 = vsel %vm1013, %v7391, 0.0
        %v7427 = vadd.f32 %v7425, %v7426
        %v7428 = vsel %vm1013, %v7392, 0.0
        %v7429 = vadd.f32 %v7427, %v7428
        %v7430 = vsel %vm1013, %v7393, 0.0
        %v7431 = vadd.f32 %v7429, %v7430
        %v7432 = vsel %vm1013, %v7394, 0.0
        %v7433 = vadd.f32 %v7431, %v7432
        %v7434 = vsel %vm1013, %v7395, 0.0
        %v7435 = vadd.f32 %v7433, %v7434
        %v7436 = vsel %vm1013, %v7396, 0.0
        %v7437 = vadd.f32 %v7435, %v7436
        %v7438 = vsel %vm1013, %v7397, 0.0
        %v7439 = vadd.f32 %v7437, %v7438
        %v7440 = vsel %vm1013, %v7398, 0.0
        %v7441 = vadd.f32 %v7439, %v7440
        %v7442 = vsel %vm1013, %v7399, 0.0
        %v7443 = vadd.f32 %v7441, %v7442
        %v7444 = vsel %vm1013, %v7400, 0.0
        %v7445 = vadd.f32 %v7443, %v7444
        %v7446 = vsel %vm1013, %v7401, 0.0
        %v7447 = vadd.f32 %v7445, %v7446
        %v7448 = vsel %vm1013, %v7402, 0.0
        %v7449 = vadd.f32 %v7447, %v7448
        %v7450 = vrot.slane %v7449, 4
        %v7451 = vadd.f32 %v7449, %v7450
        %v7452 = vrot.slane %v7451, 2
        %v7453 = vadd.f32 %v7451, %v7452
        %v7454 = vrot.slane %v7453, 1
        %v7455 = vadd.f32 %v7453, %v7454
        %v7456 = vsel %vm1013, %v7455, 0.0
        %7457 = vadd.xlane.f32.xlu0 %v7456
        %v7458 = vpop.xlane.xlu0 %7457
        %s7459 = scalar_lea.vmem %s14, 576
        %v7460 = vld [vmem:[%s7459] sm:$0xff]
        %v7461 = vld [vmem:[%s7459 + $0x8] sm:$0xff]
        %v7462 = vld [vmem:[%s7459 + $0x10] sm:$0xff]
        %v7463 = vld [vmem:[%s7459 + $0x18] sm:$0xff]
        %v7464 = vld [vmem:[%s7459 + $0x20] sm:$0xff]
        %v7465 = vld [vmem:[%s7459 + $0x28] sm:$0xff]
        %v7466 = vld [vmem:[%s7459 + $0x30] sm:$0xff]
        %v7467 = vld [vmem:[%s7459 + $0x38] sm:$0xff]
        %v7468 = vld [vmem:[%s7459 + $0x40] sm:$0xff]
        %v7469 = vld [vmem:[%s7459 + $0x48] sm:$0xff]
        %v7470 = vld [vmem:[%s7459 + $0x50] sm:$0xff]
        %v7471 = vld [vmem:[%s7459 + $0x58] sm:$0xff]
        %v7472 = vld [vmem:[%s7459 + $0x60] sm:$0xff]
        %v7473 = vld [vmem:[%s7459 + $0x68] sm:$0xff]
        %v7474 = vld [vmem:[%s7459 + $0x70] sm:$0xff]
        %v7475 = vld [vmem:[%s7459 + $0x78] sm:$0xff]
        %v7476 = vld [vmem:[%s7459 + $0x80] sm:$0xff]
        %v7477 = vld [vmem:[%s7459 + $0x88] sm:$0xff]
        %v7478 = vld [vmem:[%s7459 + $0x90] sm:$0xff]
        %v7479 = vld [vmem:[%s7459 + $0x98] sm:$0xff]
        %v7480 = vld [vmem:[%s7459 + $0xa0] sm:$0xff]
        %v7481 = vld [vmem:[%s7459 + $0xa8] sm:$0xff]
        %v7482 = vld [vmem:[%s7459 + $0xb0] sm:$0xff]
        %v7483 = vld [vmem:[%s7459 + $0xb8] sm:$0xff]
        %v7484 = vmul.f32 %v7121, %v7460
        %v7485 = vmul.f32 %v7122, %v7461
        %v7486 = vmul.f32 %v7123, %v7462
        %v7487 = vmul.f32 %v7124, %v7463
        %v7488 = vmul.f32 %v7125, %v7464
        %v7489 = vmul.f32 %v7126, %v7465
        %v7490 = vmul.f32 %v7127, %v7466
        %v7491 = vmul.f32 %v7128, %v7467
        %v7492 = vmul.f32 %v7129, %v7468
        %v7493 = vmul.f32 %v7130, %v7469
        %v7494 = vmul.f32 %v7131, %v7470
        %v7495 = vmul.f32 %v7132, %v7471
        %v7496 = vmul.f32 %v7133, %v7472
        %v7497 = vmul.f32 %v7134, %v7473
        %v7498 = vmul.f32 %v7135, %v7474
        %v7499 = vmul.f32 %v7136, %v7475
        %v7500 = vmul.f32 %v7137, %v7476
        %v7501 = vmul.f32 %v7138, %v7477
        %v7502 = vmul.f32 %v7139, %v7478
        %v7503 = vmul.f32 %v7140, %v7479
        %v7504 = vmul.f32 %v7141, %v7480
        %v7505 = vmul.f32 %v7142, %v7481
        %v7506 = vmul.f32 %v7143, %v7482
        %v7507 = vmul.f32 %v7144, %v7483
        %v7508 = vsel %vm1013, %v7484, 0.0
        %v7509 = vsel %vm1013, %v7485, 0.0
        %v7510 = vadd.f32 %v7508, %v7509
        %v7511 = vsel %vm1013, %v7486, 0.0
        %v7512 = vadd.f32 %v7510, %v7511
        %v7513 = vsel %vm1013, %v7487, 0.0
        %v7514 = vadd.f32 %v7512, %v7513
        %v7515 = vsel %vm1013, %v7488, 0.0
        %v7516 = vadd.f32 %v7514, %v7515
        %v7517 = vsel %vm1013, %v7489, 0.0
        %v7518 = vadd.f32 %v7516, %v7517
        %v7519 = vsel %vm1013, %v7490, 0.0
        %v7520 = vadd.f32 %v7518, %v7519
        %v7521 = vsel %vm1013, %v7491, 0.0
        %v7522 = vadd.f32 %v7520, %v7521
        %v7523 = vsel %vm1013, %v7492, 0.0
        %v7524 = vadd.f32 %v7522, %v7523
        %v7525 = vsel %vm1013, %v7493, 0.0
        %v7526 = vadd.f32 %v7524, %v7525
        %v7527 = vsel %vm1013, %v7494, 0.0
        %v7528 = vadd.f32 %v7526, %v7527
        %v7529 = vsel %vm1013, %v7495, 0.0
        %v7530 = vadd.f32 %v7528, %v7529
        %v7531 = vsel %vm1013, %v7496, 0.0
        %v7532 = vadd.f32 %v7530, %v7531
        %v7533 = vsel %vm1013, %v7497, 0.0
        %v7534 = vadd.f32 %v7532, %v7533
        %v7535 = vsel %vm1013, %v7498, 0.0
        %v7536 = vadd.f32 %v7534, %v7535
        %v7537 = vsel %vm1013, %v7499, 0.0
        %v7538 = vadd.f32 %v7536, %v7537
        %v7539 = vsel %vm1013, %v7500, 0.0
        %v7540 = vadd.f32 %v7538, %v7539
        %v7541 = vsel %vm1013, %v7501, 0.0
        %v7542 = vadd.f32 %v7540, %v7541
        %v7543 = vsel %vm1013, %v7502, 0.0
        %v7544 = vadd.f32 %v7542, %v7543
        %v7545 = vsel %vm1013, %v7503, 0.0
        %v7546 = vadd.f32 %v7544, %v7545
        %v7547 = vsel %vm1013, %v7504, 0.0
        %v7548 = vadd.f32 %v7546, %v7547
        %v7549 = vsel %vm1013, %v7505, 0.0
        %v7550 = vadd.f32 %v7548, %v7549
        %v7551 = vsel %vm1013, %v7506, 0.0
        %v7552 = vadd.f32 %v7550, %v7551
        %v7553 = vsel %vm1013, %v7507, 0.0
        %v7554 = vadd.f32 %v7552, %v7553
        %v7555 = vrot.slane %v7554, 4
        %v7556 = vadd.f32 %v7554, %v7555
        %v7557 = vrot.slane %v7556, 2
        %v7558 = vadd.f32 %v7556, %v7557
        %v7559 = vrot.slane %v7558, 1
        %v7560 = vadd.f32 %v7558, %v7559
        %v7561 = vsel %vm1013, %v7560, 0.0
        %7562 = vadd.xlane.f32.xlu0 %v7561
        %v7563 = vpop.xlane.xlu0 %7562
        %vm7564 = vcmask 7168
        %v7565 = vsel %vm7564, %v7248, %v7353
        %vm7566 = vcmask 15360
        %v7567 = vsel %vm7566, %v7565, %v7458
        %vm7568 = vcmask 23552
        %v7569 = vsel %vm7568, %v7567, %v7563
        %v7570 = vld [vmem:[%s15] sm:$0x1]
        %v7571 = vadd.f32 %v7569, %v7570
        %vm7572 = vcmask 24576
        %7573 = vst.msk [vmem:[%s528] sm:$0x1] %vm7572, %v7571
        %s7574 = sand.u32 %s384, 1
        %s7575 = scalar_lea.sflag [#allocation5], %s7574
        %s7576 = sand.u32 %s384, 1
        %s7577 = scalar_lea.vmem [#allocation4], %s7576
        // Predicated region
        $region85: #{gnn_forward.1} parent=83 // pred_check
          %p7578 = pneg %p394
        $region86: #{gnn_forward.1} parent=83 // pred_check_branch
          %7580 = sbr.rel (%p7578) target = $region88
        $region87: #{gnn_forward.1} parent=83 // pred_region
          %s7582 = ssub.s32 16, 16
          %7583 = vsyncadd %s7575, %s7582
          %s7584 = smul.addr %s30, 16
          %s7585 = scalar_lea.hbm %s16, %s7584
          %s7587 = sshll.u32 %s7577, 4
          %s7588 = int_to_ptr.vmem [resolvable:$true] %s7587
          %7590 = dma.vmem_to_hbm [thread:$0]  %s7588, 16, %s7585, %s7575
        $region88: #{gnn_forward.1} parent=83 // pred_fallthru
          _
      $region84: #{gnn_forward.1} parent=5 // pred_fallthru
        _
      %p7591 = scmp.le.s32.totalorder 2, %s25
      // Predicated region
      $region89: #{gnn_forward.1} parent=5 // pred_check
        %p7592 = pneg %p7591
      $region90: #{gnn_forward.1} parent=5 // pred_check_branch
        %7594 = sbr.rel (%p7592) target = $region92
      $region91: #{gnn_forward.1} parent=5 // pred_region
        %s7595 = ssub.s32 %s25, 2
        // Predicated region
        $region93: #{gnn_forward.1} parent=91 // pred_check
          %p7596 = pneg %p400
        $region94: #{gnn_forward.1} parent=91 // pred_check_branch
          %7598 = sbr.rel (%p7596) target = $region96
        $region95: #{gnn_forward.1} parent=91 // pred_region
          %s7599 = sand.u32 %s385, 1
          %s7600 = scalar_lea.sflag [#allocation5], %s7599
          %s7601 = sand.u32 %s385, 1
          %s7602 = scalar_lea.vmem [#allocation4], %s7601
          %7603 = dma.done %s7600, 16
        $region96: #{gnn_forward.1} parent=91 // pred_fallthru
          _
      $region92: #{gnn_forward.1} parent=5 // pred_fallthru
        _
    $region6: #{gnn_forward.1} parent=1 // loop_footer
      %s29 = sadd.s32 1, %s25
    $region7: #{gnn_forward.1} parent=1 // loop_footer_branch
      %24 = sbr.rel target = $region3
    $region8: #{gnn_forward.1} parent=1 // loop_exit
      _
    %7604 = vsyncpa [#allocation5], 1
    %s7605 = scalar_lea.sflag [#allocation5], 1
    %7606 = vsyncpa %s7605, 1

</llo_original>
